<compile_context>
chip_gen: v7x
topology: tpu7x:2x2x1
jax: 0.10.0
libtpu: 0.0.40
codegen_flags: <defaults>
</compile_context>

<pallas_src>
import math
import functools

import jax
import jax.numpy as jnp
from jax import lax
from jax.experimental import pallas as pl
from jax.experimental.pallas import tpu as pltpu

_LANE = 128
_NEG_BIG = -1e30   # logit bias for padded memory columns -> exp() == 0 exactly


def _round_up(x, m):
    return (x + m - 1) // m * m


# ---------------------------------------------------------------------------
# Trace-time (batch-invariant) weight preparation — call once and cache.
# ---------------------------------------------------------------------------
def _pad_cols_per_head(w, h, d, dp):
    # (rows, h*d) -> (rows, h*dp), zero-padding each head's column block.
    r = w.shape[0]
    return jnp.pad(w.reshape(r, h, d), ((0, 0), (0, 0), (0, dp - d))).reshape(r, h * dp)


def _pad_vec_per_head(b, h, d, dp):
    return jnp.pad(b.reshape(h, d), ((0, 0), (0, dp - d))).reshape(h * dp)


def _pad_rows_per_head(w, h, d, dp):
    # (h*d, cols) -> (h*dp, cols), zero-padding each head's row block.
    c = w.shape[1]
    return jnp.pad(w.reshape(h, d, c), ((0, 0), (0, dp - d), (0, 0))).reshape(h * dp, c)


def precompute_constants(params, *, d_model, d_k, d_v, h, num_memory,
                         matmul_dtype=jnp.bfloat16):
    """All batch-invariant work: transposes, 1/sqrt(d_k) folding, memory K/V
    projections, per-head lane padding, fc_q⊗memory-key folding, bf16 casts."""
    scale = 1.0 / math.sqrt(d_k)
    dkp = _round_up(d_k, _LANE)
    dvp = _round_up(d_v, _LANE)
    mp = _round_up(num_memory, _LANE)

    wq = params["fc_q_w"].T * scale                     # (d_model, h*d_k), scaled
    bq = params["fc_q_b"] * scale
    wk = params["fc_k_w"].T
    bk = params["fc_k_b"]
    wv = params["fc_v_w"].T
    bv = params["fc_v_b"]
    wo = params["fc_o_w"].T                             # (h*d_v, d_model)
    bo = params["fc_o_b"]

    # Batch-invariant memory rows: k_w/v_w then fc_k/fc_v, projected ONCE.
    k_mem = params["k_memory"][0] @ params["k_w_w"].T + params["k_w_b"]   # (M, d_model)
    v_mem = params["v_memory"][0] @ params["v_w_w"].T + params["v_w_b"]
    kmem_proj = k_mem @ wk + bk                          # (M, h*d_k)
    vmem_proj = v_mem @ wv + bv                          # (M, h*d_v)

    # Fold fc_q into the memory-key logits:  att_m = q_rows @ w_qm + b_qm.
    # Padded memory columns get zero weight and a -1e30 bias (exp -> 0).
    wq3 = wq.reshape(d_model, h, d_k)
    km3 = kmem_proj.reshape(num_memory, h, d_k)
    w_qm_h = jnp.einsum("dhk,mhk->hdm", wq3, km3)                        # (h, d_model, M)
    b_qm_h = jnp.einsum("hk,mhk->hm", bq.reshape(h, d_k), km3)           # (h, M)
    w_qm = jnp.pad(w_qm_h, ((0, 0), (0, 0), (0, mp - num_memory)))
    w_qm = jnp.transpose(w_qm, (1, 0, 2)).reshape(d_model, h * mp)
    b_qm = jnp.pad(b_qm_h, ((0, 0), (0, mp - num_memory)),
                   constant_values=_NEG_BIG).reshape(1, h * mp)

    # Per-head lane padding (zero columns / zero Wo rows — mathematically exact).
    wq_p = _pad_cols_per_head(wq, h, d_k, dkp)
    bq_p = _pad_vec_per_head(bq, h, d_k, dkp)[None, :]
    wk_p = _pad_cols_per_head(wk, h, d_k, dkp)
    bk_p = _pad_vec_per_head(bk, h, d_k, dkp)[None, :]
    wv_p = _pad_cols_per_head(wv, h, d_v, dvp)
    bv_p = _pad_vec_per_head(bv, h, d_v, dvp)[None, :]
    wo_p = _pad_rows_per_head(wo, h, d_v, dvp)                           # (h*dvp, d_model)
    vmem_pp = jnp.pad(_pad_cols_per_head(vmem_proj, h, d_v, dvp),
                      ((0, mp - num_memory), (0, 0)))                    # (mp, h*dvp)

    # Cast MXU weight operands in the wrapper (halves DMA bytes + VMEM residency,
    # removes per-step casts).  Biases / LN params / b_qm stay f32: they feed
    # f32 accumulators and b_qm carries the -1e30 sentinel.
    cast = (lambda x: x) if matmul_dtype is None else (lambda x: x.astype(matmul_dtype))
    return {
        "wq": cast(wq_p), "bq": bq_p, "wk": cast(wk_p), "bk": bk_p,
        "wv": cast(wv_p), "bv": bv_p,
        "w_qm": cast(w_qm), "b_qm": b_qm, "vmem": cast(vmem_pp),
        "wo": cast(wo_p), "bo": bo[None, :],
        "gamma": params["ln_w"][None, :], "beta": params["ln_b"][None, :],
        "dims": {"d_model": d_model, "d_k": d_k, "d_v": d_v, "h": h,
                 "num_memory": num_memory, "dkp": dkp, "dvp": dvp, "mp": mp},
        "matmul_dtype": matmul_dtype,
    }


# ---------------------------------------------------------------------------
# Pallas kernel: one batch TILE (b_tile batch elements) per grid step.
# ---------------------------------------------------------------------------
def _mha_kernel(q_ref, k_ref, v_ref,
                wq_ref, bq_ref, wk_ref, bk_ref, wv_ref, bv_ref,
                wqm_ref, bqm_ref, vmem_ref, wo_ref, bo_ref,
                gamma_ref, beta_ref,
                out_ref, o_acc_ref,
                *, h, dkp, dvp, mp, b_tile, nq, nk, matmul_dtype):
    d_model = q_ref.shape[-1]
    mm = jnp.float32 if matmul_dtype is None else matmul_dtype
    rows = b_tile * nq

    # Flatten the batch tile into rows: projections become big fused matmuls.
    q_rows = q_ref[...].reshape(rows, d_model)                # residual input
    k_rows = k_ref[...].reshape(b_tile * nk, d_model)
    v_rows = v_ref[...].reshape(b_tile * nk, d_model)
    q_in = q_rows.astype(mm)
    k_in = k_rows.astype(mm)
    v_in = v_rows.astype(mm)

    # Fused Q/K/V projections (1/sqrt(d_k) folded into Wq; per-head lanes padded
    # to dkp/dvp with zero weights -> padded columns are exactly 0).
    q = jnp.dot(q_in, wq_ref[...], preferred_element_type=jnp.float32) + bq_ref[...]
    k = jnp.dot(k_in, wk_ref[...], preferred_element_type=jnp.float32) + bk_ref[...]
    v = jnp.dot(v_in, wv_ref[...], preferred_element_type=jnp.float32) + bv_ref[...]

    # Memory-key logits for ALL heads and ALL rows in ONE matmul (fc_q folded
    # with the projected, batch-invariant memory keys at trace time).
    att_m_all = (jnp.dot(q_in, wqm_ref[...], preferred_element_type=jnp.float32)
                 + bqm_ref[...])                              # (rows, h*mp)

    q3 = q.reshape(b_tile, nq, h * dkp)
    k3 = k.reshape(b_tile, nk, h * dkp)
    v3 = v.reshape(b_tile, nk, h * dvp)
    vmem = vmem_ref[...]                                      # (mp, h*dvp)

    approx = matmul_dtype is not None
    # Per-head attention: h is small & static; every slice / store below is a
    # 128-lane-tile-aligned block (dkp/dvp/mp are multiples of 128).
    for hi in range(h):
        sk = slice(hi * dkp, (hi + 1) * dkp)
        sv = slice(hi * dvp, (hi + 1) * dvp)
        sm = slice(hi * mp, (hi + 1) * mp)
        qh = q3[:, :, sk].astype(mm)                          # (b, nq, dkp)
        kh = k3[:, :, sk].astype(mm)                          # (b, nk, dkp)
        vh = v3[:, :, sv].astype(mm)                          # (b, nk, dvp)

        # Sequence-key logits: contract last dims of both operands (no .T).
        att_s = lax.dot_general(qh, kh, (((2,), (2,)), ((0,), (0,))),
                                preferred_element_type=jnp.float32)   # (b, nq, nk)
        att_m = att_m_all[:, sm].reshape(b_tile, nq, mp)               # (b, nq, mp)

        m = jnp.maximum(att_s.max(-1, keepdims=True), att_m.max(-1, keepdims=True))
        p_s = jnp.exp(att_s - m)
        p_m = jnp.exp(att_m - m)              # padded memory columns -> exactly 0
        denom = p_s.sum(-1, keepdims=True) + p_m.sum(-1, keepdims=True)
        inv = pl.reciprocal(denom, approx=approx)   # exact in f32 validation builds
        # TODO(synk): attention dropout (p=0.1) omitted — eval-mode identity.

        out_s = lax.dot_general(p_s.astype(mm), vh, (((2,), (1,)), ((0,), (0,))),
                                preferred_element_type=jnp.float32)   # (b, nq, dvp)
        out_m = jnp.dot(p_m.reshape(rows, mp).astype(mm), vmem[:, sv],
                        preferred_element_type=jnp.float32)           # (rows, dvp)
        out_h = (out_s.reshape(rows, dvp) + out_m) * inv.reshape(rows, 1)
        o_acc_ref[:, sv] = out_h              # lane-dense, tile-aligned store

    # Output projection over all fused rows (single h*dvp contraction; padded
    # dvp rows of Wo are zero, so padding is exact).
    o = jnp.dot(o_acc_ref[...].astype(mm), wo_ref[...],
                preferred_element_type=jnp.float32) + bo_ref[...]     # (rows, d_model)
    # TODO(synk): outer dropout (p=0.1) omitted — eval-mode identity.

    # Residual + LayerNorm (eps=1e-5, biased variance — matches torch.nn.LayerNorm).
    x = q_rows.astype(jnp.float32) + o
    mean = jnp.mean(x, axis=-1, keepdims=True)
    var = jnp.mean((x - mean) ** 2, axis=-1, keepdims=True)
    y = (x - mean) * lax.rsqrt(var + 1e-5)
    y = y * gamma_ref[...] + beta_ref[...]
    out_ref[...] = y.reshape(b_tile, nq, d_model).astype(out_ref.dtype)


# ---------------------------------------------------------------------------
# Generation-aware sizing helpers
# ---------------------------------------------------------------------------
def _tpu_vmem_and_cores():
    vmem = 64 << 20                       # conservative fallback (v7x per-TC VMEM)
    try:
        info = pltpu.get_tpu_info()
        vmem = int(getattr(info, "vmem_capacity_bytes", vmem))
    except Exception:
        pass
    cores = 1
    try:
        d = jax.devices()[0]
        cores = int(getattr(d, "num_cores", None) or getattr(d, "core_count", None) or 1)
    except Exception:
        pass
    return vmem, max(cores, 1)


def _pick_b_tile(b_s, nq, per_batch_bytes, tile_budget, two_tc, target_rows=512):
    # Only force >=2 grid steps when the chip actually has 2 TensorCores (v7x);
    # on single-TC chips the grid is a serial loop, so bigger tiles win.
    max_by_grid = max(1, b_s // 2) if (two_tc and b_s >= 2) else b_s
    max_by_rows = max(1, target_rows // max(nq, 1))
    max_by_vmem = max(1, tile_budget // max(per_batch_bytes, 1))
    tile = max(1, min(b_s, max_by_grid, max_by_rows, max_by_vmem))
    while b_s % tile:                      # keep the grid exact (no ragged tile)
        tile -= 1
    return tile


# ---------------------------------------------------------------------------
# Wrapper
# ---------------------------------------------------------------------------
def memory_mha_apply(consts, queries, keys, values, *, b_tile=None):
    dims = consts["dims"]
    d_model, h = dims["d_model"], dims["h"]
    dkp, dvp, mp = dims["dkp"], dims["dvp"], dims["mp"]
    b_s, nq, _ = queries.shape
    nk = keys.shape[1]

    vmem_cap, n_cores = _tpu_vmem_and_cores()
    small_vmem = vmem_cap <= (64 << 20)                 # v7x: 64 MiB / TC
    tile_budget = (12 << 20) if small_vmem else (28 << 20)
    limit_cap = (48 << 20) if small_vmem else (96 << 20)

    # VMEM estimate per batch element: double-buffered I/O + f32 temporaries
    # (projected q/k/v, memory logits, per-head softmax blocks, scratch slab).
    in_item = jnp.dtype(queries.dtype).itemsize
    io_bytes = in_item * 2 * (2 * nq * d_model + 2 * nk * d_model)
    tmp_bytes = 4 * (nq * h * dkp + nk * h * dkp + nk * h * dvp
                     + nq * h * mp
                     + 3 * nq * nk + 2 * nq * mp + 2 * nq * dvp
                     + nq * h * dvp)
    per_batch = io_bytes + tmp_bytes

    weight_arrays = [consts[kname] for kname in
                     ("wq", "bq", "wk", "bk", "wv", "bv", "w_qm", "b_qm",
                      "vmem", "wo", "bo", "gamma", "beta")]
    weight_bytes = sum(int(a.size) * jnp.dtype(a.dtype).itemsize for a in weight_arrays)

    if b_tile is None:
        b_tile = _pick_b_tile(b_s, nq, per_batch, tile_budget, two_tc=(n_cores >= 2))
    grid = (b_s // b_tile,)

    est = b_tile * per_batch + weight_bytes + (2 << 20)
    vmem_limit = int(min(limit_cap, max(2 * est, 32 << 20)))

    kernel = functools.partial(_mha_kernel, h=h, dkp=dkp, dvp=dvp, mp=mp,
                               b_tile=b_tile, nq=nq, nk=nk,
                               matmul_dtype=consts["matmul_dtype"])

    def build(single_buffer_consts):
        def const_spec(a):
            kw = {"pipeline_mode": pl.Buffered(1)} if single_buffer_consts else {}
            return pl.BlockSpec(a.shape, lambda i, _n=a.ndim: (0,) * _n, **kw)

        return pl.pallas_call(
            kernel,
            out_shape=jax.ShapeDtypeStruct((b_s, nq, d_model), queries.dtype),
            grid=grid,
            in_specs=[
                pl.BlockSpec((b_tile, nq, d_model), lambda i: (i, 0, 0)),   # queries
                pl.BlockSpec((b_tile, nk, d_model), lambda i: (i, 0, 0)),   # keys
                pl.BlockSpec((b_tile, nk, d_model), lambda i: (i, 0, 0)),   # values
            ] + [const_spec(a) for a in weight_arrays],
            out_specs=pl.BlockSpec((b_tile, nq, d_model), lambda i: (i, 0, 0)),
            scratch_shapes=[pltpu.VMEM((b_tile * nq, h * dvp), jnp.float32)],
            compiler_params=pltpu.CompilerParams(
                dimension_semantics=("parallel",),
                vmem_limit_bytes=vmem_limit),
        )

    args = (queries, keys, values, *weight_arrays)
    try:
        return build(True)(*args)       # constants single-buffered (Buffered(1))
    except Exception:
        return build(False)(*args)      # fallback: default double-buffering


def memory_mha_forward(params, queries, keys, values, *, d_model, d_k, d_v, h,
                       num_memory, matmul_dtype=jnp.bfloat16, b_tile=None):
    consts = precompute_constants(params, d_model=d_model, d_k=d_k, d_v=d_v, h=h,
                                  num_memory=num_memory, matmul_dtype=matmul_dtype)
    return memory_mha_apply(consts, queries, keys, values, b_tile=b_tile)


# ---------------------------------------------------------------------------
# Deterministic parameter init (mirrors the PyTorch __init__ shapes)
# ---------------------------------------------------------------------------
def _xavier_uniform(key, out_f, in_f):
    bound = math.sqrt(6.0 / (in_f + out_f))
    return jax.random.uniform(key, (out_f, in_f), jnp.float32, -bound, bound)


def init_params(key, d_model, d_k, d_v, h, num_memory):
    ks = jax.random.split(key, 8)
    return {
        "fc_q_w": _xavier_uniform(ks[0], h * d_k, d_model),
        "fc_q_b": jnp.zeros((h * d_k,), jnp.float32),
        "fc_k_w": _xavier_uniform(ks[1], h * d_k, d_model),
        "fc_k_b": jnp.zeros((h * d_k,), jnp.float32),
        "fc_v_w": _xavier_uniform(ks[2], h * d_v, d_model),
        "fc_v_b": jnp.zeros((h * d_v,), jnp.float32),
        "fc_o_w": _xavier_uniform(ks[3], d_model, h * d_v),
        "fc_o_b": jnp.zeros((d_model,), jnp.float32),
        "k_memory": jax.random.normal(ks[4], (1, num_memory, d_model), jnp.float32)
                    * (1.0 / math.sqrt(d_k)),
        "v_memory": jax.random.normal(ks[5], (1, num_memory, d_model), jnp.float32)
                    * (1.0 / math.sqrt(num_memory)),
        "k_w_w": jax.random.uniform(ks[6], (d_model, d_model), jnp.float32,
                                    -1.0 / math.sqrt(d_model), 1.0 / math.sqrt(d_model)),
        "k_w_b": jnp.zeros((d_model,), jnp.float32),
        "v_w_w": jax.random.uniform(ks[7], (d_model, d_model), jnp.float32,
                                    -1.0 / math.sqrt(d_model), 1.0 / math.sqrt(d_model)),
        "v_w_b": jnp.zeros((d_model,), jnp.float32),
        "ln_w": jnp.ones((d_model,), jnp.float32),
        "ln_b": jnp.zeros((d_model,), jnp.float32),
    }


# ---------------------------------------------------------------------------
# Pure-JAX reference (same math, concat formulation) for correctness check
# ---------------------------------------------------------------------------
def reference_forward(params, queries, keys, values,
                      *, d_model, d_k, d_v, h, num_memory):
    b_s, nq, _ = queries.shape
    k_mem = jnp.dot(params["k_memory"][0], params["k_w_w"].T) + params["k_w_b"]
    v_mem = jnp.dot(params["v_memory"][0], params["v_w_w"].T) + params["v_w_b"]
    keys = jnp.concatenate([keys, jnp.broadcast_to(k_mem[None], (b_s, num_memory, d_model))], 1)
    values = jnp.concatenate([values, jnp.broadcast_to(v_mem[None], (b_s, num_memory, d_model))], 1)
    nk = keys.shape[1]

    q = (jnp.einsum("bnd,od->bno", queries, params["fc_q_w"]) + params["fc_q_b"]
         ).reshape(b_s, nq, h, d_k).transpose(0, 2, 1, 3)
    k = (jnp.einsum("bnd,od->bno", keys, params["fc_k_w"]) + params["fc_k_b"]
         ).reshape(b_s, nk, h, d_k).transpose(0, 2, 3, 1)
    v = (jnp.einsum("bnd,od->bno", values, params["fc_v_w"]) + params["fc_v_b"]
         ).reshape(b_s, nk, h, d_v).transpose(0, 2, 1, 3)
    att = jnp.matmul(q, k) / math.sqrt(d_k)
    att = jax.nn.softmax(att, axis=-1)
    out = jnp.matmul(att, v).transpose(0, 2, 1, 3).reshape(b_s, nq, h * d_v)
    out = jnp.einsum("bno,do->bnd", out, params["fc_o_w"]) + params["fc_o_b"]
    x = queries + out
    mean = jnp.mean(x, axis=-1, keepdims=True)
    var = jnp.mean((x - mean) ** 2, axis=-1, keepdims=True)
    y = (x - mean) / jnp.sqrt(var + 1e-5)
    return y * params["ln_w"] + params["ln_b"]


if __name__ == "__main__":
    d_model, d_k, d_v, h, num_memory = 32, 8, 8, 4, 10
    b_s, nq, nk = 4, 8, 8

    key = jax.random.PRNGKey(0)
    kp, kq, kk, kv = jax.random.split(key, 4)
    params = init_params(kp, d_model, d_k, d_v, h, num_memory)

    queries = jax.random.normal(kq, (b_s, nq, d_model), jnp.float32)
    keys = jax.random.normal(kk, (b_s, nk, d_model), jnp.float32)
    values = jax.random.normal(kv, (b_s, nk, d_model), jnp.float32)

    ref = reference_forward(params, queries, keys, values,
                            d_model=d_model, d_k=d_k, d_v=d_v, h=h,
                            num_memory=num_memory)

    # Validation build: f32 MXU operands + exact softmax reciprocal.
    out_f32 = memory_mha_forward(params, queries, keys, values,
                                 d_model=d_model, d_k=d_k, d_v=d_v, h=h,
                                 num_memory=num_memory, matmul_dtype=None)
    out_f32 = jax.block_until_ready(out_f32)
    assert out_f32.shape == (b_s, nq, d_model)
    err32 = float(jnp.max(jnp.abs(out_f32 - ref)))
    assert jnp.allclose(out_f32, ref, atol=5e-3, rtol=5e-3), err32

    # Production default: bf16 MXU operands (f32 accumulate) — bf16-aware tolerance.
    out_bf16 = memory_mha_forward(params, queries, keys, values,
                                  d_model=d_model, d_k=d_k, d_v=d_v, h=h,
                                  num_memory=num_memory)
    out_bf16 = jax.block_until_ready(out_bf16)
    assert out_bf16.shape == (b_s, nq, d_model)
    err16 = float(jnp.max(jnp.abs(out_bf16 - ref)))
    assert jnp.allclose(out_bf16, ref, atol=5e-2, rtol=5e-2), err16

    print("KERNEL_OK")
</pallas_src>

<mosaic_0001>
module attributes {stable_mosaic.version = 11 : i64} {
  func.func @_mha_kernel(%arg0: i32, %arg1: memref<4x8x32xf32, #tpu.memory_space<vmem>>, %arg2: memref<4x8x32xf32, #tpu.memory_space<vmem>>, %arg3: memref<4x8x32xf32, #tpu.memory_space<vmem>>, %arg4: memref<32x512xf32, #tpu.memory_space<vmem>>, %arg5: memref<1x512xf32, #tpu.memory_space<vmem>>, %arg6: memref<32x512xf32, #tpu.memory_space<vmem>>, %arg7: memref<1x512xf32, #tpu.memory_space<vmem>>, %arg8: memref<32x512xf32, #tpu.memory_space<vmem>>, %arg9: memref<1x512xf32, #tpu.memory_space<vmem>>, %arg10: memref<32x512xf32, #tpu.memory_space<vmem>>, %arg11: memref<1x512xf32, #tpu.memory_space<vmem>>, %arg12: memref<128x512xf32, #tpu.memory_space<vmem>>, %arg13: memref<512x32xf32, #tpu.memory_space<vmem>>, %arg14: memref<1x32xf32, #tpu.memory_space<vmem>>, %arg15: memref<1x32xf32, #tpu.memory_space<vmem>>, %arg16: memref<1x32xf32, #tpu.memory_space<vmem>>, %arg17: memref<4x8x32xf32, #tpu.memory_space<vmem>>, %arg18: memref<32x512xf32, #tpu.memory_space<vmem>>) attributes {dimension_semantics = [#tpu.dimension_semantics<parallel>], iteration_bounds = array<i64: 1>, scalar_prefetch = 0 : i64, scratch_operands = 1 : i64, tpu.core_type = #tpu.core_type<tc>, window_params = [{transform_indices = @transform_0, window_bounds = array<i64: 4, 8, 32>}, {transform_indices = @transform_1, window_bounds = array<i64: 4, 8, 32>}, {transform_indices = @transform_2, window_bounds = array<i64: 4, 8, 32>}, {pipeline_mode = #tpu.pipeline_mode<synchronous>, transform_indices = @transform_3, window_bounds = array<i64: 32, 512>}, {pipeline_mode = #tpu.pipeline_mode<synchronous>, transform_indices = @transform_4, window_bounds = array<i64: 1, 512>}, {pipeline_mode = #tpu.pipeline_mode<synchronous>, transform_indices = @transform_5, window_bounds = array<i64: 32, 512>}, {pipeline_mode = #tpu.pipeline_mode<synchronous>, transform_indices = @transform_6, window_bounds = array<i64: 1, 512>}, {pipeline_mode = #tpu.pipeline_mode<synchronous>, transform_indices = @transform_7, window_bounds = array<i64: 32, 512>}, {pipeline_mode = #tpu.pipeline_mode<synchronous>, transform_indices = @transform_8, window_bounds = array<i64: 1, 512>}, {pipeline_mode = #tpu.pipeline_mode<synchronous>, transform_indices = @transform_9, window_bounds = array<i64: 32, 512>}, {pipeline_mode = #tpu.pipeline_mode<synchronous>, transform_indices = @transform_10, window_bounds = array<i64: 1, 512>}, {pipeline_mode = #tpu.pipeline_mode<synchronous>, transform_indices = @transform_11, window_bounds = array<i64: 128, 512>}, {pipeline_mode = #tpu.pipeline_mode<synchronous>, transform_indices = @transform_12, window_bounds = array<i64: 512, 32>}, {pipeline_mode = #tpu.pipeline_mode<synchronous>, transform_indices = @transform_13, window_bounds = array<i64: 1, 32>}, {pipeline_mode = #tpu.pipeline_mode<synchronous>, transform_indices = @transform_14, window_bounds = array<i64: 1, 32>}, {pipeline_mode = #tpu.pipeline_mode<synchronous>, transform_indices = @transform_15, window_bounds = array<i64: 1, 32>}, {transform_indices = @transform_16, window_bounds = array<i64: 4, 8, 32>}]} {
    %c0 = arith.constant 0 : index
    %c0_0 = arith.constant 0 : index
    %c0_1 = arith.constant 0 : index
    %0 = vector.load %arg1[%c0, %c0_0, %c0_1] : memref<4x8x32xf32, #tpu.memory_space<vmem>>, vector<4x8x32xf32>
    %1 = vector.shape_cast %0 : vector<4x8x32xf32> to vector<32x32xf32>
    %c0_2 = arith.constant 0 : index
    %c0_3 = arith.constant 0 : index
    %c0_4 = arith.constant 0 : index
    %2 = vector.load %arg2[%c0_2, %c0_3, %c0_4] : memref<4x8x32xf32, #tpu.memory_space<vmem>>, vector<4x8x32xf32>
    %3 = vector.shape_cast %2 : vector<4x8x32xf32> to vector<32x32xf32>
    %c0_5 = arith.constant 0 : index
    %c0_6 = arith.constant 0 : index
    %c0_7 = arith.constant 0 : index
    %4 = vector.load %arg3[%c0_5, %c0_6, %c0_7] : memref<4x8x32xf32, #tpu.memory_space<vmem>>, vector<4x8x32xf32>
    %5 = vector.shape_cast %4 : vector<4x8x32xf32> to vector<32x32xf32>
    %c0_8 = arith.constant 0 : index
    %c0_9 = arith.constant 0 : index
    %6 = vector.load %arg4[%c0_8, %c0_9] : memref<32x512xf32, #tpu.memory_space<vmem>>, vector<32x512xf32>
    %cst = arith.constant dense<0.000000e+00> : vector<32x512xf32>
    %7 = tpu.matmul %1, %6, %cst {dimension_numbers = #tpu.dot_dimension_numbers<[1], [0], [0], [1], [0, 0, 1, 1], [], []>} : vector<32x32xf32>, vector<32x512xf32>, vector<32x512xf32> -> vector<32x512xf32>
    %c0_10 = arith.constant 0 : index
    %c0_11 = arith.constant 0 : index
    %8 = vector.load %arg5[%c0_10, %c0_11] : memref<1x512xf32, #tpu.memory_space<vmem>>, vector<1x512xf32>
    %9 = vector.broadcast %8 : vector<1x512xf32> to vector<32x512xf32>
    %10 = arith.addf %7, %9 : vector<32x512xf32>
    %c0_12 = arith.constant 0 : index
    %c0_13 = arith.constant 0 : index
    %11 = vector.load %arg6[%c0_12, %c0_13] : memref<32x512xf32, #tpu.memory_space<vmem>>, vector<32x512xf32>
    %cst_14 = arith.constant dense<0.000000e+00> : vector<32x512xf32>
    %12 = tpu.matmul %3, %11, %cst_14 {dimension_numbers = #tpu.dot_dimension_numbers<[1], [0], [0], [1], [0, 0, 1, 1], [], []>} : vector<32x32xf32>, vector<32x512xf32>, vector<32x512xf32> -> vector<32x512xf32>
    %c0_15 = arith.constant 0 : index
    %c0_16 = arith.constant 0 : index
    %13 = vector.load %arg7[%c0_15, %c0_16] : memref<1x512xf32, #tpu.memory_space<vmem>>, vector<1x512xf32>
    %14 = vector.broadcast %13 : vector<1x512xf32> to vector<32x512xf32>
    %15 = arith.addf %12, %14 : vector<32x512xf32>
    %c0_17 = arith.constant 0 : index
    %c0_18 = arith.constant 0 : index
    %16 = vector.load %arg8[%c0_17, %c0_18] : memref<32x512xf32, #tpu.memory_space<vmem>>, vector<32x512xf32>
    %cst_19 = arith.constant dense<0.000000e+00> : vector<32x512xf32>
    %17 = tpu.matmul %5, %16, %cst_19 {dimension_numbers = #tpu.dot_dimension_numbers<[1], [0], [0], [1], [0, 0, 1, 1], [], []>} : vector<32x32xf32>, vector<32x512xf32>, vector<32x512xf32> -> vector<32x512xf32>
    %c0_20 = arith.constant 0 : index
    %c0_21 = arith.constant 0 : index
    %18 = vector.load %arg9[%c0_20, %c0_21] : memref<1x512xf32, #tpu.memory_space<vmem>>, vector<1x512xf32>
    %19 = vector.broadcast %18 : vector<1x512xf32> to vector<32x512xf32>
    %20 = arith.addf %17, %19 : vector<32x512xf32>
    %c0_22 = arith.constant 0 : index
    %c0_23 = arith.constant 0 : index
    %21 = vector.load %arg10[%c0_22, %c0_23] : memref<32x512xf32, #tpu.memory_space<vmem>>, vector<32x512xf32>
    %cst_24 = arith.constant dense<0.000000e+00> : vector<32x512xf32>
    %22 = tpu.matmul %1, %21, %cst_24 {dimension_numbers = #tpu.dot_dimension_numbers<[1], [0], [0], [1], [0, 0, 1, 1], [], []>} : vector<32x32xf32>, vector<32x512xf32>, vector<32x512xf32> -> vector<32x512xf32>
    %c0_25 = arith.constant 0 : index
    %c0_26 = arith.constant 0 : index
    %23 = vector.load %arg11[%c0_25, %c0_26] : memref<1x512xf32, #tpu.memory_space<vmem>>, vector<1x512xf32>
    %24 = vector.broadcast %23 : vector<1x512xf32> to vector<32x512xf32>
    %25 = arith.addf %22, %24 : vector<32x512xf32>
    %26 = vector.shape_cast %10 : vector<32x512xf32> to vector<4x8x512xf32>
    %27 = vector.shape_cast %15 : vector<32x512xf32> to vector<4x8x512xf32>
    %28 = vector.shape_cast %20 : vector<32x512xf32> to vector<4x8x512xf32>
    %c0_27 = arith.constant 0 : index
    %c0_28 = arith.constant 0 : index
    %29 = vector.load %arg12[%c0_27, %c0_28] : memref<128x512xf32, #tpu.memory_space<vmem>>, vector<128x512xf32>
    %30 = vector.extract_strided_slice %26 {offsets = [0, 0, 0], sizes = [4, 8, 128], strides = [1, 1, 1]} : vector<4x8x512xf32> to vector<4x8x128xf32>
    %31 = vector.extract_strided_slice %27 {offsets = [0, 0, 0], sizes = [4, 8, 128], strides = [1, 1, 1]} : vector<4x8x512xf32> to vector<4x8x128xf32>
    %32 = vector.extract_strided_slice %28 {offsets = [0, 0, 0], sizes = [4, 8, 128], strides = [1, 1, 1]} : vector<4x8x512xf32> to vector<4x8x128xf32>
    %cst_29 = arith.constant dense<0.000000e+00> : vector<4x8x8xf32>
    %33 = tpu.matmul %30, %31, %cst_29 {dimension_numbers = #tpu.dot_dimension_numbers<[2], [2], [1], [1], [0, 0, 0, 1, 1, 1], [0], [0]>} : vector<4x8x128xf32>, vector<4x8x128xf32>, vector<4x8x8xf32> -> vector<4x8x8xf32>
    %34 = vector.extract_strided_slice %25 {offsets = [0, 0], sizes = [32, 128], strides = [1, 1]} : vector<32x512xf32> to vector<32x128xf32>
    %35 = vector.shape_cast %34 : vector<32x128xf32> to vector<4x8x128xf32>
    %cst_30 = arith.constant dense<0xFF800000> : vector<4x8xf32>
    %36 = vector.multi_reduction <maximumf>, %33, %cst_30 [2] : vector<4x8x8xf32> to vector<4x8xf32>
    %37 = vector.shape_cast %36 : vector<4x8xf32> to vector<4x8x1xf32>
    %cst_31 = arith.constant dense<0xFF800000> : vector<4x8xf32>
    %38 = vector.multi_reduction <maximumf>, %35, %cst_31 [2] : vector<4x8x128xf32> to vector<4x8xf32>
    %39 = vector.shape_cast %38 : vector<4x8xf32> to vector<4x8x1xf32>
    %40 = arith.maximumf %37, %39 : vector<4x8x1xf32>
    %41 = vector.broadcast %40 : vector<4x8x1xf32> to vector<4x8x8xf32>
    %42 = arith.subf %33, %41 : vector<4x8x8xf32>
    %43 = math.exp %42 : vector<4x8x8xf32>
    %44 = vector.broadcast %40 : vector<4x8x1xf32> to vector<4x8x128xf32>
    %45 = arith.subf %35, %44 : vector<4x8x128xf32>
    %46 = math.exp %45 : vector<4x8x128xf32>
    %cst_32 = arith.constant dense<0.000000e+00> : vector<4x8xf32>
    %47 = vector.multi_reduction <add>, %43, %cst_32 [2] : vector<4x8x8xf32> to vector<4x8xf32>
    %48 = vector.shape_cast %47 : vector<4x8xf32> to vector<4x8x1xf32>
    %cst_33 = arith.constant dense<0.000000e+00> : vector<4x8xf32>
    %49 = vector.multi_reduction <add>, %46, %cst_33 [2] : vector<4x8x128xf32> to vector<4x8xf32>
    %50 = vector.shape_cast %49 : vector<4x8xf32> to vector<4x8x1xf32>
    %51 = arith.addf %48, %50 : vector<4x8x1xf32>
    %52 = tpu.reciprocal %51 : vector<4x8x1xf32> -> vector<4x8x1xf32>
    %cst_34 = arith.constant dense<0.000000e+00> : vector<4x8x128xf32>
    %53 = tpu.matmul %43, %32, %cst_34 {dimension_numbers = #tpu.dot_dimension_numbers<[2], [1], [1], [2], [0, 0, 0, 1, 1, 2], [0], [0]>} : vector<4x8x8xf32>, vector<4x8x128xf32>, vector<4x8x128xf32> -> vector<4x8x128xf32>
    %54 = vector.shape_cast %46 : vector<4x8x128xf32> to vector<32x128xf32>
    %55 = vector.extract_strided_slice %29 {offsets = [0, 0], sizes = [128, 128], strides = [1, 1]} : vector<128x512xf32> to vector<128x128xf32>
    %cst_35 = arith.constant dense<0.000000e+00> : vector<32x128xf32>
    %56 = tpu.matmul %54, %55, %cst_35 {dimension_numbers = #tpu.dot_dimension_numbers<[1], [0], [0], [1], [0, 0, 1, 1], [], []>} : vector<32x128xf32>, vector<128x128xf32>, vector<32x128xf32> -> vector<32x128xf32>
    %57 = vector.shape_cast %53 : vector<4x8x128xf32> to vector<32x128xf32>
    %58 = arith.addf %57, %56 : vector<32x128xf32>
    %59 = vector.shape_cast %52 : vector<4x8x1xf32> to vector<32x1xf32>
    %60 = vector.broadcast %59 : vector<32x1xf32> to vector<32x128xf32>
    %61 = arith.mulf %58, %60 : vector<32x128xf32>
    %c0_36 = arith.constant 0 : index
    %c0_37 = arith.constant 0 : index
    %62 = vector.load %arg18[%c0_36, %c0_37] : memref<32x512xf32, #tpu.memory_space<vmem>>, vector<32x128xf32>
    tpu.vector_store %arg18[%c0_36, %c0_37], %61 {strides = array<i32>} : memref<32x512xf32, #tpu.memory_space<vmem>>, vector<32x128xf32>,
    %63 = vector.extract_strided_slice %26 {offsets = [0, 0, 128], sizes = [4, 8, 128], strides = [1, 1, 1]} : vector<4x8x512xf32> to vector<4x8x128xf32>
    %64 = vector.extract_strided_slice %27 {offsets = [0, 0, 128], sizes = [4, 8, 128], strides = [1, 1, 1]} : vector<4x8x512xf32> to vector<4x8x128xf32>
    %65 = vector.extract_strided_slice %28 {offsets = [0, 0, 128], sizes = [4, 8, 128], strides = [1, 1, 1]} : vector<4x8x512xf32> to vector<4x8x128xf32>
    %cst_38 = arith.constant dense<0.000000e+00> : vector<4x8x8xf32>
    %66 = tpu.matmul %63, %64, %cst_38 {dimension_numbers = #tpu.dot_dimension_numbers<[2], [2], [1], [1], [0, 0, 0, 1, 1, 1], [0], [0]>} : vector<4x8x128xf32>, vector<4x8x128xf32>, vector<4x8x8xf32> -> vector<4x8x8xf32>
    %67 = vector.extract_strided_slice %25 {offsets = [0, 128], sizes = [32, 128], strides = [1, 1]} : vector<32x512xf32> to vector<32x128xf32>
    %68 = vector.shape_cast %67 : vector<32x128xf32> to vector<4x8x128xf32>
    %cst_39 = arith.constant dense<0xFF800000> : vector<4x8xf32>
    %69 = vector.multi_reduction <maximumf>, %66, %cst_39 [2] : vector<4x8x8xf32> to vector<4x8xf32>
    %70 = vector.shape_cast %69 : vector<4x8xf32> to vector<4x8x1xf32>
    %cst_40 = arith.constant dense<0xFF800000> : vector<4x8xf32>
    %71 = vector.multi_reduction <maximumf>, %68, %cst_40 [2] : vector<4x8x128xf32> to vector<4x8xf32>
    %72 = vector.shape_cast %71 : vector<4x8xf32> to vector<4x8x1xf32>
    %73 = arith.maximumf %70, %72 : vector<4x8x1xf32>
    %74 = vector.broadcast %73 : vector<4x8x1xf32> to vector<4x8x8xf32>
    %75 = arith.subf %66, %74 : vector<4x8x8xf32>
    %76 = math.exp %75 : vector<4x8x8xf32>
    %77 = vector.broadcast %73 : vector<4x8x1xf32> to vector<4x8x128xf32>
    %78 = arith.subf %68, %77 : vector<4x8x128xf32>
    %79 = math.exp %78 : vector<4x8x128xf32>
    %cst_41 = arith.constant dense<0.000000e+00> : vector<4x8xf32>
    %80 = vector.multi_reduction <add>, %76, %cst_41 [2] : vector<4x8x8xf32> to vector<4x8xf32>
    %81 = vector.shape_cast %80 : vector<4x8xf32> to vector<4x8x1xf32>
    %cst_42 = arith.constant dense<0.000000e+00> : vector<4x8xf32>
    %82 = vector.multi_reduction <add>, %79, %cst_42 [2] : vector<4x8x128xf32> to vector<4x8xf32>
    %83 = vector.shape_cast %82 : vector<4x8xf32> to vector<4x8x1xf32>
    %84 = arith.addf %81, %83 : vector<4x8x1xf32>
    %85 = tpu.reciprocal %84 : vector<4x8x1xf32> -> vector<4x8x1xf32>
    %cst_43 = arith.constant dense<0.000000e+00> : vector<4x8x128xf32>
    %86 = tpu.matmul %76, %65, %cst_43 {dimension_numbers = #tpu.dot_dimension_numbers<[2], [1], [1], [2], [0, 0, 0, 1, 1, 2], [0], [0]>} : vector<4x8x8xf32>, vector<4x8x128xf32>, vector<4x8x128xf32> -> vector<4x8x128xf32>
    %87 = vector.shape_cast %79 : vector<4x8x128xf32> to vector<32x128xf32>
    %88 = vector.extract_strided_slice %29 {offsets = [0, 128], sizes = [128, 128], strides = [1, 1]} : vector<128x512xf32> to vector<128x128xf32>
    %cst_44 = arith.constant dense<0.000000e+00> : vector<32x128xf32>
    %89 = tpu.matmul %87, %88, %cst_44 {dimension_numbers = #tpu.dot_dimension_numbers<[1], [0], [0], [1], [0, 0, 1, 1], [], []>} : vector<32x128xf32>, vector<128x128xf32>, vector<32x128xf32> -> vector<32x128xf32>
    %90 = vector.shape_cast %86 : vector<4x8x128xf32> to vector<32x128xf32>
    %91 = arith.addf %90, %89 : vector<32x128xf32>
    %92 = vector.shape_cast %85 : vector<4x8x1xf32> to vector<32x1xf32>
    %93 = vector.broadcast %92 : vector<32x1xf32> to vector<32x128xf32>
    %94 = arith.mulf %91, %93 : vector<32x128xf32>
    %c0_45 = arith.constant 0 : index
    %c128 = arith.constant 128 : index
    %95 = vector.load %arg18[%c0_45, %c128] : memref<32x512xf32, #tpu.memory_space<vmem>>, vector<32x128xf32>
    tpu.vector_store %arg18[%c0_45, %c128], %94 {strides = array<i32>} : memref<32x512xf32, #tpu.memory_space<vmem>>, vector<32x128xf32>,
    %96 = vector.extract_strided_slice %26 {offsets = [0, 0, 256], sizes = [4, 8, 128], strides = [1, 1, 1]} : vector<4x8x512xf32> to vector<4x8x128xf32>
    %97 = vector.extract_strided_slice %27 {offsets = [0, 0, 256], sizes = [4, 8, 128], strides = [1, 1, 1]} : vector<4x8x512xf32> to vector<4x8x128xf32>
    %98 = vector.extract_strided_slice %28 {offsets = [0, 0, 256], sizes = [4, 8, 128], strides = [1, 1, 1]} : vector<4x8x512xf32> to vector<4x8x128xf32>
    %cst_46 = arith.constant dense<0.000000e+00> : vector<4x8x8xf32>
    %99 = tpu.matmul %96, %97, %cst_46 {dimension_numbers = #tpu.dot_dimension_numbers<[2], [2], [1], [1], [0, 0, 0, 1, 1, 1], [0], [0]>} : vector<4x8x128xf32>, vector<4x8x128xf32>, vector<4x8x8xf32> -> vector<4x8x8xf32>
    %100 = vector.extract_strided_slice %25 {offsets = [0, 256], sizes = [32, 128], strides = [1, 1]} : vector<32x512xf32> to vector<32x128xf32>
    %101 = vector.shape_cast %100 : vector<32x128xf32> to vector<4x8x128xf32>
    %cst_47 = arith.constant dense<0xFF800000> : vector<4x8xf32>
    %102 = vector.multi_reduction <maximumf>, %99, %cst_47 [2] : vector<4x8x8xf32> to vector<4x8xf32>
    %103 = vector.shape_cast %102 : vector<4x8xf32> to vector<4x8x1xf32>
    %cst_48 = arith.constant dense<0xFF800000> : vector<4x8xf32>
    %104 = vector.multi_reduction <maximumf>, %101, %cst_48 [2] : vector<4x8x128xf32> to vector<4x8xf32>
    %105 = vector.shape_cast %104 : vector<4x8xf32> to vector<4x8x1xf32>
    %106 = arith.maximumf %103, %105 : vector<4x8x1xf32>
    %107 = vector.broadcast %106 : vector<4x8x1xf32> to vector<4x8x8xf32>
    %108 = arith.subf %99, %107 : vector<4x8x8xf32>
    %109 = math.exp %108 : vector<4x8x8xf32>
    %110 = vector.broadcast %106 : vector<4x8x1xf32> to vector<4x8x128xf32>
    %111 = arith.subf %101, %110 : vector<4x8x128xf32>
    %112 = math.exp %111 : vector<4x8x128xf32>
    %cst_49 = arith.constant dense<0.000000e+00> : vector<4x8xf32>
    %113 = vector.multi_reduction <add>, %109, %cst_49 [2] : vector<4x8x8xf32> to vector<4x8xf32>
    %114 = vector.shape_cast %113 : vector<4x8xf32> to vector<4x8x1xf32>
    %cst_50 = arith.constant dense<0.000000e+00> : vector<4x8xf32>
    %115 = vector.multi_reduction <add>, %112, %cst_50 [2] : vector<4x8x128xf32> to vector<4x8xf32>
    %116 = vector.shape_cast %115 : vector<4x8xf32> to vector<4x8x1xf32>
    %117 = arith.addf %114, %116 : vector<4x8x1xf32>
    %118 = tpu.reciprocal %117 : vector<4x8x1xf32> -> vector<4x8x1xf32>
    %cst_51 = arith.constant dense<0.000000e+00> : vector<4x8x128xf32>
    %119 = tpu.matmul %109, %98, %cst_51 {dimension_numbers = #tpu.dot_dimension_numbers<[2], [1], [1], [2], [0, 0, 0, 1, 1, 2], [0], [0]>} : vector<4x8x8xf32>, vector<4x8x128xf32>, vector<4x8x128xf32> -> vector<4x8x128xf32>
    %120 = vector.shape_cast %112 : vector<4x8x128xf32> to vector<32x128xf32>
    %121 = vector.extract_strided_slice %29 {offsets = [0, 256], sizes = [128, 128], strides = [1, 1]} : vector<128x512xf32> to vector<128x128xf32>
    %cst_52 = arith.constant dense<0.000000e+00> : vector<32x128xf32>
    %122 = tpu.matmul %120, %121, %cst_52 {dimension_numbers = #tpu.dot_dimension_numbers<[1], [0], [0], [1], [0, 0, 1, 1], [], []>} : vector<32x128xf32>, vector<128x128xf32>, vector<32x128xf32> -> vector<32x128xf32>
    %123 = vector.shape_cast %119 : vector<4x8x128xf32> to vector<32x128xf32>
    %124 = arith.addf %123, %122 : vector<32x128xf32>
    %125 = vector.shape_cast %118 : vector<4x8x1xf32> to vector<32x1xf32>
    %126 = vector.broadcast %125 : vector<32x1xf32> to vector<32x128xf32>
    %127 = arith.mulf %124, %126 : vector<32x128xf32>
    %c0_53 = arith.constant 0 : index
    %c256 = arith.constant 256 : index
    %128 = vector.load %arg18[%c0_53, %c256] : memref<32x512xf32, #tpu.memory_space<vmem>>, vector<32x128xf32>
    tpu.vector_store %arg18[%c0_53, %c256], %127 {strides = array<i32>} : memref<32x512xf32, #tpu.memory_space<vmem>>, vector<32x128xf32>,
    %129 = vector.extract_strided_slice %26 {offsets = [0, 0, 384], sizes = [4, 8, 128], strides = [1, 1, 1]} : vector<4x8x512xf32> to vector<4x8x128xf32>
    %130 = vector.extract_strided_slice %27 {offsets = [0, 0, 384], sizes = [4, 8, 128], strides = [1, 1, 1]} : vector<4x8x512xf32> to vector<4x8x128xf32>
    %131 = vector.extract_strided_slice %28 {offsets = [0, 0, 384], sizes = [4, 8, 128], strides = [1, 1, 1]} : vector<4x8x512xf32> to vector<4x8x128xf32>
    %cst_54 = arith.constant dense<0.000000e+00> : vector<4x8x8xf32>
    %132 = tpu.matmul %129, %130, %cst_54 {dimension_numbers = #tpu.dot_dimension_numbers<[2], [2], [1], [1], [0, 0, 0, 1, 1, 1], [0], [0]>} : vector<4x8x128xf32>, vector<4x8x128xf32>, vector<4x8x8xf32> -> vector<4x8x8xf32>
    %133 = vector.extract_strided_slice %25 {offsets = [0, 384], sizes = [32, 128], strides = [1, 1]} : vector<32x512xf32> to vector<32x128xf32>
    %134 = vector.shape_cast %133 : vector<32x128xf32> to vector<4x8x128xf32>
    %cst_55 = arith.constant dense<0xFF800000> : vector<4x8xf32>
    %135 = vector.multi_reduction <maximumf>, %132, %cst_55 [2] : vector<4x8x8xf32> to vector<4x8xf32>
    %136 = vector.shape_cast %135 : vector<4x8xf32> to vector<4x8x1xf32>
    %cst_56 = arith.constant dense<0xFF800000> : vector<4x8xf32>
    %137 = vector.multi_reduction <maximumf>, %134, %cst_56 [2] : vector<4x8x128xf32> to vector<4x8xf32>
    %138 = vector.shape_cast %137 : vector<4x8xf32> to vector<4x8x1xf32>
    %139 = arith.maximumf %136, %138 : vector<4x8x1xf32>
    %140 = vector.broadcast %139 : vector<4x8x1xf32> to vector<4x8x8xf32>
    %141 = arith.subf %132, %140 : vector<4x8x8xf32>
    %142 = math.exp %141 : vector<4x8x8xf32>
    %143 = vector.broadcast %139 : vector<4x8x1xf32> to vector<4x8x128xf32>
    %144 = arith.subf %134, %143 : vector<4x8x128xf32>
    %145 = math.exp %144 : vector<4x8x128xf32>
    %cst_57 = arith.constant dense<0.000000e+00> : vector<4x8xf32>
    %146 = vector.multi_reduction <add>, %142, %cst_57 [2] : vector<4x8x8xf32> to vector<4x8xf32>
    %147 = vector.shape_cast %146 : vector<4x8xf32> to vector<4x8x1xf32>
    %cst_58 = arith.constant dense<0.000000e+00> : vector<4x8xf32>
    %148 = vector.multi_reduction <add>, %145, %cst_58 [2] : vector<4x8x128xf32> to vector<4x8xf32>
    %149 = vector.shape_cast %148 : vector<4x8xf32> to vector<4x8x1xf32>
    %150 = arith.addf %147, %149 : vector<4x8x1xf32>
    %151 = tpu.reciprocal %150 : vector<4x8x1xf32> -> vector<4x8x1xf32>
    %cst_59 = arith.constant dense<0.000000e+00> : vector<4x8x128xf32>
    %152 = tpu.matmul %142, %131, %cst_59 {dimension_numbers = #tpu.dot_dimension_numbers<[2], [1], [1], [2], [0, 0, 0, 1, 1, 2], [0], [0]>} : vector<4x8x8xf32>, vector<4x8x128xf32>, vector<4x8x128xf32> -> vector<4x8x128xf32>
    %153 = vector.shape_cast %145 : vector<4x8x128xf32> to vector<32x128xf32>
    %154 = vector.extract_strided_slice %29 {offsets = [0, 384], sizes = [128, 128], strides = [1, 1]} : vector<128x512xf32> to vector<128x128xf32>
    %cst_60 = arith.constant dense<0.000000e+00> : vector<32x128xf32>
    %155 = tpu.matmul %153, %154, %cst_60 {dimension_numbers = #tpu.dot_dimension_numbers<[1], [0], [0], [1], [0, 0, 1, 1], [], []>} : vector<32x128xf32>, vector<128x128xf32>, vector<32x128xf32> -> vector<32x128xf32>
    %156 = vector.shape_cast %152 : vector<4x8x128xf32> to vector<32x128xf32>
    %157 = arith.addf %156, %155 : vector<32x128xf32>
    %158 = vector.shape_cast %151 : vector<4x8x1xf32> to vector<32x1xf32>
    %159 = vector.broadcast %158 : vector<32x1xf32> to vector<32x128xf32>
    %160 = arith.mulf %157, %159 : vector<32x128xf32>
    %c0_61 = arith.constant 0 : index
    %c384 = arith.constant 384 : index
    %161 = vector.load %arg18[%c0_61, %c384] : memref<32x512xf32, #tpu.memory_space<vmem>>, vector<32x128xf32>
    tpu.vector_store %arg18[%c0_61, %c384], %160 {strides = array<i32>} : memref<32x512xf32, #tpu.memory_space<vmem>>, vector<32x128xf32>,
    %c0_62 = arith.constant 0 : index
    %c0_63 = arith.constant 0 : index
    %162 = vector.load %arg18[%c0_62, %c0_63] : memref<32x512xf32, #tpu.memory_space<vmem>>, vector<32x512xf32>
    %c0_64 = arith.constant 0 : index
    %c0_65 = arith.constant 0 : index
    %163 = vector.load %arg13[%c0_64, %c0_65] : memref<512x32xf32, #tpu.memory_space<vmem>>, vector<512x32xf32>
    %cst_66 = arith.constant dense<0.000000e+00> : vector<32x32xf32>
    %164 = tpu.matmul %162, %163, %cst_66 {dimension_numbers = #tpu.dot_dimension_numbers<[1], [0], [0], [1], [0, 0, 1, 1], [], []>} : vector<32x512xf32>, vector<512x32xf32>, vector<32x32xf32> -> vector<32x32xf32>
    %c0_67 = arith.constant 0 : index
    %c0_68 = arith.constant 0 : index
    %165 = vector.load %arg14[%c0_67, %c0_68] : memref<1x32xf32, #tpu.memory_space<vmem>>, vector<1x32xf32>
    %166 = vector.broadcast %165 : vector<1x32xf32> to vector<32x32xf32>
    %167 = arith.addf %164, %166 : vector<32x32xf32>
    %168 = arith.addf %1, %167 : vector<32x32xf32>
    %cst_69 = arith.constant dense<0.000000e+00> : vector<32xf32>
    %169 = vector.multi_reduction <add>, %168, %cst_69 [1] : vector<32x32xf32> to vector<32xf32>
    %170 = vector.shape_cast %169 : vector<32xf32> to vector<32x1xf32>
    %cst_70 = arith.constant 3.200000e+01 : f32
    %171 = vector.broadcast %cst_70 : f32 to vector<32x1xf32>
    %172 = arith.divf %170, %171 : vector<32x1xf32>
    %173 = vector.broadcast %172 : vector<32x1xf32> to vector<32x32xf32>
    %174 = arith.subf %168, %173 : vector<32x32xf32>
    %175 = arith.mulf %174, %174 : vector<32x32xf32>
    %cst_71 = arith.constant dense<0.000000e+00> : vector<32xf32>
    %176 = vector.multi_reduction <add>, %175, %cst_71 [1] : vector<32x32xf32> to vector<32xf32>
    %177 = vector.shape_cast %176 : vector<32xf32> to vector<32x1xf32>
    %cst_72 = arith.constant 3.200000e+01 : f32
    %178 = vector.broadcast %cst_72 : f32 to vector<32x1xf32>
    %179 = arith.divf %177, %178 : vector<32x1xf32>
    %180 = vector.broadcast %172 : vector<32x1xf32> to vector<32x32xf32>
    %181 = arith.subf %168, %180 : vector<32x32xf32>
    %cst_73 = arith.constant 9.99999974E-6 : f32
    %182 = vector.broadcast %cst_73 : f32 to vector<32x1xf32>
    %183 = arith.addf %179, %182 : vector<32x1xf32>
    %184 = math.rsqrt %183 : vector<32x1xf32>
    %185 = vector.broadcast %184 : vector<32x1xf32> to vector<32x32xf32>
    %186 = arith.mulf %181, %185 : vector<32x32xf32>
    %c0_74 = arith.constant 0 : index
    %c0_75 = arith.constant 0 : index
    %187 = vector.load %arg15[%c0_74, %c0_75] : memref<1x32xf32, #tpu.memory_space<vmem>>, vector<1x32xf32>
    %188 = vector.broadcast %187 : vector<1x32xf32> to vector<32x32xf32>
    %189 = arith.mulf %186, %188 : vector<32x32xf32>
    %c0_76 = arith.constant 0 : index
    %c0_77 = arith.constant 0 : index
    %190 = vector.load %arg16[%c0_76, %c0_77] : memref<1x32xf32, #tpu.memory_space<vmem>>, vector<1x32xf32>
    %191 = vector.broadcast %190 : vector<1x32xf32> to vector<32x32xf32>
    %192 = arith.addf %189, %191 : vector<32x32xf32>
    %193 = vector.shape_cast %192 : vector<32x32xf32> to vector<4x8x32xf32>
    %c0_78 = arith.constant 0 : index
    %c0_79 = arith.constant 0 : index
    %c0_80 = arith.constant 0 : index
    %194 = vector.load %arg17[%c0_78, %c0_79, %c0_80] : memref<4x8x32xf32, #tpu.memory_space<vmem>>, vector<4x8x32xf32>
    tpu.vector_store %arg17[%c0_78, %c0_79, %c0_80], %193 {strides = array<i32>} : memref<4x8x32xf32, #tpu.memory_space<vmem>>, vector<4x8x32xf32>,
    return
  }
  func.func @transform_0(%arg0: i32) -> (i32, i32, i32) {
    %c0_i32 = arith.constant 0 : i32
    %c0_i32_0 = arith.constant 0 : i32
    %c0_i32_1 = arith.constant 0 : i32
    return %arg0, %c0_i32, %c0_i32_0 : i32, i32, i32
  }
  func.func @transform_1(%arg0: i32) -> (i32, i32, i32) {
    %c0_i32 = arith.constant 0 : i32
    %c0_i32_0 = arith.constant 0 : i32
    %c0_i32_1 = arith.constant 0 : i32
    return %arg0, %c0_i32, %c0_i32_0 : i32, i32, i32
  }
  func.func @transform_2(%arg0: i32) -> (i32, i32, i32) {
    %c0_i32 = arith.constant 0 : i32
    %c0_i32_0 = arith.constant 0 : i32
    %c0_i32_1 = arith.constant 0 : i32
    return %arg0, %c0_i32, %c0_i32_0 : i32, i32, i32
  }
  func.func @transform_3(%arg0: i32) -> (i32, i32) {
    %c0_i32 = arith.constant 0 : i32
    %c0_i32_0 = arith.constant 0 : i32
    %c0_i32_1 = arith.constant 0 : i32
    return %c0_i32, %c0_i32_0 : i32, i32
  }
  func.func @transform_4(%arg0: i32) -> (i32, i32) {
    %c0_i32 = arith.constant 0 : i32
    %c0_i32_0 = arith.constant 0 : i32
    %c0_i32_1 = arith.constant 0 : i32
    return %c0_i32, %c0_i32_0 : i32, i32
  }
  func.func @transform_5(%arg0: i32) -> (i32, i32) {
    %c0_i32 = arith.constant 0 : i32
    %c0_i32_0 = arith.constant 0 : i32
    %c0_i32_1 = arith.constant 0 : i32
    return %c0_i32, %c0_i32_0 : i32, i32
  }
  func.func @transform_6(%arg0: i32) -> (i32, i32) {
    %c0_i32 = arith.constant 0 : i32
    %c0_i32_0 = arith.constant 0 : i32
    %c0_i32_1 = arith.constant 0 : i32
    return %c0_i32, %c0_i32_0 : i32, i32
  }
  func.func @transform_7(%arg0: i32) -> (i32, i32) {
    %c0_i32 = arith.constant 0 : i32
    %c0_i32_0 = arith.constant 0 : i32
    %c0_i32_1 = arith.constant 0 : i32
    return %c0_i32, %c0_i32_0 : i32, i32
  }
  func.func @transform_8(%arg0: i32) -> (i32, i32) {
    %c0_i32 = arith.constant 0 : i32
    %c0_i32_0 = arith.constant 0 : i32
    %c0_i32_1 = arith.constant 0 : i32
    return %c0_i32, %c0_i32_0 : i32, i32
  }
  func.func @transform_9(%arg0: i32) -> (i32, i32) {
    %c0_i32 = arith.constant 0 : i32
    %c0_i32_0 = arith.constant 0 : i32
    %c0_i32_1 = arith.constant 0 : i32
    return %c0_i32, %c0_i32_0 : i32, i32
  }
  func.func @transform_10(%arg0: i32) -> (i32, i32) {
    %c0_i32 = arith.constant 0 : i32
    %c0_i32_0 = arith.constant 0 : i32
    %c0_i32_1 = arith.constant 0 : i32
    return %c0_i32, %c0_i32_0 : i32, i32
  }
  func.func @transform_11(%arg0: i32) -> (i32, i32) {
    %c0_i32 = arith.constant 0 : i32
    %c0_i32_0 = arith.constant 0 : i32
    %c0_i32_1 = arith.constant 0 : i32
    return %c0_i32, %c0_i32_0 : i32, i32
  }
  func.func @transform_12(%arg0: i32) -> (i32, i32) {
    %c0_i32 = arith.constant 0 : i32
    %c0_i32_0 = arith.constant 0 : i32
    %c0_i32_1 = arith.constant 0 : i32
    return %c0_i32, %c0_i32_0 : i32, i32
  }
  func.func @transform_13(%arg0: i32) -> (i32, i32) {
    %c0_i32 = arith.constant 0 : i32
    %c0_i32_0 = arith.constant 0 : i32
    %c0_i32_1 = arith.constant 0 : i32
    return %c0_i32, %c0_i32_0 : i32, i32
  }
  func.func @transform_14(%arg0: i32) -> (i32, i32) {
    %c0_i32 = arith.constant 0 : i32
    %c0_i32_0 = arith.constant 0 : i32
    %c0_i32_1 = arith.constant 0 : i32
    return %c0_i32, %c0_i32_0 : i32, i32
  }
  func.func @transform_15(%arg0: i32) -> (i32, i32) {
    %c0_i32 = arith.constant 0 : i32
    %c0_i32_0 = arith.constant 0 : i32
    %c0_i32_1 = arith.constant 0 : i32
    return %c0_i32, %c0_i32_0 : i32, i32
  }
  func.func @transform_16(%arg0: i32) -> (i32, i32, i32) {
    %c0_i32 = arith.constant 0 : i32
    %c0_i32_0 = arith.constant 0 : i32
    %c0_i32_1 = arith.constant 0 : i32
    return %arg0, %c0_i32, %c0_i32_0 : i32, i32, i32
  }
}

module attributes {stable_mosaic.version = 11 : i64} {
  func.func @_mha_kernel(%arg0: i32, %arg1: memref<4x8x32xf32, #tpu.memory_space<vmem>>, %arg2: memref<4x8x32xf32, #tpu.memory_space<vmem>>, %arg3: memref<4x8x32xf32, #tpu.memory_space<vmem>>, %arg4: memref<32x512xf32, #tpu.memory_space<vmem>>, %arg5: memref<1x512xf32, #tpu.memory_space<vmem>>, %arg6: memref<32x512xf32, #tpu.memory_space<vmem>>, %arg7: memref<1x512xf32, #tpu.memory_space<vmem>>, %arg8: memref<32x512xf32, #tpu.memory_space<vmem>>, %arg9: memref<1x512xf32, #tpu.memory_space<vmem>>, %arg10: memref<32x512xf32, #tpu.memory_space<vmem>>, %arg11: memref<1x512xf32, #tpu.memory_space<vmem>>, %arg12: memref<128x512xf32, #tpu.memory_space<vmem>>, %arg13: memref<512x32xf32, #tpu.memory_space<vmem>>, %arg14: memref<1x32xf32, #tpu.memory_space<vmem>>, %arg15: memref<1x32xf32, #tpu.memory_space<vmem>>, %arg16: memref<1x32xf32, #tpu.memory_space<vmem>>, %arg17: memref<4x8x32xf32, #tpu.memory_space<vmem>>, %arg18: memref<32x512xf32, #tpu.memory_space<vmem>>) attributes {dimension_semantics = [#tpu.dimension_semantics<parallel>], iteration_bounds = array<i64: 1>, scalar_prefetch = 0 : i64, scratch_operands = 1 : i64, tpu.core_type = #tpu.core_type<tc>, window_params = [{transform_indices = @transform_0, window_bounds = array<i64: 4, 8, 32>}, {transform_indices = @transform_1, window_bounds = array<i64: 4, 8, 32>}, {transform_indices = @transform_2, window_bounds = array<i64: 4, 8, 32>}, {pipeline_mode = #tpu.pipeline_mode<synchronous>, transform_indices = @transform_3, window_bounds = array<i64: 32, 512>}, {pipeline_mode = #tpu.pipeline_mode<synchronous>, transform_indices = @transform_4, window_bounds = array<i64: 1, 512>}, {pipeline_mode = #tpu.pipeline_mode<synchronous>, transform_indices = @transform_5, window_bounds = array<i64: 32, 512>}, {pipeline_mode = #tpu.pipeline_mode<synchronous>, transform_indices = @transform_6, window_bounds = array<i64: 1, 512>}, {pipeline_mode = #tpu.pipeline_mode<synchronous>, transform_indices = @transform_7, window_bounds = array<i64: 32, 512>}, {pipeline_mode = #tpu.pipeline_mode<synchronous>, transform_indices = @transform_8, window_bounds = array<i64: 1, 512>}, {pipeline_mode = #tpu.pipeline_mode<synchronous>, transform_indices = @transform_9, window_bounds = array<i64: 32, 512>}, {pipeline_mode = #tpu.pipeline_mode<synchronous>, transform_indices = @transform_10, window_bounds = array<i64: 1, 512>}, {pipeline_mode = #tpu.pipeline_mode<synchronous>, transform_indices = @transform_11, window_bounds = array<i64: 128, 512>}, {pipeline_mode = #tpu.pipeline_mode<synchronous>, transform_indices = @transform_12, window_bounds = array<i64: 512, 32>}, {pipeline_mode = #tpu.pipeline_mode<synchronous>, transform_indices = @transform_13, window_bounds = array<i64: 1, 32>}, {pipeline_mode = #tpu.pipeline_mode<synchronous>, transform_indices = @transform_14, window_bounds = array<i64: 1, 32>}, {pipeline_mode = #tpu.pipeline_mode<synchronous>, transform_indices = @transform_15, window_bounds = array<i64: 1, 32>}, {transform_indices = @transform_16, window_bounds = array<i64: 4, 8, 32>}]} {
    %c0 = arith.constant 0 : index
    %c0_0 = arith.constant 0 : index
    %c0_1 = arith.constant 0 : index
    %0 = vector.load %arg1[%c0, %c0_0, %c0_1] : memref<4x8x32xf32, #tpu.memory_space<vmem>>, vector<4x8x32xf32>
    %1 = vector.shape_cast %0 : vector<4x8x32xf32> to vector<32x32xf32>
    %c0_2 = arith.constant 0 : index
    %c0_3 = arith.constant 0 : index
    %c0_4 = arith.constant 0 : index
    %2 = vector.load %arg2[%c0_2, %c0_3, %c0_4] : memref<4x8x32xf32, #tpu.memory_space<vmem>>, vector<4x8x32xf32>
    %3 = vector.shape_cast %2 : vector<4x8x32xf32> to vector<32x32xf32>
    %c0_5 = arith.constant 0 : index
    %c0_6 = arith.constant 0 : index
    %c0_7 = arith.constant 0 : index
    %4 = vector.load %arg3[%c0_5, %c0_6, %c0_7] : memref<4x8x32xf32, #tpu.memory_space<vmem>>, vector<4x8x32xf32>
    %5 = vector.shape_cast %4 : vector<4x8x32xf32> to vector<32x32xf32>
    %c0_8 = arith.constant 0 : index
    %c0_9 = arith.constant 0 : index
    %6 = vector.load %arg4[%c0_8, %c0_9] : memref<32x512xf32, #tpu.memory_space<vmem>>, vector<32x512xf32>
    %cst = arith.constant dense<0.000000e+00> : vector<32x512xf32>
    %7 = tpu.matmul %1, %6, %cst {dimension_numbers = #tpu.dot_dimension_numbers<[1], [0], [0], [1], [0, 0, 1, 1], [], []>} : vector<32x32xf32>, vector<32x512xf32>, vector<32x512xf32> -> vector<32x512xf32>
    %c0_10 = arith.constant 0 : index
    %c0_11 = arith.constant 0 : index
    %8 = vector.load %arg5[%c0_10, %c0_11] : memref<1x512xf32, #tpu.memory_space<vmem>>, vector<1x512xf32>
    %9 = vector.broadcast %8 : vector<1x512xf32> to vector<32x512xf32>
    %10 = arith.addf %7, %9 : vector<32x512xf32>
    %c0_12 = arith.constant 0 : index
    %c0_13 = arith.constant 0 : index
    %11 = vector.load %arg6[%c0_12, %c0_13] : memref<32x512xf32, #tpu.memory_space<vmem>>, vector<32x512xf32>
    %cst_14 = arith.constant dense<0.000000e+00> : vector<32x512xf32>
    %12 = tpu.matmul %3, %11, %cst_14 {dimension_numbers = #tpu.dot_dimension_numbers<[1], [0], [0], [1], [0, 0, 1, 1], [], []>} : vector<32x32xf32>, vector<32x512xf32>, vector<32x512xf32> -> vector<32x512xf32>
    %c0_15 = arith.constant 0 : index
    %c0_16 = arith.constant 0 : index
    %13 = vector.load %arg7[%c0_15, %c0_16] : memref<1x512xf32, #tpu.memory_space<vmem>>, vector<1x512xf32>
    %14 = vector.broadcast %13 : vector<1x512xf32> to vector<32x512xf32>
    %15 = arith.addf %12, %14 : vector<32x512xf32>
    %c0_17 = arith.constant 0 : index
    %c0_18 = arith.constant 0 : index
    %16 = vector.load %arg8[%c0_17, %c0_18] : memref<32x512xf32, #tpu.memory_space<vmem>>, vector<32x512xf32>
    %cst_19 = arith.constant dense<0.000000e+00> : vector<32x512xf32>
    %17 = tpu.matmul %5, %16, %cst_19 {dimension_numbers = #tpu.dot_dimension_numbers<[1], [0], [0], [1], [0, 0, 1, 1], [], []>} : vector<32x32xf32>, vector<32x512xf32>, vector<32x512xf32> -> vector<32x512xf32>
    %c0_20 = arith.constant 0 : index
    %c0_21 = arith.constant 0 : index
    %18 = vector.load %arg9[%c0_20, %c0_21] : memref<1x512xf32, #tpu.memory_space<vmem>>, vector<1x512xf32>
    %19 = vector.broadcast %18 : vector<1x512xf32> to vector<32x512xf32>
    %20 = arith.addf %17, %19 : vector<32x512xf32>
    %c0_22 = arith.constant 0 : index
    %c0_23 = arith.constant 0 : index
    %21 = vector.load %arg10[%c0_22, %c0_23] : memref<32x512xf32, #tpu.memory_space<vmem>>, vector<32x512xf32>
    %cst_24 = arith.constant dense<0.000000e+00> : vector<32x512xf32>
    %22 = tpu.matmul %1, %21, %cst_24 {dimension_numbers = #tpu.dot_dimension_numbers<[1], [0], [0], [1], [0, 0, 1, 1], [], []>} : vector<32x32xf32>, vector<32x512xf32>, vector<32x512xf32> -> vector<32x512xf32>
    %c0_25 = arith.constant 0 : index
    %c0_26 = arith.constant 0 : index
    %23 = vector.load %arg11[%c0_25, %c0_26] : memref<1x512xf32, #tpu.memory_space<vmem>>, vector<1x512xf32>
    %24 = vector.broadcast %23 : vector<1x512xf32> to vector<32x512xf32>
    %25 = arith.addf %22, %24 : vector<32x512xf32>
    %26 = vector.shape_cast %10 : vector<32x512xf32> to vector<4x8x512xf32>
    %27 = vector.shape_cast %15 : vector<32x512xf32> to vector<4x8x512xf32>
    %28 = vector.shape_cast %20 : vector<32x512xf32> to vector<4x8x512xf32>
    %c0_27 = arith.constant 0 : index
    %c0_28 = arith.constant 0 : index
    %29 = vector.load %arg12[%c0_27, %c0_28] : memref<128x512xf32, #tpu.memory_space<vmem>>, vector<128x512xf32>
    %30 = vector.extract_strided_slice %26 {offsets = [0, 0, 0], sizes = [4, 8, 128], strides = [1, 1, 1]} : vector<4x8x512xf32> to vector<4x8x128xf32>
    %31 = vector.extract_strided_slice %27 {offsets = [0, 0, 0], sizes = [4, 8, 128], strides = [1, 1, 1]} : vector<4x8x512xf32> to vector<4x8x128xf32>
    %32 = vector.extract_strided_slice %28 {offsets = [0, 0, 0], sizes = [4, 8, 128], strides = [1, 1, 1]} : vector<4x8x512xf32> to vector<4x8x128xf32>
    %cst_29 = arith.constant dense<0.000000e+00> : vector<4x8x8xf32>
    %33 = tpu.matmul %30, %31, %cst_29 {dimension_numbers = #tpu.dot_dimension_numbers<[2], [2], [1], [1], [0, 0, 0, 1, 1, 1], [0], [0]>} : vector<4x8x128xf32>, vector<4x8x128xf32>, vector<4x8x8xf32> -> vector<4x8x8xf32>
    %34 = vector.extract_strided_slice %25 {offsets = [0, 0], sizes = [32, 128], strides = [1, 1]} : vector<32x512xf32> to vector<32x128xf32>
    %35 = vector.shape_cast %34 : vector<32x128xf32> to vector<4x8x128xf32>
    %cst_30 = arith.constant dense<0xFF800000> : vector<4x8xf32>
    %36 = vector.multi_reduction <maximumf>, %33, %cst_30 [2] : vector<4x8x8xf32> to vector<4x8xf32>
    %37 = vector.shape_cast %36 : vector<4x8xf32> to vector<4x8x1xf32>
    %cst_31 = arith.constant dense<0xFF800000> : vector<4x8xf32>
    %38 = vector.multi_reduction <maximumf>, %35, %cst_31 [2] : vector<4x8x128xf32> to vector<4x8xf32>
    %39 = vector.shape_cast %38 : vector<4x8xf32> to vector<4x8x1xf32>
    %40 = arith.maximumf %37, %39 : vector<4x8x1xf32>
    %41 = vector.broadcast %40 : vector<4x8x1xf32> to vector<4x8x8xf32>
    %42 = arith.subf %33, %41 : vector<4x8x8xf32>
    %43 = math.exp %42 : vector<4x8x8xf32>
    %44 = vector.broadcast %40 : vector<4x8x1xf32> to vector<4x8x128xf32>
    %45 = arith.subf %35, %44 : vector<4x8x128xf32>
    %46 = math.exp %45 : vector<4x8x128xf32>
    %cst_32 = arith.constant dense<0.000000e+00> : vector<4x8xf32>
    %47 = vector.multi_reduction <add>, %43, %cst_32 [2] : vector<4x8x8xf32> to vector<4x8xf32>
    %48 = vector.shape_cast %47 : vector<4x8xf32> to vector<4x8x1xf32>
    %cst_33 = arith.constant dense<0.000000e+00> : vector<4x8xf32>
    %49 = vector.multi_reduction <add>, %46, %cst_33 [2] : vector<4x8x128xf32> to vector<4x8xf32>
    %50 = vector.shape_cast %49 : vector<4x8xf32> to vector<4x8x1xf32>
    %51 = arith.addf %48, %50 : vector<4x8x1xf32>
    %52 = tpu.reciprocal %51 : vector<4x8x1xf32> -> vector<4x8x1xf32>
    %cst_34 = arith.constant dense<0.000000e+00> : vector<4x8x128xf32>
    %53 = tpu.matmul %43, %32, %cst_34 {dimension_numbers = #tpu.dot_dimension_numbers<[2], [1], [1], [2], [0, 0, 0, 1, 1, 2], [0], [0]>} : vector<4x8x8xf32>, vector<4x8x128xf32>, vector<4x8x128xf32> -> vector<4x8x128xf32>
    %54 = vector.shape_cast %46 : vector<4x8x128xf32> to vector<32x128xf32>
    %55 = vector.extract_strided_slice %29 {offsets = [0, 0], sizes = [128, 128], strides = [1, 1]} : vector<128x512xf32> to vector<128x128xf32>
    %cst_35 = arith.constant dense<0.000000e+00> : vector<32x128xf32>
    %56 = tpu.matmul %54, %55, %cst_35 {dimension_numbers = #tpu.dot_dimension_numbers<[1], [0], [0], [1], [0, 0, 1, 1], [], []>} : vector<32x128xf32>, vector<128x128xf32>, vector<32x128xf32> -> vector<32x128xf32>
    %57 = vector.shape_cast %53 : vector<4x8x128xf32> to vector<32x128xf32>
    %58 = arith.addf %57, %56 : vector<32x128xf32>
    %59 = vector.shape_cast %52 : vector<4x8x1xf32> to vector<32x1xf32>
    %60 = vector.broadcast %59 : vector<32x1xf32> to vector<32x128xf32>
    %61 = arith.mulf %58, %60 : vector<32x128xf32>
    %c0_36 = arith.constant 0 : index
    %c0_37 = arith.constant 0 : index
    %62 = vector.load %arg18[%c0_36, %c0_37] : memref<32x512xf32, #tpu.memory_space<vmem>>, vector<32x128xf32>
    tpu.vector_store %arg18[%c0_36, %c0_37], %61 {strides = array<i32>} : memref<32x512xf32, #tpu.memory_space<vmem>>, vector<32x128xf32>,
    %63 = vector.extract_strided_slice %26 {offsets = [0, 0, 128], sizes = [4, 8, 128], strides = [1, 1, 1]} : vector<4x8x512xf32> to vector<4x8x128xf32>
    %64 = vector.extract_strided_slice %27 {offsets = [0, 0, 128], sizes = [4, 8, 128], strides = [1, 1, 1]} : vector<4x8x512xf32> to vector<4x8x128xf32>
    %65 = vector.extract_strided_slice %28 {offsets = [0, 0, 128], sizes = [4, 8, 128], strides = [1, 1, 1]} : vector<4x8x512xf32> to vector<4x8x128xf32>
    %cst_38 = arith.constant dense<0.000000e+00> : vector<4x8x8xf32>
    %66 = tpu.matmul %63, %64, %cst_38 {dimension_numbers = #tpu.dot_dimension_numbers<[2], [2], [1], [1], [0, 0, 0, 1, 1, 1], [0], [0]>} : vector<4x8x128xf32>, vector<4x8x128xf32>, vector<4x8x8xf32> -> vector<4x8x8xf32>
    %67 = vector.extract_strided_slice %25 {offsets = [0, 128], sizes = [32, 128], strides = [1, 1]} : vector<32x512xf32> to vector<32x128xf32>
    %68 = vector.shape_cast %67 : vector<32x128xf32> to vector<4x8x128xf32>
    %cst_39 = arith.constant dense<0xFF800000> : vector<4x8xf32>
    %69 = vector.multi_reduction <maximumf>, %66, %cst_39 [2] : vector<4x8x8xf32> to vector<4x8xf32>
    %70 = vector.shape_cast %69 : vector<4x8xf32> to vector<4x8x1xf32>
    %cst_40 = arith.constant dense<0xFF800000> : vector<4x8xf32>
    %71 = vector.multi_reduction <maximumf>, %68, %cst_40 [2] : vector<4x8x128xf32> to vector<4x8xf32>
    %72 = vector.shape_cast %71 : vector<4x8xf32> to vector<4x8x1xf32>
    %73 = arith.maximumf %70, %72 : vector<4x8x1xf32>
    %74 = vector.broadcast %73 : vector<4x8x1xf32> to vector<4x8x8xf32>
    %75 = arith.subf %66, %74 : vector<4x8x8xf32>
    %76 = math.exp %75 : vector<4x8x8xf32>
    %77 = vector.broadcast %73 : vector<4x8x1xf32> to vector<4x8x128xf32>
    %78 = arith.subf %68, %77 : vector<4x8x128xf32>
    %79 = math.exp %78 : vector<4x8x128xf32>
    %cst_41 = arith.constant dense<0.000000e+00> : vector<4x8xf32>
    %80 = vector.multi_reduction <add>, %76, %cst_41 [2] : vector<4x8x8xf32> to vector<4x8xf32>
    %81 = vector.shape_cast %80 : vector<4x8xf32> to vector<4x8x1xf32>
    %cst_42 = arith.constant dense<0.000000e+00> : vector<4x8xf32>
    %82 = vector.multi_reduction <add>, %79, %cst_42 [2] : vector<4x8x128xf32> to vector<4x8xf32>
    %83 = vector.shape_cast %82 : vector<4x8xf32> to vector<4x8x1xf32>
    %84 = arith.addf %81, %83 : vector<4x8x1xf32>
    %85 = tpu.reciprocal %84 : vector<4x8x1xf32> -> vector<4x8x1xf32>
    %cst_43 = arith.constant dense<0.000000e+00> : vector<4x8x128xf32>
    %86 = tpu.matmul %76, %65, %cst_43 {dimension_numbers = #tpu.dot_dimension_numbers<[2], [1], [1], [2], [0, 0, 0, 1, 1, 2], [0], [0]>} : vector<4x8x8xf32>, vector<4x8x128xf32>, vector<4x8x128xf32> -> vector<4x8x128xf32>
    %87 = vector.shape_cast %79 : vector<4x8x128xf32> to vector<32x128xf32>
    %88 = vector.extract_strided_slice %29 {offsets = [0, 128], sizes = [128, 128], strides = [1, 1]} : vector<128x512xf32> to vector<128x128xf32>
    %cst_44 = arith.constant dense<0.000000e+00> : vector<32x128xf32>
    %89 = tpu.matmul %87, %88, %cst_44 {dimension_numbers = #tpu.dot_dimension_numbers<[1], [0], [0], [1], [0, 0, 1, 1], [], []>} : vector<32x128xf32>, vector<128x128xf32>, vector<32x128xf32> -> vector<32x128xf32>
    %90 = vector.shape_cast %86 : vector<4x8x128xf32> to vector<32x128xf32>
    %91 = arith.addf %90, %89 : vector<32x128xf32>
    %92 = vector.shape_cast %85 : vector<4x8x1xf32> to vector<32x1xf32>
    %93 = vector.broadcast %92 : vector<32x1xf32> to vector<32x128xf32>
    %94 = arith.mulf %91, %93 : vector<32x128xf32>
    %c0_45 = arith.constant 0 : index
    %c128 = arith.constant 128 : index
    %95 = vector.load %arg18[%c0_45, %c128] : memref<32x512xf32, #tpu.memory_space<vmem>>, vector<32x128xf32>
    tpu.vector_store %arg18[%c0_45, %c128], %94 {strides = array<i32>} : memref<32x512xf32, #tpu.memory_space<vmem>>, vector<32x128xf32>,
    %96 = vector.extract_strided_slice %26 {offsets = [0, 0, 256], sizes = [4, 8, 128], strides = [1, 1, 1]} : vector<4x8x512xf32> to vector<4x8x128xf32>
    %97 = vector.extract_strided_slice %27 {offsets = [0, 0, 256], sizes = [4, 8, 128], strides = [1, 1, 1]} : vector<4x8x512xf32> to vector<4x8x128xf32>
    %98 = vector.extract_strided_slice %28 {offsets = [0, 0, 256], sizes = [4, 8, 128], strides = [1, 1, 1]} : vector<4x8x512xf32> to vector<4x8x128xf32>
    %cst_46 = arith.constant dense<0.000000e+00> : vector<4x8x8xf32>
    %99 = tpu.matmul %96, %97, %cst_46 {dimension_numbers = #tpu.dot_dimension_numbers<[2], [2], [1], [1], [0, 0, 0, 1, 1, 1], [0], [0]>} : vector<4x8x128xf32>, vector<4x8x128xf32>, vector<4x8x8xf32> -> vector<4x8x8xf32>
    %100 = vector.extract_strided_slice %25 {offsets = [0, 256], sizes = [32, 128], strides = [1, 1]} : vector<32x512xf32> to vector<32x128xf32>
    %101 = vector.shape_cast %100 : vector<32x128xf32> to vector<4x8x128xf32>
    %cst_47 = arith.constant dense<0xFF800000> : vector<4x8xf32>
    %102 = vector.multi_reduction <maximumf>, %99, %cst_47 [2] : vector<4x8x8xf32> to vector<4x8xf32>
    %103 = vector.shape_cast %102 : vector<4x8xf32> to vector<4x8x1xf32>
    %cst_48 = arith.constant dense<0xFF800000> : vector<4x8xf32>
    %104 = vector.multi_reduction <maximumf>, %101, %cst_48 [2] : vector<4x8x128xf32> to vector<4x8xf32>
    %105 = vector.shape_cast %104 : vector<4x8xf32> to vector<4x8x1xf32>
    %106 = arith.maximumf %103, %105 : vector<4x8x1xf32>
    %107 = vector.broadcast %106 : vector<4x8x1xf32> to vector<4x8x8xf32>
    %108 = arith.subf %99, %107 : vector<4x8x8xf32>
    %109 = math.exp %108 : vector<4x8x8xf32>
    %110 = vector.broadcast %106 : vector<4x8x1xf32> to vector<4x8x128xf32>
    %111 = arith.subf %101, %110 : vector<4x8x128xf32>
    %112 = math.exp %111 : vector<4x8x128xf32>
    %cst_49 = arith.constant dense<0.000000e+00> : vector<4x8xf32>
    %113 = vector.multi_reduction <add>, %109, %cst_49 [2] : vector<4x8x8xf32> to vector<4x8xf32>
    %114 = vector.shape_cast %113 : vector<4x8xf32> to vector<4x8x1xf32>
    %cst_50 = arith.constant dense<0.000000e+00> : vector<4x8xf32>
    %115 = vector.multi_reduction <add>, %112, %cst_50 [2] : vector<4x8x128xf32> to vector<4x8xf32>
    %116 = vector.shape_cast %115 : vector<4x8xf32> to vector<4x8x1xf32>
    %117 = arith.addf %114, %116 : vector<4x8x1xf32>
    %118 = tpu.reciprocal %117 : vector<4x8x1xf32> -> vector<4x8x1xf32>
    %cst_51 = arith.constant dense<0.000000e+00> : vector<4x8x128xf32>
    %119 = tpu.matmul %109, %98, %cst_51 {dimension_numbers = #tpu.dot_dimension_numbers<[2], [1], [1], [2], [0, 0, 0, 1, 1, 2], [0], [0]>} : vector<4x8x8xf32>, vector<4x8x128xf32>, vector<4x8x128xf32> -> vector<4x8x128xf32>
    %120 = vector.shape_cast %112 : vector<4x8x128xf32> to vector<32x128xf32>
    %121 = vector.extract_strided_slice %29 {offsets = [0, 256], sizes = [128, 128], strides = [1, 1]} : vector<128x512xf32> to vector<128x128xf32>
    %cst_52 = arith.constant dense<0.000000e+00> : vector<32x128xf32>
    %122 = tpu.matmul %120, %121, %cst_52 {dimension_numbers = #tpu.dot_dimension_numbers<[1], [0], [0], [1], [0, 0, 1, 1], [], []>} : vector<32x128xf32>, vector<128x128xf32>, vector<32x128xf32> -> vector<32x128xf32>
    %123 = vector.shape_cast %119 : vector<4x8x128xf32> to vector<32x128xf32>
    %124 = arith.addf %123, %122 : vector<32x128xf32>
    %125 = vector.shape_cast %118 : vector<4x8x1xf32> to vector<32x1xf32>
    %126 = vector.broadcast %125 : vector<32x1xf32> to vector<32x128xf32>
    %127 = arith.mulf %124, %126 : vector<32x128xf32>
    %c0_53 = arith.constant 0 : index
    %c256 = arith.constant 256 : index
    %128 = vector.load %arg18[%c0_53, %c256] : memref<32x512xf32, #tpu.memory_space<vmem>>, vector<32x128xf32>
    tpu.vector_store %arg18[%c0_53, %c256], %127 {strides = array<i32>} : memref<32x512xf32, #tpu.memory_space<vmem>>, vector<32x128xf32>,
    %129 = vector.extract_strided_slice %26 {offsets = [0, 0, 384], sizes = [4, 8, 128], strides = [1, 1, 1]} : vector<4x8x512xf32> to vector<4x8x128xf32>
    %130 = vector.extract_strided_slice %27 {offsets = [0, 0, 384], sizes = [4, 8, 128], strides = [1, 1, 1]} : vector<4x8x512xf32> to vector<4x8x128xf32>
    %131 = vector.extract_strided_slice %28 {offsets = [0, 0, 384], sizes = [4, 8, 128], strides = [1, 1, 1]} : vector<4x8x512xf32> to vector<4x8x128xf32>
    %cst_54 = arith.constant dense<0.000000e+00> : vector<4x8x8xf32>
    %132 = tpu.matmul %129, %130, %cst_54 {dimension_numbers = #tpu.dot_dimension_numbers<[2], [2], [1], [1], [0, 0, 0, 1, 1, 1], [0], [0]>} : vector<4x8x128xf32>, vector<4x8x128xf32>, vector<4x8x8xf32> -> vector<4x8x8xf32>
    %133 = vector.extract_strided_slice %25 {offsets = [0, 384], sizes = [32, 128], strides = [1, 1]} : vector<32x512xf32> to vector<32x128xf32>
    %134 = vector.shape_cast %133 : vector<32x128xf32> to vector<4x8x128xf32>
    %cst_55 = arith.constant dense<0xFF800000> : vector<4x8xf32>
    %135 = vector.multi_reduction <maximumf>, %132, %cst_55 [2] : vector<4x8x8xf32> to vector<4x8xf32>
    %136 = vector.shape_cast %135 : vector<4x8xf32> to vector<4x8x1xf32>
    %cst_56 = arith.constant dense<0xFF800000> : vector<4x8xf32>
    %137 = vector.multi_reduction <maximumf>, %134, %cst_56 [2] : vector<4x8x128xf32> to vector<4x8xf32>
    %138 = vector.shape_cast %137 : vector<4x8xf32> to vector<4x8x1xf32>
    %139 = arith.maximumf %136, %138 : vector<4x8x1xf32>
    %140 = vector.broadcast %139 : vector<4x8x1xf32> to vector<4x8x8xf32>
    %141 = arith.subf %132, %140 : vector<4x8x8xf32>
    %142 = math.exp %141 : vector<4x8x8xf32>
    %143 = vector.broadcast %139 : vector<4x8x1xf32> to vector<4x8x128xf32>
    %144 = arith.subf %134, %143 : vector<4x8x128xf32>
    %145 = math.exp %144 : vector<4x8x128xf32>
    %cst_57 = arith.constant dense<0.000000e+00> : vector<4x8xf32>
    %146 = vector.multi_reduction <add>, %142, %cst_57 [2] : vector<4x8x8xf32> to vector<4x8xf32>
    %147 = vector.shape_cast %146 : vector<4x8xf32> to vector<4x8x1xf32>
    %cst_58 = arith.constant dense<0.000000e+00> : vector<4x8xf32>
    %148 = vector.multi_reduction <add>, %145, %cst_58 [2] : vector<4x8x128xf32> to vector<4x8xf32>
    %149 = vector.shape_cast %148 : vector<4x8xf32> to vector<4x8x1xf32>
    %150 = arith.addf %147, %149 : vector<4x8x1xf32>
    %151 = tpu.reciprocal %150 : vector<4x8x1xf32> -> vector<4x8x1xf32>
    %cst_59 = arith.constant dense<0.000000e+00> : vector<4x8x128xf32>
    %152 = tpu.matmul %142, %131, %cst_59 {dimension_numbers = #tpu.dot_dimension_numbers<[2], [1], [1], [2], [0, 0, 0, 1, 1, 2], [0], [0]>} : vector<4x8x8xf32>, vector<4x8x128xf32>, vector<4x8x128xf32> -> vector<4x8x128xf32>
    %153 = vector.shape_cast %145 : vector<4x8x128xf32> to vector<32x128xf32>
    %154 = vector.extract_strided_slice %29 {offsets = [0, 384], sizes = [128, 128], strides = [1, 1]} : vector<128x512xf32> to vector<128x128xf32>
    %cst_60 = arith.constant dense<0.000000e+00> : vector<32x128xf32>
    %155 = tpu.matmul %153, %154, %cst_60 {dimension_numbers = #tpu.dot_dimension_numbers<[1], [0], [0], [1], [0, 0, 1, 1], [], []>} : vector<32x128xf32>, vector<128x128xf32>, vector<32x128xf32> -> vector<32x128xf32>
    %156 = vector.shape_cast %152 : vector<4x8x128xf32> to vector<32x128xf32>
    %157 = arith.addf %156, %155 : vector<32x128xf32>
    %158 = vector.shape_cast %151 : vector<4x8x1xf32> to vector<32x1xf32>
    %159 = vector.broadcast %158 : vector<32x1xf32> to vector<32x128xf32>
    %160 = arith.mulf %157, %159 : vector<32x128xf32>
    %c0_61 = arith.constant 0 : index
    %c384 = arith.constant 384 : index
    %161 = vector.load %arg18[%c0_61, %c384] : memref<32x512xf32, #tpu.memory_space<vmem>>, vector<32x128xf32>
    tpu.vector_store %arg18[%c0_61, %c384], %160 {strides = array<i32>} : memref<32x512xf32, #tpu.memory_space<vmem>>, vector<32x128xf32>,
    %c0_62 = arith.constant 0 : index
    %c0_63 = arith.constant 0 : index
    %162 = vector.load %arg18[%c0_62, %c0_63] : memref<32x512xf32, #tpu.memory_space<vmem>>, vector<32x512xf32>
    %c0_64 = arith.constant 0 : index
    %c0_65 = arith.constant 0 : index
    %163 = vector.load %arg13[%c0_64, %c0_65] : memref<512x32xf32, #tpu.memory_space<vmem>>, vector<512x32xf32>
    %cst_66 = arith.constant dense<0.000000e+00> : vector<32x32xf32>
    %164 = tpu.matmul %162, %163, %cst_66 {dimension_numbers = #tpu.dot_dimension_numbers<[1], [0], [0], [1], [0, 0, 1, 1], [], []>} : vector<32x512xf32>, vector<512x32xf32>, vector<32x32xf32> -> vector<32x32xf32>
    %c0_67 = arith.constant 0 : index
    %c0_68 = arith.constant 0 : index
    %165 = vector.load %arg14[%c0_67, %c0_68] : memref<1x32xf32, #tpu.memory_space<vmem>>, vector<1x32xf32>
    %166 = vector.broadcast %165 : vector<1x32xf32> to vector<32x32xf32>
    %167 = arith.addf %164, %166 : vector<32x32xf32>
    %168 = arith.addf %1, %167 : vector<32x32xf32>
    %cst_69 = arith.constant dense<0.000000e+00> : vector<32xf32>
    %169 = vector.multi_reduction <add>, %168, %cst_69 [1] : vector<32x32xf32> to vector<32xf32>
    %170 = vector.shape_cast %169 : vector<32xf32> to vector<32x1xf32>
    %cst_70 = arith.constant 3.200000e+01 : f32
    %171 = vector.broadcast %cst_70 : f32 to vector<32x1xf32>
    %172 = arith.divf %170, %171 : vector<32x1xf32>
    %173 = vector.broadcast %172 : vector<32x1xf32> to vector<32x32xf32>
    %174 = arith.subf %168, %173 : vector<32x32xf32>
    %175 = arith.mulf %174, %174 : vector<32x32xf32>
    %cst_71 = arith.constant dense<0.000000e+00> : vector<32xf32>
    %176 = vector.multi_reduction <add>, %175, %cst_71 [1] : vector<32x32xf32> to vector<32xf32>
    %177 = vector.shape_cast %176 : vector<32xf32> to vector<32x1xf32>
    %cst_72 = arith.constant 3.200000e+01 : f32
    %178 = vector.broadcast %cst_72 : f32 to vector<32x1xf32>
    %179 = arith.divf %177, %178 : vector<32x1xf32>
    %180 = vector.broadcast %172 : vector<32x1xf32> to vector<32x32xf32>
    %181 = arith.subf %168, %180 : vector<32x32xf32>
    %cst_73 = arith.constant 9.99999974E-6 : f32
    %182 = vector.broadcast %cst_73 : f32 to vector<32x1xf32>
    %183 = arith.addf %179, %182 : vector<32x1xf32>
    %184 = math.rsqrt %183 : vector<32x1xf32>
    %185 = vector.broadcast %184 : vector<32x1xf32> to vector<32x32xf32>
    %186 = arith.mulf %181, %185 : vector<32x32xf32>
    %c0_74 = arith.constant 0 : index
    %c0_75 = arith.constant 0 : index
    %187 = vector.load %arg15[%c0_74, %c0_75] : memref<1x32xf32, #tpu.memory_space<vmem>>, vector<1x32xf32>
    %188 = vector.broadcast %187 : vector<1x32xf32> to vector<32x32xf32>
    %189 = arith.mulf %186, %188 : vector<32x32xf32>
    %c0_76 = arith.constant 0 : index
    %c0_77 = arith.constant 0 : index
    %190 = vector.load %arg16[%c0_76, %c0_77] : memref<1x32xf32, #tpu.memory_space<vmem>>, vector<1x32xf32>
    %191 = vector.broadcast %190 : vector<1x32xf32> to vector<32x32xf32>
    %192 = arith.addf %189, %191 : vector<32x32xf32>
    %193 = vector.shape_cast %192 : vector<32x32xf32> to vector<4x8x32xf32>
    %c0_78 = arith.constant 0 : index
    %c0_79 = arith.constant 0 : index
    %c0_80 = arith.constant 0 : index
    %194 = vector.load %arg17[%c0_78, %c0_79, %c0_80] : memref<4x8x32xf32, #tpu.memory_space<vmem>>, vector<4x8x32xf32>
    tpu.vector_store %arg17[%c0_78, %c0_79, %c0_80], %193 {strides = array<i32>} : memref<4x8x32xf32, #tpu.memory_space<vmem>>, vector<4x8x32xf32>,
    return
  }
  func.func @transform_0(%arg0: i32) -> (i32, i32, i32) {
    %c0_i32 = arith.constant 0 : i32
    %c0_i32_0 = arith.constant 0 : i32
    %c0_i32_1 = arith.constant 0 : i32
    return %arg0, %c0_i32, %c0_i32_0 : i32, i32, i32
  }
  func.func @transform_1(%arg0: i32) -> (i32, i32, i32) {
    %c0_i32 = arith.constant 0 : i32
    %c0_i32_0 = arith.constant 0 : i32
    %c0_i32_1 = arith.constant 0 : i32
    return %arg0, %c0_i32, %c0_i32_0 : i32, i32, i32
  }
  func.func @transform_2(%arg0: i32) -> (i32, i32, i32) {
    %c0_i32 = arith.constant 0 : i32
    %c0_i32_0 = arith.constant 0 : i32
    %c0_i32_1 = arith.constant 0 : i32
    return %arg0, %c0_i32, %c0_i32_0 : i32, i32, i32
  }
  func.func @transform_3(%arg0: i32) -> (i32, i32) {
    %c0_i32 = arith.constant 0 : i32
    %c0_i32_0 = arith.constant 0 : i32
    %c0_i32_1 = arith.constant 0 : i32
    return %c0_i32, %c0_i32_0 : i32, i32
  }
  func.func @transform_4(%arg0: i32) -> (i32, i32) {
    %c0_i32 = arith.constant 0 : i32
    %c0_i32_0 = arith.constant 0 : i32
    %c0_i32_1 = arith.constant 0 : i32
    return %c0_i32, %c0_i32_0 : i32, i32
  }
  func.func @transform_5(%arg0: i32) -> (i32, i32) {
    %c0_i32 = arith.constant 0 : i32
    %c0_i32_0 = arith.constant 0 : i32
    %c0_i32_1 = arith.constant 0 : i32
    return %c0_i32, %c0_i32_0 : i32, i32
  }
  func.func @transform_6(%arg0: i32) -> (i32, i32) {
    %c0_i32 = arith.constant 0 : i32
    %c0_i32_0 = arith.constant 0 : i32
    %c0_i32_1 = arith.constant 0 : i32
    return %c0_i32, %c0_i32_0 : i32, i32
  }
  func.func @transform_7(%arg0: i32) -> (i32, i32) {
    %c0_i32 = arith.constant 0 : i32
    %c0_i32_0 = arith.constant 0 : i32
    %c0_i32_1 = arith.constant 0 : i32
    return %c0_i32, %c0_i32_0 : i32, i32
  }
  func.func @transform_8(%arg0: i32) -> (i32, i32) {
    %c0_i32 = arith.constant 0 : i32
    %c0_i32_0 = arith.constant 0 : i32
    %c0_i32_1 = arith.constant 0 : i32
    return %c0_i32, %c0_i32_0 : i32, i32
  }
  func.func @transform_9(%arg0: i32) -> (i32, i32) {
    %c0_i32 = arith.constant 0 : i32
    %c0_i32_0 = arith.constant 0 : i32
    %c0_i32_1 = arith.constant 0 : i32
    return %c0_i32, %c0_i32_0 : i32, i32
  }
  func.func @transform_10(%arg0: i32) -> (i32, i32) {
    %c0_i32 = arith.constant 0 : i32
    %c0_i32_0 = arith.constant 0 : i32
    %c0_i32_1 = arith.constant 0 : i32
    return %c0_i32, %c0_i32_0 : i32, i32
  }
  func.func @transform_11(%arg0: i32) -> (i32, i32) {
    %c0_i32 = arith.constant 0 : i32
    %c0_i32_0 = arith.constant 0 : i32
    %c0_i32_1 = arith.constant 0 : i32
    return %c0_i32, %c0_i32_0 : i32, i32
  }
  func.func @transform_12(%arg0: i32) -> (i32, i32) {
    %c0_i32 = arith.constant 0 : i32
    %c0_i32_0 = arith.constant 0 : i32
    %c0_i32_1 = arith.constant 0 : i32
    return %c0_i32, %c0_i32_0 : i32, i32
  }
  func.func @transform_13(%arg0: i32) -> (i32, i32) {
    %c0_i32 = arith.constant 0 : i32
    %c0_i32_0 = arith.constant 0 : i32
    %c0_i32_1 = arith.constant 0 : i32
    return %c0_i32, %c0_i32_0 : i32, i32
  }
  func.func @transform_14(%arg0: i32) -> (i32, i32) {
    %c0_i32 = arith.constant 0 : i32
    %c0_i32_0 = arith.constant 0 : i32
    %c0_i32_1 = arith.constant 0 : i32
    return %c0_i32, %c0_i32_0 : i32, i32
  }
  func.func @transform_15(%arg0: i32) -> (i32, i32) {
    %c0_i32 = arith.constant 0 : i32
    %c0_i32_0 = arith.constant 0 : i32
    %c0_i32_1 = arith.constant 0 : i32
    return %c0_i32, %c0_i32_0 : i32, i32
  }
  func.func @transform_16(%arg0: i32) -> (i32, i32, i32) {
    %c0_i32 = arith.constant 0 : i32
    %c0_i32_0 = arith.constant 0 : i32
    %c0_i32_1 = arith.constant 0 : i32
    return %arg0, %c0_i32, %c0_i32_0 : i32, i32, i32
  }
}

</mosaic_0001>

<llo_original>
// kernel: tpu_custom_call.1
$region0: #{tpu_custom_call.1}
  #allocation0 [shape = 'u32[]', space=smem, size = 0x4, offset = 0x4, fixed_abs, tag = 'smem constant byte address 0x4 - core index']
  #allocation1 [shape = 'u32[144,128]{1,0:T(1,128)}', space=vmem, size = 0x12000, scoped, tag = 'internal scratch']
  #allocation2 [shape = 'f32[32,512]{1,0:T(8,128)}', space=vmem, size = 0x10000, scoped, tag = 'scratch operand']
  %s0 = inlined_call_operand.vmem [shape: f32[4,8,32], index: 0, kind: input, shape index: {}]
  %s1 = inlined_call_operand.hbm [shape: f32[4,8,32], index: 1, kind: input, shape index: {}]
  %s2 = inlined_call_operand.hbm [shape: f32[4,8,32], index: 2, kind: input, shape index: {}]
  %s3 = inlined_call_operand.vmem [shape: f32[32,512], index: 3, kind: input, shape index: {}]
  %s4 = inlined_call_operand.vmem [shape: f32[1,512], index: 4, kind: input, shape index: {}]
  %s5 = inlined_call_operand.hbm [shape: f32[32,512], index: 5, kind: input, shape index: {}]
  %s6 = inlined_call_operand.vmem [shape: f32[1,512], index: 6, kind: input, shape index: {}]
  %s7 = inlined_call_operand.hbm [shape: f32[32,512], index: 7, kind: input, shape index: {}]
  %s8 = inlined_call_operand.hbm [shape: f32[1,512], index: 8, kind: input, shape index: {}]
  %s9 = inlined_call_operand.hbm [shape: f32[32,512], index: 9, kind: input, shape index: {}]
  %s10 = inlined_call_operand.hbm [shape: f32[1,512], index: 10, kind: input, shape index: {}]
  %s11 = inlined_call_operand.vmem [shape: f32[128,512], index: 11, kind: input, shape index: {}]
  %s12 = inlined_call_operand.vmem [shape: f32[512,32], index: 12, kind: input, shape index: {}]
  %s13 = inlined_call_operand.vmem [shape: f32[1,32], index: 13, kind: input, shape index: {}]
  %s14 = inlined_call_operand.vmem [shape: f32[1,32], index: 14, kind: input, shape index: {}]
  %s15 = inlined_call_operand.vmem [shape: f32[1,32], index: 15, kind: input, shape index: {}]
  %s16 = inlined_call_operand.hbm [shape: f32[4,8,32], index: 16, kind: output, shape index: {}]
  %s17 = sld [smem:[#allocation0]]
  $region102: #{tpu_custom_call.1} parent=0
    _
  %s19 = ssub.s32 1, %s17
  %s20 = scalar_select 0, %s19, %s17
  $region1: #{tpu_custom_call.1} parent=0
    #allocation3 [shape = 'u8[16384]{0}', space=vmem, size = 0x4000, scoped, tag = 'input window, operand 1, single buffered']
    #allocation4 [shape = 's32[1]{0}', space=sflag, size = 0x4, scoped, tag = 'scoped memory for tpu_custom_call.1']
    #allocation5 [shape = 's32[1]{0}', space=sflag, size = 0x4, scoped, tag = 'scoped memory for tpu_custom_call.1']
    #allocation6 [shape = 'u8[16384]{0}', space=vmem, size = 0x4000, scoped, tag = 'input window, operand 2, single buffered']
    #allocation7 [shape = 's32[1]{0}', space=sflag, size = 0x4, scoped, tag = 'scoped memory for tpu_custom_call.1']
    #allocation8 [shape = 'u8[65536]{0}', space=vmem, size = 0x10000, scoped, tag = 'input window, operand 5, single buffered']
    #allocation9 [shape = 'u8[65536]{0}', space=vmem, size = 0x10000, scoped, tag = 'input window, operand 7, single buffered']
    #allocation10 [shape = 's32[1]{0}', space=sflag, size = 0x4, scoped, tag = 'scoped memory for tpu_custom_call.1']
    #allocation11 [shape = 'u8[2048]{0}', space=vmem, size = 0x800, scoped, tag = 'input window, operand 8, single buffered']
    #allocation12 [shape = 'u8[65536]{0}', space=vmem, size = 0x10000, scoped, tag = 'input window, operand 9, single buffered']
    #allocation13 [shape = 's32[1]{0}', space=sflag, size = 0x4, scoped, tag = 'scoped memory for tpu_custom_call.1']
    #allocation14 [shape = 'u8[2048]{0}', space=vmem, size = 0x800, scoped, tag = 'input window, operand 10, single buffered']
    #allocation15 [shape = 'u8[16384]{0}', space=vmem, size = 0x4000, scoped, tag = 'output window, operand 0, single buffered']
    %21 = vsyncpa [#allocation4], 0
    %22 = vsyncpa [#allocation7], 0
    %23 = vsyncpa [#allocation10], 0
    %24 = vsyncpa [#allocation13], 0
    %25 = vsyncpa [#allocation5], 0
    // Predicated region
    $region2: #{tpu_custom_call.1} parent=1 // pred_check
      _
    $region3: #{tpu_custom_call.1} parent=1 // pred_check_branch
      %27 = sbr.rel (0) target = $region5
    $region4: #{tpu_custom_call.1} parent=1 // pred_region
      _
    $region5: #{tpu_custom_call.1} parent=1 // pred_fallthru
      _
    // Predicated region
    $region6: #{tpu_custom_call.1} parent=1 // pred_check
      _
    $region7: #{tpu_custom_call.1} parent=1 // pred_check_branch
      %29 = sbr.rel (0) target = $region9
    $region8: #{tpu_custom_call.1} parent=1 // pred_region
      %s31 = ssub.s32 512, 512
      %32 = vsyncadd [#allocation4], %s31
      %s33 = sshll.u32 [#allocation3], 4
      %s34 = int_to_ptr.vmem [resolvable:$true] %s33
      %39 = dma.hbm_to_vmem [thread:$0]  %s1, 512, %s34, [#allocation4], 128, 128, 8
    $region9: #{tpu_custom_call.1} parent=1 // pred_fallthru
      _
    // Predicated region
    $region10: #{tpu_custom_call.1} parent=1 // pred_check
      _
    $region11: #{tpu_custom_call.1} parent=1 // pred_check_branch
      %41 = sbr.rel (0) target = $region13
    $region12: #{tpu_custom_call.1} parent=1 // pred_region
      %s43 = ssub.s32 512, 512
      %44 = vsyncadd [#allocation7], %s43
      %s45 = sshll.u32 [#allocation6], 4
      %s46 = int_to_ptr.vmem [resolvable:$true] %s45
      %51 = dma.hbm_to_vmem [thread:$0]  %s2, 512, %s46, [#allocation7], 128, 128, 8
    $region13: #{tpu_custom_call.1} parent=1 // pred_fallthru
      _
    // Predicated region
    $region14: #{tpu_custom_call.1} parent=1 // pred_check
      _
    $region15: #{tpu_custom_call.1} parent=1 // pred_check_branch
      %53 = sbr.rel (0) target = $region17
    $region16: #{tpu_custom_call.1} parent=1 // pred_region
      _
    $region17: #{tpu_custom_call.1} parent=1 // pred_fallthru
      _
    // Predicated region
    $region18: #{tpu_custom_call.1} parent=1 // pred_check
      _
    $region19: #{tpu_custom_call.1} parent=1 // pred_check_branch
      %55 = sbr.rel (0) target = $region21
    $region20: #{tpu_custom_call.1} parent=1 // pred_region
      _
    $region21: #{tpu_custom_call.1} parent=1 // pred_fallthru
      _
    // Predicated region
    $region22: #{tpu_custom_call.1} parent=1 // pred_check
      _
    $region23: #{tpu_custom_call.1} parent=1 // pred_check_branch
      %57 = sbr.rel (0) target = $region25
    $region24: #{tpu_custom_call.1} parent=1 // pred_region
      %s59 = ssub.s32 2048, 2048
      %60 = vsyncadd [#allocation7], %s59
      %s61 = sshll.u32 [#allocation8], 4
      %s62 = int_to_ptr.vmem [resolvable:$true] %s61
      %67 = dma.hbm_to_vmem [thread:$0]  %s5, 2048, %s62, [#allocation7], 512, 512, 32
    $region25: #{tpu_custom_call.1} parent=1 // pred_fallthru
      _
    // Predicated region
    $region26: #{tpu_custom_call.1} parent=1 // pred_check
      _
    $region27: #{tpu_custom_call.1} parent=1 // pred_check_branch
      %69 = sbr.rel (0) target = $region29
    $region28: #{tpu_custom_call.1} parent=1 // pred_region
      _
    $region29: #{tpu_custom_call.1} parent=1 // pred_fallthru
      _
    // Predicated region
    $region30: #{tpu_custom_call.1} parent=1 // pred_check
      _
    $region31: #{tpu_custom_call.1} parent=1 // pred_check_branch
      %71 = sbr.rel (0) target = $region33
    $region32: #{tpu_custom_call.1} parent=1 // pred_region
      %s73 = ssub.s32 2048, 2048
      %74 = vsyncadd [#allocation10], %s73
      %s75 = sshll.u32 [#allocation9], 4
      %s76 = int_to_ptr.vmem [resolvable:$true] %s75
      %81 = dma.hbm_to_vmem [thread:$0]  %s7, 2048, %s76, [#allocation10], 512, 512, 32
    $region33: #{tpu_custom_call.1} parent=1 // pred_fallthru
      _
    // Predicated region
    $region34: #{tpu_custom_call.1} parent=1 // pred_check
      _
    $region35: #{tpu_custom_call.1} parent=1 // pred_check_branch
      %83 = sbr.rel (0) target = $region37
    $region36: #{tpu_custom_call.1} parent=1 // pred_region
      %s85 = ssub.s32 64, 64
      %86 = vsyncadd [#allocation10], %s85
      %s88 = sshll.u32 [#allocation11], 4
      %s89 = int_to_ptr.vmem [resolvable:$true] %s88
      %91 = dma.hbm_to_vmem [thread:$0]  %s8, 64, %s89, [#allocation10]
    $region37: #{tpu_custom_call.1} parent=1 // pred_fallthru
      _
    // Predicated region
    $region38: #{tpu_custom_call.1} parent=1 // pred_check
      _
    $region39: #{tpu_custom_call.1} parent=1 // pred_check_branch
      %93 = sbr.rel (0) target = $region41
    $region40: #{tpu_custom_call.1} parent=1 // pred_region
      %s95 = ssub.s32 2048, 2048
      %96 = vsyncadd [#allocation13], %s95
      %s97 = sshll.u32 [#allocation12], 4
      %s98 = int_to_ptr.vmem [resolvable:$true] %s97
      %103 = dma.hbm_to_vmem [thread:$0]  %s9, 2048, %s98, [#allocation13], 512, 512, 32
    $region41: #{tpu_custom_call.1} parent=1 // pred_fallthru
      _
    // Predicated region
    $region42: #{tpu_custom_call.1} parent=1 // pred_check
      _
    $region43: #{tpu_custom_call.1} parent=1 // pred_check_branch
      %105 = sbr.rel (0) target = $region45
    $region44: #{tpu_custom_call.1} parent=1 // pred_region
      %s107 = ssub.s32 64, 64
      %108 = vsyncadd [#allocation13], %s107
      %s110 = sshll.u32 [#allocation14], 4
      %s111 = int_to_ptr.vmem [resolvable:$true] %s110
      %113 = dma.hbm_to_vmem [thread:$0]  %s10, 64, %s111, [#allocation13]
    $region45: #{tpu_custom_call.1} parent=1 // pred_fallthru
      _
    // Predicated region
    $region46: #{tpu_custom_call.1} parent=1 // pred_check
      _
    $region47: #{tpu_custom_call.1} parent=1 // pred_check_branch
      %115 = sbr.rel (0) target = $region49
    $region48: #{tpu_custom_call.1} parent=1 // pred_region
      _
    $region49: #{tpu_custom_call.1} parent=1 // pred_fallthru
      _
    // Predicated region
    $region50: #{tpu_custom_call.1} parent=1 // pred_check
      _
    $region51: #{tpu_custom_call.1} parent=1 // pred_check_branch
      %117 = sbr.rel (0) target = $region53
    $region52: #{tpu_custom_call.1} parent=1 // pred_region
      _
    $region53: #{tpu_custom_call.1} parent=1 // pred_fallthru
      _
    // Predicated region
    $region54: #{tpu_custom_call.1} parent=1 // pred_check
      _
    $region55: #{tpu_custom_call.1} parent=1 // pred_check_branch
      %119 = sbr.rel (0) target = $region57
    $region56: #{tpu_custom_call.1} parent=1 // pred_region
      _
    $region57: #{tpu_custom_call.1} parent=1 // pred_fallthru
      _
    // Predicated region
    $region58: #{tpu_custom_call.1} parent=1 // pred_check
      _
    $region59: #{tpu_custom_call.1} parent=1 // pred_check_branch
      %121 = sbr.rel (0) target = $region61
    $region60: #{tpu_custom_call.1} parent=1 // pred_region
      _
    $region61: #{tpu_custom_call.1} parent=1 // pred_fallthru
      _
    // Predicated region
    $region62: #{tpu_custom_call.1} parent=1 // pred_check
      _
    $region63: #{tpu_custom_call.1} parent=1 // pred_check_branch
      %123 = sbr.rel (0) target = $region65
    $region64: #{tpu_custom_call.1} parent=1 // pred_region
      _
    $region65: #{tpu_custom_call.1} parent=1 // pred_fallthru
      _
    // Predicated region
    $region66: #{tpu_custom_call.1} parent=1 // pred_check
      _
    $region67: #{tpu_custom_call.1} parent=1 // pred_check_branch
      %125 = sbr.rel (0) target = $region69
    $region68: #{tpu_custom_call.1} parent=1 // pred_region
      %126 = dma.done [#allocation4], 512
    $region69: #{tpu_custom_call.1} parent=1 // pred_fallthru
      _
    // Predicated region
    $region70: #{tpu_custom_call.1} parent=1 // pred_check
      _
    $region71: #{tpu_custom_call.1} parent=1 // pred_check_branch
      %128 = sbr.rel (0) target = $region73
    $region72: #{tpu_custom_call.1} parent=1 // pred_region
      %129 = dma.done [#allocation7], 512
    $region73: #{tpu_custom_call.1} parent=1 // pred_fallthru
      _
    // Predicated region
    $region74: #{tpu_custom_call.1} parent=1 // pred_check
      _
    $region75: #{tpu_custom_call.1} parent=1 // pred_check_branch
      %131 = sbr.rel (0) target = $region77
    $region76: #{tpu_custom_call.1} parent=1 // pred_region
      %132 = dma.done [#allocation7], 2048
    $region77: #{tpu_custom_call.1} parent=1 // pred_fallthru
      _
    // Predicated region
    $region78: #{tpu_custom_call.1} parent=1 // pred_check
      _
    $region79: #{tpu_custom_call.1} parent=1 // pred_check_branch
      %134 = sbr.rel (0) target = $region81
    $region80: #{tpu_custom_call.1} parent=1 // pred_region
      %135 = dma.done [#allocation10], 2048
    $region81: #{tpu_custom_call.1} parent=1 // pred_fallthru
      _
    // Predicated region
    $region82: #{tpu_custom_call.1} parent=1 // pred_check
      _
    $region83: #{tpu_custom_call.1} parent=1 // pred_check_branch
      %137 = sbr.rel (0) target = $region85
    $region84: #{tpu_custom_call.1} parent=1 // pred_region
      %138 = dma.done [#allocation10], 64
    $region85: #{tpu_custom_call.1} parent=1 // pred_fallthru
      _
    // Predicated region
    $region86: #{tpu_custom_call.1} parent=1 // pred_check
      _
    $region87: #{tpu_custom_call.1} parent=1 // pred_check_branch
      %140 = sbr.rel (0) target = $region89
    $region88: #{tpu_custom_call.1} parent=1 // pred_region
      %141 = dma.done [#allocation13], 2048
    $region89: #{tpu_custom_call.1} parent=1 // pred_fallthru
      _
    // Predicated region
    $region90: #{tpu_custom_call.1} parent=1 // pred_check
      _
    $region91: #{tpu_custom_call.1} parent=1 // pred_check_branch
      %143 = sbr.rel (0) target = $region93
    $region92: #{tpu_custom_call.1} parent=1 // pred_region
      %144 = dma.done [#allocation13], 64
    $region93: #{tpu_custom_call.1} parent=1 // pred_fallthru
      _
    %v145 = vld [vmem:[%s0] sm:$0xff]
    %v146 = vld [vmem:[%s0 + $0x8] sm:$0xff]
    %v147 = vld [vmem:[%s0 + $0x10] sm:$0xff]
    %v148 = vld [vmem:[%s0 + $0x18] sm:$0xff]
    %v149 = vld [vmem:[#allocation3] sm:$0xff]
    %v150 = vld [vmem:[#allocation3 + $0x8] sm:$0xff]
    %v151 = vld [vmem:[#allocation3 + $0x10] sm:$0xff]
    %v152 = vld [vmem:[#allocation3 + $0x18] sm:$0xff]
    %v153 = vld [vmem:[#allocation6] sm:$0xff]
    %v154 = vld [vmem:[#allocation6 + $0x8] sm:$0xff]
    %v155 = vld [vmem:[#allocation6 + $0x10] sm:$0xff]
    %v156 = vld [vmem:[#allocation6 + $0x18] sm:$0xff]
    %v157 = vld [vmem:[%s3] sm:$0xff]
    %v158 = vld [vmem:[%s3 + $0x8] sm:$0xff]
    %v159 = vld [vmem:[%s3 + $0x10] sm:$0xff]
    %v160 = vld [vmem:[%s3 + $0x18] sm:$0xff]
    %v161 = vld [vmem:[%s3 + $0x20] sm:$0xff]
    %v162 = vld [vmem:[%s3 + $0x28] sm:$0xff]
    %v163 = vld [vmem:[%s3 + $0x30] sm:$0xff]
    %v164 = vld [vmem:[%s3 + $0x38] sm:$0xff]
    %v165 = vld [vmem:[%s3 + $0x40] sm:$0xff]
    %v166 = vld [vmem:[%s3 + $0x48] sm:$0xff]
    %v167 = vld [vmem:[%s3 + $0x50] sm:$0xff]
    %v168 = vld [vmem:[%s3 + $0x58] sm:$0xff]
    %v169 = vld [vmem:[%s3 + $0x60] sm:$0xff]
    %v170 = vld [vmem:[%s3 + $0x68] sm:$0xff]
    %v171 = vld [vmem:[%s3 + $0x70] sm:$0xff]
    %v172 = vld [vmem:[%s3 + $0x78] sm:$0xff]
    %v173 = vld [vmem:[%s4] sm:$0xf]
    %v175 = vlaneseq
    %v176 = vshrl.u32 %v175, 7
    %v177 = vsub.s32 0, %v176
    %v178 = vrot.slane %v173, %v177
    %v179 = vlaneseq
    %v180 = vshrl.u32 %v179, 7
    %v181 = vsub.s32 1, %v180
    %v182 = vrot.slane %v173, %v181
    %v183 = vlaneseq
    %v184 = vshrl.u32 %v183, 7
    %v185 = vsub.s32 2, %v184
    %v186 = vrot.slane %v173, %v185
    %v187 = vlaneseq
    %v188 = vshrl.u32 %v187, 7
    %v189 = vsub.s32 3, %v188
    %v190 = vrot.slane %v173, %v189
    %vm195 = vcmask 261120
    %v197 = vsel %vm195, %v145, 0
    %v200 = vsel %vm195, %v146, 0
    %v203 = vsel %vm195, %v147, 0
    %v206 = vsel %vm195, %v148, 0
    %208 = vmatprep.subr.mxu0 %v158
    %209 = vmatpush1.msra.mxu0 %v157
    %210 = vmatprep.subr.mxu0 %v162
    %211 = vmatpush1.msra.mxu0 %v161
    %212 = vmatprep.subr.mxu0 %v166
    %213 = vmatpush1.msra.mxu0 %v165
    %214 = vmatprep.subr.mxu0 %v170
    %215 = vmatpush1.msra.mxu0 %v169
    %216 = vmatprep.subr.mxu0 0.0
    %217 = vmatpush1.msra.mxu0 0.0
    %218 = vmatprep.subr.mxu0 0.0
    %219 = vmatpush1.msra.mxu0 0.0
    %220 = vmatprep.subr.mxu0 0.0
    %221 = vmatpush1.msra.mxu0 0.0
    %222 = vmatprep.subr.mxu0 0.0
    %223 = vmatpush1.msra.mxu0 0.0
    %224 = vmatprep.subr.mxu0 0.0
    %225 = vmatpush1.msra.mxu0 0.0
    %226 = vmatprep.subr.mxu0 0.0
    %227 = vmatpush1.msra.mxu0 0.0
    %228 = vmatprep.subr.mxu0 0.0
    %229 = vmatpush1.msra.mxu0 0.0
    %230 = vmatprep.subr.mxu0 0.0
    %231 = vmatpush1.msra.mxu0 0.0
    %232 = vmatprep.subr.mxu0 0.0
    %233 = vmatpush1.msra.mxu0 0.0
    %234 = vmatprep.subr.mxu0 0.0
    %235 = vmatpush1.msra.mxu0 0.0
    %236 = vmatprep.subr.mxu0 0.0
    %237 = vmatpush1.msra.mxu0 0.0
    %238 = vmatprep.subr.mxu0 0.0
    %239 = vmatpush1.msra.mxu0 0.0
    %240 = vmatprep.subr.mxu0 0.0
    %241 = vmatpush1.msra.mxu0 0.0
    %242 = vmatprep.subr.mxu0 0.0
    %243 = vmatpush1.msra.mxu0 0.0
    %244 = vmatprep.subr.mxu0 0.0
    %245 = vmatpush1.msra.mxu0 0.0
    %246 = vmatprep.subr.mxu0 0.0
    %247 = vmatpush1.msra.mxu0 0.0
    %248 = vmatprep.subr.mxu0 0.0
    %249 = vmatpush1.msra.mxu0 0.0
    %250 = vmatprep.subr.mxu0 0.0
    %251 = vmatpush1.msra.mxu0 0.0
    %252 = vmatprep.subr.mxu0 0.0
    %253 = vmatpush1.msra.mxu0 0.0
    %254 = vmatprep.subr.mxu0 0.0
    %255 = vmatpush1.msra.mxu0 0.0
    %256 = vmatprep.subr.mxu0 0.0
    %257 = vmatpush1.msra.mxu0 0.0
    %258 = vmatprep.subr.mxu0 0.0
    %259 = vmatpush1.msra.mxu0 0.0
    %260 = vmatprep.subr.mxu0 0.0
    %261 = vmatpush1.msra.mxu0 0.0
    %262 = vmatprep.subr.mxu0 0.0
    %263 = vmatpush1.msra.mxu0 0.0
    %264 = vmatprep.subr.mxu0 0.0
    %265 = vmatpush1.msra.mxu0 0.0
    %266 = vmatprep.subr.mxu0 0.0
    %267 = vmatpush1.msra.mxu0 0.0
    %268 = vmatprep.subr.mxu0 0.0
    %269 = vmatpush1.msra.mxu0 0.0
    %270 = vmatprep.subr.mxu0 0.0
    %271 = vmatpush1.msra.mxu0 0.0
    %272 = vmatprep.mubr.f32.mxu0 0.0
    %273 = vmatmul.mubr.f32.gmra.mrb[0].mxu0 %v197
    %v274 = vpop.f32.mrb[0].mxu0
    %v275 = vadd.f32 %v178, %v274
    %v276 = vpop.f32.mrb[0].mxu0
    %v277 = vadd.f32 %v182, %v276
    %278 = vmatprep.mubr.f32.mxu0 0.0
    %279 = vmatmul.mubr.f32.gmra.mrb[0].mxu0 %v200
    %v280 = vpop.f32.mrb[0].mxu0
    %v281 = vadd.f32 %v178, %v280
    %v282 = vpop.f32.mrb[0].mxu0
    %v283 = vadd.f32 %v182, %v282
    %284 = vmatprep.mubr.f32.mxu0 0.0
    %285 = vmatmul.mubr.f32.gmra.mrb[0].mxu0 %v203
    %v286 = vpop.f32.mrb[0].mxu0
    %v287 = vadd.f32 %v178, %v286
    %v288 = vpop.f32.mrb[0].mxu0
    %v289 = vadd.f32 %v182, %v288
    %290 = vmatprep.mubr.f32.mxu0 0.0
    %291 = vmatmul.mubr.f32.gmra.mrb[0].mxu0 %v206
    %v292 = vpop.f32.mrb[0].mxu0
    %v293 = vadd.f32 %v178, %v292
    %v294 = vpop.f32.mrb[0].mxu0
    %v295 = vadd.f32 %v182, %v294
    %296 = vdwg.mxu0
    %297 = vmatprep.subr.mxu0 %v160
    %298 = vmatpush1.msra.mxu0 %v159
    %299 = vmatprep.subr.mxu0 %v164
    %300 = vmatpush1.msra.mxu0 %v163
    %301 = vmatprep.subr.mxu0 %v168
    %302 = vmatpush1.msra.mxu0 %v167
    %303 = vmatprep.subr.mxu0 %v172
    %304 = vmatpush1.msra.mxu0 %v171
    %305 = vmatprep.subr.mxu0 0.0
    %306 = vmatpush1.msra.mxu0 0.0
    %307 = vmatprep.subr.mxu0 0.0
    %308 = vmatpush1.msra.mxu0 0.0
    %309 = vmatprep.subr.mxu0 0.0
    %310 = vmatpush1.msra.mxu0 0.0
    %311 = vmatprep.subr.mxu0 0.0
    %312 = vmatpush1.msra.mxu0 0.0
    %313 = vmatprep.subr.mxu0 0.0
    %314 = vmatpush1.msra.mxu0 0.0
    %315 = vmatprep.subr.mxu0 0.0
    %316 = vmatpush1.msra.mxu0 0.0
    %317 = vmatprep.subr.mxu0 0.0
    %318 = vmatpush1.msra.mxu0 0.0
    %319 = vmatprep.subr.mxu0 0.0
    %320 = vmatpush1.msra.mxu0 0.0
    %321 = vmatprep.subr.mxu0 0.0
    %322 = vmatpush1.msra.mxu0 0.0
    %323 = vmatprep.subr.mxu0 0.0
    %324 = vmatpush1.msra.mxu0 0.0
    %325 = vmatprep.subr.mxu0 0.0
    %326 = vmatpush1.msra.mxu0 0.0
    %327 = vmatprep.subr.mxu0 0.0
    %328 = vmatpush1.msra.mxu0 0.0
    %329 = vmatprep.subr.mxu0 0.0
    %330 = vmatpush1.msra.mxu0 0.0
    %331 = vmatprep.subr.mxu0 0.0
    %332 = vmatpush1.msra.mxu0 0.0
    %333 = vmatprep.subr.mxu0 0.0
    %334 = vmatpush1.msra.mxu0 0.0
    %335 = vmatprep.subr.mxu0 0.0
    %336 = vmatpush1.msra.mxu0 0.0
    %337 = vmatprep.subr.mxu0 0.0
    %338 = vmatpush1.msra.mxu0 0.0
    %339 = vmatprep.subr.mxu0 0.0
    %340 = vmatpush1.msra.mxu0 0.0
    %341 = vmatprep.subr.mxu0 0.0
    %342 = vmatpush1.msra.mxu0 0.0
    %343 = vmatprep.subr.mxu0 0.0
    %344 = vmatpush1.msra.mxu0 0.0
    %345 = vmatprep.subr.mxu0 0.0
    %346 = vmatpush1.msra.mxu0 0.0
    %347 = vmatprep.subr.mxu0 0.0
    %348 = vmatpush1.msra.mxu0 0.0
    %349 = vmatprep.subr.mxu0 0.0
    %350 = vmatpush1.msra.mxu0 0.0
    %351 = vmatprep.subr.mxu0 0.0
    %352 = vmatpush1.msra.mxu0 0.0
    %353 = vmatprep.subr.mxu0 0.0
    %354 = vmatpush1.msra.mxu0 0.0
    %355 = vmatprep.subr.mxu0 0.0
    %356 = vmatpush1.msra.mxu0 0.0
    %357 = vmatprep.subr.mxu0 0.0
    %358 = vmatpush1.msra.mxu0 0.0
    %359 = vmatprep.subr.mxu0 0.0
    %360 = vmatpush1.msra.mxu0 0.0
    %361 = vmatprep.mubr.f32.mxu0 0.0
    %362 = vmatmul.mubr.f32.gmra.mrb[0].mxu0 %v197
    %v363 = vpop.f32.mrb[0].mxu0
    %v364 = vadd.f32 %v186, %v363
    %v365 = vpop.f32.mrb[0].mxu0
    %v366 = vadd.f32 %v190, %v365
    %367 = vmatprep.mubr.f32.mxu0 0.0
    %368 = vmatmul.mubr.f32.gmra.mrb[0].mxu0 %v200
    %v369 = vpop.f32.mrb[0].mxu0
    %v370 = vadd.f32 %v186, %v369
    %v371 = vpop.f32.mrb[0].mxu0
    %v372 = vadd.f32 %v190, %v371
    %373 = vmatprep.mubr.f32.mxu0 0.0
    %374 = vmatmul.mubr.f32.gmra.mrb[0].mxu0 %v203
    %v375 = vpop.f32.mrb[0].mxu0
    %v376 = vadd.f32 %v186, %v375
    %v377 = vpop.f32.mrb[0].mxu0
    %v378 = vadd.f32 %v190, %v377
    %379 = vmatprep.mubr.f32.mxu0 0.0
    %380 = vmatmul.mubr.f32.gmra.mrb[0].mxu0 %v206
    %v381 = vpop.f32.mrb[0].mxu0
    %v382 = vadd.f32 %v186, %v381
    %v383 = vpop.f32.mrb[0].mxu0
    %v384 = vadd.f32 %v190, %v383
    %385 = vdwg.mxu0
    %v386 = vld [vmem:[#allocation8] sm:$0xff]
    %v387 = vld [vmem:[#allocation8 + $0x8] sm:$0xff]
    %v388 = vld [vmem:[#allocation8 + $0x10] sm:$0xff]
    %v389 = vld [vmem:[#allocation8 + $0x18] sm:$0xff]
    %v390 = vld [vmem:[#allocation8 + $0x20] sm:$0xff]
    %v391 = vld [vmem:[#allocation8 + $0x28] sm:$0xff]
    %v392 = vld [vmem:[#allocation8 + $0x30] sm:$0xff]
    %v393 = vld [vmem:[#allocation8 + $0x38] sm:$0xff]
    %v394 = vld [vmem:[#allocation8 + $0x40] sm:$0xff]
    %v395 = vld [vmem:[#allocation8 + $0x48] sm:$0xff]
    %v396 = vld [vmem:[#allocation8 + $0x50] sm:$0xff]
    %v397 = vld [vmem:[#allocation8 + $0x58] sm:$0xff]
    %v398 = vld [vmem:[#allocation8 + $0x60] sm:$0xff]
    %v399 = vld [vmem:[#allocation8 + $0x68] sm:$0xff]
    %v400 = vld [vmem:[#allocation8 + $0x70] sm:$0xff]
    %v401 = vld [vmem:[#allocation8 + $0x78] sm:$0xff]
    %v402 = vld [vmem:[%s6] sm:$0xf]
    %v404 = vlaneseq
    %v405 = vshrl.u32 %v404, 7
    %v406 = vsub.s32 0, %v405
    %v407 = vrot.slane %v402, %v406
    %v408 = vlaneseq
    %v409 = vshrl.u32 %v408, 7
    %v410 = vsub.s32 1, %v409
    %v411 = vrot.slane %v402, %v410
    %v412 = vlaneseq
    %v413 = vshrl.u32 %v412, 7
    %v414 = vsub.s32 2, %v413
    %v415 = vrot.slane %v402, %v414
    %v416 = vlaneseq
    %v417 = vshrl.u32 %v416, 7
    %v418 = vsub.s32 3, %v417
    %v419 = vrot.slane %v402, %v418
    %v425 = vsel %vm195, %v149, 0
    %v428 = vsel %vm195, %v150, 0
    %v431 = vsel %vm195, %v151, 0
    %v434 = vsel %vm195, %v152, 0
    %436 = vmatprep.subr.mxu0 %v387
    %437 = vmatpush1.msra.mxu0 %v386
    %438 = vmatprep.subr.mxu0 %v391
    %439 = vmatpush1.msra.mxu0 %v390
    %440 = vmatprep.subr.mxu0 %v395
    %441 = vmatpush1.msra.mxu0 %v394
    %442 = vmatprep.subr.mxu0 %v399
    %443 = vmatpush1.msra.mxu0 %v398
    %444 = vmatprep.subr.mxu0 0.0
    %445 = vmatpush1.msra.mxu0 0.0
    %446 = vmatprep.subr.mxu0 0.0
    %447 = vmatpush1.msra.mxu0 0.0
    %448 = vmatprep.subr.mxu0 0.0
    %449 = vmatpush1.msra.mxu0 0.0
    %450 = vmatprep.subr.mxu0 0.0
    %451 = vmatpush1.msra.mxu0 0.0
    %452 = vmatprep.subr.mxu0 0.0
    %453 = vmatpush1.msra.mxu0 0.0
    %454 = vmatprep.subr.mxu0 0.0
    %455 = vmatpush1.msra.mxu0 0.0
    %456 = vmatprep.subr.mxu0 0.0
    %457 = vmatpush1.msra.mxu0 0.0
    %458 = vmatprep.subr.mxu0 0.0
    %459 = vmatpush1.msra.mxu0 0.0
    %460 = vmatprep.subr.mxu0 0.0
    %461 = vmatpush1.msra.mxu0 0.0
    %462 = vmatprep.subr.mxu0 0.0
    %463 = vmatpush1.msra.mxu0 0.0
    %464 = vmatprep.subr.mxu0 0.0
    %465 = vmatpush1.msra.mxu0 0.0
    %466 = vmatprep.subr.mxu0 0.0
    %467 = vmatpush1.msra.mxu0 0.0
    %468 = vmatprep.subr.mxu0 0.0
    %469 = vmatpush1.msra.mxu0 0.0
    %470 = vmatprep.subr.mxu0 0.0
    %471 = vmatpush1.msra.mxu0 0.0
    %472 = vmatprep.subr.mxu0 0.0
    %473 = vmatpush1.msra.mxu0 0.0
    %474 = vmatprep.subr.mxu0 0.0
    %475 = vmatpush1.msra.mxu0 0.0
    %476 = vmatprep.subr.mxu0 0.0
    %477 = vmatpush1.msra.mxu0 0.0
    %478 = vmatprep.subr.mxu0 0.0
    %479 = vmatpush1.msra.mxu0 0.0
    %480 = vmatprep.subr.mxu0 0.0
    %481 = vmatpush1.msra.mxu0 0.0
    %482 = vmatprep.subr.mxu0 0.0
    %483 = vmatpush1.msra.mxu0 0.0
    %484 = vmatprep.subr.mxu0 0.0
    %485 = vmatpush1.msra.mxu0 0.0
    %486 = vmatprep.subr.mxu0 0.0
    %487 = vmatpush1.msra.mxu0 0.0
    %488 = vmatprep.subr.mxu0 0.0
    %489 = vmatpush1.msra.mxu0 0.0
    %490 = vmatprep.subr.mxu0 0.0
    %491 = vmatpush1.msra.mxu0 0.0
    %492 = vmatprep.subr.mxu0 0.0
    %493 = vmatpush1.msra.mxu0 0.0
    %494 = vmatprep.subr.mxu0 0.0
    %495 = vmatpush1.msra.mxu0 0.0
    %496 = vmatprep.subr.mxu0 0.0
    %497 = vmatpush1.msra.mxu0 0.0
    %498 = vmatprep.subr.mxu0 0.0
    %499 = vmatpush1.msra.mxu0 0.0
    %500 = vmatprep.mubr.f32.mxu0 0.0
    %501 = vmatmul.mubr.f32.gmra.mrb[0].mxu0 %v425
    %v502 = vpop.f32.mrb[0].mxu0
    %v503 = vadd.f32 %v407, %v502
    %v504 = vpop.f32.mrb[0].mxu0
    %v505 = vadd.f32 %v411, %v504
    %506 = vmatprep.mubr.f32.mxu0 0.0
    %507 = vmatmul.mubr.f32.gmra.mrb[0].mxu0 %v428
    %v508 = vpop.f32.mrb[0].mxu0
    %v509 = vadd.f32 %v407, %v508
    %v510 = vpop.f32.mrb[0].mxu0
    %v511 = vadd.f32 %v411, %v510
    %512 = vmatprep.mubr.f32.mxu0 0.0
    %513 = vmatmul.mubr.f32.gmra.mrb[0].mxu0 %v431
    %v514 = vpop.f32.mrb[0].mxu0
    %v515 = vadd.f32 %v407, %v514
    %v516 = vpop.f32.mrb[0].mxu0
    %v517 = vadd.f32 %v411, %v516
    %518 = vmatprep.mubr.f32.mxu0 0.0
    %519 = vmatmul.mubr.f32.gmra.mrb[0].mxu0 %v434
    %v520 = vpop.f32.mrb[0].mxu0
    %v521 = vadd.f32 %v407, %v520
    %v522 = vpop.f32.mrb[0].mxu0
    %v523 = vadd.f32 %v411, %v522
    %524 = vdwg.mxu0
    %525 = vmatprep.subr.mxu0 %v389
    %526 = vmatpush1.msra.mxu0 %v388
    %527 = vmatprep.subr.mxu0 %v393
    %528 = vmatpush1.msra.mxu0 %v392
    %529 = vmatprep.subr.mxu0 %v397
    %530 = vmatpush1.msra.mxu0 %v396
    %531 = vmatprep.subr.mxu0 %v401
    %532 = vmatpush1.msra.mxu0 %v400
    %533 = vmatprep.subr.mxu0 0.0
    %534 = vmatpush1.msra.mxu0 0.0
    %535 = vmatprep.subr.mxu0 0.0
    %536 = vmatpush1.msra.mxu0 0.0
    %537 = vmatprep.subr.mxu0 0.0
    %538 = vmatpush1.msra.mxu0 0.0
    %539 = vmatprep.subr.mxu0 0.0
    %540 = vmatpush1.msra.mxu0 0.0
    %541 = vmatprep.subr.mxu0 0.0
    %542 = vmatpush1.msra.mxu0 0.0
    %543 = vmatprep.subr.mxu0 0.0
    %544 = vmatpush1.msra.mxu0 0.0
    %545 = vmatprep.subr.mxu0 0.0
    %546 = vmatpush1.msra.mxu0 0.0
    %547 = vmatprep.subr.mxu0 0.0
    %548 = vmatpush1.msra.mxu0 0.0
    %549 = vmatprep.subr.mxu0 0.0
    %550 = vmatpush1.msra.mxu0 0.0
    %551 = vmatprep.subr.mxu0 0.0
    %552 = vmatpush1.msra.mxu0 0.0
    %553 = vmatprep.subr.mxu0 0.0
    %554 = vmatpush1.msra.mxu0 0.0
    %555 = vmatprep.subr.mxu0 0.0
    %556 = vmatpush1.msra.mxu0 0.0
    %557 = vmatprep.subr.mxu0 0.0
    %558 = vmatpush1.msra.mxu0 0.0
    %559 = vmatprep.subr.mxu0 0.0
    %560 = vmatpush1.msra.mxu0 0.0
    %561 = vmatprep.subr.mxu0 0.0
    %562 = vmatpush1.msra.mxu0 0.0
    %563 = vmatprep.subr.mxu0 0.0
    %564 = vmatpush1.msra.mxu0 0.0
    %565 = vmatprep.subr.mxu0 0.0
    %566 = vmatpush1.msra.mxu0 0.0
    %567 = vmatprep.subr.mxu0 0.0
    %568 = vmatpush1.msra.mxu0 0.0
    %569 = vmatprep.subr.mxu0 0.0
    %570 = vmatpush1.msra.mxu0 0.0
    %571 = vmatprep.subr.mxu0 0.0
    %572 = vmatpush1.msra.mxu0 0.0
    %573 = vmatprep.subr.mxu0 0.0
    %574 = vmatpush1.msra.mxu0 0.0
    %575 = vmatprep.subr.mxu0 0.0
    %576 = vmatpush1.msra.mxu0 0.0
    %577 = vmatprep.subr.mxu0 0.0
    %578 = vmatpush1.msra.mxu0 0.0
    %579 = vmatprep.subr.mxu0 0.0
    %580 = vmatpush1.msra.mxu0 0.0
    %581 = vmatprep.subr.mxu0 0.0
    %582 = vmatpush1.msra.mxu0 0.0
    %583 = vmatprep.subr.mxu0 0.0
    %584 = vmatpush1.msra.mxu0 0.0
    %585 = vmatprep.subr.mxu0 0.0
    %586 = vmatpush1.msra.mxu0 0.0
    %587 = vmatprep.subr.mxu0 0.0
    %588 = vmatpush1.msra.mxu0 0.0
    %589 = vmatprep.mubr.f32.mxu0 0.0
    %590 = vmatmul.mubr.f32.gmra.mrb[0].mxu0 %v425
    %v591 = vpop.f32.mrb[0].mxu0
    %v592 = vadd.f32 %v415, %v591
    %v593 = vpop.f32.mrb[0].mxu0
    %v594 = vadd.f32 %v419, %v593
    %595 = vmatprep.mubr.f32.mxu0 0.0
    %596 = vmatmul.mubr.f32.gmra.mrb[0].mxu0 %v428
    %v597 = vpop.f32.mrb[0].mxu0
    %v598 = vadd.f32 %v415, %v597
    %v599 = vpop.f32.mrb[0].mxu0
    %v600 = vadd.f32 %v419, %v599
    %601 = vmatprep.mubr.f32.mxu0 0.0
    %602 = vmatmul.mubr.f32.gmra.mrb[0].mxu0 %v431
    %v603 = vpop.f32.mrb[0].mxu0
    %v604 = vadd.f32 %v415, %v603
    %v605 = vpop.f32.mrb[0].mxu0
    %v606 = vadd.f32 %v419, %v605
    %607 = vmatprep.mubr.f32.mxu0 0.0
    %608 = vmatmul.mubr.f32.gmra.mrb[0].mxu0 %v434
    %v609 = vpop.f32.mrb[0].mxu0
    %v610 = vadd.f32 %v415, %v609
    %v611 = vpop.f32.mrb[0].mxu0
    %v612 = vadd.f32 %v419, %v611
    %613 = vdwg.mxu0
    %v614 = vld [vmem:[#allocation9] sm:$0xff]
    %v615 = vld [vmem:[#allocation9 + $0x8] sm:$0xff]
    %v616 = vld [vmem:[#allocation9 + $0x10] sm:$0xff]
    %v617 = vld [vmem:[#allocation9 + $0x18] sm:$0xff]
    %v618 = vld [vmem:[#allocation9 + $0x20] sm:$0xff]
    %v619 = vld [vmem:[#allocation9 + $0x28] sm:$0xff]
    %v620 = vld [vmem:[#allocation9 + $0x30] sm:$0xff]
    %v621 = vld [vmem:[#allocation9 + $0x38] sm:$0xff]
    %v622 = vld [vmem:[#allocation9 + $0x40] sm:$0xff]
    %v623 = vld [vmem:[#allocation9 + $0x48] sm:$0xff]
    %v624 = vld [vmem:[#allocation9 + $0x50] sm:$0xff]
    %v625 = vld [vmem:[#allocation9 + $0x58] sm:$0xff]
    %v626 = vld [vmem:[#allocation9 + $0x60] sm:$0xff]
    %v627 = vld [vmem:[#allocation9 + $0x68] sm:$0xff]
    %v628 = vld [vmem:[#allocation9 + $0x70] sm:$0xff]
    %v629 = vld [vmem:[#allocation9 + $0x78] sm:$0xff]
    %v630 = vld [vmem:[#allocation11] sm:$0xf]
    %v632 = vlaneseq
    %v633 = vshrl.u32 %v632, 7
    %v634 = vsub.s32 0, %v633
    %v635 = vrot.slane %v630, %v634
    %v636 = vlaneseq
    %v637 = vshrl.u32 %v636, 7
    %v638 = vsub.s32 1, %v637
    %v639 = vrot.slane %v630, %v638
    %v640 = vlaneseq
    %v641 = vshrl.u32 %v640, 7
    %v642 = vsub.s32 2, %v641
    %v643 = vrot.slane %v630, %v642
    %v644 = vlaneseq
    %v645 = vshrl.u32 %v644, 7
    %v646 = vsub.s32 3, %v645
    %v647 = vrot.slane %v630, %v646
    %v653 = vsel %vm195, %v153, 0
    %v656 = vsel %vm195, %v154, 0
    %v659 = vsel %vm195, %v155, 0
    %v662 = vsel %vm195, %v156, 0
    %664 = vmatprep.subr.mxu0 %v615
    %665 = vmatpush1.msra.mxu0 %v614
    %666 = vmatprep.subr.mxu0 %v619
    %667 = vmatpush1.msra.mxu0 %v618
    %668 = vmatprep.subr.mxu0 %v623
    %669 = vmatpush1.msra.mxu0 %v622
    %670 = vmatprep.subr.mxu0 %v627
    %671 = vmatpush1.msra.mxu0 %v626
    %672 = vmatprep.subr.mxu0 0.0
    %673 = vmatpush1.msra.mxu0 0.0
    %674 = vmatprep.subr.mxu0 0.0
    %675 = vmatpush1.msra.mxu0 0.0
    %676 = vmatprep.subr.mxu0 0.0
    %677 = vmatpush1.msra.mxu0 0.0
    %678 = vmatprep.subr.mxu0 0.0
    %679 = vmatpush1.msra.mxu0 0.0
    %680 = vmatprep.subr.mxu0 0.0
    %681 = vmatpush1.msra.mxu0 0.0
    %682 = vmatprep.subr.mxu0 0.0
    %683 = vmatpush1.msra.mxu0 0.0
    %684 = vmatprep.subr.mxu0 0.0
    %685 = vmatpush1.msra.mxu0 0.0
    %686 = vmatprep.subr.mxu0 0.0
    %687 = vmatpush1.msra.mxu0 0.0
    %688 = vmatprep.subr.mxu0 0.0
    %689 = vmatpush1.msra.mxu0 0.0
    %690 = vmatprep.subr.mxu0 0.0
    %691 = vmatpush1.msra.mxu0 0.0
    %692 = vmatprep.subr.mxu0 0.0
    %693 = vmatpush1.msra.mxu0 0.0
    %694 = vmatprep.subr.mxu0 0.0
    %695 = vmatpush1.msra.mxu0 0.0
    %696 = vmatprep.subr.mxu0 0.0
    %697 = vmatpush1.msra.mxu0 0.0
    %698 = vmatprep.subr.mxu0 0.0
    %699 = vmatpush1.msra.mxu0 0.0
    %700 = vmatprep.subr.mxu0 0.0
    %701 = vmatpush1.msra.mxu0 0.0
    %702 = vmatprep.subr.mxu0 0.0
    %703 = vmatpush1.msra.mxu0 0.0
    %704 = vmatprep.subr.mxu0 0.0
    %705 = vmatpush1.msra.mxu0 0.0
    %706 = vmatprep.subr.mxu0 0.0
    %707 = vmatpush1.msra.mxu0 0.0
    %708 = vmatprep.subr.mxu0 0.0
    %709 = vmatpush1.msra.mxu0 0.0
    %710 = vmatprep.subr.mxu0 0.0
    %711 = vmatpush1.msra.mxu0 0.0
    %712 = vmatprep.subr.mxu0 0.0
    %713 = vmatpush1.msra.mxu0 0.0
    %714 = vmatprep.subr.mxu0 0.0
    %715 = vmatpush1.msra.mxu0 0.0
    %716 = vmatprep.subr.mxu0 0.0
    %717 = vmatpush1.msra.mxu0 0.0
    %718 = vmatprep.subr.mxu0 0.0
    %719 = vmatpush1.msra.mxu0 0.0
    %720 = vmatprep.subr.mxu0 0.0
    %721 = vmatpush1.msra.mxu0 0.0
    %722 = vmatprep.subr.mxu0 0.0
    %723 = vmatpush1.msra.mxu0 0.0
    %724 = vmatprep.subr.mxu0 0.0
    %725 = vmatpush1.msra.mxu0 0.0
    %726 = vmatprep.subr.mxu0 0.0
    %727 = vmatpush1.msra.mxu0 0.0
    %728 = vmatprep.mubr.f32.mxu0 0.0
    %729 = vmatmul.mubr.f32.gmra.mrb[0].mxu0 %v653
    %v730 = vpop.f32.mrb[0].mxu0
    %v731 = vadd.f32 %v635, %v730
    %v732 = vpop.f32.mrb[0].mxu0
    %v733 = vadd.f32 %v639, %v732
    %734 = vmatprep.mubr.f32.mxu0 0.0
    %735 = vmatmul.mubr.f32.gmra.mrb[0].mxu0 %v656
    %v736 = vpop.f32.mrb[0].mxu0
    %v737 = vadd.f32 %v635, %v736
    %v738 = vpop.f32.mrb[0].mxu0
    %v739 = vadd.f32 %v639, %v738
    %740 = vmatprep.mubr.f32.mxu0 0.0
    %741 = vmatmul.mubr.f32.gmra.mrb[0].mxu0 %v659
    %v742 = vpop.f32.mrb[0].mxu0
    %v743 = vadd.f32 %v635, %v742
    %v744 = vpop.f32.mrb[0].mxu0
    %v745 = vadd.f32 %v639, %v744
    %746 = vmatprep.mubr.f32.mxu0 0.0
    %747 = vmatmul.mubr.f32.gmra.mrb[0].mxu0 %v662
    %v748 = vpop.f32.mrb[0].mxu0
    %v749 = vadd.f32 %v635, %v748
    %v750 = vpop.f32.mrb[0].mxu0
    %v751 = vadd.f32 %v639, %v750
    %752 = vdwg.mxu0
    %753 = vmatprep.subr.mxu0 %v617
    %754 = vmatpush1.msra.mxu0 %v616
    %755 = vmatprep.subr.mxu0 %v621
    %756 = vmatpush1.msra.mxu0 %v620
    %757 = vmatprep.subr.mxu0 %v625
    %758 = vmatpush1.msra.mxu0 %v624
    %759 = vmatprep.subr.mxu0 %v629
    %760 = vmatpush1.msra.mxu0 %v628
    %761 = vmatprep.subr.mxu0 0.0
    %762 = vmatpush1.msra.mxu0 0.0
    %763 = vmatprep.subr.mxu0 0.0
    %764 = vmatpush1.msra.mxu0 0.0
    %765 = vmatprep.subr.mxu0 0.0
    %766 = vmatpush1.msra.mxu0 0.0
    %767 = vmatprep.subr.mxu0 0.0
    %768 = vmatpush1.msra.mxu0 0.0
    %769 = vmatprep.subr.mxu0 0.0
    %770 = vmatpush1.msra.mxu0 0.0
    %771 = vmatprep.subr.mxu0 0.0
    %772 = vmatpush1.msra.mxu0 0.0
    %773 = vmatprep.subr.mxu0 0.0
    %774 = vmatpush1.msra.mxu0 0.0
    %775 = vmatprep.subr.mxu0 0.0
    %776 = vmatpush1.msra.mxu0 0.0
    %777 = vmatprep.subr.mxu0 0.0
    %778 = vmatpush1.msra.mxu0 0.0
    %779 = vmatprep.subr.mxu0 0.0
    %780 = vmatpush1.msra.mxu0 0.0
    %781 = vmatprep.subr.mxu0 0.0
    %782 = vmatpush1.msra.mxu0 0.0
    %783 = vmatprep.subr.mxu0 0.0
    %784 = vmatpush1.msra.mxu0 0.0
    %785 = vmatprep.subr.mxu0 0.0
    %786 = vmatpush1.msra.mxu0 0.0
    %787 = vmatprep.subr.mxu0 0.0
    %788 = vmatpush1.msra.mxu0 0.0
    %789 = vmatprep.subr.mxu0 0.0
    %790 = vmatpush1.msra.mxu0 0.0
    %791 = vmatprep.subr.mxu0 0.0
    %792 = vmatpush1.msra.mxu0 0.0
    %793 = vmatprep.subr.mxu0 0.0
    %794 = vmatpush1.msra.mxu0 0.0
    %795 = vmatprep.subr.mxu0 0.0
    %796 = vmatpush1.msra.mxu0 0.0
    %797 = vmatprep.subr.mxu0 0.0
    %798 = vmatpush1.msra.mxu0 0.0
    %799 = vmatprep.subr.mxu0 0.0
    %800 = vmatpush1.msra.mxu0 0.0
    %801 = vmatprep.subr.mxu0 0.0
    %802 = vmatpush1.msra.mxu0 0.0
    %803 = vmatprep.subr.mxu0 0.0
    %804 = vmatpush1.msra.mxu0 0.0
    %805 = vmatprep.subr.mxu0 0.0
    %806 = vmatpush1.msra.mxu0 0.0
    %807 = vmatprep.subr.mxu0 0.0
    %808 = vmatpush1.msra.mxu0 0.0
    %809 = vmatprep.subr.mxu0 0.0
    %810 = vmatpush1.msra.mxu0 0.0
    %811 = vmatprep.subr.mxu0 0.0
    %812 = vmatpush1.msra.mxu0 0.0
    %813 = vmatprep.subr.mxu0 0.0
    %814 = vmatpush1.msra.mxu0 0.0
    %815 = vmatprep.subr.mxu0 0.0
    %816 = vmatpush1.msra.mxu0 0.0
    %817 = vmatprep.mubr.f32.mxu0 0.0
    %818 = vmatmul.mubr.f32.gmra.mrb[0].mxu0 %v653
    %v819 = vpop.f32.mrb[0].mxu0
    %v820 = vadd.f32 %v643, %v819
    %v821 = vpop.f32.mrb[0].mxu0
    %v822 = vadd.f32 %v647, %v821
    %823 = vmatprep.mubr.f32.mxu0 0.0
    %824 = vmatmul.mubr.f32.gmra.mrb[0].mxu0 %v656
    %v825 = vpop.f32.mrb[0].mxu0
    %v826 = vadd.f32 %v643, %v825
    %v827 = vpop.f32.mrb[0].mxu0
    %v828 = vadd.f32 %v647, %v827
    %829 = vmatprep.mubr.f32.mxu0 0.0
    %830 = vmatmul.mubr.f32.gmra.mrb[0].mxu0 %v659
    %v831 = vpop.f32.mrb[0].mxu0
    %v832 = vadd.f32 %v643, %v831
    %v833 = vpop.f32.mrb[0].mxu0
    %v834 = vadd.f32 %v647, %v833
    %835 = vmatprep.mubr.f32.mxu0 0.0
    %836 = vmatmul.mubr.f32.gmra.mrb[0].mxu0 %v662
    %v837 = vpop.f32.mrb[0].mxu0
    %v838 = vadd.f32 %v643, %v837
    %v839 = vpop.f32.mrb[0].mxu0
    %v840 = vadd.f32 %v647, %v839
    %841 = vdwg.mxu0
    %v842 = vld [vmem:[#allocation12] sm:$0xff]
    %v843 = vld [vmem:[#allocation12 + $0x8] sm:$0xff]
    %v844 = vld [vmem:[#allocation12 + $0x10] sm:$0xff]
    %v845 = vld [vmem:[#allocation12 + $0x18] sm:$0xff]
    %v846 = vld [vmem:[#allocation12 + $0x20] sm:$0xff]
    %v847 = vld [vmem:[#allocation12 + $0x28] sm:$0xff]
    %v848 = vld [vmem:[#allocation12 + $0x30] sm:$0xff]
    %v849 = vld [vmem:[#allocation12 + $0x38] sm:$0xff]
    %v850 = vld [vmem:[#allocation12 + $0x40] sm:$0xff]
    %v851 = vld [vmem:[#allocation12 + $0x48] sm:$0xff]
    %v852 = vld [vmem:[#allocation12 + $0x50] sm:$0xff]
    %v853 = vld [vmem:[#allocation12 + $0x58] sm:$0xff]
    %v854 = vld [vmem:[#allocation12 + $0x60] sm:$0xff]
    %v855 = vld [vmem:[#allocation12 + $0x68] sm:$0xff]
    %v856 = vld [vmem:[#allocation12 + $0x70] sm:$0xff]
    %v857 = vld [vmem:[#allocation12 + $0x78] sm:$0xff]
    %v858 = vld [vmem:[#allocation14] sm:$0xf]
    %v860 = vlaneseq
    %v861 = vshrl.u32 %v860, 7
    %v862 = vsub.s32 0, %v861
    %v863 = vrot.slane %v858, %v862
    %v864 = vlaneseq
    %v865 = vshrl.u32 %v864, 7
    %v866 = vsub.s32 1, %v865
    %v867 = vrot.slane %v858, %v866
    %v868 = vlaneseq
    %v869 = vshrl.u32 %v868, 7
    %v870 = vsub.s32 2, %v869
    %v871 = vrot.slane %v858, %v870
    %v872 = vlaneseq
    %v873 = vshrl.u32 %v872, 7
    %v874 = vsub.s32 3, %v873
    %v875 = vrot.slane %v858, %v874
    %880 = vmatprep.subr.mxu0 %v843
    %881 = vmatpush1.msra.mxu0 %v842
    %882 = vmatprep.subr.mxu0 %v847
    %883 = vmatpush1.msra.mxu0 %v846
    %884 = vmatprep.subr.mxu0 %v851
    %885 = vmatpush1.msra.mxu0 %v850
    %886 = vmatprep.subr.mxu0 %v855
    %887 = vmatpush1.msra.mxu0 %v854
    %888 = vmatprep.subr.mxu0 0.0
    %889 = vmatpush1.msra.mxu0 0.0
    %890 = vmatprep.subr.mxu0 0.0
    %891 = vmatpush1.msra.mxu0 0.0
    %892 = vmatprep.subr.mxu0 0.0
    %893 = vmatpush1.msra.mxu0 0.0
    %894 = vmatprep.subr.mxu0 0.0
    %895 = vmatpush1.msra.mxu0 0.0
    %896 = vmatprep.subr.mxu0 0.0
    %897 = vmatpush1.msra.mxu0 0.0
    %898 = vmatprep.subr.mxu0 0.0
    %899 = vmatpush1.msra.mxu0 0.0
    %900 = vmatprep.subr.mxu0 0.0
    %901 = vmatpush1.msra.mxu0 0.0
    %902 = vmatprep.subr.mxu0 0.0
    %903 = vmatpush1.msra.mxu0 0.0
    %904 = vmatprep.subr.mxu0 0.0
    %905 = vmatpush1.msra.mxu0 0.0
    %906 = vmatprep.subr.mxu0 0.0
    %907 = vmatpush1.msra.mxu0 0.0
    %908 = vmatprep.subr.mxu0 0.0
    %909 = vmatpush1.msra.mxu0 0.0
    %910 = vmatprep.subr.mxu0 0.0
    %911 = vmatpush1.msra.mxu0 0.0
    %912 = vmatprep.subr.mxu0 0.0
    %913 = vmatpush1.msra.mxu0 0.0
    %914 = vmatprep.subr.mxu0 0.0
    %915 = vmatpush1.msra.mxu0 0.0
    %916 = vmatprep.subr.mxu0 0.0
    %917 = vmatpush1.msra.mxu0 0.0
    %918 = vmatprep.subr.mxu0 0.0
    %919 = vmatpush1.msra.mxu0 0.0
    %920 = vmatprep.subr.mxu0 0.0
    %921 = vmatpush1.msra.mxu0 0.0
    %922 = vmatprep.subr.mxu0 0.0
    %923 = vmatpush1.msra.mxu0 0.0
    %924 = vmatprep.subr.mxu0 0.0
    %925 = vmatpush1.msra.mxu0 0.0
    %926 = vmatprep.subr.mxu0 0.0
    %927 = vmatpush1.msra.mxu0 0.0
    %928 = vmatprep.subr.mxu0 0.0
    %929 = vmatpush1.msra.mxu0 0.0
    %930 = vmatprep.subr.mxu0 0.0
    %931 = vmatpush1.msra.mxu0 0.0
    %932 = vmatprep.subr.mxu0 0.0
    %933 = vmatpush1.msra.mxu0 0.0
    %934 = vmatprep.subr.mxu0 0.0
    %935 = vmatpush1.msra.mxu0 0.0
    %936 = vmatprep.subr.mxu0 0.0
    %937 = vmatpush1.msra.mxu0 0.0
    %938 = vmatprep.subr.mxu0 0.0
    %939 = vmatpush1.msra.mxu0 0.0
    %940 = vmatprep.subr.mxu0 0.0
    %941 = vmatpush1.msra.mxu0 0.0
    %942 = vmatprep.subr.mxu0 0.0
    %943 = vmatpush1.msra.mxu0 0.0
    %944 = vmatprep.mubr.f32.mxu0 0.0
    %945 = vmatmul.mubr.f32.gmra.mrb[0].mxu0 %v197
    %v946 = vpop.f32.mrb[0].mxu0
    %v947 = vadd.f32 %v863, %v946
    %v948 = vpop.f32.mrb[0].mxu0
    %v949 = vadd.f32 %v867, %v948
    %950 = vmatprep.mubr.f32.mxu0 0.0
    %951 = vmatmul.mubr.f32.gmra.mrb[0].mxu0 %v200
    %v952 = vpop.f32.mrb[0].mxu0
    %v953 = vadd.f32 %v863, %v952
    %v954 = vpop.f32.mrb[0].mxu0
    %v955 = vadd.f32 %v867, %v954
    %956 = vmatprep.mubr.f32.mxu0 0.0
    %957 = vmatmul.mubr.f32.gmra.mrb[0].mxu0 %v203
    %v958 = vpop.f32.mrb[0].mxu0
    %v959 = vadd.f32 %v863, %v958
    %v960 = vpop.f32.mrb[0].mxu0
    %v961 = vadd.f32 %v867, %v960
    %962 = vmatprep.mubr.f32.mxu0 0.0
    %963 = vmatmul.mubr.f32.gmra.mrb[0].mxu0 %v206
    %v964 = vpop.f32.mrb[0].mxu0
    %v965 = vadd.f32 %v863, %v964
    %v966 = vpop.f32.mrb[0].mxu0
    %v967 = vadd.f32 %v867, %v966
    %968 = vdwg.mxu0
    %969 = vmatprep.subr.mxu0 %v845
    %970 = vmatpush1.msra.mxu0 %v844
    %971 = vmatprep.subr.mxu0 %v849
    %972 = vmatpush1.msra.mxu0 %v848
    %973 = vmatprep.subr.mxu0 %v853
    %974 = vmatpush1.msra.mxu0 %v852
    %975 = vmatprep.subr.mxu0 %v857
    %976 = vmatpush1.msra.mxu0 %v856
    %977 = vmatprep.subr.mxu0 0.0
    %978 = vmatpush1.msra.mxu0 0.0
    %979 = vmatprep.subr.mxu0 0.0
    %980 = vmatpush1.msra.mxu0 0.0
    %981 = vmatprep.subr.mxu0 0.0
    %982 = vmatpush1.msra.mxu0 0.0
    %983 = vmatprep.subr.mxu0 0.0
    %984 = vmatpush1.msra.mxu0 0.0
    %985 = vmatprep.subr.mxu0 0.0
    %986 = vmatpush1.msra.mxu0 0.0
    %987 = vmatprep.subr.mxu0 0.0
    %988 = vmatpush1.msra.mxu0 0.0
    %989 = vmatprep.subr.mxu0 0.0
    %990 = vmatpush1.msra.mxu0 0.0
    %991 = vmatprep.subr.mxu0 0.0
    %992 = vmatpush1.msra.mxu0 0.0
    %993 = vmatprep.subr.mxu0 0.0
    %994 = vmatpush1.msra.mxu0 0.0
    %995 = vmatprep.subr.mxu0 0.0
    %996 = vmatpush1.msra.mxu0 0.0
    %997 = vmatprep.subr.mxu0 0.0
    %998 = vmatpush1.msra.mxu0 0.0
    %999 = vmatprep.subr.mxu0 0.0
    %1000 = vmatpush1.msra.mxu0 0.0
    %1001 = vmatprep.subr.mxu0 0.0
    %1002 = vmatpush1.msra.mxu0 0.0
    %1003 = vmatprep.subr.mxu0 0.0
    %1004 = vmatpush1.msra.mxu0 0.0
    %1005 = vmatprep.subr.mxu0 0.0
    %1006 = vmatpush1.msra.mxu0 0.0
    %1007 = vmatprep.subr.mxu0 0.0
    %1008 = vmatpush1.msra.mxu0 0.0
    %1009 = vmatprep.subr.mxu0 0.0
    %1010 = vmatpush1.msra.mxu0 0.0
    %1011 = vmatprep.subr.mxu0 0.0
    %1012 = vmatpush1.msra.mxu0 0.0
    %1013 = vmatprep.subr.mxu0 0.0
    %1014 = vmatpush1.msra.mxu0 0.0
    %1015 = vmatprep.subr.mxu0 0.0
    %1016 = vmatpush1.msra.mxu0 0.0
    %1017 = vmatprep.subr.mxu0 0.0
    %1018 = vmatpush1.msra.mxu0 0.0
    %1019 = vmatprep.subr.mxu0 0.0
    %1020 = vmatpush1.msra.mxu0 0.0
    %1021 = vmatprep.subr.mxu0 0.0
    %1022 = vmatpush1.msra.mxu0 0.0
    %1023 = vmatprep.subr.mxu0 0.0
    %1024 = vmatpush1.msra.mxu0 0.0
    %1025 = vmatprep.subr.mxu0 0.0
    %1026 = vmatpush1.msra.mxu0 0.0
    %1027 = vmatprep.subr.mxu0 0.0
    %1028 = vmatpush1.msra.mxu0 0.0
    %1029 = vmatprep.subr.mxu0 0.0
    %1030 = vmatpush1.msra.mxu0 0.0
    %1031 = vmatprep.subr.mxu0 0.0
    %1032 = vmatpush1.msra.mxu0 0.0
    %1033 = vmatprep.mubr.f32.mxu0 0.0
    %1034 = vmatmul.mubr.f32.gmra.mrb[0].mxu0 %v197
    %v1035 = vpop.f32.mrb[0].mxu0
    %v1036 = vadd.f32 %v871, %v1035
    %v1037 = vpop.f32.mrb[0].mxu0
    %v1038 = vadd.f32 %v875, %v1037
    %1039 = vmatprep.mubr.f32.mxu0 0.0
    %1040 = vmatmul.mubr.f32.gmra.mrb[0].mxu0 %v200
    %v1041 = vpop.f32.mrb[0].mxu0
    %v1042 = vadd.f32 %v871, %v1041
    %v1043 = vpop.f32.mrb[0].mxu0
    %v1044 = vadd.f32 %v875, %v1043
    %1045 = vmatprep.mubr.f32.mxu0 0.0
    %1046 = vmatmul.mubr.f32.gmra.mrb[0].mxu0 %v203
    %v1047 = vpop.f32.mrb[0].mxu0
    %v1048 = vadd.f32 %v871, %v1047
    %v1049 = vpop.f32.mrb[0].mxu0
    %v1050 = vadd.f32 %v875, %v1049
    %1051 = vmatprep.mubr.f32.mxu0 0.0
    %1052 = vmatmul.mubr.f32.gmra.mrb[0].mxu0 %v206
    %v1053 = vpop.f32.mrb[0].mxu0
    %v1054 = vadd.f32 %v871, %v1053
    %v1055 = vpop.f32.mrb[0].mxu0
    %v1056 = vadd.f32 %v875, %v1055
    %1057 = vdwg.mxu0
    %v1058 = vld [vmem:[%s11] sm:$0xff]
    %v1059 = vld [vmem:[%s11 + $0x8] sm:$0xff]
    %v1060 = vld [vmem:[%s11 + $0x10] sm:$0xff]
    %v1061 = vld [vmem:[%s11 + $0x18] sm:$0xff]
    %v1062 = vld [vmem:[%s11 + $0x20] sm:$0xff]
    %v1063 = vld [vmem:[%s11 + $0x28] sm:$0xff]
    %v1064 = vld [vmem:[%s11 + $0x30] sm:$0xff]
    %v1065 = vld [vmem:[%s11 + $0x38] sm:$0xff]
    %v1066 = vld [vmem:[%s11 + $0x40] sm:$0xff]
    %v1067 = vld [vmem:[%s11 + $0x48] sm:$0xff]
    %v1068 = vld [vmem:[%s11 + $0x50] sm:$0xff]
    %v1069 = vld [vmem:[%s11 + $0x58] sm:$0xff]
    %v1070 = vld [vmem:[%s11 + $0x60] sm:$0xff]
    %v1071 = vld [vmem:[%s11 + $0x68] sm:$0xff]
    %v1072 = vld [vmem:[%s11 + $0x70] sm:$0xff]
    %v1073 = vld [vmem:[%s11 + $0x78] sm:$0xff]
    %v1074 = vld [vmem:[%s11 + $0x80] sm:$0xff]
    %v1075 = vld [vmem:[%s11 + $0x88] sm:$0xff]
    %v1076 = vld [vmem:[%s11 + $0x90] sm:$0xff]
    %v1077 = vld [vmem:[%s11 + $0x98] sm:$0xff]
    %v1078 = vld [vmem:[%s11 + $0xa0] sm:$0xff]
    %v1079 = vld [vmem:[%s11 + $0xa8] sm:$0xff]
    %v1080 = vld [vmem:[%s11 + $0xb0] sm:$0xff]
    %v1081 = vld [vmem:[%s11 + $0xb8] sm:$0xff]
    %v1082 = vld [vmem:[%s11 + $0xc0] sm:$0xff]
    %v1083 = vld [vmem:[%s11 + $0xc8] sm:$0xff]
    %v1084 = vld [vmem:[%s11 + $0xd0] sm:$0xff]
    %v1085 = vld [vmem:[%s11 + $0xd8] sm:$0xff]
    %v1086 = vld [vmem:[%s11 + $0xe0] sm:$0xff]
    %v1087 = vld [vmem:[%s11 + $0xe8] sm:$0xff]
    %v1088 = vld [vmem:[%s11 + $0xf0] sm:$0xff]
    %v1089 = vld [vmem:[%s11 + $0xf8] sm:$0xff]
    %v1090 = vld [vmem:[%s11 + $0x100] sm:$0xff]
    %v1091 = vld [vmem:[%s11 + $0x108] sm:$0xff]
    %v1092 = vld [vmem:[%s11 + $0x110] sm:$0xff]
    %v1093 = vld [vmem:[%s11 + $0x118] sm:$0xff]
    %v1094 = vld [vmem:[%s11 + $0x120] sm:$0xff]
    %v1095 = vld [vmem:[%s11 + $0x128] sm:$0xff]
    %v1096 = vld [vmem:[%s11 + $0x130] sm:$0xff]
    %v1097 = vld [vmem:[%s11 + $0x138] sm:$0xff]
    %v1098 = vld [vmem:[%s11 + $0x140] sm:$0xff]
    %v1099 = vld [vmem:[%s11 + $0x148] sm:$0xff]
    %v1100 = vld [vmem:[%s11 + $0x150] sm:$0xff]
    %v1101 = vld [vmem:[%s11 + $0x158] sm:$0xff]
    %v1102 = vld [vmem:[%s11 + $0x160] sm:$0xff]
    %v1103 = vld [vmem:[%s11 + $0x168] sm:$0xff]
    %v1104 = vld [vmem:[%s11 + $0x170] sm:$0xff]
    %v1105 = vld [vmem:[%s11 + $0x178] sm:$0xff]
    %v1106 = vld [vmem:[%s11 + $0x180] sm:$0xff]
    %v1107 = vld [vmem:[%s11 + $0x188] sm:$0xff]
    %v1108 = vld [vmem:[%s11 + $0x190] sm:$0xff]
    %v1109 = vld [vmem:[%s11 + $0x198] sm:$0xff]
    %v1110 = vld [vmem:[%s11 + $0x1a0] sm:$0xff]
    %v1111 = vld [vmem:[%s11 + $0x1a8] sm:$0xff]
    %v1112 = vld [vmem:[%s11 + $0x1b0] sm:$0xff]
    %v1113 = vld [vmem:[%s11 + $0x1b8] sm:$0xff]
    %v1114 = vld [vmem:[%s11 + $0x1c0] sm:$0xff]
    %v1115 = vld [vmem:[%s11 + $0x1c8] sm:$0xff]
    %v1116 = vld [vmem:[%s11 + $0x1d0] sm:$0xff]
    %v1117 = vld [vmem:[%s11 + $0x1d8] sm:$0xff]
    %v1118 = vld [vmem:[%s11 + $0x1e0] sm:$0xff]
    %v1119 = vld [vmem:[%s11 + $0x1e8] sm:$0xff]
    %v1120 = vld [vmem:[%s11 + $0x1f0] sm:$0xff]
    %v1121 = vld [vmem:[%s11 + $0x1f8] sm:$0xff]
    %1122 = vmatprep.subr.mxu0 0.0
    %1123 = vmatpush1.xpose.msra.mxu0 %v503
    %1124 = vmatprep.subr.mxu0 0.0
    %1125 = vmatpush1.xpose.msra.mxu0 0.0
    %1126 = vmatprep.subr.mxu0 0.0
    %1127 = vmatpush1.xpose.msra.mxu0 0.0
    %1128 = vmatprep.subr.mxu0 0.0
    %1129 = vmatpush1.xpose.msra.mxu0 0.0
    %1130 = vmatprep.subr.mxu0 0.0
    %1131 = vmatpush1.xpose.msra.mxu0 0.0
    %1132 = vmatprep.subr.mxu0 0.0
    %1133 = vmatpush1.xpose.msra.mxu0 0.0
    %1134 = vmatprep.subr.mxu0 0.0
    %1135 = vmatpush1.xpose.msra.mxu0 0.0
    %1136 = vmatprep.subr.mxu0 0.0
    %1137 = vmatpush1.xpose.msra.mxu0 0.0
    %1138 = vmatprep.subr.mxu0 0.0
    %1139 = vmatpush1.xpose.msra.mxu0 0.0
    %1140 = vmatprep.subr.mxu0 0.0
    %1141 = vmatpush1.xpose.msra.mxu0 0.0
    %1142 = vmatprep.subr.mxu0 0.0
    %1143 = vmatpush1.xpose.msra.mxu0 0.0
    %1144 = vmatprep.subr.mxu0 0.0
    %1145 = vmatpush1.xpose.msra.mxu0 0.0
    %1146 = vmatprep.subr.mxu0 0.0
    %1147 = vmatpush1.xpose.msra.mxu0 0.0
    %1148 = vmatprep.subr.mxu0 0.0
    %1149 = vmatpush1.xpose.msra.mxu0 0.0
    %1150 = vmatprep.subr.mxu0 0.0
    %1151 = vmatpush1.xpose.msra.mxu0 0.0
    %1152 = vmatprep.subr.mxu0 0.0
    %1153 = vmatpush1.xpose.msra.mxu0 0.0
    %1154 = vmatprep.subr.mxu0 0.0
    %1155 = vmatpush1.xpose.msra.mxu0 0.0
    %1156 = vmatprep.subr.mxu0 0.0
    %1157 = vmatpush1.xpose.msra.mxu0 0.0
    %1158 = vmatprep.subr.mxu0 0.0
    %1159 = vmatpush1.xpose.msra.mxu0 0.0
    %1160 = vmatprep.subr.mxu0 0.0
    %1161 = vmatpush1.xpose.msra.mxu0 0.0
    %1162 = vmatprep.subr.mxu0 0.0
    %1163 = vmatpush1.xpose.msra.mxu0 0.0
    %1164 = vmatprep.subr.mxu0 0.0
    %1165 = vmatpush1.xpose.msra.mxu0 0.0
    %1166 = vmatprep.subr.mxu0 0.0
    %1167 = vmatpush1.xpose.msra.mxu0 0.0
    %1168 = vmatprep.subr.mxu0 0.0
    %1169 = vmatpush1.xpose.msra.mxu0 0.0
    %1170 = vmatprep.subr.mxu0 0.0
    %1171 = vmatpush1.xpose.msra.mxu0 0.0
    %1172 = vmatprep.subr.mxu0 0.0
    %1173 = vmatpush1.xpose.msra.mxu0 0.0
    %1174 = vmatprep.subr.mxu0 0.0
    %1175 = vmatpush1.xpose.msra.mxu0 0.0
    %1176 = vmatprep.subr.mxu0 0.0
    %1177 = vmatpush1.xpose.msra.mxu0 0.0
    %1178 = vmatprep.subr.mxu0 0.0
    %1179 = vmatpush1.xpose.msra.mxu0 0.0
    %1180 = vmatprep.subr.mxu0 0.0
    %1181 = vmatpush1.xpose.msra.mxu0 0.0
    %1182 = vmatprep.subr.mxu0 0.0
    %1183 = vmatpush1.xpose.msra.mxu0 0.0
    %1184 = vmatprep.subr.mxu0 0.0
    %1185 = vmatpush1.xpose.msra.mxu0 0.0
    %1186 = vmatprep.mubr.f32.mxu0 0.0
    %1187 = vmatmul.mubr.f32.gmra.mrb[0].mxu0 %v275
    %v1188 = vpop.f32.mrb[0].mxu0
    %v1189 = vadd.f32 0.0, %v1188
    %v1190 = vpop.f32.mrb[0].mxu0
    %1191 = vdwg.mxu0
    %1192 = vmatprep.subr.mxu0 0.0
    %1193 = vmatpush1.xpose.msra.mxu0 %v509
    %1194 = vmatprep.subr.mxu0 0.0
    %1195 = vmatpush1.xpose.msra.mxu0 0.0
    %1196 = vmatprep.subr.mxu0 0.0
    %1197 = vmatpush1.xpose.msra.mxu0 0.0
    %1198 = vmatprep.subr.mxu0 0.0
    %1199 = vmatpush1.xpose.msra.mxu0 0.0
    %1200 = vmatprep.subr.mxu0 0.0
    %1201 = vmatpush1.xpose.msra.mxu0 0.0
    %1202 = vmatprep.subr.mxu0 0.0
    %1203 = vmatpush1.xpose.msra.mxu0 0.0
    %1204 = vmatprep.subr.mxu0 0.0
    %1205 = vmatpush1.xpose.msra.mxu0 0.0
    %1206 = vmatprep.subr.mxu0 0.0
    %1207 = vmatpush1.xpose.msra.mxu0 0.0
    %1208 = vmatprep.subr.mxu0 0.0
    %1209 = vmatpush1.xpose.msra.mxu0 0.0
    %1210 = vmatprep.subr.mxu0 0.0
    %1211 = vmatpush1.xpose.msra.mxu0 0.0
    %1212 = vmatprep.subr.mxu0 0.0
    %1213 = vmatpush1.xpose.msra.mxu0 0.0
    %1214 = vmatprep.subr.mxu0 0.0
    %1215 = vmatpush1.xpose.msra.mxu0 0.0
    %1216 = vmatprep.subr.mxu0 0.0
    %1217 = vmatpush1.xpose.msra.mxu0 0.0
    %1218 = vmatprep.subr.mxu0 0.0
    %1219 = vmatpush1.xpose.msra.mxu0 0.0
    %1220 = vmatprep.subr.mxu0 0.0
    %1221 = vmatpush1.xpose.msra.mxu0 0.0
    %1222 = vmatprep.subr.mxu0 0.0
    %1223 = vmatpush1.xpose.msra.mxu0 0.0
    %1224 = vmatprep.subr.mxu0 0.0
    %1225 = vmatpush1.xpose.msra.mxu0 0.0
    %1226 = vmatprep.subr.mxu0 0.0
    %1227 = vmatpush1.xpose.msra.mxu0 0.0
    %1228 = vmatprep.subr.mxu0 0.0
    %1229 = vmatpush1.xpose.msra.mxu0 0.0
    %1230 = vmatprep.subr.mxu0 0.0
    %1231 = vmatpush1.xpose.msra.mxu0 0.0
    %1232 = vmatprep.subr.mxu0 0.0
    %1233 = vmatpush1.xpose.msra.mxu0 0.0
    %1234 = vmatprep.subr.mxu0 0.0
    %1235 = vmatpush1.xpose.msra.mxu0 0.0
    %1236 = vmatprep.subr.mxu0 0.0
    %1237 = vmatpush1.xpose.msra.mxu0 0.0
    %1238 = vmatprep.subr.mxu0 0.0
    %1239 = vmatpush1.xpose.msra.mxu0 0.0
    %1240 = vmatprep.subr.mxu0 0.0
    %1241 = vmatpush1.xpose.msra.mxu0 0.0
    %1242 = vmatprep.subr.mxu0 0.0
    %1243 = vmatpush1.xpose.msra.mxu0 0.0
    %1244 = vmatprep.subr.mxu0 0.0
    %1245 = vmatpush1.xpose.msra.mxu0 0.0
    %1246 = vmatprep.subr.mxu0 0.0
    %1247 = vmatpush1.xpose.msra.mxu0 0.0
    %1248 = vmatprep.subr.mxu0 0.0
    %1249 = vmatpush1.xpose.msra.mxu0 0.0
    %1250 = vmatprep.subr.mxu0 0.0
    %1251 = vmatpush1.xpose.msra.mxu0 0.0
    %1252 = vmatprep.subr.mxu0 0.0
    %1253 = vmatpush1.xpose.msra.mxu0 0.0
    %1254 = vmatprep.subr.mxu0 0.0
    %1255 = vmatpush1.xpose.msra.mxu0 0.0
    %1256 = vmatprep.mubr.f32.mxu0 0.0
    %1257 = vmatmul.mubr.f32.gmra.mrb[0].mxu0 %v281
    %v1258 = vpop.f32.mrb[0].mxu0
    %v1259 = vadd.f32 0.0, %v1258
    %v1260 = vpop.f32.mrb[0].mxu0
    %1261 = vdwg.mxu0
    %1262 = vmatprep.subr.mxu0 0.0
    %1263 = vmatpush1.xpose.msra.mxu0 %v515
    %1264 = vmatprep.subr.mxu0 0.0
    %1265 = vmatpush1.xpose.msra.mxu0 0.0
    %1266 = vmatprep.subr.mxu0 0.0
    %1267 = vmatpush1.xpose.msra.mxu0 0.0
    %1268 = vmatprep.subr.mxu0 0.0
    %1269 = vmatpush1.xpose.msra.mxu0 0.0
    %1270 = vmatprep.subr.mxu0 0.0
    %1271 = vmatpush1.xpose.msra.mxu0 0.0
    %1272 = vmatprep.subr.mxu0 0.0
    %1273 = vmatpush1.xpose.msra.mxu0 0.0
    %1274 = vmatprep.subr.mxu0 0.0
    %1275 = vmatpush1.xpose.msra.mxu0 0.0
    %1276 = vmatprep.subr.mxu0 0.0
    %1277 = vmatpush1.xpose.msra.mxu0 0.0
    %1278 = vmatprep.subr.mxu0 0.0
    %1279 = vmatpush1.xpose.msra.mxu0 0.0
    %1280 = vmatprep.subr.mxu0 0.0
    %1281 = vmatpush1.xpose.msra.mxu0 0.0
    %1282 = vmatprep.subr.mxu0 0.0
    %1283 = vmatpush1.xpose.msra.mxu0 0.0
    %1284 = vmatprep.subr.mxu0 0.0
    %1285 = vmatpush1.xpose.msra.mxu0 0.0
    %1286 = vmatprep.subr.mxu0 0.0
    %1287 = vmatpush1.xpose.msra.mxu0 0.0
    %1288 = vmatprep.subr.mxu0 0.0
    %1289 = vmatpush1.xpose.msra.mxu0 0.0
    %1290 = vmatprep.subr.mxu0 0.0
    %1291 = vmatpush1.xpose.msra.mxu0 0.0
    %1292 = vmatprep.subr.mxu0 0.0
    %1293 = vmatpush1.xpose.msra.mxu0 0.0
    %1294 = vmatprep.subr.mxu0 0.0
    %1295 = vmatpush1.xpose.msra.mxu0 0.0
    %1296 = vmatprep.subr.mxu0 0.0
    %1297 = vmatpush1.xpose.msra.mxu0 0.0
    %1298 = vmatprep.subr.mxu0 0.0
    %1299 = vmatpush1.xpose.msra.mxu0 0.0
    %1300 = vmatprep.subr.mxu0 0.0
    %1301 = vmatpush1.xpose.msra.mxu0 0.0
    %1302 = vmatprep.subr.mxu0 0.0
    %1303 = vmatpush1.xpose.msra.mxu0 0.0
    %1304 = vmatprep.subr.mxu0 0.0
    %1305 = vmatpush1.xpose.msra.mxu0 0.0
    %1306 = vmatprep.subr.mxu0 0.0
    %1307 = vmatpush1.xpose.msra.mxu0 0.0
    %1308 = vmatprep.subr.mxu0 0.0
    %1309 = vmatpush1.xpose.msra.mxu0 0.0
    %1310 = vmatprep.subr.mxu0 0.0
    %1311 = vmatpush1.xpose.msra.mxu0 0.0
    %1312 = vmatprep.subr.mxu0 0.0
    %1313 = vmatpush1.xpose.msra.mxu0 0.0
    %1314 = vmatprep.subr.mxu0 0.0
    %1315 = vmatpush1.xpose.msra.mxu0 0.0
    %1316 = vmatprep.subr.mxu0 0.0
    %1317 = vmatpush1.xpose.msra.mxu0 0.0
    %1318 = vmatprep.subr.mxu0 0.0
    %1319 = vmatpush1.xpose.msra.mxu0 0.0
    %1320 = vmatprep.subr.mxu0 0.0
    %1321 = vmatpush1.xpose.msra.mxu0 0.0
    %1322 = vmatprep.subr.mxu0 0.0
    %1323 = vmatpush1.xpose.msra.mxu0 0.0
    %1324 = vmatprep.subr.mxu0 0.0
    %1325 = vmatpush1.xpose.msra.mxu0 0.0
    %1326 = vmatprep.mubr.f32.mxu0 0.0
    %1327 = vmatmul.mubr.f32.gmra.mrb[0].mxu0 %v287
    %v1328 = vpop.f32.mrb[0].mxu0
    %v1329 = vadd.f32 0.0, %v1328
    %v1330 = vpop.f32.mrb[0].mxu0
    %1331 = vdwg.mxu0
    %1332 = vmatprep.subr.mxu0 0.0
    %1333 = vmatpush1.xpose.msra.mxu0 %v521
    %1334 = vmatprep.subr.mxu0 0.0
    %1335 = vmatpush1.xpose.msra.mxu0 0.0
    %1336 = vmatprep.subr.mxu0 0.0
    %1337 = vmatpush1.xpose.msra.mxu0 0.0
    %1338 = vmatprep.subr.mxu0 0.0
    %1339 = vmatpush1.xpose.msra.mxu0 0.0
    %1340 = vmatprep.subr.mxu0 0.0
    %1341 = vmatpush1.xpose.msra.mxu0 0.0
    %1342 = vmatprep.subr.mxu0 0.0
    %1343 = vmatpush1.xpose.msra.mxu0 0.0
    %1344 = vmatprep.subr.mxu0 0.0
    %1345 = vmatpush1.xpose.msra.mxu0 0.0
    %1346 = vmatprep.subr.mxu0 0.0
    %1347 = vmatpush1.xpose.msra.mxu0 0.0
    %1348 = vmatprep.subr.mxu0 0.0
    %1349 = vmatpush1.xpose.msra.mxu0 0.0
    %1350 = vmatprep.subr.mxu0 0.0
    %1351 = vmatpush1.xpose.msra.mxu0 0.0
    %1352 = vmatprep.subr.mxu0 0.0
    %1353 = vmatpush1.xpose.msra.mxu0 0.0
    %1354 = vmatprep.subr.mxu0 0.0
    %1355 = vmatpush1.xpose.msra.mxu0 0.0
    %1356 = vmatprep.subr.mxu0 0.0
    %1357 = vmatpush1.xpose.msra.mxu0 0.0
    %1358 = vmatprep.subr.mxu0 0.0
    %1359 = vmatpush1.xpose.msra.mxu0 0.0
    %1360 = vmatprep.subr.mxu0 0.0
    %1361 = vmatpush1.xpose.msra.mxu0 0.0
    %1362 = vmatprep.subr.mxu0 0.0
    %1363 = vmatpush1.xpose.msra.mxu0 0.0
    %1364 = vmatprep.subr.mxu0 0.0
    %1365 = vmatpush1.xpose.msra.mxu0 0.0
    %1366 = vmatprep.subr.mxu0 0.0
    %1367 = vmatpush1.xpose.msra.mxu0 0.0
    %1368 = vmatprep.subr.mxu0 0.0
    %1369 = vmatpush1.xpose.msra.mxu0 0.0
    %1370 = vmatprep.subr.mxu0 0.0
    %1371 = vmatpush1.xpose.msra.mxu0 0.0
    %1372 = vmatprep.subr.mxu0 0.0
    %1373 = vmatpush1.xpose.msra.mxu0 0.0
    %1374 = vmatprep.subr.mxu0 0.0
    %1375 = vmatpush1.xpose.msra.mxu0 0.0
    %1376 = vmatprep.subr.mxu0 0.0
    %1377 = vmatpush1.xpose.msra.mxu0 0.0
    %1378 = vmatprep.subr.mxu0 0.0
    %1379 = vmatpush1.xpose.msra.mxu0 0.0
    %1380 = vmatprep.subr.mxu0 0.0
    %1381 = vmatpush1.xpose.msra.mxu0 0.0
    %1382 = vmatprep.subr.mxu0 0.0
    %1383 = vmatpush1.xpose.msra.mxu0 0.0
    %1384 = vmatprep.subr.mxu0 0.0
    %1385 = vmatpush1.xpose.msra.mxu0 0.0
    %1386 = vmatprep.subr.mxu0 0.0
    %1387 = vmatpush1.xpose.msra.mxu0 0.0
    %1388 = vmatprep.subr.mxu0 0.0
    %1389 = vmatpush1.xpose.msra.mxu0 0.0
    %1390 = vmatprep.subr.mxu0 0.0
    %1391 = vmatpush1.xpose.msra.mxu0 0.0
    %1392 = vmatprep.subr.mxu0 0.0
    %1393 = vmatpush1.xpose.msra.mxu0 0.0
    %1394 = vmatprep.subr.mxu0 0.0
    %1395 = vmatpush1.xpose.msra.mxu0 0.0
    %1396 = vmatprep.mubr.f32.mxu0 0.0
    %1397 = vmatmul.mubr.f32.gmra.mrb[0].mxu0 %v293
    %v1398 = vpop.f32.mrb[0].mxu0
    %v1399 = vadd.f32 0.0, %v1398
    %v1400 = vpop.f32.mrb[0].mxu0
    %1401 = vdwg.mxu0
    %vm1402 = vcmask 64512
    %v1403 = vsel %vm1402, %v1189, -inf
    %1404 = vmax.xlane.f32.xlu0 %v1403
    %v1405 = vpop.xlane.xlu0 %1404
    %v1406 = vsel %vm1402, %v1259, -inf
    %1407 = vmax.xlane.f32.xlu0 %v1406
    %v1408 = vpop.xlane.xlu0 %1407
    %v1409 = vsel %vm1402, %v1329, -inf
    %1410 = vmax.xlane.f32.xlu0 %v1409
    %v1411 = vpop.xlane.xlu0 %1410
    %v1412 = vsel %vm1402, %v1399, -inf
    %1413 = vmax.xlane.f32.xlu0 %v1412
    %v1414 = vpop.xlane.xlu0 %1413
    %1415 = vmax.xlane.f32.xlu0 %v947
    %v1416 = vpop.xlane.xlu0 %1415
    %1417 = vmax.xlane.f32.xlu0 %v953
    %v1418 = vpop.xlane.xlu0 %1417
    %1419 = vmax.xlane.f32.xlu0 %v959
    %v1420 = vpop.xlane.xlu0 %1419
    %1421 = vmax.xlane.f32.xlu0 %v965
    %v1422 = vpop.xlane.xlu0 %1421
    %v1423 = vmax.f32 %v1405, %v1416
    %v1424 = vmax.f32 %v1408, %v1418
    %v1425 = vmax.f32 %v1411, %v1420
    %v1426 = vmax.f32 %v1414, %v1422
    %v1427 = vsub.f32 %v1189, %v1423
    %v1428 = vsub.f32 %v1259, %v1424
    %v1429 = vsub.f32 %v1329, %v1425
    %v1430 = vsub.f32 %v1399, %v1426
    %v1431 = vmul.f32 %v1427, 1.442695
    %v1432 = vpow.pop %v1431
    %v1433 = vmul.f32 %v1428, 1.442695
    %v1434 = vpow.pop %v1433
    %v1435 = vmul.f32 %v1429, 1.442695
    %v1436 = vpow.pop %v1435
    %v1437 = vmul.f32 %v1430, 1.442695
    %v1438 = vpow.pop %v1437
    %v1439 = vsub.f32 %v947, %v1423
    %v1440 = vsub.f32 %v953, %v1424
    %v1441 = vsub.f32 %v959, %v1425
    %v1442 = vsub.f32 %v965, %v1426
    %v1443 = vmul.f32 %v1439, 1.442695
    %v1444 = vpow.pop %v1443
    %v1445 = vmul.f32 %v1440, 1.442695
    %v1446 = vpow.pop %v1445
    %v1447 = vmul.f32 %v1441, 1.442695
    %v1448 = vpow.pop %v1447
    %v1449 = vmul.f32 %v1442, 1.442695
    %v1450 = vpow.pop %v1449
    %v1451 = vsel %vm1402, %v1432, 0.0
    %1452 = vadd.xlane.f32.xlu0 %v1451
    %v1453 = vpop.xlane.xlu0 %1452
    %v1454 = vsel %vm1402, %v1434, 0.0
    %1455 = vadd.xlane.f32.xlu0 %v1454
    %v1456 = vpop.xlane.xlu0 %1455
    %v1457 = vsel %vm1402, %v1436, 0.0
    %1458 = vadd.xlane.f32.xlu0 %v1457
    %v1459 = vpop.xlane.xlu0 %1458
    %v1460 = vsel %vm1402, %v1438, 0.0
    %1461 = vadd.xlane.f32.xlu0 %v1460
    %v1462 = vpop.xlane.xlu0 %1461
    %1463 = vadd.xlane.f32.xlu0 %v1444
    %v1464 = vpop.xlane.xlu0 %1463
    %1465 = vadd.xlane.f32.xlu0 %v1446
    %v1466 = vpop.xlane.xlu0 %1465
    %1467 = vadd.xlane.f32.xlu0 %v1448
    %v1468 = vpop.xlane.xlu0 %1467
    %1469 = vadd.xlane.f32.xlu0 %v1450
    %v1470 = vpop.xlane.xlu0 %1469
    %v1471 = vadd.f32 %v1453, %v1464
    %v1472 = vadd.f32 %v1456, %v1466
    %v1473 = vadd.f32 %v1459, %v1468
    %v1474 = vadd.f32 %v1462, %v1470
    %v1475 = vrcp.pop %v1471
    %v1476 = vrcp.pop %v1472
    %v1477 = vrcp.pop %v1473
    %v1478 = vrcp.pop %v1474
    %v1480 = vsel %vm1402, %v1432, 0
    %1482 = vmatprep.subr.mxu0 0.0
    %1483 = vmatpush1.msra.mxu0 %v731
    %1484 = vmatprep.subr.mxu0 0.0
    %1485 = vmatpush1.msra.mxu0 0.0
    %1486 = vmatprep.subr.mxu0 0.0
    %1487 = vmatpush1.msra.mxu0 0.0
    %1488 = vmatprep.subr.mxu0 0.0
    %1489 = vmatpush1.msra.mxu0 0.0
    %1490 = vmatprep.subr.mxu0 0.0
    %1491 = vmatpush1.msra.mxu0 0.0
    %1492 = vmatprep.subr.mxu0 0.0
    %1493 = vmatpush1.msra.mxu0 0.0
    %1494 = vmatprep.subr.mxu0 0.0
    %1495 = vmatpush1.msra.mxu0 0.0
    %1496 = vmatprep.subr.mxu0 0.0
    %1497 = vmatpush1.msra.mxu0 0.0
    %1498 = vmatprep.subr.mxu0 0.0
    %1499 = vmatpush1.msra.mxu0 0.0
    %1500 = vmatprep.subr.mxu0 0.0
    %1501 = vmatpush1.msra.mxu0 0.0
    %1502 = vmatprep.subr.mxu0 0.0
    %1503 = vmatpush1.msra.mxu0 0.0
    %1504 = vmatprep.subr.mxu0 0.0
    %1505 = vmatpush1.msra.mxu0 0.0
    %1506 = vmatprep.subr.mxu0 0.0
    %1507 = vmatpush1.msra.mxu0 0.0
    %1508 = vmatprep.subr.mxu0 0.0
    %1509 = vmatpush1.msra.mxu0 0.0
    %1510 = vmatprep.subr.mxu0 0.0
    %1511 = vmatpush1.msra.mxu0 0.0
    %1512 = vmatprep.subr.mxu0 0.0
    %1513 = vmatpush1.msra.mxu0 0.0
    %1514 = vmatprep.subr.mxu0 0.0
    %1515 = vmatpush1.msra.mxu0 0.0
    %1516 = vmatprep.subr.mxu0 0.0
    %1517 = vmatpush1.msra.mxu0 0.0
    %1518 = vmatprep.subr.mxu0 0.0
    %1519 = vmatpush1.msra.mxu0 0.0
    %1520 = vmatprep.subr.mxu0 0.0
    %1521 = vmatpush1.msra.mxu0 0.0
    %1522 = vmatprep.subr.mxu0 0.0
    %1523 = vmatpush1.msra.mxu0 0.0
    %1524 = vmatprep.subr.mxu0 0.0
    %1525 = vmatpush1.msra.mxu0 0.0
    %1526 = vmatprep.subr.mxu0 0.0
    %1527 = vmatpush1.msra.mxu0 0.0
    %1528 = vmatprep.subr.mxu0 0.0
    %1529 = vmatpush1.msra.mxu0 0.0
    %1530 = vmatprep.subr.mxu0 0.0
    %1531 = vmatpush1.msra.mxu0 0.0
    %1532 = vmatprep.subr.mxu0 0.0
    %1533 = vmatpush1.msra.mxu0 0.0
    %1534 = vmatprep.subr.mxu0 0.0
    %1535 = vmatpush1.msra.mxu0 0.0
    %1536 = vmatprep.subr.mxu0 0.0
    %1537 = vmatpush1.msra.mxu0 0.0
    %1538 = vmatprep.subr.mxu0 0.0
    %1539 = vmatpush1.msra.mxu0 0.0
    %1540 = vmatprep.subr.mxu0 0.0
    %1541 = vmatpush1.msra.mxu0 0.0
    %1542 = vmatprep.subr.mxu0 0.0
    %1543 = vmatpush1.msra.mxu0 0.0
    %1544 = vmatprep.subr.mxu0 0.0
    %1545 = vmatpush1.msra.mxu0 0.0
    %1546 = vmatprep.mubr.f32.mxu0 0.0
    %1547 = vmatmul.mubr.f32.gmra.mrb[0].mxu0 %v1480
    %v1548 = vpop.f32.mrb[0].mxu0
    %v1549 = vadd.f32 0.0, %v1548
    %v1550 = vpop.f32.mrb[0].mxu0
    %1551 = vdwg.mxu0
    %v1553 = vsel %vm1402, %v1434, 0
    %1555 = vmatprep.subr.mxu0 0.0
    %1556 = vmatpush1.msra.mxu0 %v737
    %1557 = vmatprep.subr.mxu0 0.0
    %1558 = vmatpush1.msra.mxu0 0.0
    %1559 = vmatprep.subr.mxu0 0.0
    %1560 = vmatpush1.msra.mxu0 0.0
    %1561 = vmatprep.subr.mxu0 0.0
    %1562 = vmatpush1.msra.mxu0 0.0
    %1563 = vmatprep.subr.mxu0 0.0
    %1564 = vmatpush1.msra.mxu0 0.0
    %1565 = vmatprep.subr.mxu0 0.0
    %1566 = vmatpush1.msra.mxu0 0.0
    %1567 = vmatprep.subr.mxu0 0.0
    %1568 = vmatpush1.msra.mxu0 0.0
    %1569 = vmatprep.subr.mxu0 0.0
    %1570 = vmatpush1.msra.mxu0 0.0
    %1571 = vmatprep.subr.mxu0 0.0
    %1572 = vmatpush1.msra.mxu0 0.0
    %1573 = vmatprep.subr.mxu0 0.0
    %1574 = vmatpush1.msra.mxu0 0.0
    %1575 = vmatprep.subr.mxu0 0.0
    %1576 = vmatpush1.msra.mxu0 0.0
    %1577 = vmatprep.subr.mxu0 0.0
    %1578 = vmatpush1.msra.mxu0 0.0
    %1579 = vmatprep.subr.mxu0 0.0
    %1580 = vmatpush1.msra.mxu0 0.0
    %1581 = vmatprep.subr.mxu0 0.0
    %1582 = vmatpush1.msra.mxu0 0.0
    %1583 = vmatprep.subr.mxu0 0.0
    %1584 = vmatpush1.msra.mxu0 0.0
    %1585 = vmatprep.subr.mxu0 0.0
    %1586 = vmatpush1.msra.mxu0 0.0
    %1587 = vmatprep.subr.mxu0 0.0
    %1588 = vmatpush1.msra.mxu0 0.0
    %1589 = vmatprep.subr.mxu0 0.0
    %1590 = vmatpush1.msra.mxu0 0.0
    %1591 = vmatprep.subr.mxu0 0.0
    %1592 = vmatpush1.msra.mxu0 0.0
    %1593 = vmatprep.subr.mxu0 0.0
    %1594 = vmatpush1.msra.mxu0 0.0
    %1595 = vmatprep.subr.mxu0 0.0
    %1596 = vmatpush1.msra.mxu0 0.0
    %1597 = vmatprep.subr.mxu0 0.0
    %1598 = vmatpush1.msra.mxu0 0.0
    %1599 = vmatprep.subr.mxu0 0.0
    %1600 = vmatpush1.msra.mxu0 0.0
    %1601 = vmatprep.subr.mxu0 0.0
    %1602 = vmatpush1.msra.mxu0 0.0
    %1603 = vmatprep.subr.mxu0 0.0
    %1604 = vmatpush1.msra.mxu0 0.0
    %1605 = vmatprep.subr.mxu0 0.0
    %1606 = vmatpush1.msra.mxu0 0.0
    %1607 = vmatprep.subr.mxu0 0.0
    %1608 = vmatpush1.msra.mxu0 0.0
    %1609 = vmatprep.subr.mxu0 0.0
    %1610 = vmatpush1.msra.mxu0 0.0
    %1611 = vmatprep.subr.mxu0 0.0
    %1612 = vmatpush1.msra.mxu0 0.0
    %1613 = vmatprep.subr.mxu0 0.0
    %1614 = vmatpush1.msra.mxu0 0.0
    %1615 = vmatprep.subr.mxu0 0.0
    %1616 = vmatpush1.msra.mxu0 0.0
    %1617 = vmatprep.subr.mxu0 0.0
    %1618 = vmatpush1.msra.mxu0 0.0
    %1619 = vmatprep.mubr.f32.mxu0 0.0
    %1620 = vmatmul.mubr.f32.gmra.mrb[0].mxu0 %v1553
    %v1621 = vpop.f32.mrb[0].mxu0
    %v1622 = vadd.f32 0.0, %v1621
    %v1623 = vpop.f32.mrb[0].mxu0
    %1624 = vdwg.mxu0
    %v1626 = vsel %vm1402, %v1436, 0
    %1628 = vmatprep.subr.mxu0 0.0
    %1629 = vmatpush1.msra.mxu0 %v743
    %1630 = vmatprep.subr.mxu0 0.0
    %1631 = vmatpush1.msra.mxu0 0.0
    %1632 = vmatprep.subr.mxu0 0.0
    %1633 = vmatpush1.msra.mxu0 0.0
    %1634 = vmatprep.subr.mxu0 0.0
    %1635 = vmatpush1.msra.mxu0 0.0
    %1636 = vmatprep.subr.mxu0 0.0
    %1637 = vmatpush1.msra.mxu0 0.0
    %1638 = vmatprep.subr.mxu0 0.0
    %1639 = vmatpush1.msra.mxu0 0.0
    %1640 = vmatprep.subr.mxu0 0.0
    %1641 = vmatpush1.msra.mxu0 0.0
    %1642 = vmatprep.subr.mxu0 0.0
    %1643 = vmatpush1.msra.mxu0 0.0
    %1644 = vmatprep.subr.mxu0 0.0
    %1645 = vmatpush1.msra.mxu0 0.0
    %1646 = vmatprep.subr.mxu0 0.0
    %1647 = vmatpush1.msra.mxu0 0.0
    %1648 = vmatprep.subr.mxu0 0.0
    %1649 = vmatpush1.msra.mxu0 0.0
    %1650 = vmatprep.subr.mxu0 0.0
    %1651 = vmatpush1.msra.mxu0 0.0
    %1652 = vmatprep.subr.mxu0 0.0
    %1653 = vmatpush1.msra.mxu0 0.0
    %1654 = vmatprep.subr.mxu0 0.0
    %1655 = vmatpush1.msra.mxu0 0.0
    %1656 = vmatprep.subr.mxu0 0.0
    %1657 = vmatpush1.msra.mxu0 0.0
    %1658 = vmatprep.subr.mxu0 0.0
    %1659 = vmatpush1.msra.mxu0 0.0
    %1660 = vmatprep.subr.mxu0 0.0
    %1661 = vmatpush1.msra.mxu0 0.0
    %1662 = vmatprep.subr.mxu0 0.0
    %1663 = vmatpush1.msra.mxu0 0.0
    %1664 = vmatprep.subr.mxu0 0.0
    %1665 = vmatpush1.msra.mxu0 0.0
    %1666 = vmatprep.subr.mxu0 0.0
    %1667 = vmatpush1.msra.mxu0 0.0
    %1668 = vmatprep.subr.mxu0 0.0
    %1669 = vmatpush1.msra.mxu0 0.0
    %1670 = vmatprep.subr.mxu0 0.0
    %1671 = vmatpush1.msra.mxu0 0.0
    %1672 = vmatprep.subr.mxu0 0.0
    %1673 = vmatpush1.msra.mxu0 0.0
    %1674 = vmatprep.subr.mxu0 0.0
    %1675 = vmatpush1.msra.mxu0 0.0
    %1676 = vmatprep.subr.mxu0 0.0
    %1677 = vmatpush1.msra.mxu0 0.0
    %1678 = vmatprep.subr.mxu0 0.0
    %1679 = vmatpush1.msra.mxu0 0.0
    %1680 = vmatprep.subr.mxu0 0.0
    %1681 = vmatpush1.msra.mxu0 0.0
    %1682 = vmatprep.subr.mxu0 0.0
    %1683 = vmatpush1.msra.mxu0 0.0
    %1684 = vmatprep.subr.mxu0 0.0
    %1685 = vmatpush1.msra.mxu0 0.0
    %1686 = vmatprep.subr.mxu0 0.0
    %1687 = vmatpush1.msra.mxu0 0.0
    %1688 = vmatprep.subr.mxu0 0.0
    %1689 = vmatpush1.msra.mxu0 0.0
    %1690 = vmatprep.subr.mxu0 0.0
    %1691 = vmatpush1.msra.mxu0 0.0
    %1692 = vmatprep.mubr.f32.mxu0 0.0
    %1693 = vmatmul.mubr.f32.gmra.mrb[0].mxu0 %v1626
    %v1694 = vpop.f32.mrb[0].mxu0
    %v1695 = vadd.f32 0.0, %v1694
    %v1696 = vpop.f32.mrb[0].mxu0
    %1697 = vdwg.mxu0
    %v1699 = vsel %vm1402, %v1438, 0
    %1701 = vmatprep.subr.mxu0 0.0
    %1702 = vmatpush1.msra.mxu0 %v749
    %1703 = vmatprep.subr.mxu0 0.0
    %1704 = vmatpush1.msra.mxu0 0.0
    %1705 = vmatprep.subr.mxu0 0.0
    %1706 = vmatpush1.msra.mxu0 0.0
    %1707 = vmatprep.subr.mxu0 0.0
    %1708 = vmatpush1.msra.mxu0 0.0
    %1709 = vmatprep.subr.mxu0 0.0
    %1710 = vmatpush1.msra.mxu0 0.0
    %1711 = vmatprep.subr.mxu0 0.0
    %1712 = vmatpush1.msra.mxu0 0.0
    %1713 = vmatprep.subr.mxu0 0.0
    %1714 = vmatpush1.msra.mxu0 0.0
    %1715 = vmatprep.subr.mxu0 0.0
    %1716 = vmatpush1.msra.mxu0 0.0
    %1717 = vmatprep.subr.mxu0 0.0
    %1718 = vmatpush1.msra.mxu0 0.0
    %1719 = vmatprep.subr.mxu0 0.0
    %1720 = vmatpush1.msra.mxu0 0.0
    %1721 = vmatprep.subr.mxu0 0.0
    %1722 = vmatpush1.msra.mxu0 0.0
    %1723 = vmatprep.subr.mxu0 0.0
    %1724 = vmatpush1.msra.mxu0 0.0
    %1725 = vmatprep.subr.mxu0 0.0
    %1726 = vmatpush1.msra.mxu0 0.0
    %1727 = vmatprep.subr.mxu0 0.0
    %1728 = vmatpush1.msra.mxu0 0.0
    %1729 = vmatprep.subr.mxu0 0.0
    %1730 = vmatpush1.msra.mxu0 0.0
    %1731 = vmatprep.subr.mxu0 0.0
    %1732 = vmatpush1.msra.mxu0 0.0
    %1733 = vmatprep.subr.mxu0 0.0
    %1734 = vmatpush1.msra.mxu0 0.0
    %1735 = vmatprep.subr.mxu0 0.0
    %1736 = vmatpush1.msra.mxu0 0.0
    %1737 = vmatprep.subr.mxu0 0.0
    %1738 = vmatpush1.msra.mxu0 0.0
    %1739 = vmatprep.subr.mxu0 0.0
    %1740 = vmatpush1.msra.mxu0 0.0
    %1741 = vmatprep.subr.mxu0 0.0
    %1742 = vmatpush1.msra.mxu0 0.0
    %1743 = vmatprep.subr.mxu0 0.0
    %1744 = vmatpush1.msra.mxu0 0.0
    %1745 = vmatprep.subr.mxu0 0.0
    %1746 = vmatpush1.msra.mxu0 0.0
    %1747 = vmatprep.subr.mxu0 0.0
    %1748 = vmatpush1.msra.mxu0 0.0
    %1749 = vmatprep.subr.mxu0 0.0
    %1750 = vmatpush1.msra.mxu0 0.0
    %1751 = vmatprep.subr.mxu0 0.0
    %1752 = vmatpush1.msra.mxu0 0.0
    %1753 = vmatprep.subr.mxu0 0.0
    %1754 = vmatpush1.msra.mxu0 0.0
    %1755 = vmatprep.subr.mxu0 0.0
    %1756 = vmatpush1.msra.mxu0 0.0
    %1757 = vmatprep.subr.mxu0 0.0
    %1758 = vmatpush1.msra.mxu0 0.0
    %1759 = vmatprep.subr.mxu0 0.0
    %1760 = vmatpush1.msra.mxu0 0.0
    %1761 = vmatprep.subr.mxu0 0.0
    %1762 = vmatpush1.msra.mxu0 0.0
    %1763 = vmatprep.subr.mxu0 0.0
    %1764 = vmatpush1.msra.mxu0 0.0
    %1765 = vmatprep.mubr.f32.mxu0 0.0
    %1766 = vmatmul.mubr.f32.gmra.mrb[0].mxu0 %v1699
    %v1767 = vpop.f32.mrb[0].mxu0
    %v1768 = vadd.f32 0.0, %v1767
    %v1769 = vpop.f32.mrb[0].mxu0
    %1770 = vdwg.mxu0
    %1771 = vmatprep.subr.mxu0 0.0
    %1772 = vmatpush1.msra.mxu0 %v1058
    %1773 = vmatprep.subr.mxu0 0.0
    %1774 = vmatpush1.msra.mxu0 %v1062
    %1775 = vmatprep.subr.mxu0 0.0
    %1776 = vmatpush1.msra.mxu0 %v1066
    %1777 = vmatprep.subr.mxu0 0.0
    %1778 = vmatpush1.msra.mxu0 %v1070
    %1779 = vmatprep.subr.mxu0 0.0
    %1780 = vmatpush1.msra.mxu0 %v1074
    %1781 = vmatprep.subr.mxu0 0.0
    %1782 = vmatpush1.msra.mxu0 %v1078
    %1783 = vmatprep.subr.mxu0 0.0
    %1784 = vmatpush1.msra.mxu0 %v1082
    %1785 = vmatprep.subr.mxu0 0.0
    %1786 = vmatpush1.msra.mxu0 %v1086
    %1787 = vmatprep.subr.mxu0 0.0
    %1788 = vmatpush1.msra.mxu0 %v1090
    %1789 = vmatprep.subr.mxu0 0.0
    %1790 = vmatpush1.msra.mxu0 %v1094
    %1791 = vmatprep.subr.mxu0 0.0
    %1792 = vmatpush1.msra.mxu0 %v1098
    %1793 = vmatprep.subr.mxu0 0.0
    %1794 = vmatpush1.msra.mxu0 %v1102
    %1795 = vmatprep.subr.mxu0 0.0
    %1796 = vmatpush1.msra.mxu0 %v1106
    %1797 = vmatprep.subr.mxu0 0.0
    %1798 = vmatpush1.msra.mxu0 %v1110
    %1799 = vmatprep.subr.mxu0 0.0
    %1800 = vmatpush1.msra.mxu0 %v1114
    %1801 = vmatprep.subr.mxu0 0.0
    %1802 = vmatpush1.msra.mxu0 %v1118
    %1803 = vmatprep.subr.mxu0 0.0
    %1804 = vmatpush1.msra.mxu0 0.0
    %1805 = vmatprep.subr.mxu0 0.0
    %1806 = vmatpush1.msra.mxu0 0.0
    %1807 = vmatprep.subr.mxu0 0.0
    %1808 = vmatpush1.msra.mxu0 0.0
    %1809 = vmatprep.subr.mxu0 0.0
    %1810 = vmatpush1.msra.mxu0 0.0
    %1811 = vmatprep.subr.mxu0 0.0
    %1812 = vmatpush1.msra.mxu0 0.0
    %1813 = vmatprep.subr.mxu0 0.0
    %1814 = vmatpush1.msra.mxu0 0.0
    %1815 = vmatprep.subr.mxu0 0.0
    %1816 = vmatpush1.msra.mxu0 0.0
    %1817 = vmatprep.subr.mxu0 0.0
    %1818 = vmatpush1.msra.mxu0 0.0
    %1819 = vmatprep.subr.mxu0 0.0
    %1820 = vmatpush1.msra.mxu0 0.0
    %1821 = vmatprep.subr.mxu0 0.0
    %1822 = vmatpush1.msra.mxu0 0.0
    %1823 = vmatprep.subr.mxu0 0.0
    %1824 = vmatpush1.msra.mxu0 0.0
    %1825 = vmatprep.subr.mxu0 0.0
    %1826 = vmatpush1.msra.mxu0 0.0
    %1827 = vmatprep.subr.mxu0 0.0
    %1828 = vmatpush1.msra.mxu0 0.0
    %1829 = vmatprep.subr.mxu0 0.0
    %1830 = vmatpush1.msra.mxu0 0.0
    %1831 = vmatprep.subr.mxu0 0.0
    %1832 = vmatpush1.msra.mxu0 0.0
    %1833 = vmatprep.subr.mxu0 0.0
    %1834 = vmatpush1.msra.mxu0 0.0
    %1835 = vmatprep.mubr.f32.mxu0 0.0
    %1836 = vmatmul.mubr.f32.gmra.mrb[0].mxu0 %v1444
    %v1837 = vpop.f32.mrb[0].mxu0
    %v1838 = vadd.f32 0.0, %v1837
    %v1839 = vpop.f32.mrb[0].mxu0
    %1840 = vmatprep.mubr.f32.mxu0 0.0
    %1841 = vmatmul.mubr.f32.gmra.mrb[0].mxu0 %v1446
    %v1842 = vpop.f32.mrb[0].mxu0
    %v1843 = vadd.f32 0.0, %v1842
    %v1844 = vpop.f32.mrb[0].mxu0
    %1845 = vmatprep.mubr.f32.mxu0 0.0
    %1846 = vmatmul.mubr.f32.gmra.mrb[0].mxu0 %v1448
    %v1847 = vpop.f32.mrb[0].mxu0
    %v1848 = vadd.f32 0.0, %v1847
    %v1849 = vpop.f32.mrb[0].mxu0
    %1850 = vmatprep.mubr.f32.mxu0 0.0
    %1851 = vmatmul.mubr.f32.gmra.mrb[0].mxu0 %v1450
    %v1852 = vpop.f32.mrb[0].mxu0
    %v1853 = vadd.f32 0.0, %v1852
    %v1854 = vpop.f32.mrb[0].mxu0
    %1855 = vdwg.mxu0
    %v1856 = vadd.f32 %v1549, %v1838
    %v1857 = vadd.f32 %v1622, %v1843
    %v1858 = vadd.f32 %v1695, %v1848
    %v1859 = vadd.f32 %v1768, %v1853
    %v1860 = vmul.f32 %v1856, %v1475
    %v1861 = vmul.f32 %v1857, %v1476
    %v1862 = vmul.f32 %v1858, %v1477
    %v1863 = vmul.f32 %v1859, %v1478
    %1864 = vst [vmem:[#allocation2] sm:$0xff] %v1860
    %1865 = vst [vmem:[#allocation2 + $0x20] sm:$0xff] %v1861
    %1866 = vst [vmem:[#allocation2 + $0x40] sm:$0xff] %v1862
    %1867 = vst [vmem:[#allocation2 + $0x60] sm:$0xff] %v1863
    %1868 = vmatprep.subr.mxu0 0.0
    %1869 = vmatpush1.xpose.msra.mxu0 %v505
    %1870 = vmatprep.subr.mxu0 0.0
    %1871 = vmatpush1.xpose.msra.mxu0 0.0
    %1872 = vmatprep.subr.mxu0 0.0
    %1873 = vmatpush1.xpose.msra.mxu0 0.0
    %1874 = vmatprep.subr.mxu0 0.0
    %1875 = vmatpush1.xpose.msra.mxu0 0.0
    %1876 = vmatprep.subr.mxu0 0.0
    %1877 = vmatpush1.xpose.msra.mxu0 0.0
    %1878 = vmatprep.subr.mxu0 0.0
    %1879 = vmatpush1.xpose.msra.mxu0 0.0
    %1880 = vmatprep.subr.mxu0 0.0
    %1881 = vmatpush1.xpose.msra.mxu0 0.0
    %1882 = vmatprep.subr.mxu0 0.0
    %1883 = vmatpush1.xpose.msra.mxu0 0.0
    %1884 = vmatprep.subr.mxu0 0.0
    %1885 = vmatpush1.xpose.msra.mxu0 0.0
    %1886 = vmatprep.subr.mxu0 0.0
    %1887 = vmatpush1.xpose.msra.mxu0 0.0
    %1888 = vmatprep.subr.mxu0 0.0
    %1889 = vmatpush1.xpose.msra.mxu0 0.0
    %1890 = vmatprep.subr.mxu0 0.0
    %1891 = vmatpush1.xpose.msra.mxu0 0.0
    %1892 = vmatprep.subr.mxu0 0.0
    %1893 = vmatpush1.xpose.msra.mxu0 0.0
    %1894 = vmatprep.subr.mxu0 0.0
    %1895 = vmatpush1.xpose.msra.mxu0 0.0
    %1896 = vmatprep.subr.mxu0 0.0
    %1897 = vmatpush1.xpose.msra.mxu0 0.0
    %1898 = vmatprep.subr.mxu0 0.0
    %1899 = vmatpush1.xpose.msra.mxu0 0.0
    %1900 = vmatprep.subr.mxu0 0.0
    %1901 = vmatpush1.xpose.msra.mxu0 0.0
    %1902 = vmatprep.subr.mxu0 0.0
    %1903 = vmatpush1.xpose.msra.mxu0 0.0
    %1904 = vmatprep.subr.mxu0 0.0
    %1905 = vmatpush1.xpose.msra.mxu0 0.0
    %1906 = vmatprep.subr.mxu0 0.0
    %1907 = vmatpush1.xpose.msra.mxu0 0.0
    %1908 = vmatprep.subr.mxu0 0.0
    %1909 = vmatpush1.xpose.msra.mxu0 0.0
    %1910 = vmatprep.subr.mxu0 0.0
    %1911 = vmatpush1.xpose.msra.mxu0 0.0
    %1912 = vmatprep.subr.mxu0 0.0
    %1913 = vmatpush1.xpose.msra.mxu0 0.0
    %1914 = vmatprep.subr.mxu0 0.0
    %1915 = vmatpush1.xpose.msra.mxu0 0.0
    %1916 = vmatprep.subr.mxu0 0.0
    %1917 = vmatpush1.xpose.msra.mxu0 0.0
    %1918 = vmatprep.subr.mxu0 0.0
    %1919 = vmatpush1.xpose.msra.mxu0 0.0
    %1920 = vmatprep.subr.mxu0 0.0
    %1921 = vmatpush1.xpose.msra.mxu0 0.0
    %1922 = vmatprep.subr.mxu0 0.0
    %1923 = vmatpush1.xpose.msra.mxu0 0.0
    %1924 = vmatprep.subr.mxu0 0.0
    %1925 = vmatpush1.xpose.msra.mxu0 0.0
    %1926 = vmatprep.subr.mxu0 0.0
    %1927 = vmatpush1.xpose.msra.mxu0 0.0
    %1928 = vmatprep.subr.mxu0 0.0
    %1929 = vmatpush1.xpose.msra.mxu0 0.0
    %1930 = vmatprep.subr.mxu0 0.0
    %1931 = vmatpush1.xpose.msra.mxu0 0.0
    %1932 = vmatprep.mubr.f32.mxu0 0.0
    %1933 = vmatmul.mubr.f32.gmra.mrb[0].mxu0 %v277
    %v1934 = vpop.f32.mrb[0].mxu0
    %v1935 = vadd.f32 0.0, %v1934
    %v1936 = vpop.f32.mrb[0].mxu0
    %1937 = vdwg.mxu0
    %1938 = vmatprep.subr.mxu0 0.0
    %1939 = vmatpush1.xpose.msra.mxu0 %v511
    %1940 = vmatprep.subr.mxu0 0.0
    %1941 = vmatpush1.xpose.msra.mxu0 0.0
    %1942 = vmatprep.subr.mxu0 0.0
    %1943 = vmatpush1.xpose.msra.mxu0 0.0
    %1944 = vmatprep.subr.mxu0 0.0
    %1945 = vmatpush1.xpose.msra.mxu0 0.0
    %1946 = vmatprep.subr.mxu0 0.0
    %1947 = vmatpush1.xpose.msra.mxu0 0.0
    %1948 = vmatprep.subr.mxu0 0.0
    %1949 = vmatpush1.xpose.msra.mxu0 0.0
    %1950 = vmatprep.subr.mxu0 0.0
    %1951 = vmatpush1.xpose.msra.mxu0 0.0
    %1952 = vmatprep.subr.mxu0 0.0
    %1953 = vmatpush1.xpose.msra.mxu0 0.0
    %1954 = vmatprep.subr.mxu0 0.0
    %1955 = vmatpush1.xpose.msra.mxu0 0.0
    %1956 = vmatprep.subr.mxu0 0.0
    %1957 = vmatpush1.xpose.msra.mxu0 0.0
    %1958 = vmatprep.subr.mxu0 0.0
    %1959 = vmatpush1.xpose.msra.mxu0 0.0
    %1960 = vmatprep.subr.mxu0 0.0
    %1961 = vmatpush1.xpose.msra.mxu0 0.0
    %1962 = vmatprep.subr.mxu0 0.0
    %1963 = vmatpush1.xpose.msra.mxu0 0.0
    %1964 = vmatprep.subr.mxu0 0.0
    %1965 = vmatpush1.xpose.msra.mxu0 0.0
    %1966 = vmatprep.subr.mxu0 0.0
    %1967 = vmatpush1.xpose.msra.mxu0 0.0
    %1968 = vmatprep.subr.mxu0 0.0
    %1969 = vmatpush1.xpose.msra.mxu0 0.0
    %1970 = vmatprep.subr.mxu0 0.0
    %1971 = vmatpush1.xpose.msra.mxu0 0.0
    %1972 = vmatprep.subr.mxu0 0.0
    %1973 = vmatpush1.xpose.msra.mxu0 0.0
    %1974 = vmatprep.subr.mxu0 0.0
    %1975 = vmatpush1.xpose.msra.mxu0 0.0
    %1976 = vmatprep.subr.mxu0 0.0
    %1977 = vmatpush1.xpose.msra.mxu0 0.0
    %1978 = vmatprep.subr.mxu0 0.0
    %1979 = vmatpush1.xpose.msra.mxu0 0.0
    %1980 = vmatprep.subr.mxu0 0.0
    %1981 = vmatpush1.xpose.msra.mxu0 0.0
    %1982 = vmatprep.subr.mxu0 0.0
    %1983 = vmatpush1.xpose.msra.mxu0 0.0
    %1984 = vmatprep.subr.mxu0 0.0
    %1985 = vmatpush1.xpose.msra.mxu0 0.0
    %1986 = vmatprep.subr.mxu0 0.0
    %1987 = vmatpush1.xpose.msra.mxu0 0.0
    %1988 = vmatprep.subr.mxu0 0.0
    %1989 = vmatpush1.xpose.msra.mxu0 0.0
    %1990 = vmatprep.subr.mxu0 0.0
    %1991 = vmatpush1.xpose.msra.mxu0 0.0
    %1992 = vmatprep.subr.mxu0 0.0
    %1993 = vmatpush1.xpose.msra.mxu0 0.0
    %1994 = vmatprep.subr.mxu0 0.0
    %1995 = vmatpush1.xpose.msra.mxu0 0.0
    %1996 = vmatprep.subr.mxu0 0.0
    %1997 = vmatpush1.xpose.msra.mxu0 0.0
    %1998 = vmatprep.subr.mxu0 0.0
    %1999 = vmatpush1.xpose.msra.mxu0 0.0
    %2000 = vmatprep.subr.mxu0 0.0
    %2001 = vmatpush1.xpose.msra.mxu0 0.0
    %2002 = vmatprep.mubr.f32.mxu0 0.0
    %2003 = vmatmul.mubr.f32.gmra.mrb[0].mxu0 %v283
    %v2004 = vpop.f32.mrb[0].mxu0
    %v2005 = vadd.f32 0.0, %v2004
    %v2006 = vpop.f32.mrb[0].mxu0
    %2007 = vdwg.mxu0
    %2008 = vmatprep.subr.mxu0 0.0
    %2009 = vmatpush1.xpose.msra.mxu0 %v517
    %2010 = vmatprep.subr.mxu0 0.0
    %2011 = vmatpush1.xpose.msra.mxu0 0.0
    %2012 = vmatprep.subr.mxu0 0.0
    %2013 = vmatpush1.xpose.msra.mxu0 0.0
    %2014 = vmatprep.subr.mxu0 0.0
    %2015 = vmatpush1.xpose.msra.mxu0 0.0
    %2016 = vmatprep.subr.mxu0 0.0
    %2017 = vmatpush1.xpose.msra.mxu0 0.0
    %2018 = vmatprep.subr.mxu0 0.0
    %2019 = vmatpush1.xpose.msra.mxu0 0.0
    %2020 = vmatprep.subr.mxu0 0.0
    %2021 = vmatpush1.xpose.msra.mxu0 0.0
    %2022 = vmatprep.subr.mxu0 0.0
    %2023 = vmatpush1.xpose.msra.mxu0 0.0
    %2024 = vmatprep.subr.mxu0 0.0
    %2025 = vmatpush1.xpose.msra.mxu0 0.0
    %2026 = vmatprep.subr.mxu0 0.0
    %2027 = vmatpush1.xpose.msra.mxu0 0.0
    %2028 = vmatprep.subr.mxu0 0.0
    %2029 = vmatpush1.xpose.msra.mxu0 0.0
    %2030 = vmatprep.subr.mxu0 0.0
    %2031 = vmatpush1.xpose.msra.mxu0 0.0
    %2032 = vmatprep.subr.mxu0 0.0
    %2033 = vmatpush1.xpose.msra.mxu0 0.0
    %2034 = vmatprep.subr.mxu0 0.0
    %2035 = vmatpush1.xpose.msra.mxu0 0.0
    %2036 = vmatprep.subr.mxu0 0.0
    %2037 = vmatpush1.xpose.msra.mxu0 0.0
    %2038 = vmatprep.subr.mxu0 0.0
    %2039 = vmatpush1.xpose.msra.mxu0 0.0
    %2040 = vmatprep.subr.mxu0 0.0
    %2041 = vmatpush1.xpose.msra.mxu0 0.0
    %2042 = vmatprep.subr.mxu0 0.0
    %2043 = vmatpush1.xpose.msra.mxu0 0.0
    %2044 = vmatprep.subr.mxu0 0.0
    %2045 = vmatpush1.xpose.msra.mxu0 0.0
    %2046 = vmatprep.subr.mxu0 0.0
    %2047 = vmatpush1.xpose.msra.mxu0 0.0
    %2048 = vmatprep.subr.mxu0 0.0
    %2049 = vmatpush1.xpose.msra.mxu0 0.0
    %2050 = vmatprep.subr.mxu0 0.0
    %2051 = vmatpush1.xpose.msra.mxu0 0.0
    %2052 = vmatprep.subr.mxu0 0.0
    %2053 = vmatpush1.xpose.msra.mxu0 0.0
    %2054 = vmatprep.subr.mxu0 0.0
    %2055 = vmatpush1.xpose.msra.mxu0 0.0
    %2056 = vmatprep.subr.mxu0 0.0
    %2057 = vmatpush1.xpose.msra.mxu0 0.0
    %2058 = vmatprep.subr.mxu0 0.0
    %2059 = vmatpush1.xpose.msra.mxu0 0.0
    %2060 = vmatprep.subr.mxu0 0.0
    %2061 = vmatpush1.xpose.msra.mxu0 0.0
    %2062 = vmatprep.subr.mxu0 0.0
    %2063 = vmatpush1.xpose.msra.mxu0 0.0
    %2064 = vmatprep.subr.mxu0 0.0
    %2065 = vmatpush1.xpose.msra.mxu0 0.0
    %2066 = vmatprep.subr.mxu0 0.0
    %2067 = vmatpush1.xpose.msra.mxu0 0.0
    %2068 = vmatprep.subr.mxu0 0.0
    %2069 = vmatpush1.xpose.msra.mxu0 0.0
    %2070 = vmatprep.subr.mxu0 0.0
    %2071 = vmatpush1.xpose.msra.mxu0 0.0
    %2072 = vmatprep.mubr.f32.mxu0 0.0
    %2073 = vmatmul.mubr.f32.gmra.mrb[0].mxu0 %v289
    %v2074 = vpop.f32.mrb[0].mxu0
    %v2075 = vadd.f32 0.0, %v2074
    %v2076 = vpop.f32.mrb[0].mxu0
    %2077 = vdwg.mxu0
    %2078 = vmatprep.subr.mxu0 0.0
    %2079 = vmatpush1.xpose.msra.mxu0 %v523
    %2080 = vmatprep.subr.mxu0 0.0
    %2081 = vmatpush1.xpose.msra.mxu0 0.0
    %2082 = vmatprep.subr.mxu0 0.0
    %2083 = vmatpush1.xpose.msra.mxu0 0.0
    %2084 = vmatprep.subr.mxu0 0.0
    %2085 = vmatpush1.xpose.msra.mxu0 0.0
    %2086 = vmatprep.subr.mxu0 0.0
    %2087 = vmatpush1.xpose.msra.mxu0 0.0
    %2088 = vmatprep.subr.mxu0 0.0
    %2089 = vmatpush1.xpose.msra.mxu0 0.0
    %2090 = vmatprep.subr.mxu0 0.0
    %2091 = vmatpush1.xpose.msra.mxu0 0.0
    %2092 = vmatprep.subr.mxu0 0.0
    %2093 = vmatpush1.xpose.msra.mxu0 0.0
    %2094 = vmatprep.subr.mxu0 0.0
    %2095 = vmatpush1.xpose.msra.mxu0 0.0
    %2096 = vmatprep.subr.mxu0 0.0
    %2097 = vmatpush1.xpose.msra.mxu0 0.0
    %2098 = vmatprep.subr.mxu0 0.0
    %2099 = vmatpush1.xpose.msra.mxu0 0.0
    %2100 = vmatprep.subr.mxu0 0.0
    %2101 = vmatpush1.xpose.msra.mxu0 0.0
    %2102 = vmatprep.subr.mxu0 0.0
    %2103 = vmatpush1.xpose.msra.mxu0 0.0
    %2104 = vmatprep.subr.mxu0 0.0
    %2105 = vmatpush1.xpose.msra.mxu0 0.0
    %2106 = vmatprep.subr.mxu0 0.0
    %2107 = vmatpush1.xpose.msra.mxu0 0.0
    %2108 = vmatprep.subr.mxu0 0.0
    %2109 = vmatpush1.xpose.msra.mxu0 0.0
    %2110 = vmatprep.subr.mxu0 0.0
    %2111 = vmatpush1.xpose.msra.mxu0 0.0
    %2112 = vmatprep.subr.mxu0 0.0
    %2113 = vmatpush1.xpose.msra.mxu0 0.0
    %2114 = vmatprep.subr.mxu0 0.0
    %2115 = vmatpush1.xpose.msra.mxu0 0.0
    %2116 = vmatprep.subr.mxu0 0.0
    %2117 = vmatpush1.xpose.msra.mxu0 0.0
    %2118 = vmatprep.subr.mxu0 0.0
    %2119 = vmatpush1.xpose.msra.mxu0 0.0
    %2120 = vmatprep.subr.mxu0 0.0
    %2121 = vmatpush1.xpose.msra.mxu0 0.0
    %2122 = vmatprep.subr.mxu0 0.0
    %2123 = vmatpush1.xpose.msra.mxu0 0.0
    %2124 = vmatprep.subr.mxu0 0.0
    %2125 = vmatpush1.xpose.msra.mxu0 0.0
    %2126 = vmatprep.subr.mxu0 0.0
    %2127 = vmatpush1.xpose.msra.mxu0 0.0
    %2128 = vmatprep.subr.mxu0 0.0
    %2129 = vmatpush1.xpose.msra.mxu0 0.0
    %2130 = vmatprep.subr.mxu0 0.0
    %2131 = vmatpush1.xpose.msra.mxu0 0.0
    %2132 = vmatprep.subr.mxu0 0.0
    %2133 = vmatpush1.xpose.msra.mxu0 0.0
    %2134 = vmatprep.subr.mxu0 0.0
    %2135 = vmatpush1.xpose.msra.mxu0 0.0
    %2136 = vmatprep.subr.mxu0 0.0
    %2137 = vmatpush1.xpose.msra.mxu0 0.0
    %2138 = vmatprep.subr.mxu0 0.0
    %2139 = vmatpush1.xpose.msra.mxu0 0.0
    %2140 = vmatprep.subr.mxu0 0.0
    %2141 = vmatpush1.xpose.msra.mxu0 0.0
    %2142 = vmatprep.mubr.f32.mxu0 0.0
    %2143 = vmatmul.mubr.f32.gmra.mrb[0].mxu0 %v295
    %v2144 = vpop.f32.mrb[0].mxu0
    %v2145 = vadd.f32 0.0, %v2144
    %v2146 = vpop.f32.mrb[0].mxu0
    %2147 = vdwg.mxu0
    %v2148 = vsel %vm1402, %v1935, -inf
    %2149 = vmax.xlane.f32.xlu0 %v2148
    %v2150 = vpop.xlane.xlu0 %2149
    %v2151 = vsel %vm1402, %v2005, -inf
    %2152 = vmax.xlane.f32.xlu0 %v2151
    %v2153 = vpop.xlane.xlu0 %2152
    %v2154 = vsel %vm1402, %v2075, -inf
    %2155 = vmax.xlane.f32.xlu0 %v2154
    %v2156 = vpop.xlane.xlu0 %2155
    %v2157 = vsel %vm1402, %v2145, -inf
    %2158 = vmax.xlane.f32.xlu0 %v2157
    %v2159 = vpop.xlane.xlu0 %2158
    %2160 = vmax.xlane.f32.xlu0 %v949
    %v2161 = vpop.xlane.xlu0 %2160
    %2162 = vmax.xlane.f32.xlu0 %v955
    %v2163 = vpop.xlane.xlu0 %2162
    %2164 = vmax.xlane.f32.xlu0 %v961
    %v2165 = vpop.xlane.xlu0 %2164
    %2166 = vmax.xlane.f32.xlu0 %v967
    %v2167 = vpop.xlane.xlu0 %2166
    %v2168 = vmax.f32 %v2150, %v2161
    %v2169 = vmax.f32 %v2153, %v2163
    %v2170 = vmax.f32 %v2156, %v2165
    %v2171 = vmax.f32 %v2159, %v2167
    %v2172 = vsub.f32 %v1935, %v2168
    %v2173 = vsub.f32 %v2005, %v2169
    %v2174 = vsub.f32 %v2075, %v2170
    %v2175 = vsub.f32 %v2145, %v2171
    %v2176 = vmul.f32 %v2172, 1.442695
    %v2177 = vpow.pop %v2176
    %v2178 = vmul.f32 %v2173, 1.442695
    %v2179 = vpow.pop %v2178
    %v2180 = vmul.f32 %v2174, 1.442695
    %v2181 = vpow.pop %v2180
    %v2182 = vmul.f32 %v2175, 1.442695
    %v2183 = vpow.pop %v2182
    %v2184 = vsub.f32 %v949, %v2168
    %v2185 = vsub.f32 %v955, %v2169
    %v2186 = vsub.f32 %v961, %v2170
    %v2187 = vsub.f32 %v967, %v2171
    %v2188 = vmul.f32 %v2184, 1.442695
    %v2189 = vpow.pop %v2188
    %v2190 = vmul.f32 %v2185, 1.442695
    %v2191 = vpow.pop %v2190
    %v2192 = vmul.f32 %v2186, 1.442695
    %v2193 = vpow.pop %v2192
    %v2194 = vmul.f32 %v2187, 1.442695
    %v2195 = vpow.pop %v2194
    %v2196 = vsel %vm1402, %v2177, 0.0
    %2197 = vadd.xlane.f32.xlu0 %v2196
    %v2198 = vpop.xlane.xlu0 %2197
    %v2199 = vsel %vm1402, %v2179, 0.0
    %2200 = vadd.xlane.f32.xlu0 %v2199
    %v2201 = vpop.xlane.xlu0 %2200
    %v2202 = vsel %vm1402, %v2181, 0.0
    %2203 = vadd.xlane.f32.xlu0 %v2202
    %v2204 = vpop.xlane.xlu0 %2203
    %v2205 = vsel %vm1402, %v2183, 0.0
    %2206 = vadd.xlane.f32.xlu0 %v2205
    %v2207 = vpop.xlane.xlu0 %2206
    %2208 = vadd.xlane.f32.xlu0 %v2189
    %v2209 = vpop.xlane.xlu0 %2208
    %2210 = vadd.xlane.f32.xlu0 %v2191
    %v2211 = vpop.xlane.xlu0 %2210
    %2212 = vadd.xlane.f32.xlu0 %v2193
    %v2213 = vpop.xlane.xlu0 %2212
    %2214 = vadd.xlane.f32.xlu0 %v2195
    %v2215 = vpop.xlane.xlu0 %2214
    %v2216 = vadd.f32 %v2198, %v2209
    %v2217 = vadd.f32 %v2201, %v2211
    %v2218 = vadd.f32 %v2204, %v2213
    %v2219 = vadd.f32 %v2207, %v2215
    %v2220 = vrcp.pop %v2216
    %v2221 = vrcp.pop %v2217
    %v2222 = vrcp.pop %v2218
    %v2223 = vrcp.pop %v2219
    %v2225 = vsel %vm1402, %v2177, 0
    %2227 = vmatprep.subr.mxu0 0.0
    %2228 = vmatpush1.msra.mxu0 %v733
    %2229 = vmatprep.subr.mxu0 0.0
    %2230 = vmatpush1.msra.mxu0 0.0
    %2231 = vmatprep.subr.mxu0 0.0
    %2232 = vmatpush1.msra.mxu0 0.0
    %2233 = vmatprep.subr.mxu0 0.0
    %2234 = vmatpush1.msra.mxu0 0.0
    %2235 = vmatprep.subr.mxu0 0.0
    %2236 = vmatpush1.msra.mxu0 0.0
    %2237 = vmatprep.subr.mxu0 0.0
    %2238 = vmatpush1.msra.mxu0 0.0
    %2239 = vmatprep.subr.mxu0 0.0
    %2240 = vmatpush1.msra.mxu0 0.0
    %2241 = vmatprep.subr.mxu0 0.0
    %2242 = vmatpush1.msra.mxu0 0.0
    %2243 = vmatprep.subr.mxu0 0.0
    %2244 = vmatpush1.msra.mxu0 0.0
    %2245 = vmatprep.subr.mxu0 0.0
    %2246 = vmatpush1.msra.mxu0 0.0
    %2247 = vmatprep.subr.mxu0 0.0
    %2248 = vmatpush1.msra.mxu0 0.0
    %2249 = vmatprep.subr.mxu0 0.0
    %2250 = vmatpush1.msra.mxu0 0.0
    %2251 = vmatprep.subr.mxu0 0.0
    %2252 = vmatpush1.msra.mxu0 0.0
    %2253 = vmatprep.subr.mxu0 0.0
    %2254 = vmatpush1.msra.mxu0 0.0
    %2255 = vmatprep.subr.mxu0 0.0
    %2256 = vmatpush1.msra.mxu0 0.0
    %2257 = vmatprep.subr.mxu0 0.0
    %2258 = vmatpush1.msra.mxu0 0.0
    %2259 = vmatprep.subr.mxu0 0.0
    %2260 = vmatpush1.msra.mxu0 0.0
    %2261 = vmatprep.subr.mxu0 0.0
    %2262 = vmatpush1.msra.mxu0 0.0
    %2263 = vmatprep.subr.mxu0 0.0
    %2264 = vmatpush1.msra.mxu0 0.0
    %2265 = vmatprep.subr.mxu0 0.0
    %2266 = vmatpush1.msra.mxu0 0.0
    %2267 = vmatprep.subr.mxu0 0.0
    %2268 = vmatpush1.msra.mxu0 0.0
    %2269 = vmatprep.subr.mxu0 0.0
    %2270 = vmatpush1.msra.mxu0 0.0
    %2271 = vmatprep.subr.mxu0 0.0
    %2272 = vmatpush1.msra.mxu0 0.0
    %2273 = vmatprep.subr.mxu0 0.0
    %2274 = vmatpush1.msra.mxu0 0.0
    %2275 = vmatprep.subr.mxu0 0.0
    %2276 = vmatpush1.msra.mxu0 0.0
    %2277 = vmatprep.subr.mxu0 0.0
    %2278 = vmatpush1.msra.mxu0 0.0
    %2279 = vmatprep.subr.mxu0 0.0
    %2280 = vmatpush1.msra.mxu0 0.0
    %2281 = vmatprep.subr.mxu0 0.0
    %2282 = vmatpush1.msra.mxu0 0.0
    %2283 = vmatprep.subr.mxu0 0.0
    %2284 = vmatpush1.msra.mxu0 0.0
    %2285 = vmatprep.subr.mxu0 0.0
    %2286 = vmatpush1.msra.mxu0 0.0
    %2287 = vmatprep.subr.mxu0 0.0
    %2288 = vmatpush1.msra.mxu0 0.0
    %2289 = vmatprep.subr.mxu0 0.0
    %2290 = vmatpush1.msra.mxu0 0.0
    %2291 = vmatprep.mubr.f32.mxu0 0.0
    %2292 = vmatmul.mubr.f32.gmra.mrb[0].mxu0 %v2225
    %v2293 = vpop.f32.mrb[0].mxu0
    %v2294 = vadd.f32 0.0, %v2293
    %v2295 = vpop.f32.mrb[0].mxu0
    %2296 = vdwg.mxu0
    %v2298 = vsel %vm1402, %v2179, 0
    %2300 = vmatprep.subr.mxu0 0.0
    %2301 = vmatpush1.msra.mxu0 %v739
    %2302 = vmatprep.subr.mxu0 0.0
    %2303 = vmatpush1.msra.mxu0 0.0
    %2304 = vmatprep.subr.mxu0 0.0
    %2305 = vmatpush1.msra.mxu0 0.0
    %2306 = vmatprep.subr.mxu0 0.0
    %2307 = vmatpush1.msra.mxu0 0.0
    %2308 = vmatprep.subr.mxu0 0.0
    %2309 = vmatpush1.msra.mxu0 0.0
    %2310 = vmatprep.subr.mxu0 0.0
    %2311 = vmatpush1.msra.mxu0 0.0
    %2312 = vmatprep.subr.mxu0 0.0
    %2313 = vmatpush1.msra.mxu0 0.0
    %2314 = vmatprep.subr.mxu0 0.0
    %2315 = vmatpush1.msra.mxu0 0.0
    %2316 = vmatprep.subr.mxu0 0.0
    %2317 = vmatpush1.msra.mxu0 0.0
    %2318 = vmatprep.subr.mxu0 0.0
    %2319 = vmatpush1.msra.mxu0 0.0
    %2320 = vmatprep.subr.mxu0 0.0
    %2321 = vmatpush1.msra.mxu0 0.0
    %2322 = vmatprep.subr.mxu0 0.0
    %2323 = vmatpush1.msra.mxu0 0.0
    %2324 = vmatprep.subr.mxu0 0.0
    %2325 = vmatpush1.msra.mxu0 0.0
    %2326 = vmatprep.subr.mxu0 0.0
    %2327 = vmatpush1.msra.mxu0 0.0
    %2328 = vmatprep.subr.mxu0 0.0
    %2329 = vmatpush1.msra.mxu0 0.0
    %2330 = vmatprep.subr.mxu0 0.0
    %2331 = vmatpush1.msra.mxu0 0.0
    %2332 = vmatprep.subr.mxu0 0.0
    %2333 = vmatpush1.msra.mxu0 0.0
    %2334 = vmatprep.subr.mxu0 0.0
    %2335 = vmatpush1.msra.mxu0 0.0
    %2336 = vmatprep.subr.mxu0 0.0
    %2337 = vmatpush1.msra.mxu0 0.0
    %2338 = vmatprep.subr.mxu0 0.0
    %2339 = vmatpush1.msra.mxu0 0.0
    %2340 = vmatprep.subr.mxu0 0.0
    %2341 = vmatpush1.msra.mxu0 0.0
    %2342 = vmatprep.subr.mxu0 0.0
    %2343 = vmatpush1.msra.mxu0 0.0
    %2344 = vmatprep.subr.mxu0 0.0
    %2345 = vmatpush1.msra.mxu0 0.0
    %2346 = vmatprep.subr.mxu0 0.0
    %2347 = vmatpush1.msra.mxu0 0.0
    %2348 = vmatprep.subr.mxu0 0.0
    %2349 = vmatpush1.msra.mxu0 0.0
    %2350 = vmatprep.subr.mxu0 0.0
    %2351 = vmatpush1.msra.mxu0 0.0
    %2352 = vmatprep.subr.mxu0 0.0
    %2353 = vmatpush1.msra.mxu0 0.0
    %2354 = vmatprep.subr.mxu0 0.0
    %2355 = vmatpush1.msra.mxu0 0.0
    %2356 = vmatprep.subr.mxu0 0.0
    %2357 = vmatpush1.msra.mxu0 0.0
    %2358 = vmatprep.subr.mxu0 0.0
    %2359 = vmatpush1.msra.mxu0 0.0
    %2360 = vmatprep.subr.mxu0 0.0
    %2361 = vmatpush1.msra.mxu0 0.0
    %2362 = vmatprep.subr.mxu0 0.0
    %2363 = vmatpush1.msra.mxu0 0.0
    %2364 = vmatprep.mubr.f32.mxu0 0.0
    %2365 = vmatmul.mubr.f32.gmra.mrb[0].mxu0 %v2298
    %v2366 = vpop.f32.mrb[0].mxu0
    %v2367 = vadd.f32 0.0, %v2366
    %v2368 = vpop.f32.mrb[0].mxu0
    %2369 = vdwg.mxu0
    %v2371 = vsel %vm1402, %v2181, 0
    %2373 = vmatprep.subr.mxu0 0.0
    %2374 = vmatpush1.msra.mxu0 %v745
    %2375 = vmatprep.subr.mxu0 0.0
    %2376 = vmatpush1.msra.mxu0 0.0
    %2377 = vmatprep.subr.mxu0 0.0
    %2378 = vmatpush1.msra.mxu0 0.0
    %2379 = vmatprep.subr.mxu0 0.0
    %2380 = vmatpush1.msra.mxu0 0.0
    %2381 = vmatprep.subr.mxu0 0.0
    %2382 = vmatpush1.msra.mxu0 0.0
    %2383 = vmatprep.subr.mxu0 0.0
    %2384 = vmatpush1.msra.mxu0 0.0
    %2385 = vmatprep.subr.mxu0 0.0
    %2386 = vmatpush1.msra.mxu0 0.0
    %2387 = vmatprep.subr.mxu0 0.0
    %2388 = vmatpush1.msra.mxu0 0.0
    %2389 = vmatprep.subr.mxu0 0.0
    %2390 = vmatpush1.msra.mxu0 0.0
    %2391 = vmatprep.subr.mxu0 0.0
    %2392 = vmatpush1.msra.mxu0 0.0
    %2393 = vmatprep.subr.mxu0 0.0
    %2394 = vmatpush1.msra.mxu0 0.0
    %2395 = vmatprep.subr.mxu0 0.0
    %2396 = vmatpush1.msra.mxu0 0.0
    %2397 = vmatprep.subr.mxu0 0.0
    %2398 = vmatpush1.msra.mxu0 0.0
    %2399 = vmatprep.subr.mxu0 0.0
    %2400 = vmatpush1.msra.mxu0 0.0
    %2401 = vmatprep.subr.mxu0 0.0
    %2402 = vmatpush1.msra.mxu0 0.0
    %2403 = vmatprep.subr.mxu0 0.0
    %2404 = vmatpush1.msra.mxu0 0.0
    %2405 = vmatprep.subr.mxu0 0.0
    %2406 = vmatpush1.msra.mxu0 0.0
    %2407 = vmatprep.subr.mxu0 0.0
    %2408 = vmatpush1.msra.mxu0 0.0
    %2409 = vmatprep.subr.mxu0 0.0
    %2410 = vmatpush1.msra.mxu0 0.0
    %2411 = vmatprep.subr.mxu0 0.0
    %2412 = vmatpush1.msra.mxu0 0.0
    %2413 = vmatprep.subr.mxu0 0.0
    %2414 = vmatpush1.msra.mxu0 0.0
    %2415 = vmatprep.subr.mxu0 0.0
    %2416 = vmatpush1.msra.mxu0 0.0
    %2417 = vmatprep.subr.mxu0 0.0
    %2418 = vmatpush1.msra.mxu0 0.0
    %2419 = vmatprep.subr.mxu0 0.0
    %2420 = vmatpush1.msra.mxu0 0.0
    %2421 = vmatprep.subr.mxu0 0.0
    %2422 = vmatpush1.msra.mxu0 0.0
    %2423 = vmatprep.subr.mxu0 0.0
    %2424 = vmatpush1.msra.mxu0 0.0
    %2425 = vmatprep.subr.mxu0 0.0
    %2426 = vmatpush1.msra.mxu0 0.0
    %2427 = vmatprep.subr.mxu0 0.0
    %2428 = vmatpush1.msra.mxu0 0.0
    %2429 = vmatprep.subr.mxu0 0.0
    %2430 = vmatpush1.msra.mxu0 0.0
    %2431 = vmatprep.subr.mxu0 0.0
    %2432 = vmatpush1.msra.mxu0 0.0
    %2433 = vmatprep.subr.mxu0 0.0
    %2434 = vmatpush1.msra.mxu0 0.0
    %2435 = vmatprep.subr.mxu0 0.0
    %2436 = vmatpush1.msra.mxu0 0.0
    %2437 = vmatprep.mubr.f32.mxu0 0.0
    %2438 = vmatmul.mubr.f32.gmra.mrb[0].mxu0 %v2371
    %v2439 = vpop.f32.mrb[0].mxu0
    %v2440 = vadd.f32 0.0, %v2439
    %v2441 = vpop.f32.mrb[0].mxu0
    %2442 = vdwg.mxu0
    %v2444 = vsel %vm1402, %v2183, 0
    %2446 = vmatprep.subr.mxu0 0.0
    %2447 = vmatpush1.msra.mxu0 %v751
    %2448 = vmatprep.subr.mxu0 0.0
    %2449 = vmatpush1.msra.mxu0 0.0
    %2450 = vmatprep.subr.mxu0 0.0
    %2451 = vmatpush1.msra.mxu0 0.0
    %2452 = vmatprep.subr.mxu0 0.0
    %2453 = vmatpush1.msra.mxu0 0.0
    %2454 = vmatprep.subr.mxu0 0.0
    %2455 = vmatpush1.msra.mxu0 0.0
    %2456 = vmatprep.subr.mxu0 0.0
    %2457 = vmatpush1.msra.mxu0 0.0
    %2458 = vmatprep.subr.mxu0 0.0
    %2459 = vmatpush1.msra.mxu0 0.0
    %2460 = vmatprep.subr.mxu0 0.0
    %2461 = vmatpush1.msra.mxu0 0.0
    %2462 = vmatprep.subr.mxu0 0.0
    %2463 = vmatpush1.msra.mxu0 0.0
    %2464 = vmatprep.subr.mxu0 0.0
    %2465 = vmatpush1.msra.mxu0 0.0
    %2466 = vmatprep.subr.mxu0 0.0
    %2467 = vmatpush1.msra.mxu0 0.0
    %2468 = vmatprep.subr.mxu0 0.0
    %2469 = vmatpush1.msra.mxu0 0.0
    %2470 = vmatprep.subr.mxu0 0.0
    %2471 = vmatpush1.msra.mxu0 0.0
    %2472 = vmatprep.subr.mxu0 0.0
    %2473 = vmatpush1.msra.mxu0 0.0
    %2474 = vmatprep.subr.mxu0 0.0
    %2475 = vmatpush1.msra.mxu0 0.0
    %2476 = vmatprep.subr.mxu0 0.0
    %2477 = vmatpush1.msra.mxu0 0.0
    %2478 = vmatprep.subr.mxu0 0.0
    %2479 = vmatpush1.msra.mxu0 0.0
    %2480 = vmatprep.subr.mxu0 0.0
    %2481 = vmatpush1.msra.mxu0 0.0
    %2482 = vmatprep.subr.mxu0 0.0
    %2483 = vmatpush1.msra.mxu0 0.0
    %2484 = vmatprep.subr.mxu0 0.0
    %2485 = vmatpush1.msra.mxu0 0.0
    %2486 = vmatprep.subr.mxu0 0.0
    %2487 = vmatpush1.msra.mxu0 0.0
    %2488 = vmatprep.subr.mxu0 0.0
    %2489 = vmatpush1.msra.mxu0 0.0
    %2490 = vmatprep.subr.mxu0 0.0
    %2491 = vmatpush1.msra.mxu0 0.0
    %2492 = vmatprep.subr.mxu0 0.0
    %2493 = vmatpush1.msra.mxu0 0.0
    %2494 = vmatprep.subr.mxu0 0.0
    %2495 = vmatpush1.msra.mxu0 0.0
    %2496 = vmatprep.subr.mxu0 0.0
    %2497 = vmatpush1.msra.mxu0 0.0
    %2498 = vmatprep.subr.mxu0 0.0
    %2499 = vmatpush1.msra.mxu0 0.0
    %2500 = vmatprep.subr.mxu0 0.0
    %2501 = vmatpush1.msra.mxu0 0.0
    %2502 = vmatprep.subr.mxu0 0.0
    %2503 = vmatpush1.msra.mxu0 0.0
    %2504 = vmatprep.subr.mxu0 0.0
    %2505 = vmatpush1.msra.mxu0 0.0
    %2506 = vmatprep.subr.mxu0 0.0
    %2507 = vmatpush1.msra.mxu0 0.0
    %2508 = vmatprep.subr.mxu0 0.0
    %2509 = vmatpush1.msra.mxu0 0.0
    %2510 = vmatprep.mubr.f32.mxu0 0.0
    %2511 = vmatmul.mubr.f32.gmra.mrb[0].mxu0 %v2444
    %v2512 = vpop.f32.mrb[0].mxu0
    %v2513 = vadd.f32 0.0, %v2512
    %v2514 = vpop.f32.mrb[0].mxu0
    %2515 = vdwg.mxu0
    %2516 = vmatprep.subr.mxu0 0.0
    %2517 = vmatpush1.msra.mxu0 %v1059
    %2518 = vmatprep.subr.mxu0 0.0
    %2519 = vmatpush1.msra.mxu0 %v1063
    %2520 = vmatprep.subr.mxu0 0.0
    %2521 = vmatpush1.msra.mxu0 %v1067
    %2522 = vmatprep.subr.mxu0 0.0
    %2523 = vmatpush1.msra.mxu0 %v1071
    %2524 = vmatprep.subr.mxu0 0.0
    %2525 = vmatpush1.msra.mxu0 %v1075
    %2526 = vmatprep.subr.mxu0 0.0
    %2527 = vmatpush1.msra.mxu0 %v1079
    %2528 = vmatprep.subr.mxu0 0.0
    %2529 = vmatpush1.msra.mxu0 %v1083
    %2530 = vmatprep.subr.mxu0 0.0
    %2531 = vmatpush1.msra.mxu0 %v1087
    %2532 = vmatprep.subr.mxu0 0.0
    %2533 = vmatpush1.msra.mxu0 %v1091
    %2534 = vmatprep.subr.mxu0 0.0
    %2535 = vmatpush1.msra.mxu0 %v1095
    %2536 = vmatprep.subr.mxu0 0.0
    %2537 = vmatpush1.msra.mxu0 %v1099
    %2538 = vmatprep.subr.mxu0 0.0
    %2539 = vmatpush1.msra.mxu0 %v1103
    %2540 = vmatprep.subr.mxu0 0.0
    %2541 = vmatpush1.msra.mxu0 %v1107
    %2542 = vmatprep.subr.mxu0 0.0
    %2543 = vmatpush1.msra.mxu0 %v1111
    %2544 = vmatprep.subr.mxu0 0.0
    %2545 = vmatpush1.msra.mxu0 %v1115
    %2546 = vmatprep.subr.mxu0 0.0
    %2547 = vmatpush1.msra.mxu0 %v1119
    %2548 = vmatprep.subr.mxu0 0.0
    %2549 = vmatpush1.msra.mxu0 0.0
    %2550 = vmatprep.subr.mxu0 0.0
    %2551 = vmatpush1.msra.mxu0 0.0
    %2552 = vmatprep.subr.mxu0 0.0
    %2553 = vmatpush1.msra.mxu0 0.0
    %2554 = vmatprep.subr.mxu0 0.0
    %2555 = vmatpush1.msra.mxu0 0.0
    %2556 = vmatprep.subr.mxu0 0.0
    %2557 = vmatpush1.msra.mxu0 0.0
    %2558 = vmatprep.subr.mxu0 0.0
    %2559 = vmatpush1.msra.mxu0 0.0
    %2560 = vmatprep.subr.mxu0 0.0
    %2561 = vmatpush1.msra.mxu0 0.0
    %2562 = vmatprep.subr.mxu0 0.0
    %2563 = vmatpush1.msra.mxu0 0.0
    %2564 = vmatprep.subr.mxu0 0.0
    %2565 = vmatpush1.msra.mxu0 0.0
    %2566 = vmatprep.subr.mxu0 0.0
    %2567 = vmatpush1.msra.mxu0 0.0
    %2568 = vmatprep.subr.mxu0 0.0
    %2569 = vmatpush1.msra.mxu0 0.0
    %2570 = vmatprep.subr.mxu0 0.0
    %2571 = vmatpush1.msra.mxu0 0.0
    %2572 = vmatprep.subr.mxu0 0.0
    %2573 = vmatpush1.msra.mxu0 0.0
    %2574 = vmatprep.subr.mxu0 0.0
    %2575 = vmatpush1.msra.mxu0 0.0
    %2576 = vmatprep.subr.mxu0 0.0
    %2577 = vmatpush1.msra.mxu0 0.0
    %2578 = vmatprep.subr.mxu0 0.0
    %2579 = vmatpush1.msra.mxu0 0.0
    %2580 = vmatprep.mubr.f32.mxu0 0.0
    %2581 = vmatmul.mubr.f32.gmra.mrb[0].mxu0 %v2189
    %v2582 = vpop.f32.mrb[0].mxu0
    %v2583 = vadd.f32 0.0, %v2582
    %v2584 = vpop.f32.mrb[0].mxu0
    %2585 = vmatprep.mubr.f32.mxu0 0.0
    %2586 = vmatmul.mubr.f32.gmra.mrb[0].mxu0 %v2191
    %v2587 = vpop.f32.mrb[0].mxu0
    %v2588 = vadd.f32 0.0, %v2587
    %v2589 = vpop.f32.mrb[0].mxu0
    %2590 = vmatprep.mubr.f32.mxu0 0.0
    %2591 = vmatmul.mubr.f32.gmra.mrb[0].mxu0 %v2193
    %v2592 = vpop.f32.mrb[0].mxu0
    %v2593 = vadd.f32 0.0, %v2592
    %v2594 = vpop.f32.mrb[0].mxu0
    %2595 = vmatprep.mubr.f32.mxu0 0.0
    %2596 = vmatmul.mubr.f32.gmra.mrb[0].mxu0 %v2195
    %v2597 = vpop.f32.mrb[0].mxu0
    %v2598 = vadd.f32 0.0, %v2597
    %v2599 = vpop.f32.mrb[0].mxu0
    %2600 = vdwg.mxu0
    %v2601 = vadd.f32 %v2294, %v2583
    %v2602 = vadd.f32 %v2367, %v2588
    %v2603 = vadd.f32 %v2440, %v2593
    %v2604 = vadd.f32 %v2513, %v2598
    %v2605 = vmul.f32 %v2601, %v2220
    %v2606 = vmul.f32 %v2602, %v2221
    %v2607 = vmul.f32 %v2603, %v2222
    %v2608 = vmul.f32 %v2604, %v2223
    %2609 = vst [vmem:[#allocation2 + $0x8] sm:$0xff] %v2605
    %2610 = vst [vmem:[#allocation2 + $0x28] sm:$0xff] %v2606
    %2611 = vst [vmem:[#allocation2 + $0x48] sm:$0xff] %v2607
    %2612 = vst [vmem:[#allocation2 + $0x68] sm:$0xff] %v2608
    %2613 = vmatprep.subr.mxu0 0.0
    %2614 = vmatpush1.xpose.msra.mxu0 %v592
    %2615 = vmatprep.subr.mxu0 0.0
    %2616 = vmatpush1.xpose.msra.mxu0 0.0
    %2617 = vmatprep.subr.mxu0 0.0
    %2618 = vmatpush1.xpose.msra.mxu0 0.0
    %2619 = vmatprep.subr.mxu0 0.0
    %2620 = vmatpush1.xpose.msra.mxu0 0.0
    %2621 = vmatprep.subr.mxu0 0.0
    %2622 = vmatpush1.xpose.msra.mxu0 0.0
    %2623 = vmatprep.subr.mxu0 0.0
    %2624 = vmatpush1.xpose.msra.mxu0 0.0
    %2625 = vmatprep.subr.mxu0 0.0
    %2626 = vmatpush1.xpose.msra.mxu0 0.0
    %2627 = vmatprep.subr.mxu0 0.0
    %2628 = vmatpush1.xpose.msra.mxu0 0.0
    %2629 = vmatprep.subr.mxu0 0.0
    %2630 = vmatpush1.xpose.msra.mxu0 0.0
    %2631 = vmatprep.subr.mxu0 0.0
    %2632 = vmatpush1.xpose.msra.mxu0 0.0
    %2633 = vmatprep.subr.mxu0 0.0
    %2634 = vmatpush1.xpose.msra.mxu0 0.0
    %2635 = vmatprep.subr.mxu0 0.0
    %2636 = vmatpush1.xpose.msra.mxu0 0.0
    %2637 = vmatprep.subr.mxu0 0.0
    %2638 = vmatpush1.xpose.msra.mxu0 0.0
    %2639 = vmatprep.subr.mxu0 0.0
    %2640 = vmatpush1.xpose.msra.mxu0 0.0
    %2641 = vmatprep.subr.mxu0 0.0
    %2642 = vmatpush1.xpose.msra.mxu0 0.0
    %2643 = vmatprep.subr.mxu0 0.0
    %2644 = vmatpush1.xpose.msra.mxu0 0.0
    %2645 = vmatprep.subr.mxu0 0.0
    %2646 = vmatpush1.xpose.msra.mxu0 0.0
    %2647 = vmatprep.subr.mxu0 0.0
    %2648 = vmatpush1.xpose.msra.mxu0 0.0
    %2649 = vmatprep.subr.mxu0 0.0
    %2650 = vmatpush1.xpose.msra.mxu0 0.0
    %2651 = vmatprep.subr.mxu0 0.0
    %2652 = vmatpush1.xpose.msra.mxu0 0.0
    %2653 = vmatprep.subr.mxu0 0.0
    %2654 = vmatpush1.xpose.msra.mxu0 0.0
    %2655 = vmatprep.subr.mxu0 0.0
    %2656 = vmatpush1.xpose.msra.mxu0 0.0
    %2657 = vmatprep.subr.mxu0 0.0
    %2658 = vmatpush1.xpose.msra.mxu0 0.0
    %2659 = vmatprep.subr.mxu0 0.0
    %2660 = vmatpush1.xpose.msra.mxu0 0.0
    %2661 = vmatprep.subr.mxu0 0.0
    %2662 = vmatpush1.xpose.msra.mxu0 0.0
    %2663 = vmatprep.subr.mxu0 0.0
    %2664 = vmatpush1.xpose.msra.mxu0 0.0
    %2665 = vmatprep.subr.mxu0 0.0
    %2666 = vmatpush1.xpose.msra.mxu0 0.0
    %2667 = vmatprep.subr.mxu0 0.0
    %2668 = vmatpush1.xpose.msra.mxu0 0.0
    %2669 = vmatprep.subr.mxu0 0.0
    %2670 = vmatpush1.xpose.msra.mxu0 0.0
    %2671 = vmatprep.subr.mxu0 0.0
    %2672 = vmatpush1.xpose.msra.mxu0 0.0
    %2673 = vmatprep.subr.mxu0 0.0
    %2674 = vmatpush1.xpose.msra.mxu0 0.0
    %2675 = vmatprep.subr.mxu0 0.0
    %2676 = vmatpush1.xpose.msra.mxu0 0.0
    %2677 = vmatprep.mubr.f32.mxu0 0.0
    %2678 = vmatmul.mubr.f32.gmra.mrb[0].mxu0 %v364
    %v2679 = vpop.f32.mrb[0].mxu0
    %v2680 = vadd.f32 0.0, %v2679
    %v2681 = vpop.f32.mrb[0].mxu0
    %2682 = vdwg.mxu0
    %2683 = vmatprep.subr.mxu0 0.0
    %2684 = vmatpush1.xpose.msra.mxu0 %v598
    %2685 = vmatprep.subr.mxu0 0.0
    %2686 = vmatpush1.xpose.msra.mxu0 0.0
    %2687 = vmatprep.subr.mxu0 0.0
    %2688 = vmatpush1.xpose.msra.mxu0 0.0
    %2689 = vmatprep.subr.mxu0 0.0
    %2690 = vmatpush1.xpose.msra.mxu0 0.0
    %2691 = vmatprep.subr.mxu0 0.0
    %2692 = vmatpush1.xpose.msra.mxu0 0.0
    %2693 = vmatprep.subr.mxu0 0.0
    %2694 = vmatpush1.xpose.msra.mxu0 0.0
    %2695 = vmatprep.subr.mxu0 0.0
    %2696 = vmatpush1.xpose.msra.mxu0 0.0
    %2697 = vmatprep.subr.mxu0 0.0
    %2698 = vmatpush1.xpose.msra.mxu0 0.0
    %2699 = vmatprep.subr.mxu0 0.0
    %2700 = vmatpush1.xpose.msra.mxu0 0.0
    %2701 = vmatprep.subr.mxu0 0.0
    %2702 = vmatpush1.xpose.msra.mxu0 0.0
    %2703 = vmatprep.subr.mxu0 0.0
    %2704 = vmatpush1.xpose.msra.mxu0 0.0
    %2705 = vmatprep.subr.mxu0 0.0
    %2706 = vmatpush1.xpose.msra.mxu0 0.0
    %2707 = vmatprep.subr.mxu0 0.0
    %2708 = vmatpush1.xpose.msra.mxu0 0.0
    %2709 = vmatprep.subr.mxu0 0.0
    %2710 = vmatpush1.xpose.msra.mxu0 0.0
    %2711 = vmatprep.subr.mxu0 0.0
    %2712 = vmatpush1.xpose.msra.mxu0 0.0
    %2713 = vmatprep.subr.mxu0 0.0
    %2714 = vmatpush1.xpose.msra.mxu0 0.0
    %2715 = vmatprep.subr.mxu0 0.0
    %2716 = vmatpush1.xpose.msra.mxu0 0.0
    %2717 = vmatprep.subr.mxu0 0.0
    %2718 = vmatpush1.xpose.msra.mxu0 0.0
    %2719 = vmatprep.subr.mxu0 0.0
    %2720 = vmatpush1.xpose.msra.mxu0 0.0
    %2721 = vmatprep.subr.mxu0 0.0
    %2722 = vmatpush1.xpose.msra.mxu0 0.0
    %2723 = vmatprep.subr.mxu0 0.0
    %2724 = vmatpush1.xpose.msra.mxu0 0.0
    %2725 = vmatprep.subr.mxu0 0.0
    %2726 = vmatpush1.xpose.msra.mxu0 0.0
    %2727 = vmatprep.subr.mxu0 0.0
    %2728 = vmatpush1.xpose.msra.mxu0 0.0
    %2729 = vmatprep.subr.mxu0 0.0
    %2730 = vmatpush1.xpose.msra.mxu0 0.0
    %2731 = vmatprep.subr.mxu0 0.0
    %2732 = vmatpush1.xpose.msra.mxu0 0.0
    %2733 = vmatprep.subr.mxu0 0.0
    %2734 = vmatpush1.xpose.msra.mxu0 0.0
    %2735 = vmatprep.subr.mxu0 0.0
    %2736 = vmatpush1.xpose.msra.mxu0 0.0
    %2737 = vmatprep.subr.mxu0 0.0
    %2738 = vmatpush1.xpose.msra.mxu0 0.0
    %2739 = vmatprep.subr.mxu0 0.0
    %2740 = vmatpush1.xpose.msra.mxu0 0.0
    %2741 = vmatprep.subr.mxu0 0.0
    %2742 = vmatpush1.xpose.msra.mxu0 0.0
    %2743 = vmatprep.subr.mxu0 0.0
    %2744 = vmatpush1.xpose.msra.mxu0 0.0
    %2745 = vmatprep.subr.mxu0 0.0
    %2746 = vmatpush1.xpose.msra.mxu0 0.0
    %2747 = vmatprep.mubr.f32.mxu0 0.0
    %2748 = vmatmul.mubr.f32.gmra.mrb[0].mxu0 %v370
    %v2749 = vpop.f32.mrb[0].mxu0
    %v2750 = vadd.f32 0.0, %v2749
    %v2751 = vpop.f32.mrb[0].mxu0
    %2752 = vdwg.mxu0
    %2753 = vmatprep.subr.mxu0 0.0
    %2754 = vmatpush1.xpose.msra.mxu0 %v604
    %2755 = vmatprep.subr.mxu0 0.0
    %2756 = vmatpush1.xpose.msra.mxu0 0.0
    %2757 = vmatprep.subr.mxu0 0.0
    %2758 = vmatpush1.xpose.msra.mxu0 0.0
    %2759 = vmatprep.subr.mxu0 0.0
    %2760 = vmatpush1.xpose.msra.mxu0 0.0
    %2761 = vmatprep.subr.mxu0 0.0
    %2762 = vmatpush1.xpose.msra.mxu0 0.0
    %2763 = vmatprep.subr.mxu0 0.0
    %2764 = vmatpush1.xpose.msra.mxu0 0.0
    %2765 = vmatprep.subr.mxu0 0.0
    %2766 = vmatpush1.xpose.msra.mxu0 0.0
    %2767 = vmatprep.subr.mxu0 0.0
    %2768 = vmatpush1.xpose.msra.mxu0 0.0
    %2769 = vmatprep.subr.mxu0 0.0
    %2770 = vmatpush1.xpose.msra.mxu0 0.0
    %2771 = vmatprep.subr.mxu0 0.0
    %2772 = vmatpush1.xpose.msra.mxu0 0.0
    %2773 = vmatprep.subr.mxu0 0.0
    %2774 = vmatpush1.xpose.msra.mxu0 0.0
    %2775 = vmatprep.subr.mxu0 0.0
    %2776 = vmatpush1.xpose.msra.mxu0 0.0
    %2777 = vmatprep.subr.mxu0 0.0
    %2778 = vmatpush1.xpose.msra.mxu0 0.0
    %2779 = vmatprep.subr.mxu0 0.0
    %2780 = vmatpush1.xpose.msra.mxu0 0.0
    %2781 = vmatprep.subr.mxu0 0.0
    %2782 = vmatpush1.xpose.msra.mxu0 0.0
    %2783 = vmatprep.subr.mxu0 0.0
    %2784 = vmatpush1.xpose.msra.mxu0 0.0
    %2785 = vmatprep.subr.mxu0 0.0
    %2786 = vmatpush1.xpose.msra.mxu0 0.0
    %2787 = vmatprep.subr.mxu0 0.0
    %2788 = vmatpush1.xpose.msra.mxu0 0.0
    %2789 = vmatprep.subr.mxu0 0.0
    %2790 = vmatpush1.xpose.msra.mxu0 0.0
    %2791 = vmatprep.subr.mxu0 0.0
    %2792 = vmatpush1.xpose.msra.mxu0 0.0
    %2793 = vmatprep.subr.mxu0 0.0
    %2794 = vmatpush1.xpose.msra.mxu0 0.0
    %2795 = vmatprep.subr.mxu0 0.0
    %2796 = vmatpush1.xpose.msra.mxu0 0.0
    %2797 = vmatprep.subr.mxu0 0.0
    %2798 = vmatpush1.xpose.msra.mxu0 0.0
    %2799 = vmatprep.subr.mxu0 0.0
    %2800 = vmatpush1.xpose.msra.mxu0 0.0
    %2801 = vmatprep.subr.mxu0 0.0
    %2802 = vmatpush1.xpose.msra.mxu0 0.0
    %2803 = vmatprep.subr.mxu0 0.0
    %2804 = vmatpush1.xpose.msra.mxu0 0.0
    %2805 = vmatprep.subr.mxu0 0.0
    %2806 = vmatpush1.xpose.msra.mxu0 0.0
    %2807 = vmatprep.subr.mxu0 0.0
    %2808 = vmatpush1.xpose.msra.mxu0 0.0
    %2809 = vmatprep.subr.mxu0 0.0
    %2810 = vmatpush1.xpose.msra.mxu0 0.0
    %2811 = vmatprep.subr.mxu0 0.0
    %2812 = vmatpush1.xpose.msra.mxu0 0.0
    %2813 = vmatprep.subr.mxu0 0.0
    %2814 = vmatpush1.xpose.msra.mxu0 0.0
    %2815 = vmatprep.subr.mxu0 0.0
    %2816 = vmatpush1.xpose.msra.mxu0 0.0
    %2817 = vmatprep.mubr.f32.mxu0 0.0
    %2818 = vmatmul.mubr.f32.gmra.mrb[0].mxu0 %v376
    %v2819 = vpop.f32.mrb[0].mxu0
    %v2820 = vadd.f32 0.0, %v2819
    %v2821 = vpop.f32.mrb[0].mxu0
    %2822 = vdwg.mxu0
    %2823 = vmatprep.subr.mxu0 0.0
    %2824 = vmatpush1.xpose.msra.mxu0 %v610
    %2825 = vmatprep.subr.mxu0 0.0
    %2826 = vmatpush1.xpose.msra.mxu0 0.0
    %2827 = vmatprep.subr.mxu0 0.0
    %2828 = vmatpush1.xpose.msra.mxu0 0.0
    %2829 = vmatprep.subr.mxu0 0.0
    %2830 = vmatpush1.xpose.msra.mxu0 0.0
    %2831 = vmatprep.subr.mxu0 0.0
    %2832 = vmatpush1.xpose.msra.mxu0 0.0
    %2833 = vmatprep.subr.mxu0 0.0
    %2834 = vmatpush1.xpose.msra.mxu0 0.0
    %2835 = vmatprep.subr.mxu0 0.0
    %2836 = vmatpush1.xpose.msra.mxu0 0.0
    %2837 = vmatprep.subr.mxu0 0.0
    %2838 = vmatpush1.xpose.msra.mxu0 0.0
    %2839 = vmatprep.subr.mxu0 0.0
    %2840 = vmatpush1.xpose.msra.mxu0 0.0
    %2841 = vmatprep.subr.mxu0 0.0
    %2842 = vmatpush1.xpose.msra.mxu0 0.0
    %2843 = vmatprep.subr.mxu0 0.0
    %2844 = vmatpush1.xpose.msra.mxu0 0.0
    %2845 = vmatprep.subr.mxu0 0.0
    %2846 = vmatpush1.xpose.msra.mxu0 0.0
    %2847 = vmatprep.subr.mxu0 0.0
    %2848 = vmatpush1.xpose.msra.mxu0 0.0
    %2849 = vmatprep.subr.mxu0 0.0
    %2850 = vmatpush1.xpose.msra.mxu0 0.0
    %2851 = vmatprep.subr.mxu0 0.0
    %2852 = vmatpush1.xpose.msra.mxu0 0.0
    %2853 = vmatprep.subr.mxu0 0.0
    %2854 = vmatpush1.xpose.msra.mxu0 0.0
    %2855 = vmatprep.subr.mxu0 0.0
    %2856 = vmatpush1.xpose.msra.mxu0 0.0
    %2857 = vmatprep.subr.mxu0 0.0
    %2858 = vmatpush1.xpose.msra.mxu0 0.0
    %2859 = vmatprep.subr.mxu0 0.0
    %2860 = vmatpush1.xpose.msra.mxu0 0.0
    %2861 = vmatprep.subr.mxu0 0.0
    %2862 = vmatpush1.xpose.msra.mxu0 0.0
    %2863 = vmatprep.subr.mxu0 0.0
    %2864 = vmatpush1.xpose.msra.mxu0 0.0
    %2865 = vmatprep.subr.mxu0 0.0
    %2866 = vmatpush1.xpose.msra.mxu0 0.0
    %2867 = vmatprep.subr.mxu0 0.0
    %2868 = vmatpush1.xpose.msra.mxu0 0.0
    %2869 = vmatprep.subr.mxu0 0.0
    %2870 = vmatpush1.xpose.msra.mxu0 0.0
    %2871 = vmatprep.subr.mxu0 0.0
    %2872 = vmatpush1.xpose.msra.mxu0 0.0
    %2873 = vmatprep.subr.mxu0 0.0
    %2874 = vmatpush1.xpose.msra.mxu0 0.0
    %2875 = vmatprep.subr.mxu0 0.0
    %2876 = vmatpush1.xpose.msra.mxu0 0.0
    %2877 = vmatprep.subr.mxu0 0.0
    %2878 = vmatpush1.xpose.msra.mxu0 0.0
    %2879 = vmatprep.subr.mxu0 0.0
    %2880 = vmatpush1.xpose.msra.mxu0 0.0
    %2881 = vmatprep.subr.mxu0 0.0
    %2882 = vmatpush1.xpose.msra.mxu0 0.0
    %2883 = vmatprep.subr.mxu0 0.0
    %2884 = vmatpush1.xpose.msra.mxu0 0.0
    %2885 = vmatprep.subr.mxu0 0.0
    %2886 = vmatpush1.xpose.msra.mxu0 0.0
    %2887 = vmatprep.mubr.f32.mxu0 0.0
    %2888 = vmatmul.mubr.f32.gmra.mrb[0].mxu0 %v382
    %v2889 = vpop.f32.mrb[0].mxu0
    %v2890 = vadd.f32 0.0, %v2889
    %v2891 = vpop.f32.mrb[0].mxu0
    %2892 = vdwg.mxu0
    %v2893 = vsel %vm1402, %v2680, -inf
    %2894 = vmax.xlane.f32.xlu0 %v2893
    %v2895 = vpop.xlane.xlu0 %2894
    %v2896 = vsel %vm1402, %v2750, -inf
    %2897 = vmax.xlane.f32.xlu0 %v2896
    %v2898 = vpop.xlane.xlu0 %2897
    %v2899 = vsel %vm1402, %v2820, -inf
    %2900 = vmax.xlane.f32.xlu0 %v2899
    %v2901 = vpop.xlane.xlu0 %2900
    %v2902 = vsel %vm1402, %v2890, -inf
    %2903 = vmax.xlane.f32.xlu0 %v2902
    %v2904 = vpop.xlane.xlu0 %2903
    %2905 = vmax.xlane.f32.xlu0 %v1036
    %v2906 = vpop.xlane.xlu0 %2905
    %2907 = vmax.xlane.f32.xlu0 %v1042
    %v2908 = vpop.xlane.xlu0 %2907
    %2909 = vmax.xlane.f32.xlu0 %v1048
    %v2910 = vpop.xlane.xlu0 %2909
    %2911 = vmax.xlane.f32.xlu0 %v1054
    %v2912 = vpop.xlane.xlu0 %2911
    %v2913 = vmax.f32 %v2895, %v2906
    %v2914 = vmax.f32 %v2898, %v2908
    %v2915 = vmax.f32 %v2901, %v2910
    %v2916 = vmax.f32 %v2904, %v2912
    %v2917 = vsub.f32 %v2680, %v2913
    %v2918 = vsub.f32 %v2750, %v2914
    %v2919 = vsub.f32 %v2820, %v2915
    %v2920 = vsub.f32 %v2890, %v2916
    %v2921 = vmul.f32 %v2917, 1.442695
    %v2922 = vpow.pop %v2921
    %v2923 = vmul.f32 %v2918, 1.442695
    %v2924 = vpow.pop %v2923
    %v2925 = vmul.f32 %v2919, 1.442695
    %v2926 = vpow.pop %v2925
    %v2927 = vmul.f32 %v2920, 1.442695
    %v2928 = vpow.pop %v2927
    %v2929 = vsub.f32 %v1036, %v2913
    %v2930 = vsub.f32 %v1042, %v2914
    %v2931 = vsub.f32 %v1048, %v2915
    %v2932 = vsub.f32 %v1054, %v2916
    %v2933 = vmul.f32 %v2929, 1.442695
    %v2934 = vpow.pop %v2933
    %v2935 = vmul.f32 %v2930, 1.442695
    %v2936 = vpow.pop %v2935
    %v2937 = vmul.f32 %v2931, 1.442695
    %v2938 = vpow.pop %v2937
    %v2939 = vmul.f32 %v2932, 1.442695
    %v2940 = vpow.pop %v2939
    %v2941 = vsel %vm1402, %v2922, 0.0
    %2942 = vadd.xlane.f32.xlu0 %v2941
    %v2943 = vpop.xlane.xlu0 %2942
    %v2944 = vsel %vm1402, %v2924, 0.0
    %2945 = vadd.xlane.f32.xlu0 %v2944
    %v2946 = vpop.xlane.xlu0 %2945
    %v2947 = vsel %vm1402, %v2926, 0.0
    %2948 = vadd.xlane.f32.xlu0 %v2947
    %v2949 = vpop.xlane.xlu0 %2948
    %v2950 = vsel %vm1402, %v2928, 0.0
    %2951 = vadd.xlane.f32.xlu0 %v2950
    %v2952 = vpop.xlane.xlu0 %2951
    %2953 = vadd.xlane.f32.xlu0 %v2934
    %v2954 = vpop.xlane.xlu0 %2953
    %2955 = vadd.xlane.f32.xlu0 %v2936
    %v2956 = vpop.xlane.xlu0 %2955
    %2957 = vadd.xlane.f32.xlu0 %v2938
    %v2958 = vpop.xlane.xlu0 %2957
    %2959 = vadd.xlane.f32.xlu0 %v2940
    %v2960 = vpop.xlane.xlu0 %2959
    %v2961 = vadd.f32 %v2943, %v2954
    %v2962 = vadd.f32 %v2946, %v2956
    %v2963 = vadd.f32 %v2949, %v2958
    %v2964 = vadd.f32 %v2952, %v2960
    %v2965 = vrcp.pop %v2961
    %v2966 = vrcp.pop %v2962
    %v2967 = vrcp.pop %v2963
    %v2968 = vrcp.pop %v2964
    %v2970 = vsel %vm1402, %v2922, 0
    %2972 = vmatprep.subr.mxu0 0.0
    %2973 = vmatpush1.msra.mxu0 %v820
    %2974 = vmatprep.subr.mxu0 0.0
    %2975 = vmatpush1.msra.mxu0 0.0
    %2976 = vmatprep.subr.mxu0 0.0
    %2977 = vmatpush1.msra.mxu0 0.0
    %2978 = vmatprep.subr.mxu0 0.0
    %2979 = vmatpush1.msra.mxu0 0.0
    %2980 = vmatprep.subr.mxu0 0.0
    %2981 = vmatpush1.msra.mxu0 0.0
    %2982 = vmatprep.subr.mxu0 0.0
    %2983 = vmatpush1.msra.mxu0 0.0
    %2984 = vmatprep.subr.mxu0 0.0
    %2985 = vmatpush1.msra.mxu0 0.0
    %2986 = vmatprep.subr.mxu0 0.0
    %2987 = vmatpush1.msra.mxu0 0.0
    %2988 = vmatprep.subr.mxu0 0.0
    %2989 = vmatpush1.msra.mxu0 0.0
    %2990 = vmatprep.subr.mxu0 0.0
    %2991 = vmatpush1.msra.mxu0 0.0
    %2992 = vmatprep.subr.mxu0 0.0
    %2993 = vmatpush1.msra.mxu0 0.0
    %2994 = vmatprep.subr.mxu0 0.0
    %2995 = vmatpush1.msra.mxu0 0.0
    %2996 = vmatprep.subr.mxu0 0.0
    %2997 = vmatpush1.msra.mxu0 0.0
    %2998 = vmatprep.subr.mxu0 0.0
    %2999 = vmatpush1.msra.mxu0 0.0
    %3000 = vmatprep.subr.mxu0 0.0
    %3001 = vmatpush1.msra.mxu0 0.0
    %3002 = vmatprep.subr.mxu0 0.0
    %3003 = vmatpush1.msra.mxu0 0.0
    %3004 = vmatprep.subr.mxu0 0.0
    %3005 = vmatpush1.msra.mxu0 0.0
    %3006 = vmatprep.subr.mxu0 0.0
    %3007 = vmatpush1.msra.mxu0 0.0
    %3008 = vmatprep.subr.mxu0 0.0
    %3009 = vmatpush1.msra.mxu0 0.0
    %3010 = vmatprep.subr.mxu0 0.0
    %3011 = vmatpush1.msra.mxu0 0.0
    %3012 = vmatprep.subr.mxu0 0.0
    %3013 = vmatpush1.msra.mxu0 0.0
    %3014 = vmatprep.subr.mxu0 0.0
    %3015 = vmatpush1.msra.mxu0 0.0
    %3016 = vmatprep.subr.mxu0 0.0
    %3017 = vmatpush1.msra.mxu0 0.0
    %3018 = vmatprep.subr.mxu0 0.0
    %3019 = vmatpush1.msra.mxu0 0.0
    %3020 = vmatprep.subr.mxu0 0.0
    %3021 = vmatpush1.msra.mxu0 0.0
    %3022 = vmatprep.subr.mxu0 0.0
    %3023 = vmatpush1.msra.mxu0 0.0
    %3024 = vmatprep.subr.mxu0 0.0
    %3025 = vmatpush1.msra.mxu0 0.0
    %3026 = vmatprep.subr.mxu0 0.0
    %3027 = vmatpush1.msra.mxu0 0.0
    %3028 = vmatprep.subr.mxu0 0.0
    %3029 = vmatpush1.msra.mxu0 0.0
    %3030 = vmatprep.subr.mxu0 0.0
    %3031 = vmatpush1.msra.mxu0 0.0
    %3032 = vmatprep.subr.mxu0 0.0
    %3033 = vmatpush1.msra.mxu0 0.0
    %3034 = vmatprep.subr.mxu0 0.0
    %3035 = vmatpush1.msra.mxu0 0.0
    %3036 = vmatprep.mubr.f32.mxu0 0.0
    %3037 = vmatmul.mubr.f32.gmra.mrb[0].mxu0 %v2970
    %v3038 = vpop.f32.mrb[0].mxu0
    %v3039 = vadd.f32 0.0, %v3038
    %v3040 = vpop.f32.mrb[0].mxu0
    %3041 = vdwg.mxu0
    %v3043 = vsel %vm1402, %v2924, 0
    %3045 = vmatprep.subr.mxu0 0.0
    %3046 = vmatpush1.msra.mxu0 %v826
    %3047 = vmatprep.subr.mxu0 0.0
    %3048 = vmatpush1.msra.mxu0 0.0
    %3049 = vmatprep.subr.mxu0 0.0
    %3050 = vmatpush1.msra.mxu0 0.0
    %3051 = vmatprep.subr.mxu0 0.0
    %3052 = vmatpush1.msra.mxu0 0.0
    %3053 = vmatprep.subr.mxu0 0.0
    %3054 = vmatpush1.msra.mxu0 0.0
    %3055 = vmatprep.subr.mxu0 0.0
    %3056 = vmatpush1.msra.mxu0 0.0
    %3057 = vmatprep.subr.mxu0 0.0
    %3058 = vmatpush1.msra.mxu0 0.0
    %3059 = vmatprep.subr.mxu0 0.0
    %3060 = vmatpush1.msra.mxu0 0.0
    %3061 = vmatprep.subr.mxu0 0.0
    %3062 = vmatpush1.msra.mxu0 0.0
    %3063 = vmatprep.subr.mxu0 0.0
    %3064 = vmatpush1.msra.mxu0 0.0
    %3065 = vmatprep.subr.mxu0 0.0
    %3066 = vmatpush1.msra.mxu0 0.0
    %3067 = vmatprep.subr.mxu0 0.0
    %3068 = vmatpush1.msra.mxu0 0.0
    %3069 = vmatprep.subr.mxu0 0.0
    %3070 = vmatpush1.msra.mxu0 0.0
    %3071 = vmatprep.subr.mxu0 0.0
    %3072 = vmatpush1.msra.mxu0 0.0
    %3073 = vmatprep.subr.mxu0 0.0
    %3074 = vmatpush1.msra.mxu0 0.0
    %3075 = vmatprep.subr.mxu0 0.0
    %3076 = vmatpush1.msra.mxu0 0.0
    %3077 = vmatprep.subr.mxu0 0.0
    %3078 = vmatpush1.msra.mxu0 0.0
    %3079 = vmatprep.subr.mxu0 0.0
    %3080 = vmatpush1.msra.mxu0 0.0
    %3081 = vmatprep.subr.mxu0 0.0
    %3082 = vmatpush1.msra.mxu0 0.0
    %3083 = vmatprep.subr.mxu0 0.0
    %3084 = vmatpush1.msra.mxu0 0.0
    %3085 = vmatprep.subr.mxu0 0.0
    %3086 = vmatpush1.msra.mxu0 0.0
    %3087 = vmatprep.subr.mxu0 0.0
    %3088 = vmatpush1.msra.mxu0 0.0
    %3089 = vmatprep.subr.mxu0 0.0
    %3090 = vmatpush1.msra.mxu0 0.0
    %3091 = vmatprep.subr.mxu0 0.0
    %3092 = vmatpush1.msra.mxu0 0.0
    %3093 = vmatprep.subr.mxu0 0.0
    %3094 = vmatpush1.msra.mxu0 0.0
    %3095 = vmatprep.subr.mxu0 0.0
    %3096 = vmatpush1.msra.mxu0 0.0
    %3097 = vmatprep.subr.mxu0 0.0
    %3098 = vmatpush1.msra.mxu0 0.0
    %3099 = vmatprep.subr.mxu0 0.0
    %3100 = vmatpush1.msra.mxu0 0.0
    %3101 = vmatprep.subr.mxu0 0.0
    %3102 = vmatpush1.msra.mxu0 0.0
    %3103 = vmatprep.subr.mxu0 0.0
    %3104 = vmatpush1.msra.mxu0 0.0
    %3105 = vmatprep.subr.mxu0 0.0
    %3106 = vmatpush1.msra.mxu0 0.0
    %3107 = vmatprep.subr.mxu0 0.0
    %3108 = vmatpush1.msra.mxu0 0.0
    %3109 = vmatprep.mubr.f32.mxu0 0.0
    %3110 = vmatmul.mubr.f32.gmra.mrb[0].mxu0 %v3043
    %v3111 = vpop.f32.mrb[0].mxu0
    %v3112 = vadd.f32 0.0, %v3111
    %v3113 = vpop.f32.mrb[0].mxu0
    %3114 = vdwg.mxu0
    %v3116 = vsel %vm1402, %v2926, 0
    %3118 = vmatprep.subr.mxu0 0.0
    %3119 = vmatpush1.msra.mxu0 %v832
    %3120 = vmatprep.subr.mxu0 0.0
    %3121 = vmatpush1.msra.mxu0 0.0
    %3122 = vmatprep.subr.mxu0 0.0
    %3123 = vmatpush1.msra.mxu0 0.0
    %3124 = vmatprep.subr.mxu0 0.0
    %3125 = vmatpush1.msra.mxu0 0.0
    %3126 = vmatprep.subr.mxu0 0.0
    %3127 = vmatpush1.msra.mxu0 0.0
    %3128 = vmatprep.subr.mxu0 0.0
    %3129 = vmatpush1.msra.mxu0 0.0
    %3130 = vmatprep.subr.mxu0 0.0
    %3131 = vmatpush1.msra.mxu0 0.0
    %3132 = vmatprep.subr.mxu0 0.0
    %3133 = vmatpush1.msra.mxu0 0.0
    %3134 = vmatprep.subr.mxu0 0.0
    %3135 = vmatpush1.msra.mxu0 0.0
    %3136 = vmatprep.subr.mxu0 0.0
    %3137 = vmatpush1.msra.mxu0 0.0
    %3138 = vmatprep.subr.mxu0 0.0
    %3139 = vmatpush1.msra.mxu0 0.0
    %3140 = vmatprep.subr.mxu0 0.0
    %3141 = vmatpush1.msra.mxu0 0.0
    %3142 = vmatprep.subr.mxu0 0.0
    %3143 = vmatpush1.msra.mxu0 0.0
    %3144 = vmatprep.subr.mxu0 0.0
    %3145 = vmatpush1.msra.mxu0 0.0
    %3146 = vmatprep.subr.mxu0 0.0
    %3147 = vmatpush1.msra.mxu0 0.0
    %3148 = vmatprep.subr.mxu0 0.0
    %3149 = vmatpush1.msra.mxu0 0.0
    %3150 = vmatprep.subr.mxu0 0.0
    %3151 = vmatpush1.msra.mxu0 0.0
    %3152 = vmatprep.subr.mxu0 0.0
    %3153 = vmatpush1.msra.mxu0 0.0
    %3154 = vmatprep.subr.mxu0 0.0
    %3155 = vmatpush1.msra.mxu0 0.0
    %3156 = vmatprep.subr.mxu0 0.0
    %3157 = vmatpush1.msra.mxu0 0.0
    %3158 = vmatprep.subr.mxu0 0.0
    %3159 = vmatpush1.msra.mxu0 0.0
    %3160 = vmatprep.subr.mxu0 0.0
    %3161 = vmatpush1.msra.mxu0 0.0
    %3162 = vmatprep.subr.mxu0 0.0
    %3163 = vmatpush1.msra.mxu0 0.0
    %3164 = vmatprep.subr.mxu0 0.0
    %3165 = vmatpush1.msra.mxu0 0.0
    %3166 = vmatprep.subr.mxu0 0.0
    %3167 = vmatpush1.msra.mxu0 0.0
    %3168 = vmatprep.subr.mxu0 0.0
    %3169 = vmatpush1.msra.mxu0 0.0
    %3170 = vmatprep.subr.mxu0 0.0
    %3171 = vmatpush1.msra.mxu0 0.0
    %3172 = vmatprep.subr.mxu0 0.0
    %3173 = vmatpush1.msra.mxu0 0.0
    %3174 = vmatprep.subr.mxu0 0.0
    %3175 = vmatpush1.msra.mxu0 0.0
    %3176 = vmatprep.subr.mxu0 0.0
    %3177 = vmatpush1.msra.mxu0 0.0
    %3178 = vmatprep.subr.mxu0 0.0
    %3179 = vmatpush1.msra.mxu0 0.0
    %3180 = vmatprep.subr.mxu0 0.0
    %3181 = vmatpush1.msra.mxu0 0.0
    %3182 = vmatprep.mubr.f32.mxu0 0.0
    %3183 = vmatmul.mubr.f32.gmra.mrb[0].mxu0 %v3116
    %v3184 = vpop.f32.mrb[0].mxu0
    %v3185 = vadd.f32 0.0, %v3184
    %v3186 = vpop.f32.mrb[0].mxu0
    %3187 = vdwg.mxu0
    %v3189 = vsel %vm1402, %v2928, 0
    %3191 = vmatprep.subr.mxu0 0.0
    %3192 = vmatpush1.msra.mxu0 %v838
    %3193 = vmatprep.subr.mxu0 0.0
    %3194 = vmatpush1.msra.mxu0 0.0
    %3195 = vmatprep.subr.mxu0 0.0
    %3196 = vmatpush1.msra.mxu0 0.0
    %3197 = vmatprep.subr.mxu0 0.0
    %3198 = vmatpush1.msra.mxu0 0.0
    %3199 = vmatprep.subr.mxu0 0.0
    %3200 = vmatpush1.msra.mxu0 0.0
    %3201 = vmatprep.subr.mxu0 0.0
    %3202 = vmatpush1.msra.mxu0 0.0
    %3203 = vmatprep.subr.mxu0 0.0
    %3204 = vmatpush1.msra.mxu0 0.0
    %3205 = vmatprep.subr.mxu0 0.0
    %3206 = vmatpush1.msra.mxu0 0.0
    %3207 = vmatprep.subr.mxu0 0.0
    %3208 = vmatpush1.msra.mxu0 0.0
    %3209 = vmatprep.subr.mxu0 0.0
    %3210 = vmatpush1.msra.mxu0 0.0
    %3211 = vmatprep.subr.mxu0 0.0
    %3212 = vmatpush1.msra.mxu0 0.0
    %3213 = vmatprep.subr.mxu0 0.0
    %3214 = vmatpush1.msra.mxu0 0.0
    %3215 = vmatprep.subr.mxu0 0.0
    %3216 = vmatpush1.msra.mxu0 0.0
    %3217 = vmatprep.subr.mxu0 0.0
    %3218 = vmatpush1.msra.mxu0 0.0
    %3219 = vmatprep.subr.mxu0 0.0
    %3220 = vmatpush1.msra.mxu0 0.0
    %3221 = vmatprep.subr.mxu0 0.0
    %3222 = vmatpush1.msra.mxu0 0.0
    %3223 = vmatprep.subr.mxu0 0.0
    %3224 = vmatpush1.msra.mxu0 0.0
    %3225 = vmatprep.subr.mxu0 0.0
    %3226 = vmatpush1.msra.mxu0 0.0
    %3227 = vmatprep.subr.mxu0 0.0
    %3228 = vmatpush1.msra.mxu0 0.0
    %3229 = vmatprep.subr.mxu0 0.0
    %3230 = vmatpush1.msra.mxu0 0.0
    %3231 = vmatprep.subr.mxu0 0.0
    %3232 = vmatpush1.msra.mxu0 0.0
    %3233 = vmatprep.subr.mxu0 0.0
    %3234 = vmatpush1.msra.mxu0 0.0
    %3235 = vmatprep.subr.mxu0 0.0
    %3236 = vmatpush1.msra.mxu0 0.0
    %3237 = vmatprep.subr.mxu0 0.0
    %3238 = vmatpush1.msra.mxu0 0.0
    %3239 = vmatprep.subr.mxu0 0.0
    %3240 = vmatpush1.msra.mxu0 0.0
    %3241 = vmatprep.subr.mxu0 0.0
    %3242 = vmatpush1.msra.mxu0 0.0
    %3243 = vmatprep.subr.mxu0 0.0
    %3244 = vmatpush1.msra.mxu0 0.0
    %3245 = vmatprep.subr.mxu0 0.0
    %3246 = vmatpush1.msra.mxu0 0.0
    %3247 = vmatprep.subr.mxu0 0.0
    %3248 = vmatpush1.msra.mxu0 0.0
    %3249 = vmatprep.subr.mxu0 0.0
    %3250 = vmatpush1.msra.mxu0 0.0
    %3251 = vmatprep.subr.mxu0 0.0
    %3252 = vmatpush1.msra.mxu0 0.0
    %3253 = vmatprep.subr.mxu0 0.0
    %3254 = vmatpush1.msra.mxu0 0.0
    %3255 = vmatprep.mubr.f32.mxu0 0.0
    %3256 = vmatmul.mubr.f32.gmra.mrb[0].mxu0 %v3189
    %v3257 = vpop.f32.mrb[0].mxu0
    %v3258 = vadd.f32 0.0, %v3257
    %v3259 = vpop.f32.mrb[0].mxu0
    %3260 = vdwg.mxu0
    %3261 = vmatprep.subr.mxu0 0.0
    %3262 = vmatpush1.msra.mxu0 %v1060
    %3263 = vmatprep.subr.mxu0 0.0
    %3264 = vmatpush1.msra.mxu0 %v1064
    %3265 = vmatprep.subr.mxu0 0.0
    %3266 = vmatpush1.msra.mxu0 %v1068
    %3267 = vmatprep.subr.mxu0 0.0
    %3268 = vmatpush1.msra.mxu0 %v1072
    %3269 = vmatprep.subr.mxu0 0.0
    %3270 = vmatpush1.msra.mxu0 %v1076
    %3271 = vmatprep.subr.mxu0 0.0
    %3272 = vmatpush1.msra.mxu0 %v1080
    %3273 = vmatprep.subr.mxu0 0.0
    %3274 = vmatpush1.msra.mxu0 %v1084
    %3275 = vmatprep.subr.mxu0 0.0
    %3276 = vmatpush1.msra.mxu0 %v1088
    %3277 = vmatprep.subr.mxu0 0.0
    %3278 = vmatpush1.msra.mxu0 %v1092
    %3279 = vmatprep.subr.mxu0 0.0
    %3280 = vmatpush1.msra.mxu0 %v1096
    %3281 = vmatprep.subr.mxu0 0.0
    %3282 = vmatpush1.msra.mxu0 %v1100
    %3283 = vmatprep.subr.mxu0 0.0
    %3284 = vmatpush1.msra.mxu0 %v1104
    %3285 = vmatprep.subr.mxu0 0.0
    %3286 = vmatpush1.msra.mxu0 %v1108
    %3287 = vmatprep.subr.mxu0 0.0
    %3288 = vmatpush1.msra.mxu0 %v1112
    %3289 = vmatprep.subr.mxu0 0.0
    %3290 = vmatpush1.msra.mxu0 %v1116
    %3291 = vmatprep.subr.mxu0 0.0
    %3292 = vmatpush1.msra.mxu0 %v1120
    %3293 = vmatprep.subr.mxu0 0.0
    %3294 = vmatpush1.msra.mxu0 0.0
    %3295 = vmatprep.subr.mxu0 0.0
    %3296 = vmatpush1.msra.mxu0 0.0
    %3297 = vmatprep.subr.mxu0 0.0
    %3298 = vmatpush1.msra.mxu0 0.0
    %3299 = vmatprep.subr.mxu0 0.0
    %3300 = vmatpush1.msra.mxu0 0.0
    %3301 = vmatprep.subr.mxu0 0.0
    %3302 = vmatpush1.msra.mxu0 0.0
    %3303 = vmatprep.subr.mxu0 0.0
    %3304 = vmatpush1.msra.mxu0 0.0
    %3305 = vmatprep.subr.mxu0 0.0
    %3306 = vmatpush1.msra.mxu0 0.0
    %3307 = vmatprep.subr.mxu0 0.0
    %3308 = vmatpush1.msra.mxu0 0.0
    %3309 = vmatprep.subr.mxu0 0.0
    %3310 = vmatpush1.msra.mxu0 0.0
    %3311 = vmatprep.subr.mxu0 0.0
    %3312 = vmatpush1.msra.mxu0 0.0
    %3313 = vmatprep.subr.mxu0 0.0
    %3314 = vmatpush1.msra.mxu0 0.0
    %3315 = vmatprep.subr.mxu0 0.0
    %3316 = vmatpush1.msra.mxu0 0.0
    %3317 = vmatprep.subr.mxu0 0.0
    %3318 = vmatpush1.msra.mxu0 0.0
    %3319 = vmatprep.subr.mxu0 0.0
    %3320 = vmatpush1.msra.mxu0 0.0
    %3321 = vmatprep.subr.mxu0 0.0
    %3322 = vmatpush1.msra.mxu0 0.0
    %3323 = vmatprep.subr.mxu0 0.0
    %3324 = vmatpush1.msra.mxu0 0.0
    %3325 = vmatprep.mubr.f32.mxu0 0.0
    %3326 = vmatmul.mubr.f32.gmra.mrb[0].mxu0 %v2934
    %v3327 = vpop.f32.mrb[0].mxu0
    %v3328 = vadd.f32 0.0, %v3327
    %v3329 = vpop.f32.mrb[0].mxu0
    %3330 = vmatprep.mubr.f32.mxu0 0.0
    %3331 = vmatmul.mubr.f32.gmra.mrb[0].mxu0 %v2936
    %v3332 = vpop.f32.mrb[0].mxu0
    %v3333 = vadd.f32 0.0, %v3332
    %v3334 = vpop.f32.mrb[0].mxu0
    %3335 = vmatprep.mubr.f32.mxu0 0.0
    %3336 = vmatmul.mubr.f32.gmra.mrb[0].mxu0 %v2938
    %v3337 = vpop.f32.mrb[0].mxu0
    %v3338 = vadd.f32 0.0, %v3337
    %v3339 = vpop.f32.mrb[0].mxu0
    %3340 = vmatprep.mubr.f32.mxu0 0.0
    %3341 = vmatmul.mubr.f32.gmra.mrb[0].mxu0 %v2940
    %v3342 = vpop.f32.mrb[0].mxu0
    %v3343 = vadd.f32 0.0, %v3342
    %v3344 = vpop.f32.mrb[0].mxu0
    %3345 = vdwg.mxu0
    %v3346 = vadd.f32 %v3039, %v3328
    %v3347 = vadd.f32 %v3112, %v3333
    %v3348 = vadd.f32 %v3185, %v3338
    %v3349 = vadd.f32 %v3258, %v3343
    %v3350 = vmul.f32 %v3346, %v2965
    %v3351 = vmul.f32 %v3347, %v2966
    %v3352 = vmul.f32 %v3348, %v2967
    %v3353 = vmul.f32 %v3349, %v2968
    %3354 = vst [vmem:[#allocation2 + $0x10] sm:$0xff] %v3350
    %3355 = vst [vmem:[#allocation2 + $0x30] sm:$0xff] %v3351
    %3356 = vst [vmem:[#allocation2 + $0x50] sm:$0xff] %v3352
    %3357 = vst [vmem:[#allocation2 + $0x70] sm:$0xff] %v3353
    %3358 = vmatprep.subr.mxu0 0.0
    %3359 = vmatpush1.xpose.msra.mxu0 %v594
    %3360 = vmatprep.subr.mxu0 0.0
    %3361 = vmatpush1.xpose.msra.mxu0 0.0
    %3362 = vmatprep.subr.mxu0 0.0
    %3363 = vmatpush1.xpose.msra.mxu0 0.0
    %3364 = vmatprep.subr.mxu0 0.0
    %3365 = vmatpush1.xpose.msra.mxu0 0.0
    %3366 = vmatprep.subr.mxu0 0.0
    %3367 = vmatpush1.xpose.msra.mxu0 0.0
    %3368 = vmatprep.subr.mxu0 0.0
    %3369 = vmatpush1.xpose.msra.mxu0 0.0
    %3370 = vmatprep.subr.mxu0 0.0
    %3371 = vmatpush1.xpose.msra.mxu0 0.0
    %3372 = vmatprep.subr.mxu0 0.0
    %3373 = vmatpush1.xpose.msra.mxu0 0.0
    %3374 = vmatprep.subr.mxu0 0.0
    %3375 = vmatpush1.xpose.msra.mxu0 0.0
    %3376 = vmatprep.subr.mxu0 0.0
    %3377 = vmatpush1.xpose.msra.mxu0 0.0
    %3378 = vmatprep.subr.mxu0 0.0
    %3379 = vmatpush1.xpose.msra.mxu0 0.0
    %3380 = vmatprep.subr.mxu0 0.0
    %3381 = vmatpush1.xpose.msra.mxu0 0.0
    %3382 = vmatprep.subr.mxu0 0.0
    %3383 = vmatpush1.xpose.msra.mxu0 0.0
    %3384 = vmatprep.subr.mxu0 0.0
    %3385 = vmatpush1.xpose.msra.mxu0 0.0
    %3386 = vmatprep.subr.mxu0 0.0
    %3387 = vmatpush1.xpose.msra.mxu0 0.0
    %3388 = vmatprep.subr.mxu0 0.0
    %3389 = vmatpush1.xpose.msra.mxu0 0.0
    %3390 = vmatprep.subr.mxu0 0.0
    %3391 = vmatpush1.xpose.msra.mxu0 0.0
    %3392 = vmatprep.subr.mxu0 0.0
    %3393 = vmatpush1.xpose.msra.mxu0 0.0
    %3394 = vmatprep.subr.mxu0 0.0
    %3395 = vmatpush1.xpose.msra.mxu0 0.0
    %3396 = vmatprep.subr.mxu0 0.0
    %3397 = vmatpush1.xpose.msra.mxu0 0.0
    %3398 = vmatprep.subr.mxu0 0.0
    %3399 = vmatpush1.xpose.msra.mxu0 0.0
    %3400 = vmatprep.subr.mxu0 0.0
    %3401 = vmatpush1.xpose.msra.mxu0 0.0
    %3402 = vmatprep.subr.mxu0 0.0
    %3403 = vmatpush1.xpose.msra.mxu0 0.0
    %3404 = vmatprep.subr.mxu0 0.0
    %3405 = vmatpush1.xpose.msra.mxu0 0.0
    %3406 = vmatprep.subr.mxu0 0.0
    %3407 = vmatpush1.xpose.msra.mxu0 0.0
    %3408 = vmatprep.subr.mxu0 0.0
    %3409 = vmatpush1.xpose.msra.mxu0 0.0
    %3410 = vmatprep.subr.mxu0 0.0
    %3411 = vmatpush1.xpose.msra.mxu0 0.0
    %3412 = vmatprep.subr.mxu0 0.0
    %3413 = vmatpush1.xpose.msra.mxu0 0.0
    %3414 = vmatprep.subr.mxu0 0.0
    %3415 = vmatpush1.xpose.msra.mxu0 0.0
    %3416 = vmatprep.subr.mxu0 0.0
    %3417 = vmatpush1.xpose.msra.mxu0 0.0
    %3418 = vmatprep.subr.mxu0 0.0
    %3419 = vmatpush1.xpose.msra.mxu0 0.0
    %3420 = vmatprep.subr.mxu0 0.0
    %3421 = vmatpush1.xpose.msra.mxu0 0.0
    %3422 = vmatprep.mubr.f32.mxu0 0.0
    %3423 = vmatmul.mubr.f32.gmra.mrb[0].mxu0 %v366
    %v3424 = vpop.f32.mrb[0].mxu0
    %v3425 = vadd.f32 0.0, %v3424
    %v3426 = vpop.f32.mrb[0].mxu0
    %3427 = vdwg.mxu0
    %3428 = vmatprep.subr.mxu0 0.0
    %3429 = vmatpush1.xpose.msra.mxu0 %v600
    %3430 = vmatprep.subr.mxu0 0.0
    %3431 = vmatpush1.xpose.msra.mxu0 0.0
    %3432 = vmatprep.subr.mxu0 0.0
    %3433 = vmatpush1.xpose.msra.mxu0 0.0
    %3434 = vmatprep.subr.mxu0 0.0
    %3435 = vmatpush1.xpose.msra.mxu0 0.0
    %3436 = vmatprep.subr.mxu0 0.0
    %3437 = vmatpush1.xpose.msra.mxu0 0.0
    %3438 = vmatprep.subr.mxu0 0.0
    %3439 = vmatpush1.xpose.msra.mxu0 0.0
    %3440 = vmatprep.subr.mxu0 0.0
    %3441 = vmatpush1.xpose.msra.mxu0 0.0
    %3442 = vmatprep.subr.mxu0 0.0
    %3443 = vmatpush1.xpose.msra.mxu0 0.0
    %3444 = vmatprep.subr.mxu0 0.0
    %3445 = vmatpush1.xpose.msra.mxu0 0.0
    %3446 = vmatprep.subr.mxu0 0.0
    %3447 = vmatpush1.xpose.msra.mxu0 0.0
    %3448 = vmatprep.subr.mxu0 0.0
    %3449 = vmatpush1.xpose.msra.mxu0 0.0
    %3450 = vmatprep.subr.mxu0 0.0
    %3451 = vmatpush1.xpose.msra.mxu0 0.0
    %3452 = vmatprep.subr.mxu0 0.0
    %3453 = vmatpush1.xpose.msra.mxu0 0.0
    %3454 = vmatprep.subr.mxu0 0.0
    %3455 = vmatpush1.xpose.msra.mxu0 0.0
    %3456 = vmatprep.subr.mxu0 0.0
    %3457 = vmatpush1.xpose.msra.mxu0 0.0
    %3458 = vmatprep.subr.mxu0 0.0
    %3459 = vmatpush1.xpose.msra.mxu0 0.0
    %3460 = vmatprep.subr.mxu0 0.0
    %3461 = vmatpush1.xpose.msra.mxu0 0.0
    %3462 = vmatprep.subr.mxu0 0.0
    %3463 = vmatpush1.xpose.msra.mxu0 0.0
    %3464 = vmatprep.subr.mxu0 0.0
    %3465 = vmatpush1.xpose.msra.mxu0 0.0
    %3466 = vmatprep.subr.mxu0 0.0
    %3467 = vmatpush1.xpose.msra.mxu0 0.0
    %3468 = vmatprep.subr.mxu0 0.0
    %3469 = vmatpush1.xpose.msra.mxu0 0.0
    %3470 = vmatprep.subr.mxu0 0.0
    %3471 = vmatpush1.xpose.msra.mxu0 0.0
    %3472 = vmatprep.subr.mxu0 0.0
    %3473 = vmatpush1.xpose.msra.mxu0 0.0
    %3474 = vmatprep.subr.mxu0 0.0
    %3475 = vmatpush1.xpose.msra.mxu0 0.0
    %3476 = vmatprep.subr.mxu0 0.0
    %3477 = vmatpush1.xpose.msra.mxu0 0.0
    %3478 = vmatprep.subr.mxu0 0.0
    %3479 = vmatpush1.xpose.msra.mxu0 0.0
    %3480 = vmatprep.subr.mxu0 0.0
    %3481 = vmatpush1.xpose.msra.mxu0 0.0
    %3482 = vmatprep.subr.mxu0 0.0
    %3483 = vmatpush1.xpose.msra.mxu0 0.0
    %3484 = vmatprep.subr.mxu0 0.0
    %3485 = vmatpush1.xpose.msra.mxu0 0.0
    %3486 = vmatprep.subr.mxu0 0.0
    %3487 = vmatpush1.xpose.msra.mxu0 0.0
    %3488 = vmatprep.subr.mxu0 0.0
    %3489 = vmatpush1.xpose.msra.mxu0 0.0
    %3490 = vmatprep.subr.mxu0 0.0
    %3491 = vmatpush1.xpose.msra.mxu0 0.0
    %3492 = vmatprep.mubr.f32.mxu0 0.0
    %3493 = vmatmul.mubr.f32.gmra.mrb[0].mxu0 %v372
    %v3494 = vpop.f32.mrb[0].mxu0
    %v3495 = vadd.f32 0.0, %v3494
    %v3496 = vpop.f32.mrb[0].mxu0
    %3497 = vdwg.mxu0
    %3498 = vmatprep.subr.mxu0 0.0
    %3499 = vmatpush1.xpose.msra.mxu0 %v606
    %3500 = vmatprep.subr.mxu0 0.0
    %3501 = vmatpush1.xpose.msra.mxu0 0.0
    %3502 = vmatprep.subr.mxu0 0.0
    %3503 = vmatpush1.xpose.msra.mxu0 0.0
    %3504 = vmatprep.subr.mxu0 0.0
    %3505 = vmatpush1.xpose.msra.mxu0 0.0
    %3506 = vmatprep.subr.mxu0 0.0
    %3507 = vmatpush1.xpose.msra.mxu0 0.0
    %3508 = vmatprep.subr.mxu0 0.0
    %3509 = vmatpush1.xpose.msra.mxu0 0.0
    %3510 = vmatprep.subr.mxu0 0.0
    %3511 = vmatpush1.xpose.msra.mxu0 0.0
    %3512 = vmatprep.subr.mxu0 0.0
    %3513 = vmatpush1.xpose.msra.mxu0 0.0
    %3514 = vmatprep.subr.mxu0 0.0
    %3515 = vmatpush1.xpose.msra.mxu0 0.0
    %3516 = vmatprep.subr.mxu0 0.0
    %3517 = vmatpush1.xpose.msra.mxu0 0.0
    %3518 = vmatprep.subr.mxu0 0.0
    %3519 = vmatpush1.xpose.msra.mxu0 0.0
    %3520 = vmatprep.subr.mxu0 0.0
    %3521 = vmatpush1.xpose.msra.mxu0 0.0
    %3522 = vmatprep.subr.mxu0 0.0
    %3523 = vmatpush1.xpose.msra.mxu0 0.0
    %3524 = vmatprep.subr.mxu0 0.0
    %3525 = vmatpush1.xpose.msra.mxu0 0.0
    %3526 = vmatprep.subr.mxu0 0.0
    %3527 = vmatpush1.xpose.msra.mxu0 0.0
    %3528 = vmatprep.subr.mxu0 0.0
    %3529 = vmatpush1.xpose.msra.mxu0 0.0
    %3530 = vmatprep.subr.mxu0 0.0
    %3531 = vmatpush1.xpose.msra.mxu0 0.0
    %3532 = vmatprep.subr.mxu0 0.0
    %3533 = vmatpush1.xpose.msra.mxu0 0.0
    %3534 = vmatprep.subr.mxu0 0.0
    %3535 = vmatpush1.xpose.msra.mxu0 0.0
    %3536 = vmatprep.subr.mxu0 0.0
    %3537 = vmatpush1.xpose.msra.mxu0 0.0
    %3538 = vmatprep.subr.mxu0 0.0
    %3539 = vmatpush1.xpose.msra.mxu0 0.0
    %3540 = vmatprep.subr.mxu0 0.0
    %3541 = vmatpush1.xpose.msra.mxu0 0.0
    %3542 = vmatprep.subr.mxu0 0.0
    %3543 = vmatpush1.xpose.msra.mxu0 0.0
    %3544 = vmatprep.subr.mxu0 0.0
    %3545 = vmatpush1.xpose.msra.mxu0 0.0
    %3546 = vmatprep.subr.mxu0 0.0
    %3547 = vmatpush1.xpose.msra.mxu0 0.0
    %3548 = vmatprep.subr.mxu0 0.0
    %3549 = vmatpush1.xpose.msra.mxu0 0.0
    %3550 = vmatprep.subr.mxu0 0.0
    %3551 = vmatpush1.xpose.msra.mxu0 0.0
    %3552 = vmatprep.subr.mxu0 0.0
    %3553 = vmatpush1.xpose.msra.mxu0 0.0
    %3554 = vmatprep.subr.mxu0 0.0
    %3555 = vmatpush1.xpose.msra.mxu0 0.0
    %3556 = vmatprep.subr.mxu0 0.0
    %3557 = vmatpush1.xpose.msra.mxu0 0.0
    %3558 = vmatprep.subr.mxu0 0.0
    %3559 = vmatpush1.xpose.msra.mxu0 0.0
    %3560 = vmatprep.subr.mxu0 0.0
    %3561 = vmatpush1.xpose.msra.mxu0 0.0
    %3562 = vmatprep.mubr.f32.mxu0 0.0
    %3563 = vmatmul.mubr.f32.gmra.mrb[0].mxu0 %v378
    %v3564 = vpop.f32.mrb[0].mxu0
    %v3565 = vadd.f32 0.0, %v3564
    %v3566 = vpop.f32.mrb[0].mxu0
    %3567 = vdwg.mxu0
    %3568 = vmatprep.subr.mxu0 0.0
    %3569 = vmatpush1.xpose.msra.mxu0 %v612
    %3570 = vmatprep.subr.mxu0 0.0
    %3571 = vmatpush1.xpose.msra.mxu0 0.0
    %3572 = vmatprep.subr.mxu0 0.0
    %3573 = vmatpush1.xpose.msra.mxu0 0.0
    %3574 = vmatprep.subr.mxu0 0.0
    %3575 = vmatpush1.xpose.msra.mxu0 0.0
    %3576 = vmatprep.subr.mxu0 0.0
    %3577 = vmatpush1.xpose.msra.mxu0 0.0
    %3578 = vmatprep.subr.mxu0 0.0
    %3579 = vmatpush1.xpose.msra.mxu0 0.0
    %3580 = vmatprep.subr.mxu0 0.0
    %3581 = vmatpush1.xpose.msra.mxu0 0.0
    %3582 = vmatprep.subr.mxu0 0.0
    %3583 = vmatpush1.xpose.msra.mxu0 0.0
    %3584 = vmatprep.subr.mxu0 0.0
    %3585 = vmatpush1.xpose.msra.mxu0 0.0
    %3586 = vmatprep.subr.mxu0 0.0
    %3587 = vmatpush1.xpose.msra.mxu0 0.0
    %3588 = vmatprep.subr.mxu0 0.0
    %3589 = vmatpush1.xpose.msra.mxu0 0.0
    %3590 = vmatprep.subr.mxu0 0.0
    %3591 = vmatpush1.xpose.msra.mxu0 0.0
    %3592 = vmatprep.subr.mxu0 0.0
    %3593 = vmatpush1.xpose.msra.mxu0 0.0
    %3594 = vmatprep.subr.mxu0 0.0
    %3595 = vmatpush1.xpose.msra.mxu0 0.0
    %3596 = vmatprep.subr.mxu0 0.0
    %3597 = vmatpush1.xpose.msra.mxu0 0.0
    %3598 = vmatprep.subr.mxu0 0.0
    %3599 = vmatpush1.xpose.msra.mxu0 0.0
    %3600 = vmatprep.subr.mxu0 0.0
    %3601 = vmatpush1.xpose.msra.mxu0 0.0
    %3602 = vmatprep.subr.mxu0 0.0
    %3603 = vmatpush1.xpose.msra.mxu0 0.0
    %3604 = vmatprep.subr.mxu0 0.0
    %3605 = vmatpush1.xpose.msra.mxu0 0.0
    %3606 = vmatprep.subr.mxu0 0.0
    %3607 = vmatpush1.xpose.msra.mxu0 0.0
    %3608 = vmatprep.subr.mxu0 0.0
    %3609 = vmatpush1.xpose.msra.mxu0 0.0
    %3610 = vmatprep.subr.mxu0 0.0
    %3611 = vmatpush1.xpose.msra.mxu0 0.0
    %3612 = vmatprep.subr.mxu0 0.0
    %3613 = vmatpush1.xpose.msra.mxu0 0.0
    %3614 = vmatprep.subr.mxu0 0.0
    %3615 = vmatpush1.xpose.msra.mxu0 0.0
    %3616 = vmatprep.subr.mxu0 0.0
    %3617 = vmatpush1.xpose.msra.mxu0 0.0
    %3618 = vmatprep.subr.mxu0 0.0
    %3619 = vmatpush1.xpose.msra.mxu0 0.0
    %3620 = vmatprep.subr.mxu0 0.0
    %3621 = vmatpush1.xpose.msra.mxu0 0.0
    %3622 = vmatprep.subr.mxu0 0.0
    %3623 = vmatpush1.xpose.msra.mxu0 0.0
    %3624 = vmatprep.subr.mxu0 0.0
    %3625 = vmatpush1.xpose.msra.mxu0 0.0
    %3626 = vmatprep.subr.mxu0 0.0
    %3627 = vmatpush1.xpose.msra.mxu0 0.0
    %3628 = vmatprep.subr.mxu0 0.0
    %3629 = vmatpush1.xpose.msra.mxu0 0.0
    %3630 = vmatprep.subr.mxu0 0.0
    %3631 = vmatpush1.xpose.msra.mxu0 0.0
    %3632 = vmatprep.mubr.f32.mxu0 0.0
    %3633 = vmatmul.mubr.f32.gmra.mrb[0].mxu0 %v384
    %v3634 = vpop.f32.mrb[0].mxu0
    %v3635 = vadd.f32 0.0, %v3634
    %v3636 = vpop.f32.mrb[0].mxu0
    %3637 = vdwg.mxu0
    %v3638 = vsel %vm1402, %v3425, -inf
    %3639 = vmax.xlane.f32.xlu0 %v3638
    %v3640 = vpop.xlane.xlu0 %3639
    %v3641 = vsel %vm1402, %v3495, -inf
    %3642 = vmax.xlane.f32.xlu0 %v3641
    %v3643 = vpop.xlane.xlu0 %3642
    %v3644 = vsel %vm1402, %v3565, -inf
    %3645 = vmax.xlane.f32.xlu0 %v3644
    %v3646 = vpop.xlane.xlu0 %3645
    %v3647 = vsel %vm1402, %v3635, -inf
    %3648 = vmax.xlane.f32.xlu0 %v3647
    %v3649 = vpop.xlane.xlu0 %3648
    %3650 = vmax.xlane.f32.xlu0 %v1038
    %v3651 = vpop.xlane.xlu0 %3650
    %3652 = vmax.xlane.f32.xlu0 %v1044
    %v3653 = vpop.xlane.xlu0 %3652
    %3654 = vmax.xlane.f32.xlu0 %v1050
    %v3655 = vpop.xlane.xlu0 %3654
    %3656 = vmax.xlane.f32.xlu0 %v1056
    %v3657 = vpop.xlane.xlu0 %3656
    %v3658 = vmax.f32 %v3640, %v3651
    %v3659 = vmax.f32 %v3643, %v3653
    %v3660 = vmax.f32 %v3646, %v3655
    %v3661 = vmax.f32 %v3649, %v3657
    %v3662 = vsub.f32 %v3425, %v3658
    %v3663 = vsub.f32 %v3495, %v3659
    %v3664 = vsub.f32 %v3565, %v3660
    %v3665 = vsub.f32 %v3635, %v3661
    %v3666 = vmul.f32 %v3662, 1.442695
    %v3667 = vpow.pop %v3666
    %v3668 = vmul.f32 %v3663, 1.442695
    %v3669 = vpow.pop %v3668
    %v3670 = vmul.f32 %v3664, 1.442695
    %v3671 = vpow.pop %v3670
    %v3672 = vmul.f32 %v3665, 1.442695
    %v3673 = vpow.pop %v3672
    %v3674 = vsub.f32 %v1038, %v3658
    %v3675 = vsub.f32 %v1044, %v3659
    %v3676 = vsub.f32 %v1050, %v3660
    %v3677 = vsub.f32 %v1056, %v3661
    %v3678 = vmul.f32 %v3674, 1.442695
    %v3679 = vpow.pop %v3678
    %v3680 = vmul.f32 %v3675, 1.442695
    %v3681 = vpow.pop %v3680
    %v3682 = vmul.f32 %v3676, 1.442695
    %v3683 = vpow.pop %v3682
    %v3684 = vmul.f32 %v3677, 1.442695
    %v3685 = vpow.pop %v3684
    %v3686 = vsel %vm1402, %v3667, 0.0
    %3687 = vadd.xlane.f32.xlu0 %v3686
    %v3688 = vpop.xlane.xlu0 %3687
    %v3689 = vsel %vm1402, %v3669, 0.0
    %3690 = vadd.xlane.f32.xlu0 %v3689
    %v3691 = vpop.xlane.xlu0 %3690
    %v3692 = vsel %vm1402, %v3671, 0.0
    %3693 = vadd.xlane.f32.xlu0 %v3692
    %v3694 = vpop.xlane.xlu0 %3693
    %v3695 = vsel %vm1402, %v3673, 0.0
    %3696 = vadd.xlane.f32.xlu0 %v3695
    %v3697 = vpop.xlane.xlu0 %3696
    %3698 = vadd.xlane.f32.xlu0 %v3679
    %v3699 = vpop.xlane.xlu0 %3698
    %3700 = vadd.xlane.f32.xlu0 %v3681
    %v3701 = vpop.xlane.xlu0 %3700
    %3702 = vadd.xlane.f32.xlu0 %v3683
    %v3703 = vpop.xlane.xlu0 %3702
    %3704 = vadd.xlane.f32.xlu0 %v3685
    %v3705 = vpop.xlane.xlu0 %3704
    %v3706 = vadd.f32 %v3688, %v3699
    %v3707 = vadd.f32 %v3691, %v3701
    %v3708 = vadd.f32 %v3694, %v3703
    %v3709 = vadd.f32 %v3697, %v3705
    %v3710 = vrcp.pop %v3706
    %v3711 = vrcp.pop %v3707
    %v3712 = vrcp.pop %v3708
    %v3713 = vrcp.pop %v3709
    %v3715 = vsel %vm1402, %v3667, 0
    %3717 = vmatprep.subr.mxu0 0.0
    %3718 = vmatpush1.msra.mxu0 %v822
    %3719 = vmatprep.subr.mxu0 0.0
    %3720 = vmatpush1.msra.mxu0 0.0
    %3721 = vmatprep.subr.mxu0 0.0
    %3722 = vmatpush1.msra.mxu0 0.0
    %3723 = vmatprep.subr.mxu0 0.0
    %3724 = vmatpush1.msra.mxu0 0.0
    %3725 = vmatprep.subr.mxu0 0.0
    %3726 = vmatpush1.msra.mxu0 0.0
    %3727 = vmatprep.subr.mxu0 0.0
    %3728 = vmatpush1.msra.mxu0 0.0
    %3729 = vmatprep.subr.mxu0 0.0
    %3730 = vmatpush1.msra.mxu0 0.0
    %3731 = vmatprep.subr.mxu0 0.0
    %3732 = vmatpush1.msra.mxu0 0.0
    %3733 = vmatprep.subr.mxu0 0.0
    %3734 = vmatpush1.msra.mxu0 0.0
    %3735 = vmatprep.subr.mxu0 0.0
    %3736 = vmatpush1.msra.mxu0 0.0
    %3737 = vmatprep.subr.mxu0 0.0
    %3738 = vmatpush1.msra.mxu0 0.0
    %3739 = vmatprep.subr.mxu0 0.0
    %3740 = vmatpush1.msra.mxu0 0.0
    %3741 = vmatprep.subr.mxu0 0.0
    %3742 = vmatpush1.msra.mxu0 0.0
    %3743 = vmatprep.subr.mxu0 0.0
    %3744 = vmatpush1.msra.mxu0 0.0
    %3745 = vmatprep.subr.mxu0 0.0
    %3746 = vmatpush1.msra.mxu0 0.0
    %3747 = vmatprep.subr.mxu0 0.0
    %3748 = vmatpush1.msra.mxu0 0.0
    %3749 = vmatprep.subr.mxu0 0.0
    %3750 = vmatpush1.msra.mxu0 0.0
    %3751 = vmatprep.subr.mxu0 0.0
    %3752 = vmatpush1.msra.mxu0 0.0
    %3753 = vmatprep.subr.mxu0 0.0
    %3754 = vmatpush1.msra.mxu0 0.0
    %3755 = vmatprep.subr.mxu0 0.0
    %3756 = vmatpush1.msra.mxu0 0.0
    %3757 = vmatprep.subr.mxu0 0.0
    %3758 = vmatpush1.msra.mxu0 0.0
    %3759 = vmatprep.subr.mxu0 0.0
    %3760 = vmatpush1.msra.mxu0 0.0
    %3761 = vmatprep.subr.mxu0 0.0
    %3762 = vmatpush1.msra.mxu0 0.0
    %3763 = vmatprep.subr.mxu0 0.0
    %3764 = vmatpush1.msra.mxu0 0.0
    %3765 = vmatprep.subr.mxu0 0.0
    %3766 = vmatpush1.msra.mxu0 0.0
    %3767 = vmatprep.subr.mxu0 0.0
    %3768 = vmatpush1.msra.mxu0 0.0
    %3769 = vmatprep.subr.mxu0 0.0
    %3770 = vmatpush1.msra.mxu0 0.0
    %3771 = vmatprep.subr.mxu0 0.0
    %3772 = vmatpush1.msra.mxu0 0.0
    %3773 = vmatprep.subr.mxu0 0.0
    %3774 = vmatpush1.msra.mxu0 0.0
    %3775 = vmatprep.subr.mxu0 0.0
    %3776 = vmatpush1.msra.mxu0 0.0
    %3777 = vmatprep.subr.mxu0 0.0
    %3778 = vmatpush1.msra.mxu0 0.0
    %3779 = vmatprep.subr.mxu0 0.0
    %3780 = vmatpush1.msra.mxu0 0.0
    %3781 = vmatprep.mubr.f32.mxu0 0.0
    %3782 = vmatmul.mubr.f32.gmra.mrb[0].mxu0 %v3715
    %v3783 = vpop.f32.mrb[0].mxu0
    %v3784 = vadd.f32 0.0, %v3783
    %v3785 = vpop.f32.mrb[0].mxu0
    %3786 = vdwg.mxu0
    %v3788 = vsel %vm1402, %v3669, 0
    %3790 = vmatprep.subr.mxu0 0.0
    %3791 = vmatpush1.msra.mxu0 %v828
    %3792 = vmatprep.subr.mxu0 0.0
    %3793 = vmatpush1.msra.mxu0 0.0
    %3794 = vmatprep.subr.mxu0 0.0
    %3795 = vmatpush1.msra.mxu0 0.0
    %3796 = vmatprep.subr.mxu0 0.0
    %3797 = vmatpush1.msra.mxu0 0.0
    %3798 = vmatprep.subr.mxu0 0.0
    %3799 = vmatpush1.msra.mxu0 0.0
    %3800 = vmatprep.subr.mxu0 0.0
    %3801 = vmatpush1.msra.mxu0 0.0
    %3802 = vmatprep.subr.mxu0 0.0
    %3803 = vmatpush1.msra.mxu0 0.0
    %3804 = vmatprep.subr.mxu0 0.0
    %3805 = vmatpush1.msra.mxu0 0.0
    %3806 = vmatprep.subr.mxu0 0.0
    %3807 = vmatpush1.msra.mxu0 0.0
    %3808 = vmatprep.subr.mxu0 0.0
    %3809 = vmatpush1.msra.mxu0 0.0
    %3810 = vmatprep.subr.mxu0 0.0
    %3811 = vmatpush1.msra.mxu0 0.0
    %3812 = vmatprep.subr.mxu0 0.0
    %3813 = vmatpush1.msra.mxu0 0.0
    %3814 = vmatprep.subr.mxu0 0.0
    %3815 = vmatpush1.msra.mxu0 0.0
    %3816 = vmatprep.subr.mxu0 0.0
    %3817 = vmatpush1.msra.mxu0 0.0
    %3818 = vmatprep.subr.mxu0 0.0
    %3819 = vmatpush1.msra.mxu0 0.0
    %3820 = vmatprep.subr.mxu0 0.0
    %3821 = vmatpush1.msra.mxu0 0.0
    %3822 = vmatprep.subr.mxu0 0.0
    %3823 = vmatpush1.msra.mxu0 0.0
    %3824 = vmatprep.subr.mxu0 0.0
    %3825 = vmatpush1.msra.mxu0 0.0
    %3826 = vmatprep.subr.mxu0 0.0
    %3827 = vmatpush1.msra.mxu0 0.0
    %3828 = vmatprep.subr.mxu0 0.0
    %3829 = vmatpush1.msra.mxu0 0.0
    %3830 = vmatprep.subr.mxu0 0.0
    %3831 = vmatpush1.msra.mxu0 0.0
    %3832 = vmatprep.subr.mxu0 0.0
    %3833 = vmatpush1.msra.mxu0 0.0
    %3834 = vmatprep.subr.mxu0 0.0
    %3835 = vmatpush1.msra.mxu0 0.0
    %3836 = vmatprep.subr.mxu0 0.0
    %3837 = vmatpush1.msra.mxu0 0.0
    %3838 = vmatprep.subr.mxu0 0.0
    %3839 = vmatpush1.msra.mxu0 0.0
    %3840 = vmatprep.subr.mxu0 0.0
    %3841 = vmatpush1.msra.mxu0 0.0
    %3842 = vmatprep.subr.mxu0 0.0
    %3843 = vmatpush1.msra.mxu0 0.0
    %3844 = vmatprep.subr.mxu0 0.0
    %3845 = vmatpush1.msra.mxu0 0.0
    %3846 = vmatprep.subr.mxu0 0.0
    %3847 = vmatpush1.msra.mxu0 0.0
    %3848 = vmatprep.subr.mxu0 0.0
    %3849 = vmatpush1.msra.mxu0 0.0
    %3850 = vmatprep.subr.mxu0 0.0
    %3851 = vmatpush1.msra.mxu0 0.0
    %3852 = vmatprep.subr.mxu0 0.0
    %3853 = vmatpush1.msra.mxu0 0.0
    %3854 = vmatprep.mubr.f32.mxu0 0.0
    %3855 = vmatmul.mubr.f32.gmra.mrb[0].mxu0 %v3788
    %v3856 = vpop.f32.mrb[0].mxu0
    %v3857 = vadd.f32 0.0, %v3856
    %v3858 = vpop.f32.mrb[0].mxu0
    %3859 = vdwg.mxu0
    %v3861 = vsel %vm1402, %v3671, 0
    %3863 = vmatprep.subr.mxu0 0.0
    %3864 = vmatpush1.msra.mxu0 %v834
    %3865 = vmatprep.subr.mxu0 0.0
    %3866 = vmatpush1.msra.mxu0 0.0
    %3867 = vmatprep.subr.mxu0 0.0
    %3868 = vmatpush1.msra.mxu0 0.0
    %3869 = vmatprep.subr.mxu0 0.0
    %3870 = vmatpush1.msra.mxu0 0.0
    %3871 = vmatprep.subr.mxu0 0.0
    %3872 = vmatpush1.msra.mxu0 0.0
    %3873 = vmatprep.subr.mxu0 0.0
    %3874 = vmatpush1.msra.mxu0 0.0
    %3875 = vmatprep.subr.mxu0 0.0
    %3876 = vmatpush1.msra.mxu0 0.0
    %3877 = vmatprep.subr.mxu0 0.0
    %3878 = vmatpush1.msra.mxu0 0.0
    %3879 = vmatprep.subr.mxu0 0.0
    %3880 = vmatpush1.msra.mxu0 0.0
    %3881 = vmatprep.subr.mxu0 0.0
    %3882 = vmatpush1.msra.mxu0 0.0
    %3883 = vmatprep.subr.mxu0 0.0
    %3884 = vmatpush1.msra.mxu0 0.0
    %3885 = vmatprep.subr.mxu0 0.0
    %3886 = vmatpush1.msra.mxu0 0.0
    %3887 = vmatprep.subr.mxu0 0.0
    %3888 = vmatpush1.msra.mxu0 0.0
    %3889 = vmatprep.subr.mxu0 0.0
    %3890 = vmatpush1.msra.mxu0 0.0
    %3891 = vmatprep.subr.mxu0 0.0
    %3892 = vmatpush1.msra.mxu0 0.0
    %3893 = vmatprep.subr.mxu0 0.0
    %3894 = vmatpush1.msra.mxu0 0.0
    %3895 = vmatprep.subr.mxu0 0.0
    %3896 = vmatpush1.msra.mxu0 0.0
    %3897 = vmatprep.subr.mxu0 0.0
    %3898 = vmatpush1.msra.mxu0 0.0
    %3899 = vmatprep.subr.mxu0 0.0
    %3900 = vmatpush1.msra.mxu0 0.0
    %3901 = vmatprep.subr.mxu0 0.0
    %3902 = vmatpush1.msra.mxu0 0.0
    %3903 = vmatprep.subr.mxu0 0.0
    %3904 = vmatpush1.msra.mxu0 0.0
    %3905 = vmatprep.subr.mxu0 0.0
    %3906 = vmatpush1.msra.mxu0 0.0
    %3907 = vmatprep.subr.mxu0 0.0
    %3908 = vmatpush1.msra.mxu0 0.0
    %3909 = vmatprep.subr.mxu0 0.0
    %3910 = vmatpush1.msra.mxu0 0.0
    %3911 = vmatprep.subr.mxu0 0.0
    %3912 = vmatpush1.msra.mxu0 0.0
    %3913 = vmatprep.subr.mxu0 0.0
    %3914 = vmatpush1.msra.mxu0 0.0
    %3915 = vmatprep.subr.mxu0 0.0
    %3916 = vmatpush1.msra.mxu0 0.0
    %3917 = vmatprep.subr.mxu0 0.0
    %3918 = vmatpush1.msra.mxu0 0.0
    %3919 = vmatprep.subr.mxu0 0.0
    %3920 = vmatpush1.msra.mxu0 0.0
    %3921 = vmatprep.subr.mxu0 0.0
    %3922 = vmatpush1.msra.mxu0 0.0
    %3923 = vmatprep.subr.mxu0 0.0
    %3924 = vmatpush1.msra.mxu0 0.0
    %3925 = vmatprep.subr.mxu0 0.0
    %3926 = vmatpush1.msra.mxu0 0.0
    %3927 = vmatprep.mubr.f32.mxu0 0.0
    %3928 = vmatmul.mubr.f32.gmra.mrb[0].mxu0 %v3861
    %v3929 = vpop.f32.mrb[0].mxu0
    %v3930 = vadd.f32 0.0, %v3929
    %v3931 = vpop.f32.mrb[0].mxu0
    %3932 = vdwg.mxu0
    %v3934 = vsel %vm1402, %v3673, 0
    %3936 = vmatprep.subr.mxu0 0.0
    %3937 = vmatpush1.msra.mxu0 %v840
    %3938 = vmatprep.subr.mxu0 0.0
    %3939 = vmatpush1.msra.mxu0 0.0
    %3940 = vmatprep.subr.mxu0 0.0
    %3941 = vmatpush1.msra.mxu0 0.0
    %3942 = vmatprep.subr.mxu0 0.0
    %3943 = vmatpush1.msra.mxu0 0.0
    %3944 = vmatprep.subr.mxu0 0.0
    %3945 = vmatpush1.msra.mxu0 0.0
    %3946 = vmatprep.subr.mxu0 0.0
    %3947 = vmatpush1.msra.mxu0 0.0
    %3948 = vmatprep.subr.mxu0 0.0
    %3949 = vmatpush1.msra.mxu0 0.0
    %3950 = vmatprep.subr.mxu0 0.0
    %3951 = vmatpush1.msra.mxu0 0.0
    %3952 = vmatprep.subr.mxu0 0.0
    %3953 = vmatpush1.msra.mxu0 0.0
    %3954 = vmatprep.subr.mxu0 0.0
    %3955 = vmatpush1.msra.mxu0 0.0
    %3956 = vmatprep.subr.mxu0 0.0
    %3957 = vmatpush1.msra.mxu0 0.0
    %3958 = vmatprep.subr.mxu0 0.0
    %3959 = vmatpush1.msra.mxu0 0.0
    %3960 = vmatprep.subr.mxu0 0.0
    %3961 = vmatpush1.msra.mxu0 0.0
    %3962 = vmatprep.subr.mxu0 0.0
    %3963 = vmatpush1.msra.mxu0 0.0
    %3964 = vmatprep.subr.mxu0 0.0
    %3965 = vmatpush1.msra.mxu0 0.0
    %3966 = vmatprep.subr.mxu0 0.0
    %3967 = vmatpush1.msra.mxu0 0.0
    %3968 = vmatprep.subr.mxu0 0.0
    %3969 = vmatpush1.msra.mxu0 0.0
    %3970 = vmatprep.subr.mxu0 0.0
    %3971 = vmatpush1.msra.mxu0 0.0
    %3972 = vmatprep.subr.mxu0 0.0
    %3973 = vmatpush1.msra.mxu0 0.0
    %3974 = vmatprep.subr.mxu0 0.0
    %3975 = vmatpush1.msra.mxu0 0.0
    %3976 = vmatprep.subr.mxu0 0.0
    %3977 = vmatpush1.msra.mxu0 0.0
    %3978 = vmatprep.subr.mxu0 0.0
    %3979 = vmatpush1.msra.mxu0 0.0
    %3980 = vmatprep.subr.mxu0 0.0
    %3981 = vmatpush1.msra.mxu0 0.0
    %3982 = vmatprep.subr.mxu0 0.0
    %3983 = vmatpush1.msra.mxu0 0.0
    %3984 = vmatprep.subr.mxu0 0.0
    %3985 = vmatpush1.msra.mxu0 0.0
    %3986 = vmatprep.subr.mxu0 0.0
    %3987 = vmatpush1.msra.mxu0 0.0
    %3988 = vmatprep.subr.mxu0 0.0
    %3989 = vmatpush1.msra.mxu0 0.0
    %3990 = vmatprep.subr.mxu0 0.0
    %3991 = vmatpush1.msra.mxu0 0.0
    %3992 = vmatprep.subr.mxu0 0.0
    %3993 = vmatpush1.msra.mxu0 0.0
    %3994 = vmatprep.subr.mxu0 0.0
    %3995 = vmatpush1.msra.mxu0 0.0
    %3996 = vmatprep.subr.mxu0 0.0
    %3997 = vmatpush1.msra.mxu0 0.0
    %3998 = vmatprep.subr.mxu0 0.0
    %3999 = vmatpush1.msra.mxu0 0.0
    %4000 = vmatprep.mubr.f32.mxu0 0.0
    %4001 = vmatmul.mubr.f32.gmra.mrb[0].mxu0 %v3934
    %v4002 = vpop.f32.mrb[0].mxu0
    %v4003 = vadd.f32 0.0, %v4002
    %v4004 = vpop.f32.mrb[0].mxu0
    %4005 = vdwg.mxu0
    %4006 = vmatprep.subr.mxu0 0.0
    %4007 = vmatpush1.msra.mxu0 %v1061
    %4008 = vmatprep.subr.mxu0 0.0
    %4009 = vmatpush1.msra.mxu0 %v1065
    %4010 = vmatprep.subr.mxu0 0.0
    %4011 = vmatpush1.msra.mxu0 %v1069
    %4012 = vmatprep.subr.mxu0 0.0
    %4013 = vmatpush1.msra.mxu0 %v1073
    %4014 = vmatprep.subr.mxu0 0.0
    %4015 = vmatpush1.msra.mxu0 %v1077
    %4016 = vmatprep.subr.mxu0 0.0
    %4017 = vmatpush1.msra.mxu0 %v1081
    %4018 = vmatprep.subr.mxu0 0.0
    %4019 = vmatpush1.msra.mxu0 %v1085
    %4020 = vmatprep.subr.mxu0 0.0
    %4021 = vmatpush1.msra.mxu0 %v1089
    %4022 = vmatprep.subr.mxu0 0.0
    %4023 = vmatpush1.msra.mxu0 %v1093
    %4024 = vmatprep.subr.mxu0 0.0
    %4025 = vmatpush1.msra.mxu0 %v1097
    %4026 = vmatprep.subr.mxu0 0.0
    %4027 = vmatpush1.msra.mxu0 %v1101
    %4028 = vmatprep.subr.mxu0 0.0
    %4029 = vmatpush1.msra.mxu0 %v1105
    %4030 = vmatprep.subr.mxu0 0.0
    %4031 = vmatpush1.msra.mxu0 %v1109
    %4032 = vmatprep.subr.mxu0 0.0
    %4033 = vmatpush1.msra.mxu0 %v1113
    %4034 = vmatprep.subr.mxu0 0.0
    %4035 = vmatpush1.msra.mxu0 %v1117
    %4036 = vmatprep.subr.mxu0 0.0
    %4037 = vmatpush1.msra.mxu0 %v1121
    %4038 = vmatprep.subr.mxu0 0.0
    %4039 = vmatpush1.msra.mxu0 0.0
    %4040 = vmatprep.subr.mxu0 0.0
    %4041 = vmatpush1.msra.mxu0 0.0
    %4042 = vmatprep.subr.mxu0 0.0
    %4043 = vmatpush1.msra.mxu0 0.0
    %4044 = vmatprep.subr.mxu0 0.0
    %4045 = vmatpush1.msra.mxu0 0.0
    %4046 = vmatprep.subr.mxu0 0.0
    %4047 = vmatpush1.msra.mxu0 0.0
    %4048 = vmatprep.subr.mxu0 0.0
    %4049 = vmatpush1.msra.mxu0 0.0
    %4050 = vmatprep.subr.mxu0 0.0
    %4051 = vmatpush1.msra.mxu0 0.0
    %4052 = vmatprep.subr.mxu0 0.0
    %4053 = vmatpush1.msra.mxu0 0.0
    %4054 = vmatprep.subr.mxu0 0.0
    %4055 = vmatpush1.msra.mxu0 0.0
    %4056 = vmatprep.subr.mxu0 0.0
    %4057 = vmatpush1.msra.mxu0 0.0
    %4058 = vmatprep.subr.mxu0 0.0
    %4059 = vmatpush1.msra.mxu0 0.0
    %4060 = vmatprep.subr.mxu0 0.0
    %4061 = vmatpush1.msra.mxu0 0.0
    %4062 = vmatprep.subr.mxu0 0.0
    %4063 = vmatpush1.msra.mxu0 0.0
    %4064 = vmatprep.subr.mxu0 0.0
    %4065 = vmatpush1.msra.mxu0 0.0
    %4066 = vmatprep.subr.mxu0 0.0
    %4067 = vmatpush1.msra.mxu0 0.0
    %4068 = vmatprep.subr.mxu0 0.0
    %4069 = vmatpush1.msra.mxu0 0.0
    %4070 = vmatprep.mubr.f32.mxu0 0.0
    %4071 = vmatmul.mubr.f32.gmra.mrb[0].mxu0 %v3679
    %v4072 = vpop.f32.mrb[0].mxu0
    %v4073 = vadd.f32 0.0, %v4072
    %v4074 = vpop.f32.mrb[0].mxu0
    %4075 = vmatprep.mubr.f32.mxu0 0.0
    %4076 = vmatmul.mubr.f32.gmra.mrb[0].mxu0 %v3681
    %v4077 = vpop.f32.mrb[0].mxu0
    %v4078 = vadd.f32 0.0, %v4077
    %v4079 = vpop.f32.mrb[0].mxu0
    %4080 = vmatprep.mubr.f32.mxu0 0.0
    %4081 = vmatmul.mubr.f32.gmra.mrb[0].mxu0 %v3683
    %v4082 = vpop.f32.mrb[0].mxu0
    %v4083 = vadd.f32 0.0, %v4082
    %v4084 = vpop.f32.mrb[0].mxu0
    %4085 = vmatprep.mubr.f32.mxu0 0.0
    %4086 = vmatmul.mubr.f32.gmra.mrb[0].mxu0 %v3685
    %v4087 = vpop.f32.mrb[0].mxu0
    %v4088 = vadd.f32 0.0, %v4087
    %v4089 = vpop.f32.mrb[0].mxu0
    %4090 = vdwg.mxu0
    %v4091 = vadd.f32 %v3784, %v4073
    %v4092 = vadd.f32 %v3857, %v4078
    %v4093 = vadd.f32 %v3930, %v4083
    %v4094 = vadd.f32 %v4003, %v4088
    %v4095 = vmul.f32 %v4091, %v3710
    %v4096 = vmul.f32 %v4092, %v3711
    %v4097 = vmul.f32 %v4093, %v3712
    %v4098 = vmul.f32 %v4094, %v3713
    %4099 = vst [vmem:[#allocation2 + $0x18] sm:$0xff] %v4095
    %4100 = vst [vmem:[#allocation2 + $0x38] sm:$0xff] %v4096
    %4101 = vst [vmem:[#allocation2 + $0x58] sm:$0xff] %v4097
    %4102 = vst [vmem:[#allocation2 + $0x78] sm:$0xff] %v4098
    %v4103 = vld [vmem:[#allocation2] sm:$0xff]
    %v4104 = vld [vmem:[#allocation2 + $0x8] sm:$0xff]
    %v4105 = vld [vmem:[#allocation2 + $0x10] sm:$0xff]
    %v4106 = vld [vmem:[#allocation2 + $0x18] sm:$0xff]
    %v4107 = vld [vmem:[#allocation2 + $0x20] sm:$0xff]
    %v4108 = vld [vmem:[#allocation2 + $0x28] sm:$0xff]
    %v4109 = vld [vmem:[#allocation2 + $0x30] sm:$0xff]
    %v4110 = vld [vmem:[#allocation2 + $0x38] sm:$0xff]
    %v4111 = vld [vmem:[#allocation2 + $0x40] sm:$0xff]
    %v4112 = vld [vmem:[#allocation2 + $0x48] sm:$0xff]
    %v4113 = vld [vmem:[#allocation2 + $0x50] sm:$0xff]
    %v4114 = vld [vmem:[#allocation2 + $0x58] sm:$0xff]
    %v4115 = vld [vmem:[#allocation2 + $0x60] sm:$0xff]
    %v4116 = vld [vmem:[#allocation2 + $0x68] sm:$0xff]
    %v4117 = vld [vmem:[#allocation2 + $0x70] sm:$0xff]
    %v4118 = vld [vmem:[#allocation2 + $0x78] sm:$0xff]
    %v4119 = vld [vmem:[%s12] sm:$0xff]
    %v4120 = vld [vmem:[%s12 + $0x8] sm:$0xff]
    %v4121 = vld [vmem:[%s12 + $0x10] sm:$0xff]
    %v4122 = vld [vmem:[%s12 + $0x18] sm:$0xff]
    %v4123 = vld [vmem:[%s12 + $0x20] sm:$0xff]
    %v4124 = vld [vmem:[%s12 + $0x28] sm:$0xff]
    %v4125 = vld [vmem:[%s12 + $0x30] sm:$0xff]
    %v4126 = vld [vmem:[%s12 + $0x38] sm:$0xff]
    %v4127 = vld [vmem:[%s12 + $0x40] sm:$0xff]
    %v4128 = vld [vmem:[%s12 + $0x48] sm:$0xff]
    %v4129 = vld [vmem:[%s12 + $0x50] sm:$0xff]
    %v4130 = vld [vmem:[%s12 + $0x58] sm:$0xff]
    %v4131 = vld [vmem:[%s12 + $0x60] sm:$0xff]
    %v4132 = vld [vmem:[%s12 + $0x68] sm:$0xff]
    %v4133 = vld [vmem:[%s12 + $0x70] sm:$0xff]
    %v4134 = vld [vmem:[%s12 + $0x78] sm:$0xff]
    %v4135 = vld [vmem:[%s12 + $0x80] sm:$0xff]
    %v4136 = vld [vmem:[%s12 + $0x88] sm:$0xff]
    %v4137 = vld [vmem:[%s12 + $0x90] sm:$0xff]
    %v4138 = vld [vmem:[%s12 + $0x98] sm:$0xff]
    %v4139 = vld [vmem:[%s12 + $0xa0] sm:$0xff]
    %v4140 = vld [vmem:[%s12 + $0xa8] sm:$0xff]
    %v4141 = vld [vmem:[%s12 + $0xb0] sm:$0xff]
    %v4142 = vld [vmem:[%s12 + $0xb8] sm:$0xff]
    %v4143 = vld [vmem:[%s12 + $0xc0] sm:$0xff]
    %v4144 = vld [vmem:[%s12 + $0xc8] sm:$0xff]
    %v4145 = vld [vmem:[%s12 + $0xd0] sm:$0xff]
    %v4146 = vld [vmem:[%s12 + $0xd8] sm:$0xff]
    %v4147 = vld [vmem:[%s12 + $0xe0] sm:$0xff]
    %v4148 = vld [vmem:[%s12 + $0xe8] sm:$0xff]
    %v4149 = vld [vmem:[%s12 + $0xf0] sm:$0xff]
    %v4150 = vld [vmem:[%s12 + $0xf8] sm:$0xff]
    %v4151 = vld [vmem:[%s12 + $0x100] sm:$0xff]
    %v4152 = vld [vmem:[%s12 + $0x108] sm:$0xff]
    %v4153 = vld [vmem:[%s12 + $0x110] sm:$0xff]
    %v4154 = vld [vmem:[%s12 + $0x118] sm:$0xff]
    %v4155 = vld [vmem:[%s12 + $0x120] sm:$0xff]
    %v4156 = vld [vmem:[%s12 + $0x128] sm:$0xff]
    %v4157 = vld [vmem:[%s12 + $0x130] sm:$0xff]
    %v4158 = vld [vmem:[%s12 + $0x138] sm:$0xff]
    %v4159 = vld [vmem:[%s12 + $0x140] sm:$0xff]
    %v4160 = vld [vmem:[%s12 + $0x148] sm:$0xff]
    %v4161 = vld [vmem:[%s12 + $0x150] sm:$0xff]
    %v4162 = vld [vmem:[%s12 + $0x158] sm:$0xff]
    %v4163 = vld [vmem:[%s12 + $0x160] sm:$0xff]
    %v4164 = vld [vmem:[%s12 + $0x168] sm:$0xff]
    %v4165 = vld [vmem:[%s12 + $0x170] sm:$0xff]
    %v4166 = vld [vmem:[%s12 + $0x178] sm:$0xff]
    %v4167 = vld [vmem:[%s12 + $0x180] sm:$0xff]
    %v4168 = vld [vmem:[%s12 + $0x188] sm:$0xff]
    %v4169 = vld [vmem:[%s12 + $0x190] sm:$0xff]
    %v4170 = vld [vmem:[%s12 + $0x198] sm:$0xff]
    %v4171 = vld [vmem:[%s12 + $0x1a0] sm:$0xff]
    %v4172 = vld [vmem:[%s12 + $0x1a8] sm:$0xff]
    %v4173 = vld [vmem:[%s12 + $0x1b0] sm:$0xff]
    %v4174 = vld [vmem:[%s12 + $0x1b8] sm:$0xff]
    %v4175 = vld [vmem:[%s12 + $0x1c0] sm:$0xff]
    %v4176 = vld [vmem:[%s12 + $0x1c8] sm:$0xff]
    %v4177 = vld [vmem:[%s12 + $0x1d0] sm:$0xff]
    %v4178 = vld [vmem:[%s12 + $0x1d8] sm:$0xff]
    %v4179 = vld [vmem:[%s12 + $0x1e0] sm:$0xff]
    %v4180 = vld [vmem:[%s12 + $0x1e8] sm:$0xff]
    %v4181 = vld [vmem:[%s12 + $0x1f0] sm:$0xff]
    %v4182 = vld [vmem:[%s12 + $0x1f8] sm:$0xff]
    %v4183 = vld [vmem:[%s13] sm:$0x1]
    %v4185 = vlaneseq
    %v4186 = vshrl.u32 %v4185, 7
    %v4187 = vsub.s32 0, %v4186
    %v4188 = vrot.slane %v4183, %v4187
    %4190 = vmatprep.subr.mxu0 0.0
    %4191 = vmatpush1.msra.mxu0 %v4119
    %4192 = vmatprep.subr.mxu0 0.0
    %4193 = vmatpush1.msra.mxu0 %v4120
    %4194 = vmatprep.subr.mxu0 0.0
    %4195 = vmatpush1.msra.mxu0 %v4121
    %4196 = vmatprep.subr.mxu0 0.0
    %4197 = vmatpush1.msra.mxu0 %v4122
    %4198 = vmatprep.subr.mxu0 0.0
    %4199 = vmatpush1.msra.mxu0 %v4123
    %4200 = vmatprep.subr.mxu0 0.0
    %4201 = vmatpush1.msra.mxu0 %v4124
    %4202 = vmatprep.subr.mxu0 0.0
    %4203 = vmatpush1.msra.mxu0 %v4125
    %4204 = vmatprep.subr.mxu0 0.0
    %4205 = vmatpush1.msra.mxu0 %v4126
    %4206 = vmatprep.subr.mxu0 0.0
    %4207 = vmatpush1.msra.mxu0 %v4127
    %4208 = vmatprep.subr.mxu0 0.0
    %4209 = vmatpush1.msra.mxu0 %v4128
    %4210 = vmatprep.subr.mxu0 0.0
    %4211 = vmatpush1.msra.mxu0 %v4129
    %4212 = vmatprep.subr.mxu0 0.0
    %4213 = vmatpush1.msra.mxu0 %v4130
    %4214 = vmatprep.subr.mxu0 0.0
    %4215 = vmatpush1.msra.mxu0 %v4131
    %4216 = vmatprep.subr.mxu0 0.0
    %4217 = vmatpush1.msra.mxu0 %v4132
    %4218 = vmatprep.subr.mxu0 0.0
    %4219 = vmatpush1.msra.mxu0 %v4133
    %4220 = vmatprep.subr.mxu0 0.0
    %4221 = vmatpush1.msra.mxu0 %v4134
    %4222 = vmatprep.subr.mxu0 0.0
    %4223 = vmatpush1.msra.mxu0 %v4135
    %4224 = vmatprep.subr.mxu0 0.0
    %4225 = vmatpush1.msra.mxu0 %v4136
    %4226 = vmatprep.subr.mxu0 0.0
    %4227 = vmatpush1.msra.mxu0 %v4137
    %4228 = vmatprep.subr.mxu0 0.0
    %4229 = vmatpush1.msra.mxu0 %v4138
    %4230 = vmatprep.subr.mxu0 0.0
    %4231 = vmatpush1.msra.mxu0 %v4139
    %4232 = vmatprep.subr.mxu0 0.0
    %4233 = vmatpush1.msra.mxu0 %v4140
    %4234 = vmatprep.subr.mxu0 0.0
    %4235 = vmatpush1.msra.mxu0 %v4141
    %4236 = vmatprep.subr.mxu0 0.0
    %4237 = vmatpush1.msra.mxu0 %v4142
    %4238 = vmatprep.subr.mxu0 0.0
    %4239 = vmatpush1.msra.mxu0 %v4143
    %4240 = vmatprep.subr.mxu0 0.0
    %4241 = vmatpush1.msra.mxu0 %v4144
    %4242 = vmatprep.subr.mxu0 0.0
    %4243 = vmatpush1.msra.mxu0 %v4145
    %4244 = vmatprep.subr.mxu0 0.0
    %4245 = vmatpush1.msra.mxu0 %v4146
    %4246 = vmatprep.subr.mxu0 0.0
    %4247 = vmatpush1.msra.mxu0 %v4147
    %4248 = vmatprep.subr.mxu0 0.0
    %4249 = vmatpush1.msra.mxu0 %v4148
    %4250 = vmatprep.subr.mxu0 0.0
    %4251 = vmatpush1.msra.mxu0 %v4149
    %4252 = vmatprep.subr.mxu0 0.0
    %4253 = vmatpush1.msra.mxu0 %v4150
    %4254 = vmatprep.mubr.f32.mxu0 %v4104
    %4255 = vmatmul.mubr.f32.gmra.mrb[0].mxu0 %v4103
    %v4256 = vpop.f32.mrb[0].mxu0
    %v4257 = vadd.f32 %v4188, %v4256
    %v4258 = vpop.f32.mrb[0].mxu0
    %4259 = vmatprep.mubr.f32.mxu0 %v4108
    %4260 = vmatmul.mubr.f32.gmra.mrb[0].mxu0 %v4107
    %v4261 = vpop.f32.mrb[0].mxu0
    %v4262 = vadd.f32 %v4188, %v4261
    %v4263 = vpop.f32.mrb[0].mxu0
    %4264 = vmatprep.mubr.f32.mxu0 %v4112
    %4265 = vmatmul.mubr.f32.gmra.mrb[0].mxu0 %v4111
    %v4266 = vpop.f32.mrb[0].mxu0
    %v4267 = vadd.f32 %v4188, %v4266
    %v4268 = vpop.f32.mrb[0].mxu0
    %4269 = vmatprep.mubr.f32.mxu0 %v4116
    %4270 = vmatmul.mubr.f32.gmra.mrb[0].mxu0 %v4115
    %v4271 = vpop.f32.mrb[0].mxu0
    %v4272 = vadd.f32 %v4188, %v4271
    %v4273 = vpop.f32.mrb[0].mxu0
    %4274 = vdwg.mxu0
    %4275 = vmatprep.subr.mxu0 0.0
    %4276 = vmatpush1.msra.mxu0 %v4151
    %4277 = vmatprep.subr.mxu0 0.0
    %4278 = vmatpush1.msra.mxu0 %v4152
    %4279 = vmatprep.subr.mxu0 0.0
    %4280 = vmatpush1.msra.mxu0 %v4153
    %4281 = vmatprep.subr.mxu0 0.0
    %4282 = vmatpush1.msra.mxu0 %v4154
    %4283 = vmatprep.subr.mxu0 0.0
    %4284 = vmatpush1.msra.mxu0 %v4155
    %4285 = vmatprep.subr.mxu0 0.0
    %4286 = vmatpush1.msra.mxu0 %v4156
    %4287 = vmatprep.subr.mxu0 0.0
    %4288 = vmatpush1.msra.mxu0 %v4157
    %4289 = vmatprep.subr.mxu0 0.0
    %4290 = vmatpush1.msra.mxu0 %v4158
    %4291 = vmatprep.subr.mxu0 0.0
    %4292 = vmatpush1.msra.mxu0 %v4159
    %4293 = vmatprep.subr.mxu0 0.0
    %4294 = vmatpush1.msra.mxu0 %v4160
    %4295 = vmatprep.subr.mxu0 0.0
    %4296 = vmatpush1.msra.mxu0 %v4161
    %4297 = vmatprep.subr.mxu0 0.0
    %4298 = vmatpush1.msra.mxu0 %v4162
    %4299 = vmatprep.subr.mxu0 0.0
    %4300 = vmatpush1.msra.mxu0 %v4163
    %4301 = vmatprep.subr.mxu0 0.0
    %4302 = vmatpush1.msra.mxu0 %v4164
    %4303 = vmatprep.subr.mxu0 0.0
    %4304 = vmatpush1.msra.mxu0 %v4165
    %4305 = vmatprep.subr.mxu0 0.0
    %4306 = vmatpush1.msra.mxu0 %v4166
    %4307 = vmatprep.subr.mxu0 0.0
    %4308 = vmatpush1.msra.mxu0 %v4167
    %4309 = vmatprep.subr.mxu0 0.0
    %4310 = vmatpush1.msra.mxu0 %v4168
    %4311 = vmatprep.subr.mxu0 0.0
    %4312 = vmatpush1.msra.mxu0 %v4169
    %4313 = vmatprep.subr.mxu0 0.0
    %4314 = vmatpush1.msra.mxu0 %v4170
    %4315 = vmatprep.subr.mxu0 0.0
    %4316 = vmatpush1.msra.mxu0 %v4171
    %4317 = vmatprep.subr.mxu0 0.0
    %4318 = vmatpush1.msra.mxu0 %v4172
    %4319 = vmatprep.subr.mxu0 0.0
    %4320 = vmatpush1.msra.mxu0 %v4173
    %4321 = vmatprep.subr.mxu0 0.0
    %4322 = vmatpush1.msra.mxu0 %v4174
    %4323 = vmatprep.subr.mxu0 0.0
    %4324 = vmatpush1.msra.mxu0 %v4175
    %4325 = vmatprep.subr.mxu0 0.0
    %4326 = vmatpush1.msra.mxu0 %v4176
    %4327 = vmatprep.subr.mxu0 0.0
    %4328 = vmatpush1.msra.mxu0 %v4177
    %4329 = vmatprep.subr.mxu0 0.0
    %4330 = vmatpush1.msra.mxu0 %v4178
    %4331 = vmatprep.subr.mxu0 0.0
    %4332 = vmatpush1.msra.mxu0 %v4179
    %4333 = vmatprep.subr.mxu0 0.0
    %4334 = vmatpush1.msra.mxu0 %v4180
    %4335 = vmatprep.subr.mxu0 0.0
    %4336 = vmatpush1.msra.mxu0 %v4181
    %4337 = vmatprep.subr.mxu0 0.0
    %4338 = vmatpush1.msra.mxu0 %v4182
    %4339 = vmatprep.mubr.f32.mxu0 %v4106
    %4340 = vmatmul.mubr.f32.gmra.mrb[0].mxu0 %v4105
    %v4341 = vpop.f32.mrb[0].mxu0
    %v4342 = vadd.f32 %v4257, %v4341
    %v4343 = vpop.f32.mrb[0].mxu0
    %4344 = vmatprep.mubr.f32.mxu0 %v4110
    %4345 = vmatmul.mubr.f32.gmra.mrb[0].mxu0 %v4109
    %v4346 = vpop.f32.mrb[0].mxu0
    %v4347 = vadd.f32 %v4262, %v4346
    %v4348 = vpop.f32.mrb[0].mxu0
    %4349 = vmatprep.mubr.f32.mxu0 %v4114
    %4350 = vmatmul.mubr.f32.gmra.mrb[0].mxu0 %v4113
    %v4351 = vpop.f32.mrb[0].mxu0
    %v4352 = vadd.f32 %v4267, %v4351
    %v4353 = vpop.f32.mrb[0].mxu0
    %4354 = vmatprep.mubr.f32.mxu0 %v4118
    %4355 = vmatmul.mubr.f32.gmra.mrb[0].mxu0 %v4117
    %v4356 = vpop.f32.mrb[0].mxu0
    %v4357 = vadd.f32 %v4272, %v4356
    %v4358 = vpop.f32.mrb[0].mxu0
    %4359 = vdwg.mxu0
    %v4360 = vadd.f32 %v145, %v4342
    %v4361 = vadd.f32 %v146, %v4347
    %v4362 = vadd.f32 %v147, %v4352
    %v4363 = vadd.f32 %v148, %v4357
    %v4364 = vsel %vm195, %v4360, 0.0
    %4365 = vadd.xlane.f32.xlu0 %v4364
    %v4366 = vpop.xlane.xlu0 %4365
    %v4367 = vsel %vm195, %v4361, 0.0
    %4368 = vadd.xlane.f32.xlu0 %v4367
    %v4369 = vpop.xlane.xlu0 %4368
    %v4370 = vsel %vm195, %v4362, 0.0
    %4371 = vadd.xlane.f32.xlu0 %v4370
    %v4372 = vpop.xlane.xlu0 %4371
    %v4373 = vsel %vm195, %v4363, 0.0
    %4374 = vadd.xlane.f32.xlu0 %v4373
    %v4375 = vpop.xlane.xlu0 %4374
    %v4376 = vrcp.pop 32.0
    %v4377 = vmul.f32 %v4366, %v4376
    %v4378 = vmul.f32 %v4369, %v4376
    %v4379 = vmul.f32 %v4372, %v4376
    %v4380 = vmul.f32 %v4375, %v4376
    %v4381 = vsub.f32 %v4360, %v4377
    %v4382 = vsub.f32 %v4361, %v4378
    %v4383 = vsub.f32 %v4362, %v4379
    %v4384 = vsub.f32 %v4363, %v4380
    %v4385 = vmul.f32 %v4381, %v4381
    %v4386 = vmul.f32 %v4382, %v4382
    %v4387 = vmul.f32 %v4383, %v4383
    %v4388 = vmul.f32 %v4384, %v4384
    %v4389 = vsel %vm195, %v4385, 0.0
    %4390 = vadd.xlane.f32.xlu0 %v4389
    %v4391 = vpop.xlane.xlu0 %4390
    %v4392 = vsel %vm195, %v4386, 0.0
    %4393 = vadd.xlane.f32.xlu0 %v4392
    %v4394 = vpop.xlane.xlu0 %4393
    %v4395 = vsel %vm195, %v4387, 0.0
    %4396 = vadd.xlane.f32.xlu0 %v4395
    %v4397 = vpop.xlane.xlu0 %4396
    %v4398 = vsel %vm195, %v4388, 0.0
    %4399 = vadd.xlane.f32.xlu0 %v4398
    %v4400 = vpop.xlane.xlu0 %4399
    %v4401 = vmul.f32 %v4391, %v4376
    %v4402 = vmul.f32 %v4394, %v4376
    %v4403 = vmul.f32 %v4397, %v4376
    %v4404 = vmul.f32 %v4400, %v4376
    %v4405 = vadd.f32 %v4401, 1e-05
    %v4406 = vadd.f32 %v4402, 1e-05
    %v4407 = vadd.f32 %v4403, 1e-05
    %v4408 = vadd.f32 %v4404, 1e-05
    %v4409 = vrsqrt.pop %v4405
    %v4410 = vrsqrt.pop %v4406
    %v4411 = vrsqrt.pop %v4407
    %v4412 = vrsqrt.pop %v4408
    %v4413 = vmul.f32 %v4381, %v4409
    %v4414 = vmul.f32 %v4382, %v4410
    %v4415 = vmul.f32 %v4383, %v4411
    %v4416 = vmul.f32 %v4384, %v4412
    %v4417 = vld [vmem:[%s14] sm:$0x1]
    %v4419 = vlaneseq
    %v4420 = vshrl.u32 %v4419, 7
    %v4421 = vsub.s32 0, %v4420
    %v4422 = vrot.slane %v4417, %v4421
    %v4424 = vmul.f32 %v4413, %v4422
    %v4425 = vmul.f32 %v4414, %v4422
    %v4426 = vmul.f32 %v4415, %v4422
    %v4427 = vmul.f32 %v4416, %v4422
    %v4428 = vld [vmem:[%s15] sm:$0x1]
    %v4430 = vlaneseq
    %v4431 = vshrl.u32 %v4430, 7
    %v4432 = vsub.s32 0, %v4431
    %v4433 = vrot.slane %v4428, %v4432
    %v4435 = vadd.f32 %v4424, %v4433
    %v4436 = vadd.f32 %v4425, %v4433
    %v4437 = vadd.f32 %v4426, %v4433
    %v4438 = vadd.f32 %v4427, %v4433
    %4439 = vst.msk [vmem:[#allocation15] sm:$0xff] %vm195, %v4435
    %4440 = vst.msk [vmem:[#allocation15 + $0x8] sm:$0xff] %vm195, %v4436
    %4441 = vst.msk [vmem:[#allocation15 + $0x10] sm:$0xff] %vm195, %v4437
    %4442 = vst.msk [vmem:[#allocation15 + $0x18] sm:$0xff] %vm195, %v4438
    // Predicated region
    $region94: #{tpu_custom_call.1} parent=1 // pred_check
      _
    $region95: #{tpu_custom_call.1} parent=1 // pred_check_branch
      %4444 = sbr.rel (0) target = $region97
    $region96: #{tpu_custom_call.1} parent=1 // pred_region
      %s4446 = ssub.s32 512, 512
      %4447 = vsyncadd [#allocation5], %s4446
      %s4448 = sshll.u32 [#allocation15], 4
      %s4449 = int_to_ptr.vmem [resolvable:$true] %s4448
      %4454 = dma.vmem_to_hbm [thread:$0]  %s4449, 512, %s16, [#allocation5], 128, 128, 8
    $region97: #{tpu_custom_call.1} parent=1 // pred_fallthru
      _
    // Predicated region
    $region98: #{tpu_custom_call.1} parent=1 // pred_check
      _
    $region99: #{tpu_custom_call.1} parent=1 // pred_check_branch
      %4456 = sbr.rel (0) target = $region101
    $region100: #{tpu_custom_call.1} parent=1 // pred_region
      %4457 = dma.done [#allocation5], 512
    $region101: #{tpu_custom_call.1} parent=1 // pred_fallthru
      _
    %4458 = vsyncpa [#allocation4], 1
    %4459 = vsyncpa [#allocation7], 1
    %4460 = vsyncpa [#allocation10], 1
    %4461 = vsyncpa [#allocation13], 1
    %4462 = vsyncpa [#allocation5], 1

// kernel: tpu_custom_call.1
$region0: #{tpu_custom_call.1}
  #allocation0 [shape = 'u32[]', space=smem, size = 0x4, offset = 0x4, fixed_abs, tag = 'smem constant byte address 0x4 - core index']
  #allocation1 [shape = 'u32[144,128]{1,0:T(1,128)}', space=vmem, size = 0x12000, scoped, tag = 'internal scratch']
  #allocation2 [shape = 'f32[32,512]{1,0:T(8,128)}', space=vmem, size = 0x10000, scoped, tag = 'scratch operand']
  %s0 = inlined_call_operand.vmem [shape: f32[4,8,32], index: 0, kind: input, shape index: {}]
  %s1 = inlined_call_operand.hbm [shape: f32[4,8,32], index: 1, kind: input, shape index: {}]
  %s2 = inlined_call_operand.hbm [shape: f32[4,8,32], index: 2, kind: input, shape index: {}]
  %s3 = inlined_call_operand.vmem [shape: f32[32,512], index: 3, kind: input, shape index: {}]
  %s4 = inlined_call_operand.vmem [shape: f32[1,512], index: 4, kind: input, shape index: {}]
  %s5 = inlined_call_operand.hbm [shape: f32[32,512], index: 5, kind: input, shape index: {}]
  %s6 = inlined_call_operand.vmem [shape: f32[1,512], index: 6, kind: input, shape index: {}]
  %s7 = inlined_call_operand.hbm [shape: f32[32,512], index: 7, kind: input, shape index: {}]
  %s8 = inlined_call_operand.hbm [shape: f32[1,512], index: 8, kind: input, shape index: {}]
  %s9 = inlined_call_operand.hbm [shape: f32[32,512], index: 9, kind: input, shape index: {}]
  %s10 = inlined_call_operand.hbm [shape: f32[1,512], index: 10, kind: input, shape index: {}]
  %s11 = inlined_call_operand.vmem [shape: f32[128,512], index: 11, kind: input, shape index: {}]
  %s12 = inlined_call_operand.vmem [shape: f32[512,32], index: 12, kind: input, shape index: {}]
  %s13 = inlined_call_operand.vmem [shape: f32[1,32], index: 13, kind: input, shape index: {}]
  %s14 = inlined_call_operand.vmem [shape: f32[1,32], index: 14, kind: input, shape index: {}]
  %s15 = inlined_call_operand.vmem [shape: f32[1,32], index: 15, kind: input, shape index: {}]
  %s16 = inlined_call_operand.hbm [shape: f32[4,8,32], index: 16, kind: output, shape index: {}]
  %s17 = sld [smem:[#allocation0]]
  $region102: #{tpu_custom_call.1} parent=0
    _
  %s19 = ssub.s32 1, %s17
  %s20 = scalar_select 0, %s19, %s17
  $region1: #{tpu_custom_call.1} parent=0
    #allocation3 [shape = 'u8[16384]{0}', space=vmem, size = 0x4000, scoped, tag = 'input window, operand 1, single buffered']
    #allocation4 [shape = 's32[1]{0}', space=sflag, size = 0x4, scoped, tag = 'scoped memory for tpu_custom_call.1']
    #allocation5 [shape = 's32[1]{0}', space=sflag, size = 0x4, scoped, tag = 'scoped memory for tpu_custom_call.1']
    #allocation6 [shape = 'u8[16384]{0}', space=vmem, size = 0x4000, scoped, tag = 'input window, operand 2, single buffered']
    #allocation7 [shape = 's32[1]{0}', space=sflag, size = 0x4, scoped, tag = 'scoped memory for tpu_custom_call.1']
    #allocation8 [shape = 'u8[65536]{0}', space=vmem, size = 0x10000, scoped, tag = 'input window, operand 5, single buffered']
    #allocation9 [shape = 'u8[65536]{0}', space=vmem, size = 0x10000, scoped, tag = 'input window, operand 7, single buffered']
    #allocation10 [shape = 's32[1]{0}', space=sflag, size = 0x4, scoped, tag = 'scoped memory for tpu_custom_call.1']
    #allocation11 [shape = 'u8[2048]{0}', space=vmem, size = 0x800, scoped, tag = 'input window, operand 8, single buffered']
    #allocation12 [shape = 'u8[65536]{0}', space=vmem, size = 0x10000, scoped, tag = 'input window, operand 9, single buffered']
    #allocation13 [shape = 's32[1]{0}', space=sflag, size = 0x4, scoped, tag = 'scoped memory for tpu_custom_call.1']
    #allocation14 [shape = 'u8[2048]{0}', space=vmem, size = 0x800, scoped, tag = 'input window, operand 10, single buffered']
    #allocation15 [shape = 'u8[16384]{0}', space=vmem, size = 0x4000, scoped, tag = 'output window, operand 0, single buffered']
    %21 = vsyncpa [#allocation4], 0
    %22 = vsyncpa [#allocation7], 0
    %23 = vsyncpa [#allocation10], 0
    %24 = vsyncpa [#allocation13], 0
    %25 = vsyncpa [#allocation5], 0
    // Predicated region
    $region2: #{tpu_custom_call.1} parent=1 // pred_check
      _
    $region3: #{tpu_custom_call.1} parent=1 // pred_check_branch
      %27 = sbr.rel (0) target = $region5
    $region4: #{tpu_custom_call.1} parent=1 // pred_region
      _
    $region5: #{tpu_custom_call.1} parent=1 // pred_fallthru
      _
    // Predicated region
    $region6: #{tpu_custom_call.1} parent=1 // pred_check
      _
    $region7: #{tpu_custom_call.1} parent=1 // pred_check_branch
      %29 = sbr.rel (0) target = $region9
    $region8: #{tpu_custom_call.1} parent=1 // pred_region
      %s31 = ssub.s32 512, 512
      %32 = vsyncadd [#allocation4], %s31
      %s33 = sshll.u32 [#allocation3], 4
      %s34 = int_to_ptr.vmem [resolvable:$true] %s33
      %39 = dma.hbm_to_vmem [thread:$0]  %s1, 512, %s34, [#allocation4], 128, 128, 8
    $region9: #{tpu_custom_call.1} parent=1 // pred_fallthru
      _
    // Predicated region
    $region10: #{tpu_custom_call.1} parent=1 // pred_check
      _
    $region11: #{tpu_custom_call.1} parent=1 // pred_check_branch
      %41 = sbr.rel (0) target = $region13
    $region12: #{tpu_custom_call.1} parent=1 // pred_region
      %s43 = ssub.s32 512, 512
      %44 = vsyncadd [#allocation7], %s43
      %s45 = sshll.u32 [#allocation6], 4
      %s46 = int_to_ptr.vmem [resolvable:$true] %s45
      %51 = dma.hbm_to_vmem [thread:$0]  %s2, 512, %s46, [#allocation7], 128, 128, 8
    $region13: #{tpu_custom_call.1} parent=1 // pred_fallthru
      _
    // Predicated region
    $region14: #{tpu_custom_call.1} parent=1 // pred_check
      _
    $region15: #{tpu_custom_call.1} parent=1 // pred_check_branch
      %53 = sbr.rel (0) target = $region17
    $region16: #{tpu_custom_call.1} parent=1 // pred_region
      _
    $region17: #{tpu_custom_call.1} parent=1 // pred_fallthru
      _
    // Predicated region
    $region18: #{tpu_custom_call.1} parent=1 // pred_check
      _
    $region19: #{tpu_custom_call.1} parent=1 // pred_check_branch
      %55 = sbr.rel (0) target = $region21
    $region20: #{tpu_custom_call.1} parent=1 // pred_region
      _
    $region21: #{tpu_custom_call.1} parent=1 // pred_fallthru
      _
    // Predicated region
    $region22: #{tpu_custom_call.1} parent=1 // pred_check
      _
    $region23: #{tpu_custom_call.1} parent=1 // pred_check_branch
      %57 = sbr.rel (0) target = $region25
    $region24: #{tpu_custom_call.1} parent=1 // pred_region
      %s59 = ssub.s32 2048, 2048
      %60 = vsyncadd [#allocation7], %s59
      %s61 = sshll.u32 [#allocation8], 4
      %s62 = int_to_ptr.vmem [resolvable:$true] %s61
      %67 = dma.hbm_to_vmem [thread:$0]  %s5, 2048, %s62, [#allocation7], 512, 512, 32
    $region25: #{tpu_custom_call.1} parent=1 // pred_fallthru
      _
    // Predicated region
    $region26: #{tpu_custom_call.1} parent=1 // pred_check
      _
    $region27: #{tpu_custom_call.1} parent=1 // pred_check_branch
      %69 = sbr.rel (0) target = $region29
    $region28: #{tpu_custom_call.1} parent=1 // pred_region
      _
    $region29: #{tpu_custom_call.1} parent=1 // pred_fallthru
      _
    // Predicated region
    $region30: #{tpu_custom_call.1} parent=1 // pred_check
      _
    $region31: #{tpu_custom_call.1} parent=1 // pred_check_branch
      %71 = sbr.rel (0) target = $region33
    $region32: #{tpu_custom_call.1} parent=1 // pred_region
      %s73 = ssub.s32 2048, 2048
      %74 = vsyncadd [#allocation10], %s73
      %s75 = sshll.u32 [#allocation9], 4
      %s76 = int_to_ptr.vmem [resolvable:$true] %s75
      %81 = dma.hbm_to_vmem [thread:$0]  %s7, 2048, %s76, [#allocation10], 512, 512, 32
    $region33: #{tpu_custom_call.1} parent=1 // pred_fallthru
      _
    // Predicated region
    $region34: #{tpu_custom_call.1} parent=1 // pred_check
      _
    $region35: #{tpu_custom_call.1} parent=1 // pred_check_branch
      %83 = sbr.rel (0) target = $region37
    $region36: #{tpu_custom_call.1} parent=1 // pred_region
      %s85 = ssub.s32 64, 64
      %86 = vsyncadd [#allocation10], %s85
      %s88 = sshll.u32 [#allocation11], 4
      %s89 = int_to_ptr.vmem [resolvable:$true] %s88
      %91 = dma.hbm_to_vmem [thread:$0]  %s8, 64, %s89, [#allocation10]
    $region37: #{tpu_custom_call.1} parent=1 // pred_fallthru
      _
    // Predicated region
    $region38: #{tpu_custom_call.1} parent=1 // pred_check
      _
    $region39: #{tpu_custom_call.1} parent=1 // pred_check_branch
      %93 = sbr.rel (0) target = $region41
    $region40: #{tpu_custom_call.1} parent=1 // pred_region
      %s95 = ssub.s32 2048, 2048
      %96 = vsyncadd [#allocation13], %s95
      %s97 = sshll.u32 [#allocation12], 4
      %s98 = int_to_ptr.vmem [resolvable:$true] %s97
      %103 = dma.hbm_to_vmem [thread:$0]  %s9, 2048, %s98, [#allocation13], 512, 512, 32
    $region41: #{tpu_custom_call.1} parent=1 // pred_fallthru
      _
    // Predicated region
    $region42: #{tpu_custom_call.1} parent=1 // pred_check
      _
    $region43: #{tpu_custom_call.1} parent=1 // pred_check_branch
      %105 = sbr.rel (0) target = $region45
    $region44: #{tpu_custom_call.1} parent=1 // pred_region
      %s107 = ssub.s32 64, 64
      %108 = vsyncadd [#allocation13], %s107
      %s110 = sshll.u32 [#allocation14], 4
      %s111 = int_to_ptr.vmem [resolvable:$true] %s110
      %113 = dma.hbm_to_vmem [thread:$0]  %s10, 64, %s111, [#allocation13]
    $region45: #{tpu_custom_call.1} parent=1 // pred_fallthru
      _
    // Predicated region
    $region46: #{tpu_custom_call.1} parent=1 // pred_check
      _
    $region47: #{tpu_custom_call.1} parent=1 // pred_check_branch
      %115 = sbr.rel (0) target = $region49
    $region48: #{tpu_custom_call.1} parent=1 // pred_region
      _
    $region49: #{tpu_custom_call.1} parent=1 // pred_fallthru
      _
    // Predicated region
    $region50: #{tpu_custom_call.1} parent=1 // pred_check
      _
    $region51: #{tpu_custom_call.1} parent=1 // pred_check_branch
      %117 = sbr.rel (0) target = $region53
    $region52: #{tpu_custom_call.1} parent=1 // pred_region
      _
    $region53: #{tpu_custom_call.1} parent=1 // pred_fallthru
      _
    // Predicated region
    $region54: #{tpu_custom_call.1} parent=1 // pred_check
      _
    $region55: #{tpu_custom_call.1} parent=1 // pred_check_branch
      %119 = sbr.rel (0) target = $region57
    $region56: #{tpu_custom_call.1} parent=1 // pred_region
      _
    $region57: #{tpu_custom_call.1} parent=1 // pred_fallthru
      _
    // Predicated region
    $region58: #{tpu_custom_call.1} parent=1 // pred_check
      _
    $region59: #{tpu_custom_call.1} parent=1 // pred_check_branch
      %121 = sbr.rel (0) target = $region61
    $region60: #{tpu_custom_call.1} parent=1 // pred_region
      _
    $region61: #{tpu_custom_call.1} parent=1 // pred_fallthru
      _
    // Predicated region
    $region62: #{tpu_custom_call.1} parent=1 // pred_check
      _
    $region63: #{tpu_custom_call.1} parent=1 // pred_check_branch
      %123 = sbr.rel (0) target = $region65
    $region64: #{tpu_custom_call.1} parent=1 // pred_region
      _
    $region65: #{tpu_custom_call.1} parent=1 // pred_fallthru
      _
    // Predicated region
    $region66: #{tpu_custom_call.1} parent=1 // pred_check
      _
    $region67: #{tpu_custom_call.1} parent=1 // pred_check_branch
      %125 = sbr.rel (0) target = $region69
    $region68: #{tpu_custom_call.1} parent=1 // pred_region
      %126 = dma.done [#allocation4], 512
    $region69: #{tpu_custom_call.1} parent=1 // pred_fallthru
      _
    // Predicated region
    $region70: #{tpu_custom_call.1} parent=1 // pred_check
      _
    $region71: #{tpu_custom_call.1} parent=1 // pred_check_branch
      %128 = sbr.rel (0) target = $region73
    $region72: #{tpu_custom_call.1} parent=1 // pred_region
      %129 = dma.done [#allocation7], 512
    $region73: #{tpu_custom_call.1} parent=1 // pred_fallthru
      _
    // Predicated region
    $region74: #{tpu_custom_call.1} parent=1 // pred_check
      _
    $region75: #{tpu_custom_call.1} parent=1 // pred_check_branch
      %131 = sbr.rel (0) target = $region77
    $region76: #{tpu_custom_call.1} parent=1 // pred_region
      %132 = dma.done [#allocation7], 2048
    $region77: #{tpu_custom_call.1} parent=1 // pred_fallthru
      _
    // Predicated region
    $region78: #{tpu_custom_call.1} parent=1 // pred_check
      _
    $region79: #{tpu_custom_call.1} parent=1 // pred_check_branch
      %134 = sbr.rel (0) target = $region81
    $region80: #{tpu_custom_call.1} parent=1 // pred_region
      %135 = dma.done [#allocation10], 2048
    $region81: #{tpu_custom_call.1} parent=1 // pred_fallthru
      _
    // Predicated region
    $region82: #{tpu_custom_call.1} parent=1 // pred_check
      _
    $region83: #{tpu_custom_call.1} parent=1 // pred_check_branch
      %137 = sbr.rel (0) target = $region85
    $region84: #{tpu_custom_call.1} parent=1 // pred_region
      %138 = dma.done [#allocation10], 64
    $region85: #{tpu_custom_call.1} parent=1 // pred_fallthru
      _
    // Predicated region
    $region86: #{tpu_custom_call.1} parent=1 // pred_check
      _
    $region87: #{tpu_custom_call.1} parent=1 // pred_check_branch
      %140 = sbr.rel (0) target = $region89
    $region88: #{tpu_custom_call.1} parent=1 // pred_region
      %141 = dma.done [#allocation13], 2048
    $region89: #{tpu_custom_call.1} parent=1 // pred_fallthru
      _
    // Predicated region
    $region90: #{tpu_custom_call.1} parent=1 // pred_check
      _
    $region91: #{tpu_custom_call.1} parent=1 // pred_check_branch
      %143 = sbr.rel (0) target = $region93
    $region92: #{tpu_custom_call.1} parent=1 // pred_region
      %144 = dma.done [#allocation13], 64
    $region93: #{tpu_custom_call.1} parent=1 // pred_fallthru
      _
    %v145 = vld [vmem:[%s0] sm:$0xff]
    %v146 = vld [vmem:[%s0 + $0x8] sm:$0xff]
    %v147 = vld [vmem:[%s0 + $0x10] sm:$0xff]
    %v148 = vld [vmem:[%s0 + $0x18] sm:$0xff]
    %v149 = vld [vmem:[#allocation3] sm:$0xff]
    %v150 = vld [vmem:[#allocation3 + $0x8] sm:$0xff]
    %v151 = vld [vmem:[#allocation3 + $0x10] sm:$0xff]
    %v152 = vld [vmem:[#allocation3 + $0x18] sm:$0xff]
    %v153 = vld [vmem:[#allocation6] sm:$0xff]
    %v154 = vld [vmem:[#allocation6 + $0x8] sm:$0xff]
    %v155 = vld [vmem:[#allocation6 + $0x10] sm:$0xff]
    %v156 = vld [vmem:[#allocation6 + $0x18] sm:$0xff]
    %v157 = vld [vmem:[%s3] sm:$0xff]
    %v158 = vld [vmem:[%s3 + $0x8] sm:$0xff]
    %v159 = vld [vmem:[%s3 + $0x10] sm:$0xff]
    %v160 = vld [vmem:[%s3 + $0x18] sm:$0xff]
    %v161 = vld [vmem:[%s3 + $0x20] sm:$0xff]
    %v162 = vld [vmem:[%s3 + $0x28] sm:$0xff]
    %v163 = vld [vmem:[%s3 + $0x30] sm:$0xff]
    %v164 = vld [vmem:[%s3 + $0x38] sm:$0xff]
    %v165 = vld [vmem:[%s3 + $0x40] sm:$0xff]
    %v166 = vld [vmem:[%s3 + $0x48] sm:$0xff]
    %v167 = vld [vmem:[%s3 + $0x50] sm:$0xff]
    %v168 = vld [vmem:[%s3 + $0x58] sm:$0xff]
    %v169 = vld [vmem:[%s3 + $0x60] sm:$0xff]
    %v170 = vld [vmem:[%s3 + $0x68] sm:$0xff]
    %v171 = vld [vmem:[%s3 + $0x70] sm:$0xff]
    %v172 = vld [vmem:[%s3 + $0x78] sm:$0xff]
    %v173 = vld [vmem:[%s4] sm:$0xf]
    %v175 = vlaneseq
    %v176 = vshrl.u32 %v175, 7
    %v177 = vsub.s32 0, %v176
    %v178 = vrot.slane %v173, %v177
    %v179 = vlaneseq
    %v180 = vshrl.u32 %v179, 7
    %v181 = vsub.s32 1, %v180
    %v182 = vrot.slane %v173, %v181
    %v183 = vlaneseq
    %v184 = vshrl.u32 %v183, 7
    %v185 = vsub.s32 2, %v184
    %v186 = vrot.slane %v173, %v185
    %v187 = vlaneseq
    %v188 = vshrl.u32 %v187, 7
    %v189 = vsub.s32 3, %v188
    %v190 = vrot.slane %v173, %v189
    %vm195 = vcmask 261120
    %v197 = vsel %vm195, %v145, 0
    %v200 = vsel %vm195, %v146, 0
    %v203 = vsel %vm195, %v147, 0
    %v206 = vsel %vm195, %v148, 0
    %208 = vmatprep.subr.mxu0 %v158
    %209 = vmatpush1.msra.mxu0 %v157
    %210 = vmatprep.subr.mxu0 %v162
    %211 = vmatpush1.msra.mxu0 %v161
    %212 = vmatprep.subr.mxu0 %v166
    %213 = vmatpush1.msra.mxu0 %v165
    %214 = vmatprep.subr.mxu0 %v170
    %215 = vmatpush1.msra.mxu0 %v169
    %216 = vmatprep.subr.mxu0 0.0
    %217 = vmatpush1.msra.mxu0 0.0
    %218 = vmatprep.subr.mxu0 0.0
    %219 = vmatpush1.msra.mxu0 0.0
    %220 = vmatprep.subr.mxu0 0.0
    %221 = vmatpush1.msra.mxu0 0.0
    %222 = vmatprep.subr.mxu0 0.0
    %223 = vmatpush1.msra.mxu0 0.0
    %224 = vmatprep.subr.mxu0 0.0
    %225 = vmatpush1.msra.mxu0 0.0
    %226 = vmatprep.subr.mxu0 0.0
    %227 = vmatpush1.msra.mxu0 0.0
    %228 = vmatprep.subr.mxu0 0.0
    %229 = vmatpush1.msra.mxu0 0.0
    %230 = vmatprep.subr.mxu0 0.0
    %231 = vmatpush1.msra.mxu0 0.0
    %232 = vmatprep.subr.mxu0 0.0
    %233 = vmatpush1.msra.mxu0 0.0
    %234 = vmatprep.subr.mxu0 0.0
    %235 = vmatpush1.msra.mxu0 0.0
    %236 = vmatprep.subr.mxu0 0.0
    %237 = vmatpush1.msra.mxu0 0.0
    %238 = vmatprep.subr.mxu0 0.0
    %239 = vmatpush1.msra.mxu0 0.0
    %240 = vmatprep.subr.mxu0 0.0
    %241 = vmatpush1.msra.mxu0 0.0
    %242 = vmatprep.subr.mxu0 0.0
    %243 = vmatpush1.msra.mxu0 0.0
    %244 = vmatprep.subr.mxu0 0.0
    %245 = vmatpush1.msra.mxu0 0.0
    %246 = vmatprep.subr.mxu0 0.0
    %247 = vmatpush1.msra.mxu0 0.0
    %248 = vmatprep.subr.mxu0 0.0
    %249 = vmatpush1.msra.mxu0 0.0
    %250 = vmatprep.subr.mxu0 0.0
    %251 = vmatpush1.msra.mxu0 0.0
    %252 = vmatprep.subr.mxu0 0.0
    %253 = vmatpush1.msra.mxu0 0.0
    %254 = vmatprep.subr.mxu0 0.0
    %255 = vmatpush1.msra.mxu0 0.0
    %256 = vmatprep.subr.mxu0 0.0
    %257 = vmatpush1.msra.mxu0 0.0
    %258 = vmatprep.subr.mxu0 0.0
    %259 = vmatpush1.msra.mxu0 0.0
    %260 = vmatprep.subr.mxu0 0.0
    %261 = vmatpush1.msra.mxu0 0.0
    %262 = vmatprep.subr.mxu0 0.0
    %263 = vmatpush1.msra.mxu0 0.0
    %264 = vmatprep.subr.mxu0 0.0
    %265 = vmatpush1.msra.mxu0 0.0
    %266 = vmatprep.subr.mxu0 0.0
    %267 = vmatpush1.msra.mxu0 0.0
    %268 = vmatprep.subr.mxu0 0.0
    %269 = vmatpush1.msra.mxu0 0.0
    %270 = vmatprep.subr.mxu0 0.0
    %271 = vmatpush1.msra.mxu0 0.0
    %272 = vmatprep.mubr.f32.mxu0 0.0
    %273 = vmatmul.mubr.f32.gmra.mrb[0].mxu0 %v197
    %v274 = vpop.f32.mrb[0].mxu0
    %v275 = vadd.f32 %v178, %v274
    %v276 = vpop.f32.mrb[0].mxu0
    %v277 = vadd.f32 %v182, %v276
    %278 = vmatprep.mubr.f32.mxu0 0.0
    %279 = vmatmul.mubr.f32.gmra.mrb[0].mxu0 %v200
    %v280 = vpop.f32.mrb[0].mxu0
    %v281 = vadd.f32 %v178, %v280
    %v282 = vpop.f32.mrb[0].mxu0
    %v283 = vadd.f32 %v182, %v282
    %284 = vmatprep.mubr.f32.mxu0 0.0
    %285 = vmatmul.mubr.f32.gmra.mrb[0].mxu0 %v203
    %v286 = vpop.f32.mrb[0].mxu0
    %v287 = vadd.f32 %v178, %v286
    %v288 = vpop.f32.mrb[0].mxu0
    %v289 = vadd.f32 %v182, %v288
    %290 = vmatprep.mubr.f32.mxu0 0.0
    %291 = vmatmul.mubr.f32.gmra.mrb[0].mxu0 %v206
    %v292 = vpop.f32.mrb[0].mxu0
    %v293 = vadd.f32 %v178, %v292
    %v294 = vpop.f32.mrb[0].mxu0
    %v295 = vadd.f32 %v182, %v294
    %296 = vdwg.mxu0
    %297 = vmatprep.subr.mxu0 %v160
    %298 = vmatpush1.msra.mxu0 %v159
    %299 = vmatprep.subr.mxu0 %v164
    %300 = vmatpush1.msra.mxu0 %v163
    %301 = vmatprep.subr.mxu0 %v168
    %302 = vmatpush1.msra.mxu0 %v167
    %303 = vmatprep.subr.mxu0 %v172
    %304 = vmatpush1.msra.mxu0 %v171
    %305 = vmatprep.subr.mxu0 0.0
    %306 = vmatpush1.msra.mxu0 0.0
    %307 = vmatprep.subr.mxu0 0.0
    %308 = vmatpush1.msra.mxu0 0.0
    %309 = vmatprep.subr.mxu0 0.0
    %310 = vmatpush1.msra.mxu0 0.0
    %311 = vmatprep.subr.mxu0 0.0
    %312 = vmatpush1.msra.mxu0 0.0
    %313 = vmatprep.subr.mxu0 0.0
    %314 = vmatpush1.msra.mxu0 0.0
    %315 = vmatprep.subr.mxu0 0.0
    %316 = vmatpush1.msra.mxu0 0.0
    %317 = vmatprep.subr.mxu0 0.0
    %318 = vmatpush1.msra.mxu0 0.0
    %319 = vmatprep.subr.mxu0 0.0
    %320 = vmatpush1.msra.mxu0 0.0
    %321 = vmatprep.subr.mxu0 0.0
    %322 = vmatpush1.msra.mxu0 0.0
    %323 = vmatprep.subr.mxu0 0.0
    %324 = vmatpush1.msra.mxu0 0.0
    %325 = vmatprep.subr.mxu0 0.0
    %326 = vmatpush1.msra.mxu0 0.0
    %327 = vmatprep.subr.mxu0 0.0
    %328 = vmatpush1.msra.mxu0 0.0
    %329 = vmatprep.subr.mxu0 0.0
    %330 = vmatpush1.msra.mxu0 0.0
    %331 = vmatprep.subr.mxu0 0.0
    %332 = vmatpush1.msra.mxu0 0.0
    %333 = vmatprep.subr.mxu0 0.0
    %334 = vmatpush1.msra.mxu0 0.0
    %335 = vmatprep.subr.mxu0 0.0
    %336 = vmatpush1.msra.mxu0 0.0
    %337 = vmatprep.subr.mxu0 0.0
    %338 = vmatpush1.msra.mxu0 0.0
    %339 = vmatprep.subr.mxu0 0.0
    %340 = vmatpush1.msra.mxu0 0.0
    %341 = vmatprep.subr.mxu0 0.0
    %342 = vmatpush1.msra.mxu0 0.0
    %343 = vmatprep.subr.mxu0 0.0
    %344 = vmatpush1.msra.mxu0 0.0
    %345 = vmatprep.subr.mxu0 0.0
    %346 = vmatpush1.msra.mxu0 0.0
    %347 = vmatprep.subr.mxu0 0.0
    %348 = vmatpush1.msra.mxu0 0.0
    %349 = vmatprep.subr.mxu0 0.0
    %350 = vmatpush1.msra.mxu0 0.0
    %351 = vmatprep.subr.mxu0 0.0
    %352 = vmatpush1.msra.mxu0 0.0
    %353 = vmatprep.subr.mxu0 0.0
    %354 = vmatpush1.msra.mxu0 0.0
    %355 = vmatprep.subr.mxu0 0.0
    %356 = vmatpush1.msra.mxu0 0.0
    %357 = vmatprep.subr.mxu0 0.0
    %358 = vmatpush1.msra.mxu0 0.0
    %359 = vmatprep.subr.mxu0 0.0
    %360 = vmatpush1.msra.mxu0 0.0
    %361 = vmatprep.mubr.f32.mxu0 0.0
    %362 = vmatmul.mubr.f32.gmra.mrb[0].mxu0 %v197
    %v363 = vpop.f32.mrb[0].mxu0
    %v364 = vadd.f32 %v186, %v363
    %v365 = vpop.f32.mrb[0].mxu0
    %v366 = vadd.f32 %v190, %v365
    %367 = vmatprep.mubr.f32.mxu0 0.0
    %368 = vmatmul.mubr.f32.gmra.mrb[0].mxu0 %v200
    %v369 = vpop.f32.mrb[0].mxu0
    %v370 = vadd.f32 %v186, %v369
    %v371 = vpop.f32.mrb[0].mxu0
    %v372 = vadd.f32 %v190, %v371
    %373 = vmatprep.mubr.f32.mxu0 0.0
    %374 = vmatmul.mubr.f32.gmra.mrb[0].mxu0 %v203
    %v375 = vpop.f32.mrb[0].mxu0
    %v376 = vadd.f32 %v186, %v375
    %v377 = vpop.f32.mrb[0].mxu0
    %v378 = vadd.f32 %v190, %v377
    %379 = vmatprep.mubr.f32.mxu0 0.0
    %380 = vmatmul.mubr.f32.gmra.mrb[0].mxu0 %v206
    %v381 = vpop.f32.mrb[0].mxu0
    %v382 = vadd.f32 %v186, %v381
    %v383 = vpop.f32.mrb[0].mxu0
    %v384 = vadd.f32 %v190, %v383
    %385 = vdwg.mxu0
    %v386 = vld [vmem:[#allocation8] sm:$0xff]
    %v387 = vld [vmem:[#allocation8 + $0x8] sm:$0xff]
    %v388 = vld [vmem:[#allocation8 + $0x10] sm:$0xff]
    %v389 = vld [vmem:[#allocation8 + $0x18] sm:$0xff]
    %v390 = vld [vmem:[#allocation8 + $0x20] sm:$0xff]
    %v391 = vld [vmem:[#allocation8 + $0x28] sm:$0xff]
    %v392 = vld [vmem:[#allocation8 + $0x30] sm:$0xff]
    %v393 = vld [vmem:[#allocation8 + $0x38] sm:$0xff]
    %v394 = vld [vmem:[#allocation8 + $0x40] sm:$0xff]
    %v395 = vld [vmem:[#allocation8 + $0x48] sm:$0xff]
    %v396 = vld [vmem:[#allocation8 + $0x50] sm:$0xff]
    %v397 = vld [vmem:[#allocation8 + $0x58] sm:$0xff]
    %v398 = vld [vmem:[#allocation8 + $0x60] sm:$0xff]
    %v399 = vld [vmem:[#allocation8 + $0x68] sm:$0xff]
    %v400 = vld [vmem:[#allocation8 + $0x70] sm:$0xff]
    %v401 = vld [vmem:[#allocation8 + $0x78] sm:$0xff]
    %v402 = vld [vmem:[%s6] sm:$0xf]
    %v404 = vlaneseq
    %v405 = vshrl.u32 %v404, 7
    %v406 = vsub.s32 0, %v405
    %v407 = vrot.slane %v402, %v406
    %v408 = vlaneseq
    %v409 = vshrl.u32 %v408, 7
    %v410 = vsub.s32 1, %v409
    %v411 = vrot.slane %v402, %v410
    %v412 = vlaneseq
    %v413 = vshrl.u32 %v412, 7
    %v414 = vsub.s32 2, %v413
    %v415 = vrot.slane %v402, %v414
    %v416 = vlaneseq
    %v417 = vshrl.u32 %v416, 7
    %v418 = vsub.s32 3, %v417
    %v419 = vrot.slane %v402, %v418
    %v425 = vsel %vm195, %v149, 0
    %v428 = vsel %vm195, %v150, 0
    %v431 = vsel %vm195, %v151, 0
    %v434 = vsel %vm195, %v152, 0
    %436 = vmatprep.subr.mxu0 %v387
    %437 = vmatpush1.msra.mxu0 %v386
    %438 = vmatprep.subr.mxu0 %v391
    %439 = vmatpush1.msra.mxu0 %v390
    %440 = vmatprep.subr.mxu0 %v395
    %441 = vmatpush1.msra.mxu0 %v394
    %442 = vmatprep.subr.mxu0 %v399
    %443 = vmatpush1.msra.mxu0 %v398
    %444 = vmatprep.subr.mxu0 0.0
    %445 = vmatpush1.msra.mxu0 0.0
    %446 = vmatprep.subr.mxu0 0.0
    %447 = vmatpush1.msra.mxu0 0.0
    %448 = vmatprep.subr.mxu0 0.0
    %449 = vmatpush1.msra.mxu0 0.0
    %450 = vmatprep.subr.mxu0 0.0
    %451 = vmatpush1.msra.mxu0 0.0
    %452 = vmatprep.subr.mxu0 0.0
    %453 = vmatpush1.msra.mxu0 0.0
    %454 = vmatprep.subr.mxu0 0.0
    %455 = vmatpush1.msra.mxu0 0.0
    %456 = vmatprep.subr.mxu0 0.0
    %457 = vmatpush1.msra.mxu0 0.0
    %458 = vmatprep.subr.mxu0 0.0
    %459 = vmatpush1.msra.mxu0 0.0
    %460 = vmatprep.subr.mxu0 0.0
    %461 = vmatpush1.msra.mxu0 0.0
    %462 = vmatprep.subr.mxu0 0.0
    %463 = vmatpush1.msra.mxu0 0.0
    %464 = vmatprep.subr.mxu0 0.0
    %465 = vmatpush1.msra.mxu0 0.0
    %466 = vmatprep.subr.mxu0 0.0
    %467 = vmatpush1.msra.mxu0 0.0
    %468 = vmatprep.subr.mxu0 0.0
    %469 = vmatpush1.msra.mxu0 0.0
    %470 = vmatprep.subr.mxu0 0.0
    %471 = vmatpush1.msra.mxu0 0.0
    %472 = vmatprep.subr.mxu0 0.0
    %473 = vmatpush1.msra.mxu0 0.0
    %474 = vmatprep.subr.mxu0 0.0
    %475 = vmatpush1.msra.mxu0 0.0
    %476 = vmatprep.subr.mxu0 0.0
    %477 = vmatpush1.msra.mxu0 0.0
    %478 = vmatprep.subr.mxu0 0.0
    %479 = vmatpush1.msra.mxu0 0.0
    %480 = vmatprep.subr.mxu0 0.0
    %481 = vmatpush1.msra.mxu0 0.0
    %482 = vmatprep.subr.mxu0 0.0
    %483 = vmatpush1.msra.mxu0 0.0
    %484 = vmatprep.subr.mxu0 0.0
    %485 = vmatpush1.msra.mxu0 0.0
    %486 = vmatprep.subr.mxu0 0.0
    %487 = vmatpush1.msra.mxu0 0.0
    %488 = vmatprep.subr.mxu0 0.0
    %489 = vmatpush1.msra.mxu0 0.0
    %490 = vmatprep.subr.mxu0 0.0
    %491 = vmatpush1.msra.mxu0 0.0
    %492 = vmatprep.subr.mxu0 0.0
    %493 = vmatpush1.msra.mxu0 0.0
    %494 = vmatprep.subr.mxu0 0.0
    %495 = vmatpush1.msra.mxu0 0.0
    %496 = vmatprep.subr.mxu0 0.0
    %497 = vmatpush1.msra.mxu0 0.0
    %498 = vmatprep.subr.mxu0 0.0
    %499 = vmatpush1.msra.mxu0 0.0
    %500 = vmatprep.mubr.f32.mxu0 0.0
    %501 = vmatmul.mubr.f32.gmra.mrb[0].mxu0 %v425
    %v502 = vpop.f32.mrb[0].mxu0
    %v503 = vadd.f32 %v407, %v502
    %v504 = vpop.f32.mrb[0].mxu0
    %v505 = vadd.f32 %v411, %v504
    %506 = vmatprep.mubr.f32.mxu0 0.0
    %507 = vmatmul.mubr.f32.gmra.mrb[0].mxu0 %v428
    %v508 = vpop.f32.mrb[0].mxu0
    %v509 = vadd.f32 %v407, %v508
    %v510 = vpop.f32.mrb[0].mxu0
    %v511 = vadd.f32 %v411, %v510
    %512 = vmatprep.mubr.f32.mxu0 0.0
    %513 = vmatmul.mubr.f32.gmra.mrb[0].mxu0 %v431
    %v514 = vpop.f32.mrb[0].mxu0
    %v515 = vadd.f32 %v407, %v514
    %v516 = vpop.f32.mrb[0].mxu0
    %v517 = vadd.f32 %v411, %v516
    %518 = vmatprep.mubr.f32.mxu0 0.0
    %519 = vmatmul.mubr.f32.gmra.mrb[0].mxu0 %v434
    %v520 = vpop.f32.mrb[0].mxu0
    %v521 = vadd.f32 %v407, %v520
    %v522 = vpop.f32.mrb[0].mxu0
    %v523 = vadd.f32 %v411, %v522
    %524 = vdwg.mxu0
    %525 = vmatprep.subr.mxu0 %v389
    %526 = vmatpush1.msra.mxu0 %v388
    %527 = vmatprep.subr.mxu0 %v393
    %528 = vmatpush1.msra.mxu0 %v392
    %529 = vmatprep.subr.mxu0 %v397
    %530 = vmatpush1.msra.mxu0 %v396
    %531 = vmatprep.subr.mxu0 %v401
    %532 = vmatpush1.msra.mxu0 %v400
    %533 = vmatprep.subr.mxu0 0.0
    %534 = vmatpush1.msra.mxu0 0.0
    %535 = vmatprep.subr.mxu0 0.0
    %536 = vmatpush1.msra.mxu0 0.0
    %537 = vmatprep.subr.mxu0 0.0
    %538 = vmatpush1.msra.mxu0 0.0
    %539 = vmatprep.subr.mxu0 0.0
    %540 = vmatpush1.msra.mxu0 0.0
    %541 = vmatprep.subr.mxu0 0.0
    %542 = vmatpush1.msra.mxu0 0.0
    %543 = vmatprep.subr.mxu0 0.0
    %544 = vmatpush1.msra.mxu0 0.0
    %545 = vmatprep.subr.mxu0 0.0
    %546 = vmatpush1.msra.mxu0 0.0
    %547 = vmatprep.subr.mxu0 0.0
    %548 = vmatpush1.msra.mxu0 0.0
    %549 = vmatprep.subr.mxu0 0.0
    %550 = vmatpush1.msra.mxu0 0.0
    %551 = vmatprep.subr.mxu0 0.0
    %552 = vmatpush1.msra.mxu0 0.0
    %553 = vmatprep.subr.mxu0 0.0
    %554 = vmatpush1.msra.mxu0 0.0
    %555 = vmatprep.subr.mxu0 0.0
    %556 = vmatpush1.msra.mxu0 0.0
    %557 = vmatprep.subr.mxu0 0.0
    %558 = vmatpush1.msra.mxu0 0.0
    %559 = vmatprep.subr.mxu0 0.0
    %560 = vmatpush1.msra.mxu0 0.0
    %561 = vmatprep.subr.mxu0 0.0
    %562 = vmatpush1.msra.mxu0 0.0
    %563 = vmatprep.subr.mxu0 0.0
    %564 = vmatpush1.msra.mxu0 0.0
    %565 = vmatprep.subr.mxu0 0.0
    %566 = vmatpush1.msra.mxu0 0.0
    %567 = vmatprep.subr.mxu0 0.0
    %568 = vmatpush1.msra.mxu0 0.0
    %569 = vmatprep.subr.mxu0 0.0
    %570 = vmatpush1.msra.mxu0 0.0
    %571 = vmatprep.subr.mxu0 0.0
    %572 = vmatpush1.msra.mxu0 0.0
    %573 = vmatprep.subr.mxu0 0.0
    %574 = vmatpush1.msra.mxu0 0.0
    %575 = vmatprep.subr.mxu0 0.0
    %576 = vmatpush1.msra.mxu0 0.0
    %577 = vmatprep.subr.mxu0 0.0
    %578 = vmatpush1.msra.mxu0 0.0
    %579 = vmatprep.subr.mxu0 0.0
    %580 = vmatpush1.msra.mxu0 0.0
    %581 = vmatprep.subr.mxu0 0.0
    %582 = vmatpush1.msra.mxu0 0.0
    %583 = vmatprep.subr.mxu0 0.0
    %584 = vmatpush1.msra.mxu0 0.0
    %585 = vmatprep.subr.mxu0 0.0
    %586 = vmatpush1.msra.mxu0 0.0
    %587 = vmatprep.subr.mxu0 0.0
    %588 = vmatpush1.msra.mxu0 0.0
    %589 = vmatprep.mubr.f32.mxu0 0.0
    %590 = vmatmul.mubr.f32.gmra.mrb[0].mxu0 %v425
    %v591 = vpop.f32.mrb[0].mxu0
    %v592 = vadd.f32 %v415, %v591
    %v593 = vpop.f32.mrb[0].mxu0
    %v594 = vadd.f32 %v419, %v593
    %595 = vmatprep.mubr.f32.mxu0 0.0
    %596 = vmatmul.mubr.f32.gmra.mrb[0].mxu0 %v428
    %v597 = vpop.f32.mrb[0].mxu0
    %v598 = vadd.f32 %v415, %v597
    %v599 = vpop.f32.mrb[0].mxu0
    %v600 = vadd.f32 %v419, %v599
    %601 = vmatprep.mubr.f32.mxu0 0.0
    %602 = vmatmul.mubr.f32.gmra.mrb[0].mxu0 %v431
    %v603 = vpop.f32.mrb[0].mxu0
    %v604 = vadd.f32 %v415, %v603
    %v605 = vpop.f32.mrb[0].mxu0
    %v606 = vadd.f32 %v419, %v605
    %607 = vmatprep.mubr.f32.mxu0 0.0
    %608 = vmatmul.mubr.f32.gmra.mrb[0].mxu0 %v434
    %v609 = vpop.f32.mrb[0].mxu0
    %v610 = vadd.f32 %v415, %v609
    %v611 = vpop.f32.mrb[0].mxu0
    %v612 = vadd.f32 %v419, %v611
    %613 = vdwg.mxu0
    %v614 = vld [vmem:[#allocation9] sm:$0xff]
    %v615 = vld [vmem:[#allocation9 + $0x8] sm:$0xff]
    %v616 = vld [vmem:[#allocation9 + $0x10] sm:$0xff]
    %v617 = vld [vmem:[#allocation9 + $0x18] sm:$0xff]
    %v618 = vld [vmem:[#allocation9 + $0x20] sm:$0xff]
    %v619 = vld [vmem:[#allocation9 + $0x28] sm:$0xff]
    %v620 = vld [vmem:[#allocation9 + $0x30] sm:$0xff]
    %v621 = vld [vmem:[#allocation9 + $0x38] sm:$0xff]
    %v622 = vld [vmem:[#allocation9 + $0x40] sm:$0xff]
    %v623 = vld [vmem:[#allocation9 + $0x48] sm:$0xff]
    %v624 = vld [vmem:[#allocation9 + $0x50] sm:$0xff]
    %v625 = vld [vmem:[#allocation9 + $0x58] sm:$0xff]
    %v626 = vld [vmem:[#allocation9 + $0x60] sm:$0xff]
    %v627 = vld [vmem:[#allocation9 + $0x68] sm:$0xff]
    %v628 = vld [vmem:[#allocation9 + $0x70] sm:$0xff]
    %v629 = vld [vmem:[#allocation9 + $0x78] sm:$0xff]
    %v630 = vld [vmem:[#allocation11] sm:$0xf]
    %v632 = vlaneseq
    %v633 = vshrl.u32 %v632, 7
    %v634 = vsub.s32 0, %v633
    %v635 = vrot.slane %v630, %v634
    %v636 = vlaneseq
    %v637 = vshrl.u32 %v636, 7
    %v638 = vsub.s32 1, %v637
    %v639 = vrot.slane %v630, %v638
    %v640 = vlaneseq
    %v641 = vshrl.u32 %v640, 7
    %v642 = vsub.s32 2, %v641
    %v643 = vrot.slane %v630, %v642
    %v644 = vlaneseq
    %v645 = vshrl.u32 %v644, 7
    %v646 = vsub.s32 3, %v645
    %v647 = vrot.slane %v630, %v646
    %v653 = vsel %vm195, %v153, 0
    %v656 = vsel %vm195, %v154, 0
    %v659 = vsel %vm195, %v155, 0
    %v662 = vsel %vm195, %v156, 0
    %664 = vmatprep.subr.mxu0 %v615
    %665 = vmatpush1.msra.mxu0 %v614
    %666 = vmatprep.subr.mxu0 %v619
    %667 = vmatpush1.msra.mxu0 %v618
    %668 = vmatprep.subr.mxu0 %v623
    %669 = vmatpush1.msra.mxu0 %v622
    %670 = vmatprep.subr.mxu0 %v627
    %671 = vmatpush1.msra.mxu0 %v626
    %672 = vmatprep.subr.mxu0 0.0
    %673 = vmatpush1.msra.mxu0 0.0
    %674 = vmatprep.subr.mxu0 0.0
    %675 = vmatpush1.msra.mxu0 0.0
    %676 = vmatprep.subr.mxu0 0.0
    %677 = vmatpush1.msra.mxu0 0.0
    %678 = vmatprep.subr.mxu0 0.0
    %679 = vmatpush1.msra.mxu0 0.0
    %680 = vmatprep.subr.mxu0 0.0
    %681 = vmatpush1.msra.mxu0 0.0
    %682 = vmatprep.subr.mxu0 0.0
    %683 = vmatpush1.msra.mxu0 0.0
    %684 = vmatprep.subr.mxu0 0.0
    %685 = vmatpush1.msra.mxu0 0.0
    %686 = vmatprep.subr.mxu0 0.0
    %687 = vmatpush1.msra.mxu0 0.0
    %688 = vmatprep.subr.mxu0 0.0
    %689 = vmatpush1.msra.mxu0 0.0
    %690 = vmatprep.subr.mxu0 0.0
    %691 = vmatpush1.msra.mxu0 0.0
    %692 = vmatprep.subr.mxu0 0.0
    %693 = vmatpush1.msra.mxu0 0.0
    %694 = vmatprep.subr.mxu0 0.0
    %695 = vmatpush1.msra.mxu0 0.0
    %696 = vmatprep.subr.mxu0 0.0
    %697 = vmatpush1.msra.mxu0 0.0
    %698 = vmatprep.subr.mxu0 0.0
    %699 = vmatpush1.msra.mxu0 0.0
    %700 = vmatprep.subr.mxu0 0.0
    %701 = vmatpush1.msra.mxu0 0.0
    %702 = vmatprep.subr.mxu0 0.0
    %703 = vmatpush1.msra.mxu0 0.0
    %704 = vmatprep.subr.mxu0 0.0
    %705 = vmatpush1.msra.mxu0 0.0
    %706 = vmatprep.subr.mxu0 0.0
    %707 = vmatpush1.msra.mxu0 0.0
    %708 = vmatprep.subr.mxu0 0.0
    %709 = vmatpush1.msra.mxu0 0.0
    %710 = vmatprep.subr.mxu0 0.0
    %711 = vmatpush1.msra.mxu0 0.0
    %712 = vmatprep.subr.mxu0 0.0
    %713 = vmatpush1.msra.mxu0 0.0
    %714 = vmatprep.subr.mxu0 0.0
    %715 = vmatpush1.msra.mxu0 0.0
    %716 = vmatprep.subr.mxu0 0.0
    %717 = vmatpush1.msra.mxu0 0.0
    %718 = vmatprep.subr.mxu0 0.0
    %719 = vmatpush1.msra.mxu0 0.0
    %720 = vmatprep.subr.mxu0 0.0
    %721 = vmatpush1.msra.mxu0 0.0
    %722 = vmatprep.subr.mxu0 0.0
    %723 = vmatpush1.msra.mxu0 0.0
    %724 = vmatprep.subr.mxu0 0.0
    %725 = vmatpush1.msra.mxu0 0.0
    %726 = vmatprep.subr.mxu0 0.0
    %727 = vmatpush1.msra.mxu0 0.0
    %728 = vmatprep.mubr.f32.mxu0 0.0
    %729 = vmatmul.mubr.f32.gmra.mrb[0].mxu0 %v653
    %v730 = vpop.f32.mrb[0].mxu0
    %v731 = vadd.f32 %v635, %v730
    %v732 = vpop.f32.mrb[0].mxu0
    %v733 = vadd.f32 %v639, %v732
    %734 = vmatprep.mubr.f32.mxu0 0.0
    %735 = vmatmul.mubr.f32.gmra.mrb[0].mxu0 %v656
    %v736 = vpop.f32.mrb[0].mxu0
    %v737 = vadd.f32 %v635, %v736
    %v738 = vpop.f32.mrb[0].mxu0
    %v739 = vadd.f32 %v639, %v738
    %740 = vmatprep.mubr.f32.mxu0 0.0
    %741 = vmatmul.mubr.f32.gmra.mrb[0].mxu0 %v659
    %v742 = vpop.f32.mrb[0].mxu0
    %v743 = vadd.f32 %v635, %v742
    %v744 = vpop.f32.mrb[0].mxu0
    %v745 = vadd.f32 %v639, %v744
    %746 = vmatprep.mubr.f32.mxu0 0.0
    %747 = vmatmul.mubr.f32.gmra.mrb[0].mxu0 %v662
    %v748 = vpop.f32.mrb[0].mxu0
    %v749 = vadd.f32 %v635, %v748
    %v750 = vpop.f32.mrb[0].mxu0
    %v751 = vadd.f32 %v639, %v750
    %752 = vdwg.mxu0
    %753 = vmatprep.subr.mxu0 %v617
    %754 = vmatpush1.msra.mxu0 %v616
    %755 = vmatprep.subr.mxu0 %v621
    %756 = vmatpush1.msra.mxu0 %v620
    %757 = vmatprep.subr.mxu0 %v625
    %758 = vmatpush1.msra.mxu0 %v624
    %759 = vmatprep.subr.mxu0 %v629
    %760 = vmatpush1.msra.mxu0 %v628
    %761 = vmatprep.subr.mxu0 0.0
    %762 = vmatpush1.msra.mxu0 0.0
    %763 = vmatprep.subr.mxu0 0.0
    %764 = vmatpush1.msra.mxu0 0.0
    %765 = vmatprep.subr.mxu0 0.0
    %766 = vmatpush1.msra.mxu0 0.0
    %767 = vmatprep.subr.mxu0 0.0
    %768 = vmatpush1.msra.mxu0 0.0
    %769 = vmatprep.subr.mxu0 0.0
    %770 = vmatpush1.msra.mxu0 0.0
    %771 = vmatprep.subr.mxu0 0.0
    %772 = vmatpush1.msra.mxu0 0.0
    %773 = vmatprep.subr.mxu0 0.0
    %774 = vmatpush1.msra.mxu0 0.0
    %775 = vmatprep.subr.mxu0 0.0
    %776 = vmatpush1.msra.mxu0 0.0
    %777 = vmatprep.subr.mxu0 0.0
    %778 = vmatpush1.msra.mxu0 0.0
    %779 = vmatprep.subr.mxu0 0.0
    %780 = vmatpush1.msra.mxu0 0.0
    %781 = vmatprep.subr.mxu0 0.0
    %782 = vmatpush1.msra.mxu0 0.0
    %783 = vmatprep.subr.mxu0 0.0
    %784 = vmatpush1.msra.mxu0 0.0
    %785 = vmatprep.subr.mxu0 0.0
    %786 = vmatpush1.msra.mxu0 0.0
    %787 = vmatprep.subr.mxu0 0.0
    %788 = vmatpush1.msra.mxu0 0.0
    %789 = vmatprep.subr.mxu0 0.0
    %790 = vmatpush1.msra.mxu0 0.0
    %791 = vmatprep.subr.mxu0 0.0
    %792 = vmatpush1.msra.mxu0 0.0
    %793 = vmatprep.subr.mxu0 0.0
    %794 = vmatpush1.msra.mxu0 0.0
    %795 = vmatprep.subr.mxu0 0.0
    %796 = vmatpush1.msra.mxu0 0.0
    %797 = vmatprep.subr.mxu0 0.0
    %798 = vmatpush1.msra.mxu0 0.0
    %799 = vmatprep.subr.mxu0 0.0
    %800 = vmatpush1.msra.mxu0 0.0
    %801 = vmatprep.subr.mxu0 0.0
    %802 = vmatpush1.msra.mxu0 0.0
    %803 = vmatprep.subr.mxu0 0.0
    %804 = vmatpush1.msra.mxu0 0.0
    %805 = vmatprep.subr.mxu0 0.0
    %806 = vmatpush1.msra.mxu0 0.0
    %807 = vmatprep.subr.mxu0 0.0
    %808 = vmatpush1.msra.mxu0 0.0
    %809 = vmatprep.subr.mxu0 0.0
    %810 = vmatpush1.msra.mxu0 0.0
    %811 = vmatprep.subr.mxu0 0.0
    %812 = vmatpush1.msra.mxu0 0.0
    %813 = vmatprep.subr.mxu0 0.0
    %814 = vmatpush1.msra.mxu0 0.0
    %815 = vmatprep.subr.mxu0 0.0
    %816 = vmatpush1.msra.mxu0 0.0
    %817 = vmatprep.mubr.f32.mxu0 0.0
    %818 = vmatmul.mubr.f32.gmra.mrb[0].mxu0 %v653
    %v819 = vpop.f32.mrb[0].mxu0
    %v820 = vadd.f32 %v643, %v819
    %v821 = vpop.f32.mrb[0].mxu0
    %v822 = vadd.f32 %v647, %v821
    %823 = vmatprep.mubr.f32.mxu0 0.0
    %824 = vmatmul.mubr.f32.gmra.mrb[0].mxu0 %v656
    %v825 = vpop.f32.mrb[0].mxu0
    %v826 = vadd.f32 %v643, %v825
    %v827 = vpop.f32.mrb[0].mxu0
    %v828 = vadd.f32 %v647, %v827
    %829 = vmatprep.mubr.f32.mxu0 0.0
    %830 = vmatmul.mubr.f32.gmra.mrb[0].mxu0 %v659
    %v831 = vpop.f32.mrb[0].mxu0
    %v832 = vadd.f32 %v643, %v831
    %v833 = vpop.f32.mrb[0].mxu0
    %v834 = vadd.f32 %v647, %v833
    %835 = vmatprep.mubr.f32.mxu0 0.0
    %836 = vmatmul.mubr.f32.gmra.mrb[0].mxu0 %v662
    %v837 = vpop.f32.mrb[0].mxu0
    %v838 = vadd.f32 %v643, %v837
    %v839 = vpop.f32.mrb[0].mxu0
    %v840 = vadd.f32 %v647, %v839
    %841 = vdwg.mxu0
    %v842 = vld [vmem:[#allocation12] sm:$0xff]
    %v843 = vld [vmem:[#allocation12 + $0x8] sm:$0xff]
    %v844 = vld [vmem:[#allocation12 + $0x10] sm:$0xff]
    %v845 = vld [vmem:[#allocation12 + $0x18] sm:$0xff]
    %v846 = vld [vmem:[#allocation12 + $0x20] sm:$0xff]
    %v847 = vld [vmem:[#allocation12 + $0x28] sm:$0xff]
    %v848 = vld [vmem:[#allocation12 + $0x30] sm:$0xff]
    %v849 = vld [vmem:[#allocation12 + $0x38] sm:$0xff]
    %v850 = vld [vmem:[#allocation12 + $0x40] sm:$0xff]
    %v851 = vld [vmem:[#allocation12 + $0x48] sm:$0xff]
    %v852 = vld [vmem:[#allocation12 + $0x50] sm:$0xff]
    %v853 = vld [vmem:[#allocation12 + $0x58] sm:$0xff]
    %v854 = vld [vmem:[#allocation12 + $0x60] sm:$0xff]
    %v855 = vld [vmem:[#allocation12 + $0x68] sm:$0xff]
    %v856 = vld [vmem:[#allocation12 + $0x70] sm:$0xff]
    %v857 = vld [vmem:[#allocation12 + $0x78] sm:$0xff]
    %v858 = vld [vmem:[#allocation14] sm:$0xf]
    %v860 = vlaneseq
    %v861 = vshrl.u32 %v860, 7
    %v862 = vsub.s32 0, %v861
    %v863 = vrot.slane %v858, %v862
    %v864 = vlaneseq
    %v865 = vshrl.u32 %v864, 7
    %v866 = vsub.s32 1, %v865
    %v867 = vrot.slane %v858, %v866
    %v868 = vlaneseq
    %v869 = vshrl.u32 %v868, 7
    %v870 = vsub.s32 2, %v869
    %v871 = vrot.slane %v858, %v870
    %v872 = vlaneseq
    %v873 = vshrl.u32 %v872, 7
    %v874 = vsub.s32 3, %v873
    %v875 = vrot.slane %v858, %v874
    %880 = vmatprep.subr.mxu0 %v843
    %881 = vmatpush1.msra.mxu0 %v842
    %882 = vmatprep.subr.mxu0 %v847
    %883 = vmatpush1.msra.mxu0 %v846
    %884 = vmatprep.subr.mxu0 %v851
    %885 = vmatpush1.msra.mxu0 %v850
    %886 = vmatprep.subr.mxu0 %v855
    %887 = vmatpush1.msra.mxu0 %v854
    %888 = vmatprep.subr.mxu0 0.0
    %889 = vmatpush1.msra.mxu0 0.0
    %890 = vmatprep.subr.mxu0 0.0
    %891 = vmatpush1.msra.mxu0 0.0
    %892 = vmatprep.subr.mxu0 0.0
    %893 = vmatpush1.msra.mxu0 0.0
    %894 = vmatprep.subr.mxu0 0.0
    %895 = vmatpush1.msra.mxu0 0.0
    %896 = vmatprep.subr.mxu0 0.0
    %897 = vmatpush1.msra.mxu0 0.0
    %898 = vmatprep.subr.mxu0 0.0
    %899 = vmatpush1.msra.mxu0 0.0
    %900 = vmatprep.subr.mxu0 0.0
    %901 = vmatpush1.msra.mxu0 0.0
    %902 = vmatprep.subr.mxu0 0.0
    %903 = vmatpush1.msra.mxu0 0.0
    %904 = vmatprep.subr.mxu0 0.0
    %905 = vmatpush1.msra.mxu0 0.0
    %906 = vmatprep.subr.mxu0 0.0
    %907 = vmatpush1.msra.mxu0 0.0
    %908 = vmatprep.subr.mxu0 0.0
    %909 = vmatpush1.msra.mxu0 0.0
    %910 = vmatprep.subr.mxu0 0.0
    %911 = vmatpush1.msra.mxu0 0.0
    %912 = vmatprep.subr.mxu0 0.0
    %913 = vmatpush1.msra.mxu0 0.0
    %914 = vmatprep.subr.mxu0 0.0
    %915 = vmatpush1.msra.mxu0 0.0
    %916 = vmatprep.subr.mxu0 0.0
    %917 = vmatpush1.msra.mxu0 0.0
    %918 = vmatprep.subr.mxu0 0.0
    %919 = vmatpush1.msra.mxu0 0.0
    %920 = vmatprep.subr.mxu0 0.0
    %921 = vmatpush1.msra.mxu0 0.0
    %922 = vmatprep.subr.mxu0 0.0
    %923 = vmatpush1.msra.mxu0 0.0
    %924 = vmatprep.subr.mxu0 0.0
    %925 = vmatpush1.msra.mxu0 0.0
    %926 = vmatprep.subr.mxu0 0.0
    %927 = vmatpush1.msra.mxu0 0.0
    %928 = vmatprep.subr.mxu0 0.0
    %929 = vmatpush1.msra.mxu0 0.0
    %930 = vmatprep.subr.mxu0 0.0
    %931 = vmatpush1.msra.mxu0 0.0
    %932 = vmatprep.subr.mxu0 0.0
    %933 = vmatpush1.msra.mxu0 0.0
    %934 = vmatprep.subr.mxu0 0.0
    %935 = vmatpush1.msra.mxu0 0.0
    %936 = vmatprep.subr.mxu0 0.0
    %937 = vmatpush1.msra.mxu0 0.0
    %938 = vmatprep.subr.mxu0 0.0
    %939 = vmatpush1.msra.mxu0 0.0
    %940 = vmatprep.subr.mxu0 0.0
    %941 = vmatpush1.msra.mxu0 0.0
    %942 = vmatprep.subr.mxu0 0.0
    %943 = vmatpush1.msra.mxu0 0.0
    %944 = vmatprep.mubr.f32.mxu0 0.0
    %945 = vmatmul.mubr.f32.gmra.mrb[0].mxu0 %v197
    %v946 = vpop.f32.mrb[0].mxu0
    %v947 = vadd.f32 %v863, %v946
    %v948 = vpop.f32.mrb[0].mxu0
    %v949 = vadd.f32 %v867, %v948
    %950 = vmatprep.mubr.f32.mxu0 0.0
    %951 = vmatmul.mubr.f32.gmra.mrb[0].mxu0 %v200
    %v952 = vpop.f32.mrb[0].mxu0
    %v953 = vadd.f32 %v863, %v952
    %v954 = vpop.f32.mrb[0].mxu0
    %v955 = vadd.f32 %v867, %v954
    %956 = vmatprep.mubr.f32.mxu0 0.0
    %957 = vmatmul.mubr.f32.gmra.mrb[0].mxu0 %v203
    %v958 = vpop.f32.mrb[0].mxu0
    %v959 = vadd.f32 %v863, %v958
    %v960 = vpop.f32.mrb[0].mxu0
    %v961 = vadd.f32 %v867, %v960
    %962 = vmatprep.mubr.f32.mxu0 0.0
    %963 = vmatmul.mubr.f32.gmra.mrb[0].mxu0 %v206
    %v964 = vpop.f32.mrb[0].mxu0
    %v965 = vadd.f32 %v863, %v964
    %v966 = vpop.f32.mrb[0].mxu0
    %v967 = vadd.f32 %v867, %v966
    %968 = vdwg.mxu0
    %969 = vmatprep.subr.mxu0 %v845
    %970 = vmatpush1.msra.mxu0 %v844
    %971 = vmatprep.subr.mxu0 %v849
    %972 = vmatpush1.msra.mxu0 %v848
    %973 = vmatprep.subr.mxu0 %v853
    %974 = vmatpush1.msra.mxu0 %v852
    %975 = vmatprep.subr.mxu0 %v857
    %976 = vmatpush1.msra.mxu0 %v856
    %977 = vmatprep.subr.mxu0 0.0
    %978 = vmatpush1.msra.mxu0 0.0
    %979 = vmatprep.subr.mxu0 0.0
    %980 = vmatpush1.msra.mxu0 0.0
    %981 = vmatprep.subr.mxu0 0.0
    %982 = vmatpush1.msra.mxu0 0.0
    %983 = vmatprep.subr.mxu0 0.0
    %984 = vmatpush1.msra.mxu0 0.0
    %985 = vmatprep.subr.mxu0 0.0
    %986 = vmatpush1.msra.mxu0 0.0
    %987 = vmatprep.subr.mxu0 0.0
    %988 = vmatpush1.msra.mxu0 0.0
    %989 = vmatprep.subr.mxu0 0.0
    %990 = vmatpush1.msra.mxu0 0.0
    %991 = vmatprep.subr.mxu0 0.0
    %992 = vmatpush1.msra.mxu0 0.0
    %993 = vmatprep.subr.mxu0 0.0
    %994 = vmatpush1.msra.mxu0 0.0
    %995 = vmatprep.subr.mxu0 0.0
    %996 = vmatpush1.msra.mxu0 0.0
    %997 = vmatprep.subr.mxu0 0.0
    %998 = vmatpush1.msra.mxu0 0.0
    %999 = vmatprep.subr.mxu0 0.0
    %1000 = vmatpush1.msra.mxu0 0.0
    %1001 = vmatprep.subr.mxu0 0.0
    %1002 = vmatpush1.msra.mxu0 0.0
    %1003 = vmatprep.subr.mxu0 0.0
    %1004 = vmatpush1.msra.mxu0 0.0
    %1005 = vmatprep.subr.mxu0 0.0
    %1006 = vmatpush1.msra.mxu0 0.0
    %1007 = vmatprep.subr.mxu0 0.0
    %1008 = vmatpush1.msra.mxu0 0.0
    %1009 = vmatprep.subr.mxu0 0.0
    %1010 = vmatpush1.msra.mxu0 0.0
    %1011 = vmatprep.subr.mxu0 0.0
    %1012 = vmatpush1.msra.mxu0 0.0
    %1013 = vmatprep.subr.mxu0 0.0
    %1014 = vmatpush1.msra.mxu0 0.0
    %1015 = vmatprep.subr.mxu0 0.0
    %1016 = vmatpush1.msra.mxu0 0.0
    %1017 = vmatprep.subr.mxu0 0.0
    %1018 = vmatpush1.msra.mxu0 0.0
    %1019 = vmatprep.subr.mxu0 0.0
    %1020 = vmatpush1.msra.mxu0 0.0
    %1021 = vmatprep.subr.mxu0 0.0
    %1022 = vmatpush1.msra.mxu0 0.0
    %1023 = vmatprep.subr.mxu0 0.0
    %1024 = vmatpush1.msra.mxu0 0.0
    %1025 = vmatprep.subr.mxu0 0.0
    %1026 = vmatpush1.msra.mxu0 0.0
    %1027 = vmatprep.subr.mxu0 0.0
    %1028 = vmatpush1.msra.mxu0 0.0
    %1029 = vmatprep.subr.mxu0 0.0
    %1030 = vmatpush1.msra.mxu0 0.0
    %1031 = vmatprep.subr.mxu0 0.0
    %1032 = vmatpush1.msra.mxu0 0.0
    %1033 = vmatprep.mubr.f32.mxu0 0.0
    %1034 = vmatmul.mubr.f32.gmra.mrb[0].mxu0 %v197
    %v1035 = vpop.f32.mrb[0].mxu0
    %v1036 = vadd.f32 %v871, %v1035
    %v1037 = vpop.f32.mrb[0].mxu0
    %v1038 = vadd.f32 %v875, %v1037
    %1039 = vmatprep.mubr.f32.mxu0 0.0
    %1040 = vmatmul.mubr.f32.gmra.mrb[0].mxu0 %v200
    %v1041 = vpop.f32.mrb[0].mxu0
    %v1042 = vadd.f32 %v871, %v1041
    %v1043 = vpop.f32.mrb[0].mxu0
    %v1044 = vadd.f32 %v875, %v1043
    %1045 = vmatprep.mubr.f32.mxu0 0.0
    %1046 = vmatmul.mubr.f32.gmra.mrb[0].mxu0 %v203
    %v1047 = vpop.f32.mrb[0].mxu0
    %v1048 = vadd.f32 %v871, %v1047
    %v1049 = vpop.f32.mrb[0].mxu0
    %v1050 = vadd.f32 %v875, %v1049
    %1051 = vmatprep.mubr.f32.mxu0 0.0
    %1052 = vmatmul.mubr.f32.gmra.mrb[0].mxu0 %v206
    %v1053 = vpop.f32.mrb[0].mxu0
    %v1054 = vadd.f32 %v871, %v1053
    %v1055 = vpop.f32.mrb[0].mxu0
    %v1056 = vadd.f32 %v875, %v1055
    %1057 = vdwg.mxu0
    %v1058 = vld [vmem:[%s11] sm:$0xff]
    %v1059 = vld [vmem:[%s11 + $0x8] sm:$0xff]
    %v1060 = vld [vmem:[%s11 + $0x10] sm:$0xff]
    %v1061 = vld [vmem:[%s11 + $0x18] sm:$0xff]
    %v1062 = vld [vmem:[%s11 + $0x20] sm:$0xff]
    %v1063 = vld [vmem:[%s11 + $0x28] sm:$0xff]
    %v1064 = vld [vmem:[%s11 + $0x30] sm:$0xff]
    %v1065 = vld [vmem:[%s11 + $0x38] sm:$0xff]
    %v1066 = vld [vmem:[%s11 + $0x40] sm:$0xff]
    %v1067 = vld [vmem:[%s11 + $0x48] sm:$0xff]
    %v1068 = vld [vmem:[%s11 + $0x50] sm:$0xff]
    %v1069 = vld [vmem:[%s11 + $0x58] sm:$0xff]
    %v1070 = vld [vmem:[%s11 + $0x60] sm:$0xff]
    %v1071 = vld [vmem:[%s11 + $0x68] sm:$0xff]
    %v1072 = vld [vmem:[%s11 + $0x70] sm:$0xff]
    %v1073 = vld [vmem:[%s11 + $0x78] sm:$0xff]
    %v1074 = vld [vmem:[%s11 + $0x80] sm:$0xff]
    %v1075 = vld [vmem:[%s11 + $0x88] sm:$0xff]
    %v1076 = vld [vmem:[%s11 + $0x90] sm:$0xff]
    %v1077 = vld [vmem:[%s11 + $0x98] sm:$0xff]
    %v1078 = vld [vmem:[%s11 + $0xa0] sm:$0xff]
    %v1079 = vld [vmem:[%s11 + $0xa8] sm:$0xff]
    %v1080 = vld [vmem:[%s11 + $0xb0] sm:$0xff]
    %v1081 = vld [vmem:[%s11 + $0xb8] sm:$0xff]
    %v1082 = vld [vmem:[%s11 + $0xc0] sm:$0xff]
    %v1083 = vld [vmem:[%s11 + $0xc8] sm:$0xff]
    %v1084 = vld [vmem:[%s11 + $0xd0] sm:$0xff]
    %v1085 = vld [vmem:[%s11 + $0xd8] sm:$0xff]
    %v1086 = vld [vmem:[%s11 + $0xe0] sm:$0xff]
    %v1087 = vld [vmem:[%s11 + $0xe8] sm:$0xff]
    %v1088 = vld [vmem:[%s11 + $0xf0] sm:$0xff]
    %v1089 = vld [vmem:[%s11 + $0xf8] sm:$0xff]
    %v1090 = vld [vmem:[%s11 + $0x100] sm:$0xff]
    %v1091 = vld [vmem:[%s11 + $0x108] sm:$0xff]
    %v1092 = vld [vmem:[%s11 + $0x110] sm:$0xff]
    %v1093 = vld [vmem:[%s11 + $0x118] sm:$0xff]
    %v1094 = vld [vmem:[%s11 + $0x120] sm:$0xff]
    %v1095 = vld [vmem:[%s11 + $0x128] sm:$0xff]
    %v1096 = vld [vmem:[%s11 + $0x130] sm:$0xff]
    %v1097 = vld [vmem:[%s11 + $0x138] sm:$0xff]
    %v1098 = vld [vmem:[%s11 + $0x140] sm:$0xff]
    %v1099 = vld [vmem:[%s11 + $0x148] sm:$0xff]
    %v1100 = vld [vmem:[%s11 + $0x150] sm:$0xff]
    %v1101 = vld [vmem:[%s11 + $0x158] sm:$0xff]
    %v1102 = vld [vmem:[%s11 + $0x160] sm:$0xff]
    %v1103 = vld [vmem:[%s11 + $0x168] sm:$0xff]
    %v1104 = vld [vmem:[%s11 + $0x170] sm:$0xff]
    %v1105 = vld [vmem:[%s11 + $0x178] sm:$0xff]
    %v1106 = vld [vmem:[%s11 + $0x180] sm:$0xff]
    %v1107 = vld [vmem:[%s11 + $0x188] sm:$0xff]
    %v1108 = vld [vmem:[%s11 + $0x190] sm:$0xff]
    %v1109 = vld [vmem:[%s11 + $0x198] sm:$0xff]
    %v1110 = vld [vmem:[%s11 + $0x1a0] sm:$0xff]
    %v1111 = vld [vmem:[%s11 + $0x1a8] sm:$0xff]
    %v1112 = vld [vmem:[%s11 + $0x1b0] sm:$0xff]
    %v1113 = vld [vmem:[%s11 + $0x1b8] sm:$0xff]
    %v1114 = vld [vmem:[%s11 + $0x1c0] sm:$0xff]
    %v1115 = vld [vmem:[%s11 + $0x1c8] sm:$0xff]
    %v1116 = vld [vmem:[%s11 + $0x1d0] sm:$0xff]
    %v1117 = vld [vmem:[%s11 + $0x1d8] sm:$0xff]
    %v1118 = vld [vmem:[%s11 + $0x1e0] sm:$0xff]
    %v1119 = vld [vmem:[%s11 + $0x1e8] sm:$0xff]
    %v1120 = vld [vmem:[%s11 + $0x1f0] sm:$0xff]
    %v1121 = vld [vmem:[%s11 + $0x1f8] sm:$0xff]
    %1122 = vmatprep.subr.mxu0 0.0
    %1123 = vmatpush1.xpose.msra.mxu0 %v503
    %1124 = vmatprep.subr.mxu0 0.0
    %1125 = vmatpush1.xpose.msra.mxu0 0.0
    %1126 = vmatprep.subr.mxu0 0.0
    %1127 = vmatpush1.xpose.msra.mxu0 0.0
    %1128 = vmatprep.subr.mxu0 0.0
    %1129 = vmatpush1.xpose.msra.mxu0 0.0
    %1130 = vmatprep.subr.mxu0 0.0
    %1131 = vmatpush1.xpose.msra.mxu0 0.0
    %1132 = vmatprep.subr.mxu0 0.0
    %1133 = vmatpush1.xpose.msra.mxu0 0.0
    %1134 = vmatprep.subr.mxu0 0.0
    %1135 = vmatpush1.xpose.msra.mxu0 0.0
    %1136 = vmatprep.subr.mxu0 0.0
    %1137 = vmatpush1.xpose.msra.mxu0 0.0
    %1138 = vmatprep.subr.mxu0 0.0
    %1139 = vmatpush1.xpose.msra.mxu0 0.0
    %1140 = vmatprep.subr.mxu0 0.0
    %1141 = vmatpush1.xpose.msra.mxu0 0.0
    %1142 = vmatprep.subr.mxu0 0.0
    %1143 = vmatpush1.xpose.msra.mxu0 0.0
    %1144 = vmatprep.subr.mxu0 0.0
    %1145 = vmatpush1.xpose.msra.mxu0 0.0
    %1146 = vmatprep.subr.mxu0 0.0
    %1147 = vmatpush1.xpose.msra.mxu0 0.0
    %1148 = vmatprep.subr.mxu0 0.0
    %1149 = vmatpush1.xpose.msra.mxu0 0.0
    %1150 = vmatprep.subr.mxu0 0.0
    %1151 = vmatpush1.xpose.msra.mxu0 0.0
    %1152 = vmatprep.subr.mxu0 0.0
    %1153 = vmatpush1.xpose.msra.mxu0 0.0
    %1154 = vmatprep.subr.mxu0 0.0
    %1155 = vmatpush1.xpose.msra.mxu0 0.0
    %1156 = vmatprep.subr.mxu0 0.0
    %1157 = vmatpush1.xpose.msra.mxu0 0.0
    %1158 = vmatprep.subr.mxu0 0.0
    %1159 = vmatpush1.xpose.msra.mxu0 0.0
    %1160 = vmatprep.subr.mxu0 0.0
    %1161 = vmatpush1.xpose.msra.mxu0 0.0
    %1162 = vmatprep.subr.mxu0 0.0
    %1163 = vmatpush1.xpose.msra.mxu0 0.0
    %1164 = vmatprep.subr.mxu0 0.0
    %1165 = vmatpush1.xpose.msra.mxu0 0.0
    %1166 = vmatprep.subr.mxu0 0.0
    %1167 = vmatpush1.xpose.msra.mxu0 0.0
    %1168 = vmatprep.subr.mxu0 0.0
    %1169 = vmatpush1.xpose.msra.mxu0 0.0
    %1170 = vmatprep.subr.mxu0 0.0
    %1171 = vmatpush1.xpose.msra.mxu0 0.0
    %1172 = vmatprep.subr.mxu0 0.0
    %1173 = vmatpush1.xpose.msra.mxu0 0.0
    %1174 = vmatprep.subr.mxu0 0.0
    %1175 = vmatpush1.xpose.msra.mxu0 0.0
    %1176 = vmatprep.subr.mxu0 0.0
    %1177 = vmatpush1.xpose.msra.mxu0 0.0
    %1178 = vmatprep.subr.mxu0 0.0
    %1179 = vmatpush1.xpose.msra.mxu0 0.0
    %1180 = vmatprep.subr.mxu0 0.0
    %1181 = vmatpush1.xpose.msra.mxu0 0.0
    %1182 = vmatprep.subr.mxu0 0.0
    %1183 = vmatpush1.xpose.msra.mxu0 0.0
    %1184 = vmatprep.subr.mxu0 0.0
    %1185 = vmatpush1.xpose.msra.mxu0 0.0
    %1186 = vmatprep.mubr.f32.mxu0 0.0
    %1187 = vmatmul.mubr.f32.gmra.mrb[0].mxu0 %v275
    %v1188 = vpop.f32.mrb[0].mxu0
    %v1189 = vadd.f32 0.0, %v1188
    %v1190 = vpop.f32.mrb[0].mxu0
    %1191 = vdwg.mxu0
    %1192 = vmatprep.subr.mxu0 0.0
    %1193 = vmatpush1.xpose.msra.mxu0 %v509
    %1194 = vmatprep.subr.mxu0 0.0
    %1195 = vmatpush1.xpose.msra.mxu0 0.0
    %1196 = vmatprep.subr.mxu0 0.0
    %1197 = vmatpush1.xpose.msra.mxu0 0.0
    %1198 = vmatprep.subr.mxu0 0.0
    %1199 = vmatpush1.xpose.msra.mxu0 0.0
    %1200 = vmatprep.subr.mxu0 0.0
    %1201 = vmatpush1.xpose.msra.mxu0 0.0
    %1202 = vmatprep.subr.mxu0 0.0
    %1203 = vmatpush1.xpose.msra.mxu0 0.0
    %1204 = vmatprep.subr.mxu0 0.0
    %1205 = vmatpush1.xpose.msra.mxu0 0.0
    %1206 = vmatprep.subr.mxu0 0.0
    %1207 = vmatpush1.xpose.msra.mxu0 0.0
    %1208 = vmatprep.subr.mxu0 0.0
    %1209 = vmatpush1.xpose.msra.mxu0 0.0
    %1210 = vmatprep.subr.mxu0 0.0
    %1211 = vmatpush1.xpose.msra.mxu0 0.0
    %1212 = vmatprep.subr.mxu0 0.0
    %1213 = vmatpush1.xpose.msra.mxu0 0.0
    %1214 = vmatprep.subr.mxu0 0.0
    %1215 = vmatpush1.xpose.msra.mxu0 0.0
    %1216 = vmatprep.subr.mxu0 0.0
    %1217 = vmatpush1.xpose.msra.mxu0 0.0
    %1218 = vmatprep.subr.mxu0 0.0
    %1219 = vmatpush1.xpose.msra.mxu0 0.0
    %1220 = vmatprep.subr.mxu0 0.0
    %1221 = vmatpush1.xpose.msra.mxu0 0.0
    %1222 = vmatprep.subr.mxu0 0.0
    %1223 = vmatpush1.xpose.msra.mxu0 0.0
    %1224 = vmatprep.subr.mxu0 0.0
    %1225 = vmatpush1.xpose.msra.mxu0 0.0
    %1226 = vmatprep.subr.mxu0 0.0
    %1227 = vmatpush1.xpose.msra.mxu0 0.0
    %1228 = vmatprep.subr.mxu0 0.0
    %1229 = vmatpush1.xpose.msra.mxu0 0.0
    %1230 = vmatprep.subr.mxu0 0.0
    %1231 = vmatpush1.xpose.msra.mxu0 0.0
    %1232 = vmatprep.subr.mxu0 0.0
    %1233 = vmatpush1.xpose.msra.mxu0 0.0
    %1234 = vmatprep.subr.mxu0 0.0
    %1235 = vmatpush1.xpose.msra.mxu0 0.0
    %1236 = vmatprep.subr.mxu0 0.0
    %1237 = vmatpush1.xpose.msra.mxu0 0.0
    %1238 = vmatprep.subr.mxu0 0.0
    %1239 = vmatpush1.xpose.msra.mxu0 0.0
    %1240 = vmatprep.subr.mxu0 0.0
    %1241 = vmatpush1.xpose.msra.mxu0 0.0
    %1242 = vmatprep.subr.mxu0 0.0
    %1243 = vmatpush1.xpose.msra.mxu0 0.0
    %1244 = vmatprep.subr.mxu0 0.0
    %1245 = vmatpush1.xpose.msra.mxu0 0.0
    %1246 = vmatprep.subr.mxu0 0.0
    %1247 = vmatpush1.xpose.msra.mxu0 0.0
    %1248 = vmatprep.subr.mxu0 0.0
    %1249 = vmatpush1.xpose.msra.mxu0 0.0
    %1250 = vmatprep.subr.mxu0 0.0
    %1251 = vmatpush1.xpose.msra.mxu0 0.0
    %1252 = vmatprep.subr.mxu0 0.0
    %1253 = vmatpush1.xpose.msra.mxu0 0.0
    %1254 = vmatprep.subr.mxu0 0.0
    %1255 = vmatpush1.xpose.msra.mxu0 0.0
    %1256 = vmatprep.mubr.f32.mxu0 0.0
    %1257 = vmatmul.mubr.f32.gmra.mrb[0].mxu0 %v281
    %v1258 = vpop.f32.mrb[0].mxu0
    %v1259 = vadd.f32 0.0, %v1258
    %v1260 = vpop.f32.mrb[0].mxu0
    %1261 = vdwg.mxu0
    %1262 = vmatprep.subr.mxu0 0.0
    %1263 = vmatpush1.xpose.msra.mxu0 %v515
    %1264 = vmatprep.subr.mxu0 0.0
    %1265 = vmatpush1.xpose.msra.mxu0 0.0
    %1266 = vmatprep.subr.mxu0 0.0
    %1267 = vmatpush1.xpose.msra.mxu0 0.0
    %1268 = vmatprep.subr.mxu0 0.0
    %1269 = vmatpush1.xpose.msra.mxu0 0.0
    %1270 = vmatprep.subr.mxu0 0.0
    %1271 = vmatpush1.xpose.msra.mxu0 0.0
    %1272 = vmatprep.subr.mxu0 0.0
    %1273 = vmatpush1.xpose.msra.mxu0 0.0
    %1274 = vmatprep.subr.mxu0 0.0
    %1275 = vmatpush1.xpose.msra.mxu0 0.0
    %1276 = vmatprep.subr.mxu0 0.0
    %1277 = vmatpush1.xpose.msra.mxu0 0.0
    %1278 = vmatprep.subr.mxu0 0.0
    %1279 = vmatpush1.xpose.msra.mxu0 0.0
    %1280 = vmatprep.subr.mxu0 0.0
    %1281 = vmatpush1.xpose.msra.mxu0 0.0
    %1282 = vmatprep.subr.mxu0 0.0
    %1283 = vmatpush1.xpose.msra.mxu0 0.0
    %1284 = vmatprep.subr.mxu0 0.0
    %1285 = vmatpush1.xpose.msra.mxu0 0.0
    %1286 = vmatprep.subr.mxu0 0.0
    %1287 = vmatpush1.xpose.msra.mxu0 0.0
    %1288 = vmatprep.subr.mxu0 0.0
    %1289 = vmatpush1.xpose.msra.mxu0 0.0
    %1290 = vmatprep.subr.mxu0 0.0
    %1291 = vmatpush1.xpose.msra.mxu0 0.0
    %1292 = vmatprep.subr.mxu0 0.0
    %1293 = vmatpush1.xpose.msra.mxu0 0.0
    %1294 = vmatprep.subr.mxu0 0.0
    %1295 = vmatpush1.xpose.msra.mxu0 0.0
    %1296 = vmatprep.subr.mxu0 0.0
    %1297 = vmatpush1.xpose.msra.mxu0 0.0
    %1298 = vmatprep.subr.mxu0 0.0
    %1299 = vmatpush1.xpose.msra.mxu0 0.0
    %1300 = vmatprep.subr.mxu0 0.0
    %1301 = vmatpush1.xpose.msra.mxu0 0.0
    %1302 = vmatprep.subr.mxu0 0.0
    %1303 = vmatpush1.xpose.msra.mxu0 0.0
    %1304 = vmatprep.subr.mxu0 0.0
    %1305 = vmatpush1.xpose.msra.mxu0 0.0
    %1306 = vmatprep.subr.mxu0 0.0
    %1307 = vmatpush1.xpose.msra.mxu0 0.0
    %1308 = vmatprep.subr.mxu0 0.0
    %1309 = vmatpush1.xpose.msra.mxu0 0.0
    %1310 = vmatprep.subr.mxu0 0.0
    %1311 = vmatpush1.xpose.msra.mxu0 0.0
    %1312 = vmatprep.subr.mxu0 0.0
    %1313 = vmatpush1.xpose.msra.mxu0 0.0
    %1314 = vmatprep.subr.mxu0 0.0
    %1315 = vmatpush1.xpose.msra.mxu0 0.0
    %1316 = vmatprep.subr.mxu0 0.0
    %1317 = vmatpush1.xpose.msra.mxu0 0.0
    %1318 = vmatprep.subr.mxu0 0.0
    %1319 = vmatpush1.xpose.msra.mxu0 0.0
    %1320 = vmatprep.subr.mxu0 0.0
    %1321 = vmatpush1.xpose.msra.mxu0 0.0
    %1322 = vmatprep.subr.mxu0 0.0
    %1323 = vmatpush1.xpose.msra.mxu0 0.0
    %1324 = vmatprep.subr.mxu0 0.0
    %1325 = vmatpush1.xpose.msra.mxu0 0.0
    %1326 = vmatprep.mubr.f32.mxu0 0.0
    %1327 = vmatmul.mubr.f32.gmra.mrb[0].mxu0 %v287
    %v1328 = vpop.f32.mrb[0].mxu0
    %v1329 = vadd.f32 0.0, %v1328
    %v1330 = vpop.f32.mrb[0].mxu0
    %1331 = vdwg.mxu0
    %1332 = vmatprep.subr.mxu0 0.0
    %1333 = vmatpush1.xpose.msra.mxu0 %v521
    %1334 = vmatprep.subr.mxu0 0.0
    %1335 = vmatpush1.xpose.msra.mxu0 0.0
    %1336 = vmatprep.subr.mxu0 0.0
    %1337 = vmatpush1.xpose.msra.mxu0 0.0
    %1338 = vmatprep.subr.mxu0 0.0
    %1339 = vmatpush1.xpose.msra.mxu0 0.0
    %1340 = vmatprep.subr.mxu0 0.0
    %1341 = vmatpush1.xpose.msra.mxu0 0.0
    %1342 = vmatprep.subr.mxu0 0.0
    %1343 = vmatpush1.xpose.msra.mxu0 0.0
    %1344 = vmatprep.subr.mxu0 0.0
    %1345 = vmatpush1.xpose.msra.mxu0 0.0
    %1346 = vmatprep.subr.mxu0 0.0
    %1347 = vmatpush1.xpose.msra.mxu0 0.0
    %1348 = vmatprep.subr.mxu0 0.0
    %1349 = vmatpush1.xpose.msra.mxu0 0.0
    %1350 = vmatprep.subr.mxu0 0.0
    %1351 = vmatpush1.xpose.msra.mxu0 0.0
    %1352 = vmatprep.subr.mxu0 0.0
    %1353 = vmatpush1.xpose.msra.mxu0 0.0
    %1354 = vmatprep.subr.mxu0 0.0
    %1355 = vmatpush1.xpose.msra.mxu0 0.0
    %1356 = vmatprep.subr.mxu0 0.0
    %1357 = vmatpush1.xpose.msra.mxu0 0.0
    %1358 = vmatprep.subr.mxu0 0.0
    %1359 = vmatpush1.xpose.msra.mxu0 0.0
    %1360 = vmatprep.subr.mxu0 0.0
    %1361 = vmatpush1.xpose.msra.mxu0 0.0
    %1362 = vmatprep.subr.mxu0 0.0
    %1363 = vmatpush1.xpose.msra.mxu0 0.0
    %1364 = vmatprep.subr.mxu0 0.0
    %1365 = vmatpush1.xpose.msra.mxu0 0.0
    %1366 = vmatprep.subr.mxu0 0.0
    %1367 = vmatpush1.xpose.msra.mxu0 0.0
    %1368 = vmatprep.subr.mxu0 0.0
    %1369 = vmatpush1.xpose.msra.mxu0 0.0
    %1370 = vmatprep.subr.mxu0 0.0
    %1371 = vmatpush1.xpose.msra.mxu0 0.0
    %1372 = vmatprep.subr.mxu0 0.0
    %1373 = vmatpush1.xpose.msra.mxu0 0.0
    %1374 = vmatprep.subr.mxu0 0.0
    %1375 = vmatpush1.xpose.msra.mxu0 0.0
    %1376 = vmatprep.subr.mxu0 0.0
    %1377 = vmatpush1.xpose.msra.mxu0 0.0
    %1378 = vmatprep.subr.mxu0 0.0
    %1379 = vmatpush1.xpose.msra.mxu0 0.0
    %1380 = vmatprep.subr.mxu0 0.0
    %1381 = vmatpush1.xpose.msra.mxu0 0.0
    %1382 = vmatprep.subr.mxu0 0.0
    %1383 = vmatpush1.xpose.msra.mxu0 0.0
    %1384 = vmatprep.subr.mxu0 0.0
    %1385 = vmatpush1.xpose.msra.mxu0 0.0
    %1386 = vmatprep.subr.mxu0 0.0
    %1387 = vmatpush1.xpose.msra.mxu0 0.0
    %1388 = vmatprep.subr.mxu0 0.0
    %1389 = vmatpush1.xpose.msra.mxu0 0.0
    %1390 = vmatprep.subr.mxu0 0.0
    %1391 = vmatpush1.xpose.msra.mxu0 0.0
    %1392 = vmatprep.subr.mxu0 0.0
    %1393 = vmatpush1.xpose.msra.mxu0 0.0
    %1394 = vmatprep.subr.mxu0 0.0
    %1395 = vmatpush1.xpose.msra.mxu0 0.0
    %1396 = vmatprep.mubr.f32.mxu0 0.0
    %1397 = vmatmul.mubr.f32.gmra.mrb[0].mxu0 %v293
    %v1398 = vpop.f32.mrb[0].mxu0
    %v1399 = vadd.f32 0.0, %v1398
    %v1400 = vpop.f32.mrb[0].mxu0
    %1401 = vdwg.mxu0
    %vm1402 = vcmask 64512
    %v1403 = vsel %vm1402, %v1189, -inf
    %1404 = vmax.xlane.f32.xlu0 %v1403
    %v1405 = vpop.xlane.xlu0 %1404
    %v1406 = vsel %vm1402, %v1259, -inf
    %1407 = vmax.xlane.f32.xlu0 %v1406
    %v1408 = vpop.xlane.xlu0 %1407
    %v1409 = vsel %vm1402, %v1329, -inf
    %1410 = vmax.xlane.f32.xlu0 %v1409
    %v1411 = vpop.xlane.xlu0 %1410
    %v1412 = vsel %vm1402, %v1399, -inf
    %1413 = vmax.xlane.f32.xlu0 %v1412
    %v1414 = vpop.xlane.xlu0 %1413
    %1415 = vmax.xlane.f32.xlu0 %v947
    %v1416 = vpop.xlane.xlu0 %1415
    %1417 = vmax.xlane.f32.xlu0 %v953
    %v1418 = vpop.xlane.xlu0 %1417
    %1419 = vmax.xlane.f32.xlu0 %v959
    %v1420 = vpop.xlane.xlu0 %1419
    %1421 = vmax.xlane.f32.xlu0 %v965
    %v1422 = vpop.xlane.xlu0 %1421
    %v1423 = vmax.f32 %v1405, %v1416
    %v1424 = vmax.f32 %v1408, %v1418
    %v1425 = vmax.f32 %v1411, %v1420
    %v1426 = vmax.f32 %v1414, %v1422
    %v1427 = vsub.f32 %v1189, %v1423
    %v1428 = vsub.f32 %v1259, %v1424
    %v1429 = vsub.f32 %v1329, %v1425
    %v1430 = vsub.f32 %v1399, %v1426
    %v1431 = vmul.f32 %v1427, 1.442695
    %v1432 = vpow.pop %v1431
    %v1433 = vmul.f32 %v1428, 1.442695
    %v1434 = vpow.pop %v1433
    %v1435 = vmul.f32 %v1429, 1.442695
    %v1436 = vpow.pop %v1435
    %v1437 = vmul.f32 %v1430, 1.442695
    %v1438 = vpow.pop %v1437
    %v1439 = vsub.f32 %v947, %v1423
    %v1440 = vsub.f32 %v953, %v1424
    %v1441 = vsub.f32 %v959, %v1425
    %v1442 = vsub.f32 %v965, %v1426
    %v1443 = vmul.f32 %v1439, 1.442695
    %v1444 = vpow.pop %v1443
    %v1445 = vmul.f32 %v1440, 1.442695
    %v1446 = vpow.pop %v1445
    %v1447 = vmul.f32 %v1441, 1.442695
    %v1448 = vpow.pop %v1447
    %v1449 = vmul.f32 %v1442, 1.442695
    %v1450 = vpow.pop %v1449
    %v1451 = vsel %vm1402, %v1432, 0.0
    %1452 = vadd.xlane.f32.xlu0 %v1451
    %v1453 = vpop.xlane.xlu0 %1452
    %v1454 = vsel %vm1402, %v1434, 0.0
    %1455 = vadd.xlane.f32.xlu0 %v1454
    %v1456 = vpop.xlane.xlu0 %1455
    %v1457 = vsel %vm1402, %v1436, 0.0
    %1458 = vadd.xlane.f32.xlu0 %v1457
    %v1459 = vpop.xlane.xlu0 %1458
    %v1460 = vsel %vm1402, %v1438, 0.0
    %1461 = vadd.xlane.f32.xlu0 %v1460
    %v1462 = vpop.xlane.xlu0 %1461
    %1463 = vadd.xlane.f32.xlu0 %v1444
    %v1464 = vpop.xlane.xlu0 %1463
    %1465 = vadd.xlane.f32.xlu0 %v1446
    %v1466 = vpop.xlane.xlu0 %1465
    %1467 = vadd.xlane.f32.xlu0 %v1448
    %v1468 = vpop.xlane.xlu0 %1467
    %1469 = vadd.xlane.f32.xlu0 %v1450
    %v1470 = vpop.xlane.xlu0 %1469
    %v1471 = vadd.f32 %v1453, %v1464
    %v1472 = vadd.f32 %v1456, %v1466
    %v1473 = vadd.f32 %v1459, %v1468
    %v1474 = vadd.f32 %v1462, %v1470
    %v1475 = vrcp.pop %v1471
    %v1476 = vrcp.pop %v1472
    %v1477 = vrcp.pop %v1473
    %v1478 = vrcp.pop %v1474
    %v1480 = vsel %vm1402, %v1432, 0
    %1482 = vmatprep.subr.mxu0 0.0
    %1483 = vmatpush1.msra.mxu0 %v731
    %1484 = vmatprep.subr.mxu0 0.0
    %1485 = vmatpush1.msra.mxu0 0.0
    %1486 = vmatprep.subr.mxu0 0.0
    %1487 = vmatpush1.msra.mxu0 0.0
    %1488 = vmatprep.subr.mxu0 0.0
    %1489 = vmatpush1.msra.mxu0 0.0
    %1490 = vmatprep.subr.mxu0 0.0
    %1491 = vmatpush1.msra.mxu0 0.0
    %1492 = vmatprep.subr.mxu0 0.0
    %1493 = vmatpush1.msra.mxu0 0.0
    %1494 = vmatprep.subr.mxu0 0.0
    %1495 = vmatpush1.msra.mxu0 0.0
    %1496 = vmatprep.subr.mxu0 0.0
    %1497 = vmatpush1.msra.mxu0 0.0
    %1498 = vmatprep.subr.mxu0 0.0
    %1499 = vmatpush1.msra.mxu0 0.0
    %1500 = vmatprep.subr.mxu0 0.0
    %1501 = vmatpush1.msra.mxu0 0.0
    %1502 = vmatprep.subr.mxu0 0.0
    %1503 = vmatpush1.msra.mxu0 0.0
    %1504 = vmatprep.subr.mxu0 0.0
    %1505 = vmatpush1.msra.mxu0 0.0
    %1506 = vmatprep.subr.mxu0 0.0
    %1507 = vmatpush1.msra.mxu0 0.0
    %1508 = vmatprep.subr.mxu0 0.0
    %1509 = vmatpush1.msra.mxu0 0.0
    %1510 = vmatprep.subr.mxu0 0.0
    %1511 = vmatpush1.msra.mxu0 0.0
    %1512 = vmatprep.subr.mxu0 0.0
    %1513 = vmatpush1.msra.mxu0 0.0
    %1514 = vmatprep.subr.mxu0 0.0
    %1515 = vmatpush1.msra.mxu0 0.0
    %1516 = vmatprep.subr.mxu0 0.0
    %1517 = vmatpush1.msra.mxu0 0.0
    %1518 = vmatprep.subr.mxu0 0.0
    %1519 = vmatpush1.msra.mxu0 0.0
    %1520 = vmatprep.subr.mxu0 0.0
    %1521 = vmatpush1.msra.mxu0 0.0
    %1522 = vmatprep.subr.mxu0 0.0
    %1523 = vmatpush1.msra.mxu0 0.0
    %1524 = vmatprep.subr.mxu0 0.0
    %1525 = vmatpush1.msra.mxu0 0.0
    %1526 = vmatprep.subr.mxu0 0.0
    %1527 = vmatpush1.msra.mxu0 0.0
    %1528 = vmatprep.subr.mxu0 0.0
    %1529 = vmatpush1.msra.mxu0 0.0
    %1530 = vmatprep.subr.mxu0 0.0
    %1531 = vmatpush1.msra.mxu0 0.0
    %1532 = vmatprep.subr.mxu0 0.0
    %1533 = vmatpush1.msra.mxu0 0.0
    %1534 = vmatprep.subr.mxu0 0.0
    %1535 = vmatpush1.msra.mxu0 0.0
    %1536 = vmatprep.subr.mxu0 0.0
    %1537 = vmatpush1.msra.mxu0 0.0
    %1538 = vmatprep.subr.mxu0 0.0
    %1539 = vmatpush1.msra.mxu0 0.0
    %1540 = vmatprep.subr.mxu0 0.0
    %1541 = vmatpush1.msra.mxu0 0.0
    %1542 = vmatprep.subr.mxu0 0.0
    %1543 = vmatpush1.msra.mxu0 0.0
    %1544 = vmatprep.subr.mxu0 0.0
    %1545 = vmatpush1.msra.mxu0 0.0
    %1546 = vmatprep.mubr.f32.mxu0 0.0
    %1547 = vmatmul.mubr.f32.gmra.mrb[0].mxu0 %v1480
    %v1548 = vpop.f32.mrb[0].mxu0
    %v1549 = vadd.f32 0.0, %v1548
    %v1550 = vpop.f32.mrb[0].mxu0
    %1551 = vdwg.mxu0
    %v1553 = vsel %vm1402, %v1434, 0
    %1555 = vmatprep.subr.mxu0 0.0
    %1556 = vmatpush1.msra.mxu0 %v737
    %1557 = vmatprep.subr.mxu0 0.0
    %1558 = vmatpush1.msra.mxu0 0.0
    %1559 = vmatprep.subr.mxu0 0.0
    %1560 = vmatpush1.msra.mxu0 0.0
    %1561 = vmatprep.subr.mxu0 0.0
    %1562 = vmatpush1.msra.mxu0 0.0
    %1563 = vmatprep.subr.mxu0 0.0
    %1564 = vmatpush1.msra.mxu0 0.0
    %1565 = vmatprep.subr.mxu0 0.0
    %1566 = vmatpush1.msra.mxu0 0.0
    %1567 = vmatprep.subr.mxu0 0.0
    %1568 = vmatpush1.msra.mxu0 0.0
    %1569 = vmatprep.subr.mxu0 0.0
    %1570 = vmatpush1.msra.mxu0 0.0
    %1571 = vmatprep.subr.mxu0 0.0
    %1572 = vmatpush1.msra.mxu0 0.0
    %1573 = vmatprep.subr.mxu0 0.0
    %1574 = vmatpush1.msra.mxu0 0.0
    %1575 = vmatprep.subr.mxu0 0.0
    %1576 = vmatpush1.msra.mxu0 0.0
    %1577 = vmatprep.subr.mxu0 0.0
    %1578 = vmatpush1.msra.mxu0 0.0
    %1579 = vmatprep.subr.mxu0 0.0
    %1580 = vmatpush1.msra.mxu0 0.0
    %1581 = vmatprep.subr.mxu0 0.0
    %1582 = vmatpush1.msra.mxu0 0.0
    %1583 = vmatprep.subr.mxu0 0.0
    %1584 = vmatpush1.msra.mxu0 0.0
    %1585 = vmatprep.subr.mxu0 0.0
    %1586 = vmatpush1.msra.mxu0 0.0
    %1587 = vmatprep.subr.mxu0 0.0
    %1588 = vmatpush1.msra.mxu0 0.0
    %1589 = vmatprep.subr.mxu0 0.0
    %1590 = vmatpush1.msra.mxu0 0.0
    %1591 = vmatprep.subr.mxu0 0.0
    %1592 = vmatpush1.msra.mxu0 0.0
    %1593 = vmatprep.subr.mxu0 0.0
    %1594 = vmatpush1.msra.mxu0 0.0
    %1595 = vmatprep.subr.mxu0 0.0
    %1596 = vmatpush1.msra.mxu0 0.0
    %1597 = vmatprep.subr.mxu0 0.0
    %1598 = vmatpush1.msra.mxu0 0.0
    %1599 = vmatprep.subr.mxu0 0.0
    %1600 = vmatpush1.msra.mxu0 0.0
    %1601 = vmatprep.subr.mxu0 0.0
    %1602 = vmatpush1.msra.mxu0 0.0
    %1603 = vmatprep.subr.mxu0 0.0
    %1604 = vmatpush1.msra.mxu0 0.0
    %1605 = vmatprep.subr.mxu0 0.0
    %1606 = vmatpush1.msra.mxu0 0.0
    %1607 = vmatprep.subr.mxu0 0.0
    %1608 = vmatpush1.msra.mxu0 0.0
    %1609 = vmatprep.subr.mxu0 0.0
    %1610 = vmatpush1.msra.mxu0 0.0
    %1611 = vmatprep.subr.mxu0 0.0
    %1612 = vmatpush1.msra.mxu0 0.0
    %1613 = vmatprep.subr.mxu0 0.0
    %1614 = vmatpush1.msra.mxu0 0.0
    %1615 = vmatprep.subr.mxu0 0.0
    %1616 = vmatpush1.msra.mxu0 0.0
    %1617 = vmatprep.subr.mxu0 0.0
    %1618 = vmatpush1.msra.mxu0 0.0
    %1619 = vmatprep.mubr.f32.mxu0 0.0
    %1620 = vmatmul.mubr.f32.gmra.mrb[0].mxu0 %v1553
    %v1621 = vpop.f32.mrb[0].mxu0
    %v1622 = vadd.f32 0.0, %v1621
    %v1623 = vpop.f32.mrb[0].mxu0
    %1624 = vdwg.mxu0
    %v1626 = vsel %vm1402, %v1436, 0
    %1628 = vmatprep.subr.mxu0 0.0
    %1629 = vmatpush1.msra.mxu0 %v743
    %1630 = vmatprep.subr.mxu0 0.0
    %1631 = vmatpush1.msra.mxu0 0.0
    %1632 = vmatprep.subr.mxu0 0.0
    %1633 = vmatpush1.msra.mxu0 0.0
    %1634 = vmatprep.subr.mxu0 0.0
    %1635 = vmatpush1.msra.mxu0 0.0
    %1636 = vmatprep.subr.mxu0 0.0
    %1637 = vmatpush1.msra.mxu0 0.0
    %1638 = vmatprep.subr.mxu0 0.0
    %1639 = vmatpush1.msra.mxu0 0.0
    %1640 = vmatprep.subr.mxu0 0.0
    %1641 = vmatpush1.msra.mxu0 0.0
    %1642 = vmatprep.subr.mxu0 0.0
    %1643 = vmatpush1.msra.mxu0 0.0
    %1644 = vmatprep.subr.mxu0 0.0
    %1645 = vmatpush1.msra.mxu0 0.0
    %1646 = vmatprep.subr.mxu0 0.0
    %1647 = vmatpush1.msra.mxu0 0.0
    %1648 = vmatprep.subr.mxu0 0.0
    %1649 = vmatpush1.msra.mxu0 0.0
    %1650 = vmatprep.subr.mxu0 0.0
    %1651 = vmatpush1.msra.mxu0 0.0
    %1652 = vmatprep.subr.mxu0 0.0
    %1653 = vmatpush1.msra.mxu0 0.0
    %1654 = vmatprep.subr.mxu0 0.0
    %1655 = vmatpush1.msra.mxu0 0.0
    %1656 = vmatprep.subr.mxu0 0.0
    %1657 = vmatpush1.msra.mxu0 0.0
    %1658 = vmatprep.subr.mxu0 0.0
    %1659 = vmatpush1.msra.mxu0 0.0
    %1660 = vmatprep.subr.mxu0 0.0
    %1661 = vmatpush1.msra.mxu0 0.0
    %1662 = vmatprep.subr.mxu0 0.0
    %1663 = vmatpush1.msra.mxu0 0.0
    %1664 = vmatprep.subr.mxu0 0.0
    %1665 = vmatpush1.msra.mxu0 0.0
    %1666 = vmatprep.subr.mxu0 0.0
    %1667 = vmatpush1.msra.mxu0 0.0
    %1668 = vmatprep.subr.mxu0 0.0
    %1669 = vmatpush1.msra.mxu0 0.0
    %1670 = vmatprep.subr.mxu0 0.0
    %1671 = vmatpush1.msra.mxu0 0.0
    %1672 = vmatprep.subr.mxu0 0.0
    %1673 = vmatpush1.msra.mxu0 0.0
    %1674 = vmatprep.subr.mxu0 0.0
    %1675 = vmatpush1.msra.mxu0 0.0
    %1676 = vmatprep.subr.mxu0 0.0
    %1677 = vmatpush1.msra.mxu0 0.0
    %1678 = vmatprep.subr.mxu0 0.0
    %1679 = vmatpush1.msra.mxu0 0.0
    %1680 = vmatprep.subr.mxu0 0.0
    %1681 = vmatpush1.msra.mxu0 0.0
    %1682 = vmatprep.subr.mxu0 0.0
    %1683 = vmatpush1.msra.mxu0 0.0
    %1684 = vmatprep.subr.mxu0 0.0
    %1685 = vmatpush1.msra.mxu0 0.0
    %1686 = vmatprep.subr.mxu0 0.0
    %1687 = vmatpush1.msra.mxu0 0.0
    %1688 = vmatprep.subr.mxu0 0.0
    %1689 = vmatpush1.msra.mxu0 0.0
    %1690 = vmatprep.subr.mxu0 0.0
    %1691 = vmatpush1.msra.mxu0 0.0
    %1692 = vmatprep.mubr.f32.mxu0 0.0
    %1693 = vmatmul.mubr.f32.gmra.mrb[0].mxu0 %v1626
    %v1694 = vpop.f32.mrb[0].mxu0
    %v1695 = vadd.f32 0.0, %v1694
    %v1696 = vpop.f32.mrb[0].mxu0
    %1697 = vdwg.mxu0
    %v1699 = vsel %vm1402, %v1438, 0
    %1701 = vmatprep.subr.mxu0 0.0
    %1702 = vmatpush1.msra.mxu0 %v749
    %1703 = vmatprep.subr.mxu0 0.0
    %1704 = vmatpush1.msra.mxu0 0.0
    %1705 = vmatprep.subr.mxu0 0.0
    %1706 = vmatpush1.msra.mxu0 0.0
    %1707 = vmatprep.subr.mxu0 0.0
    %1708 = vmatpush1.msra.mxu0 0.0
    %1709 = vmatprep.subr.mxu0 0.0
    %1710 = vmatpush1.msra.mxu0 0.0
    %1711 = vmatprep.subr.mxu0 0.0
    %1712 = vmatpush1.msra.mxu0 0.0
    %1713 = vmatprep.subr.mxu0 0.0
    %1714 = vmatpush1.msra.mxu0 0.0
    %1715 = vmatprep.subr.mxu0 0.0
    %1716 = vmatpush1.msra.mxu0 0.0
    %1717 = vmatprep.subr.mxu0 0.0
    %1718 = vmatpush1.msra.mxu0 0.0
    %1719 = vmatprep.subr.mxu0 0.0
    %1720 = vmatpush1.msra.mxu0 0.0
    %1721 = vmatprep.subr.mxu0 0.0
    %1722 = vmatpush1.msra.mxu0 0.0
    %1723 = vmatprep.subr.mxu0 0.0
    %1724 = vmatpush1.msra.mxu0 0.0
    %1725 = vmatprep.subr.mxu0 0.0
    %1726 = vmatpush1.msra.mxu0 0.0
    %1727 = vmatprep.subr.mxu0 0.0
    %1728 = vmatpush1.msra.mxu0 0.0
    %1729 = vmatprep.subr.mxu0 0.0
    %1730 = vmatpush1.msra.mxu0 0.0
    %1731 = vmatprep.subr.mxu0 0.0
    %1732 = vmatpush1.msra.mxu0 0.0
    %1733 = vmatprep.subr.mxu0 0.0
    %1734 = vmatpush1.msra.mxu0 0.0
    %1735 = vmatprep.subr.mxu0 0.0
    %1736 = vmatpush1.msra.mxu0 0.0
    %1737 = vmatprep.subr.mxu0 0.0
    %1738 = vmatpush1.msra.mxu0 0.0
    %1739 = vmatprep.subr.mxu0 0.0
    %1740 = vmatpush1.msra.mxu0 0.0
    %1741 = vmatprep.subr.mxu0 0.0
    %1742 = vmatpush1.msra.mxu0 0.0
    %1743 = vmatprep.subr.mxu0 0.0
    %1744 = vmatpush1.msra.mxu0 0.0
    %1745 = vmatprep.subr.mxu0 0.0
    %1746 = vmatpush1.msra.mxu0 0.0
    %1747 = vmatprep.subr.mxu0 0.0
    %1748 = vmatpush1.msra.mxu0 0.0
    %1749 = vmatprep.subr.mxu0 0.0
    %1750 = vmatpush1.msra.mxu0 0.0
    %1751 = vmatprep.subr.mxu0 0.0
    %1752 = vmatpush1.msra.mxu0 0.0
    %1753 = vmatprep.subr.mxu0 0.0
    %1754 = vmatpush1.msra.mxu0 0.0
    %1755 = vmatprep.subr.mxu0 0.0
    %1756 = vmatpush1.msra.mxu0 0.0
    %1757 = vmatprep.subr.mxu0 0.0
    %1758 = vmatpush1.msra.mxu0 0.0
    %1759 = vmatprep.subr.mxu0 0.0
    %1760 = vmatpush1.msra.mxu0 0.0
    %1761 = vmatprep.subr.mxu0 0.0
    %1762 = vmatpush1.msra.mxu0 0.0
    %1763 = vmatprep.subr.mxu0 0.0
    %1764 = vmatpush1.msra.mxu0 0.0
    %1765 = vmatprep.mubr.f32.mxu0 0.0
    %1766 = vmatmul.mubr.f32.gmra.mrb[0].mxu0 %v1699
    %v1767 = vpop.f32.mrb[0].mxu0
    %v1768 = vadd.f32 0.0, %v1767
    %v1769 = vpop.f32.mrb[0].mxu0
    %1770 = vdwg.mxu0
    %1771 = vmatprep.subr.mxu0 0.0
    %1772 = vmatpush1.msra.mxu0 %v1058
    %1773 = vmatprep.subr.mxu0 0.0
    %1774 = vmatpush1.msra.mxu0 %v1062
    %1775 = vmatprep.subr.mxu0 0.0
    %1776 = vmatpush1.msra.mxu0 %v1066
    %1777 = vmatprep.subr.mxu0 0.0
    %1778 = vmatpush1.msra.mxu0 %v1070
    %1779 = vmatprep.subr.mxu0 0.0
    %1780 = vmatpush1.msra.mxu0 %v1074
    %1781 = vmatprep.subr.mxu0 0.0
    %1782 = vmatpush1.msra.mxu0 %v1078
    %1783 = vmatprep.subr.mxu0 0.0
    %1784 = vmatpush1.msra.mxu0 %v1082
    %1785 = vmatprep.subr.mxu0 0.0
    %1786 = vmatpush1.msra.mxu0 %v1086
    %1787 = vmatprep.subr.mxu0 0.0
    %1788 = vmatpush1.msra.mxu0 %v1090
    %1789 = vmatprep.subr.mxu0 0.0
    %1790 = vmatpush1.msra.mxu0 %v1094
    %1791 = vmatprep.subr.mxu0 0.0
    %1792 = vmatpush1.msra.mxu0 %v1098
    %1793 = vmatprep.subr.mxu0 0.0
    %1794 = vmatpush1.msra.mxu0 %v1102
    %1795 = vmatprep.subr.mxu0 0.0
    %1796 = vmatpush1.msra.mxu0 %v1106
    %1797 = vmatprep.subr.mxu0 0.0
    %1798 = vmatpush1.msra.mxu0 %v1110
    %1799 = vmatprep.subr.mxu0 0.0
    %1800 = vmatpush1.msra.mxu0 %v1114
    %1801 = vmatprep.subr.mxu0 0.0
    %1802 = vmatpush1.msra.mxu0 %v1118
    %1803 = vmatprep.subr.mxu0 0.0
    %1804 = vmatpush1.msra.mxu0 0.0
    %1805 = vmatprep.subr.mxu0 0.0
    %1806 = vmatpush1.msra.mxu0 0.0
    %1807 = vmatprep.subr.mxu0 0.0
    %1808 = vmatpush1.msra.mxu0 0.0
    %1809 = vmatprep.subr.mxu0 0.0
    %1810 = vmatpush1.msra.mxu0 0.0
    %1811 = vmatprep.subr.mxu0 0.0
    %1812 = vmatpush1.msra.mxu0 0.0
    %1813 = vmatprep.subr.mxu0 0.0
    %1814 = vmatpush1.msra.mxu0 0.0
    %1815 = vmatprep.subr.mxu0 0.0
    %1816 = vmatpush1.msra.mxu0 0.0
    %1817 = vmatprep.subr.mxu0 0.0
    %1818 = vmatpush1.msra.mxu0 0.0
    %1819 = vmatprep.subr.mxu0 0.0
    %1820 = vmatpush1.msra.mxu0 0.0
    %1821 = vmatprep.subr.mxu0 0.0
    %1822 = vmatpush1.msra.mxu0 0.0
    %1823 = vmatprep.subr.mxu0 0.0
    %1824 = vmatpush1.msra.mxu0 0.0
    %1825 = vmatprep.subr.mxu0 0.0
    %1826 = vmatpush1.msra.mxu0 0.0
    %1827 = vmatprep.subr.mxu0 0.0
    %1828 = vmatpush1.msra.mxu0 0.0
    %1829 = vmatprep.subr.mxu0 0.0
    %1830 = vmatpush1.msra.mxu0 0.0
    %1831 = vmatprep.subr.mxu0 0.0
    %1832 = vmatpush1.msra.mxu0 0.0
    %1833 = vmatprep.subr.mxu0 0.0
    %1834 = vmatpush1.msra.mxu0 0.0
    %1835 = vmatprep.mubr.f32.mxu0 0.0
    %1836 = vmatmul.mubr.f32.gmra.mrb[0].mxu0 %v1444
    %v1837 = vpop.f32.mrb[0].mxu0
    %v1838 = vadd.f32 0.0, %v1837
    %v1839 = vpop.f32.mrb[0].mxu0
    %1840 = vmatprep.mubr.f32.mxu0 0.0
    %1841 = vmatmul.mubr.f32.gmra.mrb[0].mxu0 %v1446
    %v1842 = vpop.f32.mrb[0].mxu0
    %v1843 = vadd.f32 0.0, %v1842
    %v1844 = vpop.f32.mrb[0].mxu0
    %1845 = vmatprep.mubr.f32.mxu0 0.0
    %1846 = vmatmul.mubr.f32.gmra.mrb[0].mxu0 %v1448
    %v1847 = vpop.f32.mrb[0].mxu0
    %v1848 = vadd.f32 0.0, %v1847
    %v1849 = vpop.f32.mrb[0].mxu0
    %1850 = vmatprep.mubr.f32.mxu0 0.0
    %1851 = vmatmul.mubr.f32.gmra.mrb[0].mxu0 %v1450
    %v1852 = vpop.f32.mrb[0].mxu0
    %v1853 = vadd.f32 0.0, %v1852
    %v1854 = vpop.f32.mrb[0].mxu0
    %1855 = vdwg.mxu0
    %v1856 = vadd.f32 %v1549, %v1838
    %v1857 = vadd.f32 %v1622, %v1843
    %v1858 = vadd.f32 %v1695, %v1848
    %v1859 = vadd.f32 %v1768, %v1853
    %v1860 = vmul.f32 %v1856, %v1475
    %v1861 = vmul.f32 %v1857, %v1476
    %v1862 = vmul.f32 %v1858, %v1477
    %v1863 = vmul.f32 %v1859, %v1478
    %1864 = vst [vmem:[#allocation2] sm:$0xff] %v1860
    %1865 = vst [vmem:[#allocation2 + $0x20] sm:$0xff] %v1861
    %1866 = vst [vmem:[#allocation2 + $0x40] sm:$0xff] %v1862
    %1867 = vst [vmem:[#allocation2 + $0x60] sm:$0xff] %v1863
    %1868 = vmatprep.subr.mxu0 0.0
    %1869 = vmatpush1.xpose.msra.mxu0 %v505
    %1870 = vmatprep.subr.mxu0 0.0
    %1871 = vmatpush1.xpose.msra.mxu0 0.0
    %1872 = vmatprep.subr.mxu0 0.0
    %1873 = vmatpush1.xpose.msra.mxu0 0.0
    %1874 = vmatprep.subr.mxu0 0.0
    %1875 = vmatpush1.xpose.msra.mxu0 0.0
    %1876 = vmatprep.subr.mxu0 0.0
    %1877 = vmatpush1.xpose.msra.mxu0 0.0
    %1878 = vmatprep.subr.mxu0 0.0
    %1879 = vmatpush1.xpose.msra.mxu0 0.0
    %1880 = vmatprep.subr.mxu0 0.0
    %1881 = vmatpush1.xpose.msra.mxu0 0.0
    %1882 = vmatprep.subr.mxu0 0.0
    %1883 = vmatpush1.xpose.msra.mxu0 0.0
    %1884 = vmatprep.subr.mxu0 0.0
    %1885 = vmatpush1.xpose.msra.mxu0 0.0
    %1886 = vmatprep.subr.mxu0 0.0
    %1887 = vmatpush1.xpose.msra.mxu0 0.0
    %1888 = vmatprep.subr.mxu0 0.0
    %1889 = vmatpush1.xpose.msra.mxu0 0.0
    %1890 = vmatprep.subr.mxu0 0.0
    %1891 = vmatpush1.xpose.msra.mxu0 0.0
    %1892 = vmatprep.subr.mxu0 0.0
    %1893 = vmatpush1.xpose.msra.mxu0 0.0
    %1894 = vmatprep.subr.mxu0 0.0
    %1895 = vmatpush1.xpose.msra.mxu0 0.0
    %1896 = vmatprep.subr.mxu0 0.0
    %1897 = vmatpush1.xpose.msra.mxu0 0.0
    %1898 = vmatprep.subr.mxu0 0.0
    %1899 = vmatpush1.xpose.msra.mxu0 0.0
    %1900 = vmatprep.subr.mxu0 0.0
    %1901 = vmatpush1.xpose.msra.mxu0 0.0
    %1902 = vmatprep.subr.mxu0 0.0
    %1903 = vmatpush1.xpose.msra.mxu0 0.0
    %1904 = vmatprep.subr.mxu0 0.0
    %1905 = vmatpush1.xpose.msra.mxu0 0.0
    %1906 = vmatprep.subr.mxu0 0.0
    %1907 = vmatpush1.xpose.msra.mxu0 0.0
    %1908 = vmatprep.subr.mxu0 0.0
    %1909 = vmatpush1.xpose.msra.mxu0 0.0
    %1910 = vmatprep.subr.mxu0 0.0
    %1911 = vmatpush1.xpose.msra.mxu0 0.0
    %1912 = vmatprep.subr.mxu0 0.0
    %1913 = vmatpush1.xpose.msra.mxu0 0.0
    %1914 = vmatprep.subr.mxu0 0.0
    %1915 = vmatpush1.xpose.msra.mxu0 0.0
    %1916 = vmatprep.subr.mxu0 0.0
    %1917 = vmatpush1.xpose.msra.mxu0 0.0
    %1918 = vmatprep.subr.mxu0 0.0
    %1919 = vmatpush1.xpose.msra.mxu0 0.0
    %1920 = vmatprep.subr.mxu0 0.0
    %1921 = vmatpush1.xpose.msra.mxu0 0.0
    %1922 = vmatprep.subr.mxu0 0.0
    %1923 = vmatpush1.xpose.msra.mxu0 0.0
    %1924 = vmatprep.subr.mxu0 0.0
    %1925 = vmatpush1.xpose.msra.mxu0 0.0
    %1926 = vmatprep.subr.mxu0 0.0
    %1927 = vmatpush1.xpose.msra.mxu0 0.0
    %1928 = vmatprep.subr.mxu0 0.0
    %1929 = vmatpush1.xpose.msra.mxu0 0.0
    %1930 = vmatprep.subr.mxu0 0.0
    %1931 = vmatpush1.xpose.msra.mxu0 0.0
    %1932 = vmatprep.mubr.f32.mxu0 0.0
    %1933 = vmatmul.mubr.f32.gmra.mrb[0].mxu0 %v277
    %v1934 = vpop.f32.mrb[0].mxu0
    %v1935 = vadd.f32 0.0, %v1934
    %v1936 = vpop.f32.mrb[0].mxu0
    %1937 = vdwg.mxu0
    %1938 = vmatprep.subr.mxu0 0.0
    %1939 = vmatpush1.xpose.msra.mxu0 %v511
    %1940 = vmatprep.subr.mxu0 0.0
    %1941 = vmatpush1.xpose.msra.mxu0 0.0
    %1942 = vmatprep.subr.mxu0 0.0
    %1943 = vmatpush1.xpose.msra.mxu0 0.0
    %1944 = vmatprep.subr.mxu0 0.0
    %1945 = vmatpush1.xpose.msra.mxu0 0.0
    %1946 = vmatprep.subr.mxu0 0.0
    %1947 = vmatpush1.xpose.msra.mxu0 0.0
    %1948 = vmatprep.subr.mxu0 0.0
    %1949 = vmatpush1.xpose.msra.mxu0 0.0
    %1950 = vmatprep.subr.mxu0 0.0
    %1951 = vmatpush1.xpose.msra.mxu0 0.0
    %1952 = vmatprep.subr.mxu0 0.0
    %1953 = vmatpush1.xpose.msra.mxu0 0.0
    %1954 = vmatprep.subr.mxu0 0.0
    %1955 = vmatpush1.xpose.msra.mxu0 0.0
    %1956 = vmatprep.subr.mxu0 0.0
    %1957 = vmatpush1.xpose.msra.mxu0 0.0
    %1958 = vmatprep.subr.mxu0 0.0
    %1959 = vmatpush1.xpose.msra.mxu0 0.0
    %1960 = vmatprep.subr.mxu0 0.0
    %1961 = vmatpush1.xpose.msra.mxu0 0.0
    %1962 = vmatprep.subr.mxu0 0.0
    %1963 = vmatpush1.xpose.msra.mxu0 0.0
    %1964 = vmatprep.subr.mxu0 0.0
    %1965 = vmatpush1.xpose.msra.mxu0 0.0
    %1966 = vmatprep.subr.mxu0 0.0
    %1967 = vmatpush1.xpose.msra.mxu0 0.0
    %1968 = vmatprep.subr.mxu0 0.0
    %1969 = vmatpush1.xpose.msra.mxu0 0.0
    %1970 = vmatprep.subr.mxu0 0.0
    %1971 = vmatpush1.xpose.msra.mxu0 0.0
    %1972 = vmatprep.subr.mxu0 0.0
    %1973 = vmatpush1.xpose.msra.mxu0 0.0
    %1974 = vmatprep.subr.mxu0 0.0
    %1975 = vmatpush1.xpose.msra.mxu0 0.0
    %1976 = vmatprep.subr.mxu0 0.0
    %1977 = vmatpush1.xpose.msra.mxu0 0.0
    %1978 = vmatprep.subr.mxu0 0.0
    %1979 = vmatpush1.xpose.msra.mxu0 0.0
    %1980 = vmatprep.subr.mxu0 0.0
    %1981 = vmatpush1.xpose.msra.mxu0 0.0
    %1982 = vmatprep.subr.mxu0 0.0
    %1983 = vmatpush1.xpose.msra.mxu0 0.0
    %1984 = vmatprep.subr.mxu0 0.0
    %1985 = vmatpush1.xpose.msra.mxu0 0.0
    %1986 = vmatprep.subr.mxu0 0.0
    %1987 = vmatpush1.xpose.msra.mxu0 0.0
    %1988 = vmatprep.subr.mxu0 0.0
    %1989 = vmatpush1.xpose.msra.mxu0 0.0
    %1990 = vmatprep.subr.mxu0 0.0
    %1991 = vmatpush1.xpose.msra.mxu0 0.0
    %1992 = vmatprep.subr.mxu0 0.0
    %1993 = vmatpush1.xpose.msra.mxu0 0.0
    %1994 = vmatprep.subr.mxu0 0.0
    %1995 = vmatpush1.xpose.msra.mxu0 0.0
    %1996 = vmatprep.subr.mxu0 0.0
    %1997 = vmatpush1.xpose.msra.mxu0 0.0
    %1998 = vmatprep.subr.mxu0 0.0
    %1999 = vmatpush1.xpose.msra.mxu0 0.0
    %2000 = vmatprep.subr.mxu0 0.0
    %2001 = vmatpush1.xpose.msra.mxu0 0.0
    %2002 = vmatprep.mubr.f32.mxu0 0.0
    %2003 = vmatmul.mubr.f32.gmra.mrb[0].mxu0 %v283
    %v2004 = vpop.f32.mrb[0].mxu0
    %v2005 = vadd.f32 0.0, %v2004
    %v2006 = vpop.f32.mrb[0].mxu0
    %2007 = vdwg.mxu0
    %2008 = vmatprep.subr.mxu0 0.0
    %2009 = vmatpush1.xpose.msra.mxu0 %v517
    %2010 = vmatprep.subr.mxu0 0.0
    %2011 = vmatpush1.xpose.msra.mxu0 0.0
    %2012 = vmatprep.subr.mxu0 0.0
    %2013 = vmatpush1.xpose.msra.mxu0 0.0
    %2014 = vmatprep.subr.mxu0 0.0
    %2015 = vmatpush1.xpose.msra.mxu0 0.0
    %2016 = vmatprep.subr.mxu0 0.0
    %2017 = vmatpush1.xpose.msra.mxu0 0.0
    %2018 = vmatprep.subr.mxu0 0.0
    %2019 = vmatpush1.xpose.msra.mxu0 0.0
    %2020 = vmatprep.subr.mxu0 0.0
    %2021 = vmatpush1.xpose.msra.mxu0 0.0
    %2022 = vmatprep.subr.mxu0 0.0
    %2023 = vmatpush1.xpose.msra.mxu0 0.0
    %2024 = vmatprep.subr.mxu0 0.0
    %2025 = vmatpush1.xpose.msra.mxu0 0.0
    %2026 = vmatprep.subr.mxu0 0.0
    %2027 = vmatpush1.xpose.msra.mxu0 0.0
    %2028 = vmatprep.subr.mxu0 0.0
    %2029 = vmatpush1.xpose.msra.mxu0 0.0
    %2030 = vmatprep.subr.mxu0 0.0
    %2031 = vmatpush1.xpose.msra.mxu0 0.0
    %2032 = vmatprep.subr.mxu0 0.0
    %2033 = vmatpush1.xpose.msra.mxu0 0.0
    %2034 = vmatprep.subr.mxu0 0.0
    %2035 = vmatpush1.xpose.msra.mxu0 0.0
    %2036 = vmatprep.subr.mxu0 0.0
    %2037 = vmatpush1.xpose.msra.mxu0 0.0
    %2038 = vmatprep.subr.mxu0 0.0
    %2039 = vmatpush1.xpose.msra.mxu0 0.0
    %2040 = vmatprep.subr.mxu0 0.0
    %2041 = vmatpush1.xpose.msra.mxu0 0.0
    %2042 = vmatprep.subr.mxu0 0.0
    %2043 = vmatpush1.xpose.msra.mxu0 0.0
    %2044 = vmatprep.subr.mxu0 0.0
    %2045 = vmatpush1.xpose.msra.mxu0 0.0
    %2046 = vmatprep.subr.mxu0 0.0
    %2047 = vmatpush1.xpose.msra.mxu0 0.0
    %2048 = vmatprep.subr.mxu0 0.0
    %2049 = vmatpush1.xpose.msra.mxu0 0.0
    %2050 = vmatprep.subr.mxu0 0.0
    %2051 = vmatpush1.xpose.msra.mxu0 0.0
    %2052 = vmatprep.subr.mxu0 0.0
    %2053 = vmatpush1.xpose.msra.mxu0 0.0
    %2054 = vmatprep.subr.mxu0 0.0
    %2055 = vmatpush1.xpose.msra.mxu0 0.0
    %2056 = vmatprep.subr.mxu0 0.0
    %2057 = vmatpush1.xpose.msra.mxu0 0.0
    %2058 = vmatprep.subr.mxu0 0.0
    %2059 = vmatpush1.xpose.msra.mxu0 0.0
    %2060 = vmatprep.subr.mxu0 0.0
    %2061 = vmatpush1.xpose.msra.mxu0 0.0
    %2062 = vmatprep.subr.mxu0 0.0
    %2063 = vmatpush1.xpose.msra.mxu0 0.0
    %2064 = vmatprep.subr.mxu0 0.0
    %2065 = vmatpush1.xpose.msra.mxu0 0.0
    %2066 = vmatprep.subr.mxu0 0.0
    %2067 = vmatpush1.xpose.msra.mxu0 0.0
    %2068 = vmatprep.subr.mxu0 0.0
    %2069 = vmatpush1.xpose.msra.mxu0 0.0
    %2070 = vmatprep.subr.mxu0 0.0
    %2071 = vmatpush1.xpose.msra.mxu0 0.0
    %2072 = vmatprep.mubr.f32.mxu0 0.0
    %2073 = vmatmul.mubr.f32.gmra.mrb[0].mxu0 %v289
    %v2074 = vpop.f32.mrb[0].mxu0
    %v2075 = vadd.f32 0.0, %v2074
    %v2076 = vpop.f32.mrb[0].mxu0
    %2077 = vdwg.mxu0
    %2078 = vmatprep.subr.mxu0 0.0
    %2079 = vmatpush1.xpose.msra.mxu0 %v523
    %2080 = vmatprep.subr.mxu0 0.0
    %2081 = vmatpush1.xpose.msra.mxu0 0.0
    %2082 = vmatprep.subr.mxu0 0.0
    %2083 = vmatpush1.xpose.msra.mxu0 0.0
    %2084 = vmatprep.subr.mxu0 0.0
    %2085 = vmatpush1.xpose.msra.mxu0 0.0
    %2086 = vmatprep.subr.mxu0 0.0
    %2087 = vmatpush1.xpose.msra.mxu0 0.0
    %2088 = vmatprep.subr.mxu0 0.0
    %2089 = vmatpush1.xpose.msra.mxu0 0.0
    %2090 = vmatprep.subr.mxu0 0.0
    %2091 = vmatpush1.xpose.msra.mxu0 0.0
    %2092 = vmatprep.subr.mxu0 0.0
    %2093 = vmatpush1.xpose.msra.mxu0 0.0
    %2094 = vmatprep.subr.mxu0 0.0
    %2095 = vmatpush1.xpose.msra.mxu0 0.0
    %2096 = vmatprep.subr.mxu0 0.0
    %2097 = vmatpush1.xpose.msra.mxu0 0.0
    %2098 = vmatprep.subr.mxu0 0.0
    %2099 = vmatpush1.xpose.msra.mxu0 0.0
    %2100 = vmatprep.subr.mxu0 0.0
    %2101 = vmatpush1.xpose.msra.mxu0 0.0
    %2102 = vmatprep.subr.mxu0 0.0
    %2103 = vmatpush1.xpose.msra.mxu0 0.0
    %2104 = vmatprep.subr.mxu0 0.0
    %2105 = vmatpush1.xpose.msra.mxu0 0.0
    %2106 = vmatprep.subr.mxu0 0.0
    %2107 = vmatpush1.xpose.msra.mxu0 0.0
    %2108 = vmatprep.subr.mxu0 0.0
    %2109 = vmatpush1.xpose.msra.mxu0 0.0
    %2110 = vmatprep.subr.mxu0 0.0
    %2111 = vmatpush1.xpose.msra.mxu0 0.0
    %2112 = vmatprep.subr.mxu0 0.0
    %2113 = vmatpush1.xpose.msra.mxu0 0.0
    %2114 = vmatprep.subr.mxu0 0.0
    %2115 = vmatpush1.xpose.msra.mxu0 0.0
    %2116 = vmatprep.subr.mxu0 0.0
    %2117 = vmatpush1.xpose.msra.mxu0 0.0
    %2118 = vmatprep.subr.mxu0 0.0
    %2119 = vmatpush1.xpose.msra.mxu0 0.0
    %2120 = vmatprep.subr.mxu0 0.0
    %2121 = vmatpush1.xpose.msra.mxu0 0.0
    %2122 = vmatprep.subr.mxu0 0.0
    %2123 = vmatpush1.xpose.msra.mxu0 0.0
    %2124 = vmatprep.subr.mxu0 0.0
    %2125 = vmatpush1.xpose.msra.mxu0 0.0
    %2126 = vmatprep.subr.mxu0 0.0
    %2127 = vmatpush1.xpose.msra.mxu0 0.0
    %2128 = vmatprep.subr.mxu0 0.0
    %2129 = vmatpush1.xpose.msra.mxu0 0.0
    %2130 = vmatprep.subr.mxu0 0.0
    %2131 = vmatpush1.xpose.msra.mxu0 0.0
    %2132 = vmatprep.subr.mxu0 0.0
    %2133 = vmatpush1.xpose.msra.mxu0 0.0
    %2134 = vmatprep.subr.mxu0 0.0
    %2135 = vmatpush1.xpose.msra.mxu0 0.0
    %2136 = vmatprep.subr.mxu0 0.0
    %2137 = vmatpush1.xpose.msra.mxu0 0.0
    %2138 = vmatprep.subr.mxu0 0.0
    %2139 = vmatpush1.xpose.msra.mxu0 0.0
    %2140 = vmatprep.subr.mxu0 0.0
    %2141 = vmatpush1.xpose.msra.mxu0 0.0
    %2142 = vmatprep.mubr.f32.mxu0 0.0
    %2143 = vmatmul.mubr.f32.gmra.mrb[0].mxu0 %v295
    %v2144 = vpop.f32.mrb[0].mxu0
    %v2145 = vadd.f32 0.0, %v2144
    %v2146 = vpop.f32.mrb[0].mxu0
    %2147 = vdwg.mxu0
    %v2148 = vsel %vm1402, %v1935, -inf
    %2149 = vmax.xlane.f32.xlu0 %v2148
    %v2150 = vpop.xlane.xlu0 %2149
    %v2151 = vsel %vm1402, %v2005, -inf
    %2152 = vmax.xlane.f32.xlu0 %v2151
    %v2153 = vpop.xlane.xlu0 %2152
    %v2154 = vsel %vm1402, %v2075, -inf
    %2155 = vmax.xlane.f32.xlu0 %v2154
    %v2156 = vpop.xlane.xlu0 %2155
    %v2157 = vsel %vm1402, %v2145, -inf
    %2158 = vmax.xlane.f32.xlu0 %v2157
    %v2159 = vpop.xlane.xlu0 %2158
    %2160 = vmax.xlane.f32.xlu0 %v949
    %v2161 = vpop.xlane.xlu0 %2160
    %2162 = vmax.xlane.f32.xlu0 %v955
    %v2163 = vpop.xlane.xlu0 %2162
    %2164 = vmax.xlane.f32.xlu0 %v961
    %v2165 = vpop.xlane.xlu0 %2164
    %2166 = vmax.xlane.f32.xlu0 %v967
    %v2167 = vpop.xlane.xlu0 %2166
    %v2168 = vmax.f32 %v2150, %v2161
    %v2169 = vmax.f32 %v2153, %v2163
    %v2170 = vmax.f32 %v2156, %v2165
    %v2171 = vmax.f32 %v2159, %v2167
    %v2172 = vsub.f32 %v1935, %v2168
    %v2173 = vsub.f32 %v2005, %v2169
    %v2174 = vsub.f32 %v2075, %v2170
    %v2175 = vsub.f32 %v2145, %v2171
    %v2176 = vmul.f32 %v2172, 1.442695
    %v2177 = vpow.pop %v2176
    %v2178 = vmul.f32 %v2173, 1.442695
    %v2179 = vpow.pop %v2178
    %v2180 = vmul.f32 %v2174, 1.442695
    %v2181 = vpow.pop %v2180
    %v2182 = vmul.f32 %v2175, 1.442695
    %v2183 = vpow.pop %v2182
    %v2184 = vsub.f32 %v949, %v2168
    %v2185 = vsub.f32 %v955, %v2169
    %v2186 = vsub.f32 %v961, %v2170
    %v2187 = vsub.f32 %v967, %v2171
    %v2188 = vmul.f32 %v2184, 1.442695
    %v2189 = vpow.pop %v2188
    %v2190 = vmul.f32 %v2185, 1.442695
    %v2191 = vpow.pop %v2190
    %v2192 = vmul.f32 %v2186, 1.442695
    %v2193 = vpow.pop %v2192
    %v2194 = vmul.f32 %v2187, 1.442695
    %v2195 = vpow.pop %v2194
    %v2196 = vsel %vm1402, %v2177, 0.0
    %2197 = vadd.xlane.f32.xlu0 %v2196
    %v2198 = vpop.xlane.xlu0 %2197
    %v2199 = vsel %vm1402, %v2179, 0.0
    %2200 = vadd.xlane.f32.xlu0 %v2199
    %v2201 = vpop.xlane.xlu0 %2200
    %v2202 = vsel %vm1402, %v2181, 0.0
    %2203 = vadd.xlane.f32.xlu0 %v2202
    %v2204 = vpop.xlane.xlu0 %2203
    %v2205 = vsel %vm1402, %v2183, 0.0
    %2206 = vadd.xlane.f32.xlu0 %v2205
    %v2207 = vpop.xlane.xlu0 %2206
    %2208 = vadd.xlane.f32.xlu0 %v2189
    %v2209 = vpop.xlane.xlu0 %2208
    %2210 = vadd.xlane.f32.xlu0 %v2191
    %v2211 = vpop.xlane.xlu0 %2210
    %2212 = vadd.xlane.f32.xlu0 %v2193
    %v2213 = vpop.xlane.xlu0 %2212
    %2214 = vadd.xlane.f32.xlu0 %v2195
    %v2215 = vpop.xlane.xlu0 %2214
    %v2216 = vadd.f32 %v2198, %v2209
    %v2217 = vadd.f32 %v2201, %v2211
    %v2218 = vadd.f32 %v2204, %v2213
    %v2219 = vadd.f32 %v2207, %v2215
    %v2220 = vrcp.pop %v2216
    %v2221 = vrcp.pop %v2217
    %v2222 = vrcp.pop %v2218
    %v2223 = vrcp.pop %v2219
    %v2225 = vsel %vm1402, %v2177, 0
    %2227 = vmatprep.subr.mxu0 0.0
    %2228 = vmatpush1.msra.mxu0 %v733
    %2229 = vmatprep.subr.mxu0 0.0
    %2230 = vmatpush1.msra.mxu0 0.0
    %2231 = vmatprep.subr.mxu0 0.0
    %2232 = vmatpush1.msra.mxu0 0.0
    %2233 = vmatprep.subr.mxu0 0.0
    %2234 = vmatpush1.msra.mxu0 0.0
    %2235 = vmatprep.subr.mxu0 0.0
    %2236 = vmatpush1.msra.mxu0 0.0
    %2237 = vmatprep.subr.mxu0 0.0
    %2238 = vmatpush1.msra.mxu0 0.0
    %2239 = vmatprep.subr.mxu0 0.0
    %2240 = vmatpush1.msra.mxu0 0.0
    %2241 = vmatprep.subr.mxu0 0.0
    %2242 = vmatpush1.msra.mxu0 0.0
    %2243 = vmatprep.subr.mxu0 0.0
    %2244 = vmatpush1.msra.mxu0 0.0
    %2245 = vmatprep.subr.mxu0 0.0
    %2246 = vmatpush1.msra.mxu0 0.0
    %2247 = vmatprep.subr.mxu0 0.0
    %2248 = vmatpush1.msra.mxu0 0.0
    %2249 = vmatprep.subr.mxu0 0.0
    %2250 = vmatpush1.msra.mxu0 0.0
    %2251 = vmatprep.subr.mxu0 0.0
    %2252 = vmatpush1.msra.mxu0 0.0
    %2253 = vmatprep.subr.mxu0 0.0
    %2254 = vmatpush1.msra.mxu0 0.0
    %2255 = vmatprep.subr.mxu0 0.0
    %2256 = vmatpush1.msra.mxu0 0.0
    %2257 = vmatprep.subr.mxu0 0.0
    %2258 = vmatpush1.msra.mxu0 0.0
    %2259 = vmatprep.subr.mxu0 0.0
    %2260 = vmatpush1.msra.mxu0 0.0
    %2261 = vmatprep.subr.mxu0 0.0
    %2262 = vmatpush1.msra.mxu0 0.0
    %2263 = vmatprep.subr.mxu0 0.0
    %2264 = vmatpush1.msra.mxu0 0.0
    %2265 = vmatprep.subr.mxu0 0.0
    %2266 = vmatpush1.msra.mxu0 0.0
    %2267 = vmatprep.subr.mxu0 0.0
    %2268 = vmatpush1.msra.mxu0 0.0
    %2269 = vmatprep.subr.mxu0 0.0
    %2270 = vmatpush1.msra.mxu0 0.0
    %2271 = vmatprep.subr.mxu0 0.0
    %2272 = vmatpush1.msra.mxu0 0.0
    %2273 = vmatprep.subr.mxu0 0.0
    %2274 = vmatpush1.msra.mxu0 0.0
    %2275 = vmatprep.subr.mxu0 0.0
    %2276 = vmatpush1.msra.mxu0 0.0
    %2277 = vmatprep.subr.mxu0 0.0
    %2278 = vmatpush1.msra.mxu0 0.0
    %2279 = vmatprep.subr.mxu0 0.0
    %2280 = vmatpush1.msra.mxu0 0.0
    %2281 = vmatprep.subr.mxu0 0.0
    %2282 = vmatpush1.msra.mxu0 0.0
    %2283 = vmatprep.subr.mxu0 0.0
    %2284 = vmatpush1.msra.mxu0 0.0
    %2285 = vmatprep.subr.mxu0 0.0
    %2286 = vmatpush1.msra.mxu0 0.0
    %2287 = vmatprep.subr.mxu0 0.0
    %2288 = vmatpush1.msra.mxu0 0.0
    %2289 = vmatprep.subr.mxu0 0.0
    %2290 = vmatpush1.msra.mxu0 0.0
    %2291 = vmatprep.mubr.f32.mxu0 0.0
    %2292 = vmatmul.mubr.f32.gmra.mrb[0].mxu0 %v2225
    %v2293 = vpop.f32.mrb[0].mxu0
    %v2294 = vadd.f32 0.0, %v2293
    %v2295 = vpop.f32.mrb[0].mxu0
    %2296 = vdwg.mxu0
    %v2298 = vsel %vm1402, %v2179, 0
    %2300 = vmatprep.subr.mxu0 0.0
    %2301 = vmatpush1.msra.mxu0 %v739
    %2302 = vmatprep.subr.mxu0 0.0
    %2303 = vmatpush1.msra.mxu0 0.0
    %2304 = vmatprep.subr.mxu0 0.0
    %2305 = vmatpush1.msra.mxu0 0.0
    %2306 = vmatprep.subr.mxu0 0.0
    %2307 = vmatpush1.msra.mxu0 0.0
    %2308 = vmatprep.subr.mxu0 0.0
    %2309 = vmatpush1.msra.mxu0 0.0
    %2310 = vmatprep.subr.mxu0 0.0
    %2311 = vmatpush1.msra.mxu0 0.0
    %2312 = vmatprep.subr.mxu0 0.0
    %2313 = vmatpush1.msra.mxu0 0.0
    %2314 = vmatprep.subr.mxu0 0.0
    %2315 = vmatpush1.msra.mxu0 0.0
    %2316 = vmatprep.subr.mxu0 0.0
    %2317 = vmatpush1.msra.mxu0 0.0
    %2318 = vmatprep.subr.mxu0 0.0
    %2319 = vmatpush1.msra.mxu0 0.0
    %2320 = vmatprep.subr.mxu0 0.0
    %2321 = vmatpush1.msra.mxu0 0.0
    %2322 = vmatprep.subr.mxu0 0.0
    %2323 = vmatpush1.msra.mxu0 0.0
    %2324 = vmatprep.subr.mxu0 0.0
    %2325 = vmatpush1.msra.mxu0 0.0
    %2326 = vmatprep.subr.mxu0 0.0
    %2327 = vmatpush1.msra.mxu0 0.0
    %2328 = vmatprep.subr.mxu0 0.0
    %2329 = vmatpush1.msra.mxu0 0.0
    %2330 = vmatprep.subr.mxu0 0.0
    %2331 = vmatpush1.msra.mxu0 0.0
    %2332 = vmatprep.subr.mxu0 0.0
    %2333 = vmatpush1.msra.mxu0 0.0
    %2334 = vmatprep.subr.mxu0 0.0
    %2335 = vmatpush1.msra.mxu0 0.0
    %2336 = vmatprep.subr.mxu0 0.0
    %2337 = vmatpush1.msra.mxu0 0.0
    %2338 = vmatprep.subr.mxu0 0.0
    %2339 = vmatpush1.msra.mxu0 0.0
    %2340 = vmatprep.subr.mxu0 0.0
    %2341 = vmatpush1.msra.mxu0 0.0
    %2342 = vmatprep.subr.mxu0 0.0
    %2343 = vmatpush1.msra.mxu0 0.0
    %2344 = vmatprep.subr.mxu0 0.0
    %2345 = vmatpush1.msra.mxu0 0.0
    %2346 = vmatprep.subr.mxu0 0.0
    %2347 = vmatpush1.msra.mxu0 0.0
    %2348 = vmatprep.subr.mxu0 0.0
    %2349 = vmatpush1.msra.mxu0 0.0
    %2350 = vmatprep.subr.mxu0 0.0
    %2351 = vmatpush1.msra.mxu0 0.0
    %2352 = vmatprep.subr.mxu0 0.0
    %2353 = vmatpush1.msra.mxu0 0.0
    %2354 = vmatprep.subr.mxu0 0.0
    %2355 = vmatpush1.msra.mxu0 0.0
    %2356 = vmatprep.subr.mxu0 0.0
    %2357 = vmatpush1.msra.mxu0 0.0
    %2358 = vmatprep.subr.mxu0 0.0
    %2359 = vmatpush1.msra.mxu0 0.0
    %2360 = vmatprep.subr.mxu0 0.0
    %2361 = vmatpush1.msra.mxu0 0.0
    %2362 = vmatprep.subr.mxu0 0.0
    %2363 = vmatpush1.msra.mxu0 0.0
    %2364 = vmatprep.mubr.f32.mxu0 0.0
    %2365 = vmatmul.mubr.f32.gmra.mrb[0].mxu0 %v2298
    %v2366 = vpop.f32.mrb[0].mxu0
    %v2367 = vadd.f32 0.0, %v2366
    %v2368 = vpop.f32.mrb[0].mxu0
    %2369 = vdwg.mxu0
    %v2371 = vsel %vm1402, %v2181, 0
    %2373 = vmatprep.subr.mxu0 0.0
    %2374 = vmatpush1.msra.mxu0 %v745
    %2375 = vmatprep.subr.mxu0 0.0
    %2376 = vmatpush1.msra.mxu0 0.0
    %2377 = vmatprep.subr.mxu0 0.0
    %2378 = vmatpush1.msra.mxu0 0.0
    %2379 = vmatprep.subr.mxu0 0.0
    %2380 = vmatpush1.msra.mxu0 0.0
    %2381 = vmatprep.subr.mxu0 0.0
    %2382 = vmatpush1.msra.mxu0 0.0
    %2383 = vmatprep.subr.mxu0 0.0
    %2384 = vmatpush1.msra.mxu0 0.0
    %2385 = vmatprep.subr.mxu0 0.0
    %2386 = vmatpush1.msra.mxu0 0.0
    %2387 = vmatprep.subr.mxu0 0.0
    %2388 = vmatpush1.msra.mxu0 0.0
    %2389 = vmatprep.subr.mxu0 0.0
    %2390 = vmatpush1.msra.mxu0 0.0
    %2391 = vmatprep.subr.mxu0 0.0
    %2392 = vmatpush1.msra.mxu0 0.0
    %2393 = vmatprep.subr.mxu0 0.0
    %2394 = vmatpush1.msra.mxu0 0.0
    %2395 = vmatprep.subr.mxu0 0.0
    %2396 = vmatpush1.msra.mxu0 0.0
    %2397 = vmatprep.subr.mxu0 0.0
    %2398 = vmatpush1.msra.mxu0 0.0
    %2399 = vmatprep.subr.mxu0 0.0
    %2400 = vmatpush1.msra.mxu0 0.0
    %2401 = vmatprep.subr.mxu0 0.0
    %2402 = vmatpush1.msra.mxu0 0.0
    %2403 = vmatprep.subr.mxu0 0.0
    %2404 = vmatpush1.msra.mxu0 0.0
    %2405 = vmatprep.subr.mxu0 0.0
    %2406 = vmatpush1.msra.mxu0 0.0
    %2407 = vmatprep.subr.mxu0 0.0
    %2408 = vmatpush1.msra.mxu0 0.0
    %2409 = vmatprep.subr.mxu0 0.0
    %2410 = vmatpush1.msra.mxu0 0.0
    %2411 = vmatprep.subr.mxu0 0.0
    %2412 = vmatpush1.msra.mxu0 0.0
    %2413 = vmatprep.subr.mxu0 0.0
    %2414 = vmatpush1.msra.mxu0 0.0
    %2415 = vmatprep.subr.mxu0 0.0
    %2416 = vmatpush1.msra.mxu0 0.0
    %2417 = vmatprep.subr.mxu0 0.0
    %2418 = vmatpush1.msra.mxu0 0.0
    %2419 = vmatprep.subr.mxu0 0.0
    %2420 = vmatpush1.msra.mxu0 0.0
    %2421 = vmatprep.subr.mxu0 0.0
    %2422 = vmatpush1.msra.mxu0 0.0
    %2423 = vmatprep.subr.mxu0 0.0
    %2424 = vmatpush1.msra.mxu0 0.0
    %2425 = vmatprep.subr.mxu0 0.0
    %2426 = vmatpush1.msra.mxu0 0.0
    %2427 = vmatprep.subr.mxu0 0.0
    %2428 = vmatpush1.msra.mxu0 0.0
    %2429 = vmatprep.subr.mxu0 0.0
    %2430 = vmatpush1.msra.mxu0 0.0
    %2431 = vmatprep.subr.mxu0 0.0
    %2432 = vmatpush1.msra.mxu0 0.0
    %2433 = vmatprep.subr.mxu0 0.0
    %2434 = vmatpush1.msra.mxu0 0.0
    %2435 = vmatprep.subr.mxu0 0.0
    %2436 = vmatpush1.msra.mxu0 0.0
    %2437 = vmatprep.mubr.f32.mxu0 0.0
    %2438 = vmatmul.mubr.f32.gmra.mrb[0].mxu0 %v2371
    %v2439 = vpop.f32.mrb[0].mxu0
    %v2440 = vadd.f32 0.0, %v2439
    %v2441 = vpop.f32.mrb[0].mxu0
    %2442 = vdwg.mxu0
    %v2444 = vsel %vm1402, %v2183, 0
    %2446 = vmatprep.subr.mxu0 0.0
    %2447 = vmatpush1.msra.mxu0 %v751
    %2448 = vmatprep.subr.mxu0 0.0
    %2449 = vmatpush1.msra.mxu0 0.0
    %2450 = vmatprep.subr.mxu0 0.0
    %2451 = vmatpush1.msra.mxu0 0.0
    %2452 = vmatprep.subr.mxu0 0.0
    %2453 = vmatpush1.msra.mxu0 0.0
    %2454 = vmatprep.subr.mxu0 0.0
    %2455 = vmatpush1.msra.mxu0 0.0
    %2456 = vmatprep.subr.mxu0 0.0
    %2457 = vmatpush1.msra.mxu0 0.0
    %2458 = vmatprep.subr.mxu0 0.0
    %2459 = vmatpush1.msra.mxu0 0.0
    %2460 = vmatprep.subr.mxu0 0.0
    %2461 = vmatpush1.msra.mxu0 0.0
    %2462 = vmatprep.subr.mxu0 0.0
    %2463 = vmatpush1.msra.mxu0 0.0
    %2464 = vmatprep.subr.mxu0 0.0
    %2465 = vmatpush1.msra.mxu0 0.0
    %2466 = vmatprep.subr.mxu0 0.0
    %2467 = vmatpush1.msra.mxu0 0.0
    %2468 = vmatprep.subr.mxu0 0.0
    %2469 = vmatpush1.msra.mxu0 0.0
    %2470 = vmatprep.subr.mxu0 0.0
    %2471 = vmatpush1.msra.mxu0 0.0
    %2472 = vmatprep.subr.mxu0 0.0
    %2473 = vmatpush1.msra.mxu0 0.0
    %2474 = vmatprep.subr.mxu0 0.0
    %2475 = vmatpush1.msra.mxu0 0.0
    %2476 = vmatprep.subr.mxu0 0.0
    %2477 = vmatpush1.msra.mxu0 0.0
    %2478 = vmatprep.subr.mxu0 0.0
    %2479 = vmatpush1.msra.mxu0 0.0
    %2480 = vmatprep.subr.mxu0 0.0
    %2481 = vmatpush1.msra.mxu0 0.0
    %2482 = vmatprep.subr.mxu0 0.0
    %2483 = vmatpush1.msra.mxu0 0.0
    %2484 = vmatprep.subr.mxu0 0.0
    %2485 = vmatpush1.msra.mxu0 0.0
    %2486 = vmatprep.subr.mxu0 0.0
    %2487 = vmatpush1.msra.mxu0 0.0
    %2488 = vmatprep.subr.mxu0 0.0
    %2489 = vmatpush1.msra.mxu0 0.0
    %2490 = vmatprep.subr.mxu0 0.0
    %2491 = vmatpush1.msra.mxu0 0.0
    %2492 = vmatprep.subr.mxu0 0.0
    %2493 = vmatpush1.msra.mxu0 0.0
    %2494 = vmatprep.subr.mxu0 0.0
    %2495 = vmatpush1.msra.mxu0 0.0
    %2496 = vmatprep.subr.mxu0 0.0
    %2497 = vmatpush1.msra.mxu0 0.0
    %2498 = vmatprep.subr.mxu0 0.0
    %2499 = vmatpush1.msra.mxu0 0.0
    %2500 = vmatprep.subr.mxu0 0.0
    %2501 = vmatpush1.msra.mxu0 0.0
    %2502 = vmatprep.subr.mxu0 0.0
    %2503 = vmatpush1.msra.mxu0 0.0
    %2504 = vmatprep.subr.mxu0 0.0
    %2505 = vmatpush1.msra.mxu0 0.0
    %2506 = vmatprep.subr.mxu0 0.0
    %2507 = vmatpush1.msra.mxu0 0.0
    %2508 = vmatprep.subr.mxu0 0.0
    %2509 = vmatpush1.msra.mxu0 0.0
    %2510 = vmatprep.mubr.f32.mxu0 0.0
    %2511 = vmatmul.mubr.f32.gmra.mrb[0].mxu0 %v2444
    %v2512 = vpop.f32.mrb[0].mxu0
    %v2513 = vadd.f32 0.0, %v2512
    %v2514 = vpop.f32.mrb[0].mxu0
    %2515 = vdwg.mxu0
    %2516 = vmatprep.subr.mxu0 0.0
    %2517 = vmatpush1.msra.mxu0 %v1059
    %2518 = vmatprep.subr.mxu0 0.0
    %2519 = vmatpush1.msra.mxu0 %v1063
    %2520 = vmatprep.subr.mxu0 0.0
    %2521 = vmatpush1.msra.mxu0 %v1067
    %2522 = vmatprep.subr.mxu0 0.0
    %2523 = vmatpush1.msra.mxu0 %v1071
    %2524 = vmatprep.subr.mxu0 0.0
    %2525 = vmatpush1.msra.mxu0 %v1075
    %2526 = vmatprep.subr.mxu0 0.0
    %2527 = vmatpush1.msra.mxu0 %v1079
    %2528 = vmatprep.subr.mxu0 0.0
    %2529 = vmatpush1.msra.mxu0 %v1083
    %2530 = vmatprep.subr.mxu0 0.0
    %2531 = vmatpush1.msra.mxu0 %v1087
    %2532 = vmatprep.subr.mxu0 0.0
    %2533 = vmatpush1.msra.mxu0 %v1091
    %2534 = vmatprep.subr.mxu0 0.0
    %2535 = vmatpush1.msra.mxu0 %v1095
    %2536 = vmatprep.subr.mxu0 0.0
    %2537 = vmatpush1.msra.mxu0 %v1099
    %2538 = vmatprep.subr.mxu0 0.0
    %2539 = vmatpush1.msra.mxu0 %v1103
    %2540 = vmatprep.subr.mxu0 0.0
    %2541 = vmatpush1.msra.mxu0 %v1107
    %2542 = vmatprep.subr.mxu0 0.0
    %2543 = vmatpush1.msra.mxu0 %v1111
    %2544 = vmatprep.subr.mxu0 0.0
    %2545 = vmatpush1.msra.mxu0 %v1115
    %2546 = vmatprep.subr.mxu0 0.0
    %2547 = vmatpush1.msra.mxu0 %v1119
    %2548 = vmatprep.subr.mxu0 0.0
    %2549 = vmatpush1.msra.mxu0 0.0
    %2550 = vmatprep.subr.mxu0 0.0
    %2551 = vmatpush1.msra.mxu0 0.0
    %2552 = vmatprep.subr.mxu0 0.0
    %2553 = vmatpush1.msra.mxu0 0.0
    %2554 = vmatprep.subr.mxu0 0.0
    %2555 = vmatpush1.msra.mxu0 0.0
    %2556 = vmatprep.subr.mxu0 0.0
    %2557 = vmatpush1.msra.mxu0 0.0
    %2558 = vmatprep.subr.mxu0 0.0
    %2559 = vmatpush1.msra.mxu0 0.0
    %2560 = vmatprep.subr.mxu0 0.0
    %2561 = vmatpush1.msra.mxu0 0.0
    %2562 = vmatprep.subr.mxu0 0.0
    %2563 = vmatpush1.msra.mxu0 0.0
    %2564 = vmatprep.subr.mxu0 0.0
    %2565 = vmatpush1.msra.mxu0 0.0
    %2566 = vmatprep.subr.mxu0 0.0
    %2567 = vmatpush1.msra.mxu0 0.0
    %2568 = vmatprep.subr.mxu0 0.0
    %2569 = vmatpush1.msra.mxu0 0.0
    %2570 = vmatprep.subr.mxu0 0.0
    %2571 = vmatpush1.msra.mxu0 0.0
    %2572 = vmatprep.subr.mxu0 0.0
    %2573 = vmatpush1.msra.mxu0 0.0
    %2574 = vmatprep.subr.mxu0 0.0
    %2575 = vmatpush1.msra.mxu0 0.0
    %2576 = vmatprep.subr.mxu0 0.0
    %2577 = vmatpush1.msra.mxu0 0.0
    %2578 = vmatprep.subr.mxu0 0.0
    %2579 = vmatpush1.msra.mxu0 0.0
    %2580 = vmatprep.mubr.f32.mxu0 0.0
    %2581 = vmatmul.mubr.f32.gmra.mrb[0].mxu0 %v2189
    %v2582 = vpop.f32.mrb[0].mxu0
    %v2583 = vadd.f32 0.0, %v2582
    %v2584 = vpop.f32.mrb[0].mxu0
    %2585 = vmatprep.mubr.f32.mxu0 0.0
    %2586 = vmatmul.mubr.f32.gmra.mrb[0].mxu0 %v2191
    %v2587 = vpop.f32.mrb[0].mxu0
    %v2588 = vadd.f32 0.0, %v2587
    %v2589 = vpop.f32.mrb[0].mxu0
    %2590 = vmatprep.mubr.f32.mxu0 0.0
    %2591 = vmatmul.mubr.f32.gmra.mrb[0].mxu0 %v2193
    %v2592 = vpop.f32.mrb[0].mxu0
    %v2593 = vadd.f32 0.0, %v2592
    %v2594 = vpop.f32.mrb[0].mxu0
    %2595 = vmatprep.mubr.f32.mxu0 0.0
    %2596 = vmatmul.mubr.f32.gmra.mrb[0].mxu0 %v2195
    %v2597 = vpop.f32.mrb[0].mxu0
    %v2598 = vadd.f32 0.0, %v2597
    %v2599 = vpop.f32.mrb[0].mxu0
    %2600 = vdwg.mxu0
    %v2601 = vadd.f32 %v2294, %v2583
    %v2602 = vadd.f32 %v2367, %v2588
    %v2603 = vadd.f32 %v2440, %v2593
    %v2604 = vadd.f32 %v2513, %v2598
    %v2605 = vmul.f32 %v2601, %v2220
    %v2606 = vmul.f32 %v2602, %v2221
    %v2607 = vmul.f32 %v2603, %v2222
    %v2608 = vmul.f32 %v2604, %v2223
    %2609 = vst [vmem:[#allocation2 + $0x8] sm:$0xff] %v2605
    %2610 = vst [vmem:[#allocation2 + $0x28] sm:$0xff] %v2606
    %2611 = vst [vmem:[#allocation2 + $0x48] sm:$0xff] %v2607
    %2612 = vst [vmem:[#allocation2 + $0x68] sm:$0xff] %v2608
    %2613 = vmatprep.subr.mxu0 0.0
    %2614 = vmatpush1.xpose.msra.mxu0 %v592
    %2615 = vmatprep.subr.mxu0 0.0
    %2616 = vmatpush1.xpose.msra.mxu0 0.0
    %2617 = vmatprep.subr.mxu0 0.0
    %2618 = vmatpush1.xpose.msra.mxu0 0.0
    %2619 = vmatprep.subr.mxu0 0.0
    %2620 = vmatpush1.xpose.msra.mxu0 0.0
    %2621 = vmatprep.subr.mxu0 0.0
    %2622 = vmatpush1.xpose.msra.mxu0 0.0
    %2623 = vmatprep.subr.mxu0 0.0
    %2624 = vmatpush1.xpose.msra.mxu0 0.0
    %2625 = vmatprep.subr.mxu0 0.0
    %2626 = vmatpush1.xpose.msra.mxu0 0.0
    %2627 = vmatprep.subr.mxu0 0.0
    %2628 = vmatpush1.xpose.msra.mxu0 0.0
    %2629 = vmatprep.subr.mxu0 0.0
    %2630 = vmatpush1.xpose.msra.mxu0 0.0
    %2631 = vmatprep.subr.mxu0 0.0
    %2632 = vmatpush1.xpose.msra.mxu0 0.0
    %2633 = vmatprep.subr.mxu0 0.0
    %2634 = vmatpush1.xpose.msra.mxu0 0.0
    %2635 = vmatprep.subr.mxu0 0.0
    %2636 = vmatpush1.xpose.msra.mxu0 0.0
    %2637 = vmatprep.subr.mxu0 0.0
    %2638 = vmatpush1.xpose.msra.mxu0 0.0
    %2639 = vmatprep.subr.mxu0 0.0
    %2640 = vmatpush1.xpose.msra.mxu0 0.0
    %2641 = vmatprep.subr.mxu0 0.0
    %2642 = vmatpush1.xpose.msra.mxu0 0.0
    %2643 = vmatprep.subr.mxu0 0.0
    %2644 = vmatpush1.xpose.msra.mxu0 0.0
    %2645 = vmatprep.subr.mxu0 0.0
    %2646 = vmatpush1.xpose.msra.mxu0 0.0
    %2647 = vmatprep.subr.mxu0 0.0
    %2648 = vmatpush1.xpose.msra.mxu0 0.0
    %2649 = vmatprep.subr.mxu0 0.0
    %2650 = vmatpush1.xpose.msra.mxu0 0.0
    %2651 = vmatprep.subr.mxu0 0.0
    %2652 = vmatpush1.xpose.msra.mxu0 0.0
    %2653 = vmatprep.subr.mxu0 0.0
    %2654 = vmatpush1.xpose.msra.mxu0 0.0
    %2655 = vmatprep.subr.mxu0 0.0
    %2656 = vmatpush1.xpose.msra.mxu0 0.0
    %2657 = vmatprep.subr.mxu0 0.0
    %2658 = vmatpush1.xpose.msra.mxu0 0.0
    %2659 = vmatprep.subr.mxu0 0.0
    %2660 = vmatpush1.xpose.msra.mxu0 0.0
    %2661 = vmatprep.subr.mxu0 0.0
    %2662 = vmatpush1.xpose.msra.mxu0 0.0
    %2663 = vmatprep.subr.mxu0 0.0
    %2664 = vmatpush1.xpose.msra.mxu0 0.0
    %2665 = vmatprep.subr.mxu0 0.0
    %2666 = vmatpush1.xpose.msra.mxu0 0.0
    %2667 = vmatprep.subr.mxu0 0.0
    %2668 = vmatpush1.xpose.msra.mxu0 0.0
    %2669 = vmatprep.subr.mxu0 0.0
    %2670 = vmatpush1.xpose.msra.mxu0 0.0
    %2671 = vmatprep.subr.mxu0 0.0
    %2672 = vmatpush1.xpose.msra.mxu0 0.0
    %2673 = vmatprep.subr.mxu0 0.0
    %2674 = vmatpush1.xpose.msra.mxu0 0.0
    %2675 = vmatprep.subr.mxu0 0.0
    %2676 = vmatpush1.xpose.msra.mxu0 0.0
    %2677 = vmatprep.mubr.f32.mxu0 0.0
    %2678 = vmatmul.mubr.f32.gmra.mrb[0].mxu0 %v364
    %v2679 = vpop.f32.mrb[0].mxu0
    %v2680 = vadd.f32 0.0, %v2679
    %v2681 = vpop.f32.mrb[0].mxu0
    %2682 = vdwg.mxu0
    %2683 = vmatprep.subr.mxu0 0.0
    %2684 = vmatpush1.xpose.msra.mxu0 %v598
    %2685 = vmatprep.subr.mxu0 0.0
    %2686 = vmatpush1.xpose.msra.mxu0 0.0
    %2687 = vmatprep.subr.mxu0 0.0
    %2688 = vmatpush1.xpose.msra.mxu0 0.0
    %2689 = vmatprep.subr.mxu0 0.0
    %2690 = vmatpush1.xpose.msra.mxu0 0.0
    %2691 = vmatprep.subr.mxu0 0.0
    %2692 = vmatpush1.xpose.msra.mxu0 0.0
    %2693 = vmatprep.subr.mxu0 0.0
    %2694 = vmatpush1.xpose.msra.mxu0 0.0
    %2695 = vmatprep.subr.mxu0 0.0
    %2696 = vmatpush1.xpose.msra.mxu0 0.0
    %2697 = vmatprep.subr.mxu0 0.0
    %2698 = vmatpush1.xpose.msra.mxu0 0.0
    %2699 = vmatprep.subr.mxu0 0.0
    %2700 = vmatpush1.xpose.msra.mxu0 0.0
    %2701 = vmatprep.subr.mxu0 0.0
    %2702 = vmatpush1.xpose.msra.mxu0 0.0
    %2703 = vmatprep.subr.mxu0 0.0
    %2704 = vmatpush1.xpose.msra.mxu0 0.0
    %2705 = vmatprep.subr.mxu0 0.0
    %2706 = vmatpush1.xpose.msra.mxu0 0.0
    %2707 = vmatprep.subr.mxu0 0.0
    %2708 = vmatpush1.xpose.msra.mxu0 0.0
    %2709 = vmatprep.subr.mxu0 0.0
    %2710 = vmatpush1.xpose.msra.mxu0 0.0
    %2711 = vmatprep.subr.mxu0 0.0
    %2712 = vmatpush1.xpose.msra.mxu0 0.0
    %2713 = vmatprep.subr.mxu0 0.0
    %2714 = vmatpush1.xpose.msra.mxu0 0.0
    %2715 = vmatprep.subr.mxu0 0.0
    %2716 = vmatpush1.xpose.msra.mxu0 0.0
    %2717 = vmatprep.subr.mxu0 0.0
    %2718 = vmatpush1.xpose.msra.mxu0 0.0
    %2719 = vmatprep.subr.mxu0 0.0
    %2720 = vmatpush1.xpose.msra.mxu0 0.0
    %2721 = vmatprep.subr.mxu0 0.0
    %2722 = vmatpush1.xpose.msra.mxu0 0.0
    %2723 = vmatprep.subr.mxu0 0.0
    %2724 = vmatpush1.xpose.msra.mxu0 0.0
    %2725 = vmatprep.subr.mxu0 0.0
    %2726 = vmatpush1.xpose.msra.mxu0 0.0
    %2727 = vmatprep.subr.mxu0 0.0
    %2728 = vmatpush1.xpose.msra.mxu0 0.0
    %2729 = vmatprep.subr.mxu0 0.0
    %2730 = vmatpush1.xpose.msra.mxu0 0.0
    %2731 = vmatprep.subr.mxu0 0.0
    %2732 = vmatpush1.xpose.msra.mxu0 0.0
    %2733 = vmatprep.subr.mxu0 0.0
    %2734 = vmatpush1.xpose.msra.mxu0 0.0
    %2735 = vmatprep.subr.mxu0 0.0
    %2736 = vmatpush1.xpose.msra.mxu0 0.0
    %2737 = vmatprep.subr.mxu0 0.0
    %2738 = vmatpush1.xpose.msra.mxu0 0.0
    %2739 = vmatprep.subr.mxu0 0.0
    %2740 = vmatpush1.xpose.msra.mxu0 0.0
    %2741 = vmatprep.subr.mxu0 0.0
    %2742 = vmatpush1.xpose.msra.mxu0 0.0
    %2743 = vmatprep.subr.mxu0 0.0
    %2744 = vmatpush1.xpose.msra.mxu0 0.0
    %2745 = vmatprep.subr.mxu0 0.0
    %2746 = vmatpush1.xpose.msra.mxu0 0.0
    %2747 = vmatprep.mubr.f32.mxu0 0.0
    %2748 = vmatmul.mubr.f32.gmra.mrb[0].mxu0 %v370
    %v2749 = vpop.f32.mrb[0].mxu0
    %v2750 = vadd.f32 0.0, %v2749
    %v2751 = vpop.f32.mrb[0].mxu0
    %2752 = vdwg.mxu0
    %2753 = vmatprep.subr.mxu0 0.0
    %2754 = vmatpush1.xpose.msra.mxu0 %v604
    %2755 = vmatprep.subr.mxu0 0.0
    %2756 = vmatpush1.xpose.msra.mxu0 0.0
    %2757 = vmatprep.subr.mxu0 0.0
    %2758 = vmatpush1.xpose.msra.mxu0 0.0
    %2759 = vmatprep.subr.mxu0 0.0
    %2760 = vmatpush1.xpose.msra.mxu0 0.0
    %2761 = vmatprep.subr.mxu0 0.0
    %2762 = vmatpush1.xpose.msra.mxu0 0.0
    %2763 = vmatprep.subr.mxu0 0.0
    %2764 = vmatpush1.xpose.msra.mxu0 0.0
    %2765 = vmatprep.subr.mxu0 0.0
    %2766 = vmatpush1.xpose.msra.mxu0 0.0
    %2767 = vmatprep.subr.mxu0 0.0
    %2768 = vmatpush1.xpose.msra.mxu0 0.0
    %2769 = vmatprep.subr.mxu0 0.0
    %2770 = vmatpush1.xpose.msra.mxu0 0.0
    %2771 = vmatprep.subr.mxu0 0.0
    %2772 = vmatpush1.xpose.msra.mxu0 0.0
    %2773 = vmatprep.subr.mxu0 0.0
    %2774 = vmatpush1.xpose.msra.mxu0 0.0
    %2775 = vmatprep.subr.mxu0 0.0
    %2776 = vmatpush1.xpose.msra.mxu0 0.0
    %2777 = vmatprep.subr.mxu0 0.0
    %2778 = vmatpush1.xpose.msra.mxu0 0.0
    %2779 = vmatprep.subr.mxu0 0.0
    %2780 = vmatpush1.xpose.msra.mxu0 0.0
    %2781 = vmatprep.subr.mxu0 0.0
    %2782 = vmatpush1.xpose.msra.mxu0 0.0
    %2783 = vmatprep.subr.mxu0 0.0
    %2784 = vmatpush1.xpose.msra.mxu0 0.0
    %2785 = vmatprep.subr.mxu0 0.0
    %2786 = vmatpush1.xpose.msra.mxu0 0.0
    %2787 = vmatprep.subr.mxu0 0.0
    %2788 = vmatpush1.xpose.msra.mxu0 0.0
    %2789 = vmatprep.subr.mxu0 0.0
    %2790 = vmatpush1.xpose.msra.mxu0 0.0
    %2791 = vmatprep.subr.mxu0 0.0
    %2792 = vmatpush1.xpose.msra.mxu0 0.0
    %2793 = vmatprep.subr.mxu0 0.0
    %2794 = vmatpush1.xpose.msra.mxu0 0.0
    %2795 = vmatprep.subr.mxu0 0.0
    %2796 = vmatpush1.xpose.msra.mxu0 0.0
    %2797 = vmatprep.subr.mxu0 0.0
    %2798 = vmatpush1.xpose.msra.mxu0 0.0
    %2799 = vmatprep.subr.mxu0 0.0
    %2800 = vmatpush1.xpose.msra.mxu0 0.0
    %2801 = vmatprep.subr.mxu0 0.0
    %2802 = vmatpush1.xpose.msra.mxu0 0.0
    %2803 = vmatprep.subr.mxu0 0.0
    %2804 = vmatpush1.xpose.msra.mxu0 0.0
    %2805 = vmatprep.subr.mxu0 0.0
    %2806 = vmatpush1.xpose.msra.mxu0 0.0
    %2807 = vmatprep.subr.mxu0 0.0
    %2808 = vmatpush1.xpose.msra.mxu0 0.0
    %2809 = vmatprep.subr.mxu0 0.0
    %2810 = vmatpush1.xpose.msra.mxu0 0.0
    %2811 = vmatprep.subr.mxu0 0.0
    %2812 = vmatpush1.xpose.msra.mxu0 0.0
    %2813 = vmatprep.subr.mxu0 0.0
    %2814 = vmatpush1.xpose.msra.mxu0 0.0
    %2815 = vmatprep.subr.mxu0 0.0
    %2816 = vmatpush1.xpose.msra.mxu0 0.0
    %2817 = vmatprep.mubr.f32.mxu0 0.0
    %2818 = vmatmul.mubr.f32.gmra.mrb[0].mxu0 %v376
    %v2819 = vpop.f32.mrb[0].mxu0
    %v2820 = vadd.f32 0.0, %v2819
    %v2821 = vpop.f32.mrb[0].mxu0
    %2822 = vdwg.mxu0
    %2823 = vmatprep.subr.mxu0 0.0
    %2824 = vmatpush1.xpose.msra.mxu0 %v610
    %2825 = vmatprep.subr.mxu0 0.0
    %2826 = vmatpush1.xpose.msra.mxu0 0.0
    %2827 = vmatprep.subr.mxu0 0.0
    %2828 = vmatpush1.xpose.msra.mxu0 0.0
    %2829 = vmatprep.subr.mxu0 0.0
    %2830 = vmatpush1.xpose.msra.mxu0 0.0
    %2831 = vmatprep.subr.mxu0 0.0
    %2832 = vmatpush1.xpose.msra.mxu0 0.0
    %2833 = vmatprep.subr.mxu0 0.0
    %2834 = vmatpush1.xpose.msra.mxu0 0.0
    %2835 = vmatprep.subr.mxu0 0.0
    %2836 = vmatpush1.xpose.msra.mxu0 0.0
    %2837 = vmatprep.subr.mxu0 0.0
    %2838 = vmatpush1.xpose.msra.mxu0 0.0
    %2839 = vmatprep.subr.mxu0 0.0
    %2840 = vmatpush1.xpose.msra.mxu0 0.0
    %2841 = vmatprep.subr.mxu0 0.0
    %2842 = vmatpush1.xpose.msra.mxu0 0.0
    %2843 = vmatprep.subr.mxu0 0.0
    %2844 = vmatpush1.xpose.msra.mxu0 0.0
    %2845 = vmatprep.subr.mxu0 0.0
    %2846 = vmatpush1.xpose.msra.mxu0 0.0
    %2847 = vmatprep.subr.mxu0 0.0
    %2848 = vmatpush1.xpose.msra.mxu0 0.0
    %2849 = vmatprep.subr.mxu0 0.0
    %2850 = vmatpush1.xpose.msra.mxu0 0.0
    %2851 = vmatprep.subr.mxu0 0.0
    %2852 = vmatpush1.xpose.msra.mxu0 0.0
    %2853 = vmatprep.subr.mxu0 0.0
    %2854 = vmatpush1.xpose.msra.mxu0 0.0
    %2855 = vmatprep.subr.mxu0 0.0
    %2856 = vmatpush1.xpose.msra.mxu0 0.0
    %2857 = vmatprep.subr.mxu0 0.0
    %2858 = vmatpush1.xpose.msra.mxu0 0.0
    %2859 = vmatprep.subr.mxu0 0.0
    %2860 = vmatpush1.xpose.msra.mxu0 0.0
    %2861 = vmatprep.subr.mxu0 0.0
    %2862 = vmatpush1.xpose.msra.mxu0 0.0
    %2863 = vmatprep.subr.mxu0 0.0
    %2864 = vmatpush1.xpose.msra.mxu0 0.0
    %2865 = vmatprep.subr.mxu0 0.0
    %2866 = vmatpush1.xpose.msra.mxu0 0.0
    %2867 = vmatprep.subr.mxu0 0.0
    %2868 = vmatpush1.xpose.msra.mxu0 0.0
    %2869 = vmatprep.subr.mxu0 0.0
    %2870 = vmatpush1.xpose.msra.mxu0 0.0
    %2871 = vmatprep.subr.mxu0 0.0
    %2872 = vmatpush1.xpose.msra.mxu0 0.0
    %2873 = vmatprep.subr.mxu0 0.0
    %2874 = vmatpush1.xpose.msra.mxu0 0.0
    %2875 = vmatprep.subr.mxu0 0.0
    %2876 = vmatpush1.xpose.msra.mxu0 0.0
    %2877 = vmatprep.subr.mxu0 0.0
    %2878 = vmatpush1.xpose.msra.mxu0 0.0
    %2879 = vmatprep.subr.mxu0 0.0
    %2880 = vmatpush1.xpose.msra.mxu0 0.0
    %2881 = vmatprep.subr.mxu0 0.0
    %2882 = vmatpush1.xpose.msra.mxu0 0.0
    %2883 = vmatprep.subr.mxu0 0.0
    %2884 = vmatpush1.xpose.msra.mxu0 0.0
    %2885 = vmatprep.subr.mxu0 0.0
    %2886 = vmatpush1.xpose.msra.mxu0 0.0
    %2887 = vmatprep.mubr.f32.mxu0 0.0
    %2888 = vmatmul.mubr.f32.gmra.mrb[0].mxu0 %v382
    %v2889 = vpop.f32.mrb[0].mxu0
    %v2890 = vadd.f32 0.0, %v2889
    %v2891 = vpop.f32.mrb[0].mxu0
    %2892 = vdwg.mxu0
    %v2893 = vsel %vm1402, %v2680, -inf
    %2894 = vmax.xlane.f32.xlu0 %v2893
    %v2895 = vpop.xlane.xlu0 %2894
    %v2896 = vsel %vm1402, %v2750, -inf
    %2897 = vmax.xlane.f32.xlu0 %v2896
    %v2898 = vpop.xlane.xlu0 %2897
    %v2899 = vsel %vm1402, %v2820, -inf
    %2900 = vmax.xlane.f32.xlu0 %v2899
    %v2901 = vpop.xlane.xlu0 %2900
    %v2902 = vsel %vm1402, %v2890, -inf
    %2903 = vmax.xlane.f32.xlu0 %v2902
    %v2904 = vpop.xlane.xlu0 %2903
    %2905 = vmax.xlane.f32.xlu0 %v1036
    %v2906 = vpop.xlane.xlu0 %2905
    %2907 = vmax.xlane.f32.xlu0 %v1042
    %v2908 = vpop.xlane.xlu0 %2907
    %2909 = vmax.xlane.f32.xlu0 %v1048
    %v2910 = vpop.xlane.xlu0 %2909
    %2911 = vmax.xlane.f32.xlu0 %v1054
    %v2912 = vpop.xlane.xlu0 %2911
    %v2913 = vmax.f32 %v2895, %v2906
    %v2914 = vmax.f32 %v2898, %v2908
    %v2915 = vmax.f32 %v2901, %v2910
    %v2916 = vmax.f32 %v2904, %v2912
    %v2917 = vsub.f32 %v2680, %v2913
    %v2918 = vsub.f32 %v2750, %v2914
    %v2919 = vsub.f32 %v2820, %v2915
    %v2920 = vsub.f32 %v2890, %v2916
    %v2921 = vmul.f32 %v2917, 1.442695
    %v2922 = vpow.pop %v2921
    %v2923 = vmul.f32 %v2918, 1.442695
    %v2924 = vpow.pop %v2923
    %v2925 = vmul.f32 %v2919, 1.442695
    %v2926 = vpow.pop %v2925
    %v2927 = vmul.f32 %v2920, 1.442695
    %v2928 = vpow.pop %v2927
    %v2929 = vsub.f32 %v1036, %v2913
    %v2930 = vsub.f32 %v1042, %v2914
    %v2931 = vsub.f32 %v1048, %v2915
    %v2932 = vsub.f32 %v1054, %v2916
    %v2933 = vmul.f32 %v2929, 1.442695
    %v2934 = vpow.pop %v2933
    %v2935 = vmul.f32 %v2930, 1.442695
    %v2936 = vpow.pop %v2935
    %v2937 = vmul.f32 %v2931, 1.442695
    %v2938 = vpow.pop %v2937
    %v2939 = vmul.f32 %v2932, 1.442695
    %v2940 = vpow.pop %v2939
    %v2941 = vsel %vm1402, %v2922, 0.0
    %2942 = vadd.xlane.f32.xlu0 %v2941
    %v2943 = vpop.xlane.xlu0 %2942
    %v2944 = vsel %vm1402, %v2924, 0.0
    %2945 = vadd.xlane.f32.xlu0 %v2944
    %v2946 = vpop.xlane.xlu0 %2945
    %v2947 = vsel %vm1402, %v2926, 0.0
    %2948 = vadd.xlane.f32.xlu0 %v2947
    %v2949 = vpop.xlane.xlu0 %2948
    %v2950 = vsel %vm1402, %v2928, 0.0
    %2951 = vadd.xlane.f32.xlu0 %v2950
    %v2952 = vpop.xlane.xlu0 %2951
    %2953 = vadd.xlane.f32.xlu0 %v2934
    %v2954 = vpop.xlane.xlu0 %2953
    %2955 = vadd.xlane.f32.xlu0 %v2936
    %v2956 = vpop.xlane.xlu0 %2955
    %2957 = vadd.xlane.f32.xlu0 %v2938
    %v2958 = vpop.xlane.xlu0 %2957
    %2959 = vadd.xlane.f32.xlu0 %v2940
    %v2960 = vpop.xlane.xlu0 %2959
    %v2961 = vadd.f32 %v2943, %v2954
    %v2962 = vadd.f32 %v2946, %v2956
    %v2963 = vadd.f32 %v2949, %v2958
    %v2964 = vadd.f32 %v2952, %v2960
    %v2965 = vrcp.pop %v2961
    %v2966 = vrcp.pop %v2962
    %v2967 = vrcp.pop %v2963
    %v2968 = vrcp.pop %v2964
    %v2970 = vsel %vm1402, %v2922, 0
    %2972 = vmatprep.subr.mxu0 0.0
    %2973 = vmatpush1.msra.mxu0 %v820
    %2974 = vmatprep.subr.mxu0 0.0
    %2975 = vmatpush1.msra.mxu0 0.0
    %2976 = vmatprep.subr.mxu0 0.0
    %2977 = vmatpush1.msra.mxu0 0.0
    %2978 = vmatprep.subr.mxu0 0.0
    %2979 = vmatpush1.msra.mxu0 0.0
    %2980 = vmatprep.subr.mxu0 0.0
    %2981 = vmatpush1.msra.mxu0 0.0
    %2982 = vmatprep.subr.mxu0 0.0
    %2983 = vmatpush1.msra.mxu0 0.0
    %2984 = vmatprep.subr.mxu0 0.0
    %2985 = vmatpush1.msra.mxu0 0.0
    %2986 = vmatprep.subr.mxu0 0.0
    %2987 = vmatpush1.msra.mxu0 0.0
    %2988 = vmatprep.subr.mxu0 0.0
    %2989 = vmatpush1.msra.mxu0 0.0
    %2990 = vmatprep.subr.mxu0 0.0
    %2991 = vmatpush1.msra.mxu0 0.0
    %2992 = vmatprep.subr.mxu0 0.0
    %2993 = vmatpush1.msra.mxu0 0.0
    %2994 = vmatprep.subr.mxu0 0.0
    %2995 = vmatpush1.msra.mxu0 0.0
    %2996 = vmatprep.subr.mxu0 0.0
    %2997 = vmatpush1.msra.mxu0 0.0
    %2998 = vmatprep.subr.mxu0 0.0
    %2999 = vmatpush1.msra.mxu0 0.0
    %3000 = vmatprep.subr.mxu0 0.0
    %3001 = vmatpush1.msra.mxu0 0.0
    %3002 = vmatprep.subr.mxu0 0.0
    %3003 = vmatpush1.msra.mxu0 0.0
    %3004 = vmatprep.subr.mxu0 0.0
    %3005 = vmatpush1.msra.mxu0 0.0
    %3006 = vmatprep.subr.mxu0 0.0
    %3007 = vmatpush1.msra.mxu0 0.0
    %3008 = vmatprep.subr.mxu0 0.0
    %3009 = vmatpush1.msra.mxu0 0.0
    %3010 = vmatprep.subr.mxu0 0.0
    %3011 = vmatpush1.msra.mxu0 0.0
    %3012 = vmatprep.subr.mxu0 0.0
    %3013 = vmatpush1.msra.mxu0 0.0
    %3014 = vmatprep.subr.mxu0 0.0
    %3015 = vmatpush1.msra.mxu0 0.0
    %3016 = vmatprep.subr.mxu0 0.0
    %3017 = vmatpush1.msra.mxu0 0.0
    %3018 = vmatprep.subr.mxu0 0.0
    %3019 = vmatpush1.msra.mxu0 0.0
    %3020 = vmatprep.subr.mxu0 0.0
    %3021 = vmatpush1.msra.mxu0 0.0
    %3022 = vmatprep.subr.mxu0 0.0
    %3023 = vmatpush1.msra.mxu0 0.0
    %3024 = vmatprep.subr.mxu0 0.0
    %3025 = vmatpush1.msra.mxu0 0.0
    %3026 = vmatprep.subr.mxu0 0.0
    %3027 = vmatpush1.msra.mxu0 0.0
    %3028 = vmatprep.subr.mxu0 0.0
    %3029 = vmatpush1.msra.mxu0 0.0
    %3030 = vmatprep.subr.mxu0 0.0
    %3031 = vmatpush1.msra.mxu0 0.0
    %3032 = vmatprep.subr.mxu0 0.0
    %3033 = vmatpush1.msra.mxu0 0.0
    %3034 = vmatprep.subr.mxu0 0.0
    %3035 = vmatpush1.msra.mxu0 0.0
    %3036 = vmatprep.mubr.f32.mxu0 0.0
    %3037 = vmatmul.mubr.f32.gmra.mrb[0].mxu0 %v2970
    %v3038 = vpop.f32.mrb[0].mxu0
    %v3039 = vadd.f32 0.0, %v3038
    %v3040 = vpop.f32.mrb[0].mxu0
    %3041 = vdwg.mxu0
    %v3043 = vsel %vm1402, %v2924, 0
    %3045 = vmatprep.subr.mxu0 0.0
    %3046 = vmatpush1.msra.mxu0 %v826
    %3047 = vmatprep.subr.mxu0 0.0
    %3048 = vmatpush1.msra.mxu0 0.0
    %3049 = vmatprep.subr.mxu0 0.0
    %3050 = vmatpush1.msra.mxu0 0.0
    %3051 = vmatprep.subr.mxu0 0.0
    %3052 = vmatpush1.msra.mxu0 0.0
    %3053 = vmatprep.subr.mxu0 0.0
    %3054 = vmatpush1.msra.mxu0 0.0
    %3055 = vmatprep.subr.mxu0 0.0
    %3056 = vmatpush1.msra.mxu0 0.0
    %3057 = vmatprep.subr.mxu0 0.0
    %3058 = vmatpush1.msra.mxu0 0.0
    %3059 = vmatprep.subr.mxu0 0.0
    %3060 = vmatpush1.msra.mxu0 0.0
    %3061 = vmatprep.subr.mxu0 0.0
    %3062 = vmatpush1.msra.mxu0 0.0
    %3063 = vmatprep.subr.mxu0 0.0
    %3064 = vmatpush1.msra.mxu0 0.0
    %3065 = vmatprep.subr.mxu0 0.0
    %3066 = vmatpush1.msra.mxu0 0.0
    %3067 = vmatprep.subr.mxu0 0.0
    %3068 = vmatpush1.msra.mxu0 0.0
    %3069 = vmatprep.subr.mxu0 0.0
    %3070 = vmatpush1.msra.mxu0 0.0
    %3071 = vmatprep.subr.mxu0 0.0
    %3072 = vmatpush1.msra.mxu0 0.0
    %3073 = vmatprep.subr.mxu0 0.0
    %3074 = vmatpush1.msra.mxu0 0.0
    %3075 = vmatprep.subr.mxu0 0.0
    %3076 = vmatpush1.msra.mxu0 0.0
    %3077 = vmatprep.subr.mxu0 0.0
    %3078 = vmatpush1.msra.mxu0 0.0
    %3079 = vmatprep.subr.mxu0 0.0
    %3080 = vmatpush1.msra.mxu0 0.0
    %3081 = vmatprep.subr.mxu0 0.0
    %3082 = vmatpush1.msra.mxu0 0.0
    %3083 = vmatprep.subr.mxu0 0.0
    %3084 = vmatpush1.msra.mxu0 0.0
    %3085 = vmatprep.subr.mxu0 0.0
    %3086 = vmatpush1.msra.mxu0 0.0
    %3087 = vmatprep.subr.mxu0 0.0
    %3088 = vmatpush1.msra.mxu0 0.0
    %3089 = vmatprep.subr.mxu0 0.0
    %3090 = vmatpush1.msra.mxu0 0.0
    %3091 = vmatprep.subr.mxu0 0.0
    %3092 = vmatpush1.msra.mxu0 0.0
    %3093 = vmatprep.subr.mxu0 0.0
    %3094 = vmatpush1.msra.mxu0 0.0
    %3095 = vmatprep.subr.mxu0 0.0
    %3096 = vmatpush1.msra.mxu0 0.0
    %3097 = vmatprep.subr.mxu0 0.0
    %3098 = vmatpush1.msra.mxu0 0.0
    %3099 = vmatprep.subr.mxu0 0.0
    %3100 = vmatpush1.msra.mxu0 0.0
    %3101 = vmatprep.subr.mxu0 0.0
    %3102 = vmatpush1.msra.mxu0 0.0
    %3103 = vmatprep.subr.mxu0 0.0
    %3104 = vmatpush1.msra.mxu0 0.0
    %3105 = vmatprep.subr.mxu0 0.0
    %3106 = vmatpush1.msra.mxu0 0.0
    %3107 = vmatprep.subr.mxu0 0.0
    %3108 = vmatpush1.msra.mxu0 0.0
    %3109 = vmatprep.mubr.f32.mxu0 0.0
    %3110 = vmatmul.mubr.f32.gmra.mrb[0].mxu0 %v3043
    %v3111 = vpop.f32.mrb[0].mxu0
    %v3112 = vadd.f32 0.0, %v3111
    %v3113 = vpop.f32.mrb[0].mxu0
    %3114 = vdwg.mxu0
    %v3116 = vsel %vm1402, %v2926, 0
    %3118 = vmatprep.subr.mxu0 0.0
    %3119 = vmatpush1.msra.mxu0 %v832
    %3120 = vmatprep.subr.mxu0 0.0
    %3121 = vmatpush1.msra.mxu0 0.0
    %3122 = vmatprep.subr.mxu0 0.0
    %3123 = vmatpush1.msra.mxu0 0.0
    %3124 = vmatprep.subr.mxu0 0.0
    %3125 = vmatpush1.msra.mxu0 0.0
    %3126 = vmatprep.subr.mxu0 0.0
    %3127 = vmatpush1.msra.mxu0 0.0
    %3128 = vmatprep.subr.mxu0 0.0
    %3129 = vmatpush1.msra.mxu0 0.0
    %3130 = vmatprep.subr.mxu0 0.0
    %3131 = vmatpush1.msra.mxu0 0.0
    %3132 = vmatprep.subr.mxu0 0.0
    %3133 = vmatpush1.msra.mxu0 0.0
    %3134 = vmatprep.subr.mxu0 0.0
    %3135 = vmatpush1.msra.mxu0 0.0
    %3136 = vmatprep.subr.mxu0 0.0
    %3137 = vmatpush1.msra.mxu0 0.0
    %3138 = vmatprep.subr.mxu0 0.0
    %3139 = vmatpush1.msra.mxu0 0.0
    %3140 = vmatprep.subr.mxu0 0.0
    %3141 = vmatpush1.msra.mxu0 0.0
    %3142 = vmatprep.subr.mxu0 0.0
    %3143 = vmatpush1.msra.mxu0 0.0
    %3144 = vmatprep.subr.mxu0 0.0
    %3145 = vmatpush1.msra.mxu0 0.0
    %3146 = vmatprep.subr.mxu0 0.0
    %3147 = vmatpush1.msra.mxu0 0.0
    %3148 = vmatprep.subr.mxu0 0.0
    %3149 = vmatpush1.msra.mxu0 0.0
    %3150 = vmatprep.subr.mxu0 0.0
    %3151 = vmatpush1.msra.mxu0 0.0
    %3152 = vmatprep.subr.mxu0 0.0
    %3153 = vmatpush1.msra.mxu0 0.0
    %3154 = vmatprep.subr.mxu0 0.0
    %3155 = vmatpush1.msra.mxu0 0.0
    %3156 = vmatprep.subr.mxu0 0.0
    %3157 = vmatpush1.msra.mxu0 0.0
    %3158 = vmatprep.subr.mxu0 0.0
    %3159 = vmatpush1.msra.mxu0 0.0
    %3160 = vmatprep.subr.mxu0 0.0
    %3161 = vmatpush1.msra.mxu0 0.0
    %3162 = vmatprep.subr.mxu0 0.0
    %3163 = vmatpush1.msra.mxu0 0.0
    %3164 = vmatprep.subr.mxu0 0.0
    %3165 = vmatpush1.msra.mxu0 0.0
    %3166 = vmatprep.subr.mxu0 0.0
    %3167 = vmatpush1.msra.mxu0 0.0
    %3168 = vmatprep.subr.mxu0 0.0
    %3169 = vmatpush1.msra.mxu0 0.0
    %3170 = vmatprep.subr.mxu0 0.0
    %3171 = vmatpush1.msra.mxu0 0.0
    %3172 = vmatprep.subr.mxu0 0.0
    %3173 = vmatpush1.msra.mxu0 0.0
    %3174 = vmatprep.subr.mxu0 0.0
    %3175 = vmatpush1.msra.mxu0 0.0
    %3176 = vmatprep.subr.mxu0 0.0
    %3177 = vmatpush1.msra.mxu0 0.0
    %3178 = vmatprep.subr.mxu0 0.0
    %3179 = vmatpush1.msra.mxu0 0.0
    %3180 = vmatprep.subr.mxu0 0.0
    %3181 = vmatpush1.msra.mxu0 0.0
    %3182 = vmatprep.mubr.f32.mxu0 0.0
    %3183 = vmatmul.mubr.f32.gmra.mrb[0].mxu0 %v3116
    %v3184 = vpop.f32.mrb[0].mxu0
    %v3185 = vadd.f32 0.0, %v3184
    %v3186 = vpop.f32.mrb[0].mxu0
    %3187 = vdwg.mxu0
    %v3189 = vsel %vm1402, %v2928, 0
    %3191 = vmatprep.subr.mxu0 0.0
    %3192 = vmatpush1.msra.mxu0 %v838
    %3193 = vmatprep.subr.mxu0 0.0
    %3194 = vmatpush1.msra.mxu0 0.0
    %3195 = vmatprep.subr.mxu0 0.0
    %3196 = vmatpush1.msra.mxu0 0.0
    %3197 = vmatprep.subr.mxu0 0.0
    %3198 = vmatpush1.msra.mxu0 0.0
    %3199 = vmatprep.subr.mxu0 0.0
    %3200 = vmatpush1.msra.mxu0 0.0
    %3201 = vmatprep.subr.mxu0 0.0
    %3202 = vmatpush1.msra.mxu0 0.0
    %3203 = vmatprep.subr.mxu0 0.0
    %3204 = vmatpush1.msra.mxu0 0.0
    %3205 = vmatprep.subr.mxu0 0.0
    %3206 = vmatpush1.msra.mxu0 0.0
    %3207 = vmatprep.subr.mxu0 0.0
    %3208 = vmatpush1.msra.mxu0 0.0
    %3209 = vmatprep.subr.mxu0 0.0
    %3210 = vmatpush1.msra.mxu0 0.0
    %3211 = vmatprep.subr.mxu0 0.0
    %3212 = vmatpush1.msra.mxu0 0.0
    %3213 = vmatprep.subr.mxu0 0.0
    %3214 = vmatpush1.msra.mxu0 0.0
    %3215 = vmatprep.subr.mxu0 0.0
    %3216 = vmatpush1.msra.mxu0 0.0
    %3217 = vmatprep.subr.mxu0 0.0
    %3218 = vmatpush1.msra.mxu0 0.0
    %3219 = vmatprep.subr.mxu0 0.0
    %3220 = vmatpush1.msra.mxu0 0.0
    %3221 = vmatprep.subr.mxu0 0.0
    %3222 = vmatpush1.msra.mxu0 0.0
    %3223 = vmatprep.subr.mxu0 0.0
    %3224 = vmatpush1.msra.mxu0 0.0
    %3225 = vmatprep.subr.mxu0 0.0
    %3226 = vmatpush1.msra.mxu0 0.0
    %3227 = vmatprep.subr.mxu0 0.0
    %3228 = vmatpush1.msra.mxu0 0.0
    %3229 = vmatprep.subr.mxu0 0.0
    %3230 = vmatpush1.msra.mxu0 0.0
    %3231 = vmatprep.subr.mxu0 0.0
    %3232 = vmatpush1.msra.mxu0 0.0
    %3233 = vmatprep.subr.mxu0 0.0
    %3234 = vmatpush1.msra.mxu0 0.0
    %3235 = vmatprep.subr.mxu0 0.0
    %3236 = vmatpush1.msra.mxu0 0.0
    %3237 = vmatprep.subr.mxu0 0.0
    %3238 = vmatpush1.msra.mxu0 0.0
    %3239 = vmatprep.subr.mxu0 0.0
    %3240 = vmatpush1.msra.mxu0 0.0
    %3241 = vmatprep.subr.mxu0 0.0
    %3242 = vmatpush1.msra.mxu0 0.0
    %3243 = vmatprep.subr.mxu0 0.0
    %3244 = vmatpush1.msra.mxu0 0.0
    %3245 = vmatprep.subr.mxu0 0.0
    %3246 = vmatpush1.msra.mxu0 0.0
    %3247 = vmatprep.subr.mxu0 0.0
    %3248 = vmatpush1.msra.mxu0 0.0
    %3249 = vmatprep.subr.mxu0 0.0
    %3250 = vmatpush1.msra.mxu0 0.0
    %3251 = vmatprep.subr.mxu0 0.0
    %3252 = vmatpush1.msra.mxu0 0.0
    %3253 = vmatprep.subr.mxu0 0.0
    %3254 = vmatpush1.msra.mxu0 0.0
    %3255 = vmatprep.mubr.f32.mxu0 0.0
    %3256 = vmatmul.mubr.f32.gmra.mrb[0].mxu0 %v3189
    %v3257 = vpop.f32.mrb[0].mxu0
    %v3258 = vadd.f32 0.0, %v3257
    %v3259 = vpop.f32.mrb[0].mxu0
    %3260 = vdwg.mxu0
    %3261 = vmatprep.subr.mxu0 0.0
    %3262 = vmatpush1.msra.mxu0 %v1060
    %3263 = vmatprep.subr.mxu0 0.0
    %3264 = vmatpush1.msra.mxu0 %v1064
    %3265 = vmatprep.subr.mxu0 0.0
    %3266 = vmatpush1.msra.mxu0 %v1068
    %3267 = vmatprep.subr.mxu0 0.0
    %3268 = vmatpush1.msra.mxu0 %v1072
    %3269 = vmatprep.subr.mxu0 0.0
    %3270 = vmatpush1.msra.mxu0 %v1076
    %3271 = vmatprep.subr.mxu0 0.0
    %3272 = vmatpush1.msra.mxu0 %v1080
    %3273 = vmatprep.subr.mxu0 0.0
    %3274 = vmatpush1.msra.mxu0 %v1084
    %3275 = vmatprep.subr.mxu0 0.0
    %3276 = vmatpush1.msra.mxu0 %v1088
    %3277 = vmatprep.subr.mxu0 0.0
    %3278 = vmatpush1.msra.mxu0 %v1092
    %3279 = vmatprep.subr.mxu0 0.0
    %3280 = vmatpush1.msra.mxu0 %v1096
    %3281 = vmatprep.subr.mxu0 0.0
    %3282 = vmatpush1.msra.mxu0 %v1100
    %3283 = vmatprep.subr.mxu0 0.0
    %3284 = vmatpush1.msra.mxu0 %v1104
    %3285 = vmatprep.subr.mxu0 0.0
    %3286 = vmatpush1.msra.mxu0 %v1108
    %3287 = vmatprep.subr.mxu0 0.0
    %3288 = vmatpush1.msra.mxu0 %v1112
    %3289 = vmatprep.subr.mxu0 0.0
    %3290 = vmatpush1.msra.mxu0 %v1116
    %3291 = vmatprep.subr.mxu0 0.0
    %3292 = vmatpush1.msra.mxu0 %v1120
    %3293 = vmatprep.subr.mxu0 0.0
    %3294 = vmatpush1.msra.mxu0 0.0
    %3295 = vmatprep.subr.mxu0 0.0
    %3296 = vmatpush1.msra.mxu0 0.0
    %3297 = vmatprep.subr.mxu0 0.0
    %3298 = vmatpush1.msra.mxu0 0.0
    %3299 = vmatprep.subr.mxu0 0.0
    %3300 = vmatpush1.msra.mxu0 0.0
    %3301 = vmatprep.subr.mxu0 0.0
    %3302 = vmatpush1.msra.mxu0 0.0
    %3303 = vmatprep.subr.mxu0 0.0
    %3304 = vmatpush1.msra.mxu0 0.0
    %3305 = vmatprep.subr.mxu0 0.0
    %3306 = vmatpush1.msra.mxu0 0.0
    %3307 = vmatprep.subr.mxu0 0.0
    %3308 = vmatpush1.msra.mxu0 0.0
    %3309 = vmatprep.subr.mxu0 0.0
    %3310 = vmatpush1.msra.mxu0 0.0
    %3311 = vmatprep.subr.mxu0 0.0
    %3312 = vmatpush1.msra.mxu0 0.0
    %3313 = vmatprep.subr.mxu0 0.0
    %3314 = vmatpush1.msra.mxu0 0.0
    %3315 = vmatprep.subr.mxu0 0.0
    %3316 = vmatpush1.msra.mxu0 0.0
    %3317 = vmatprep.subr.mxu0 0.0
    %3318 = vmatpush1.msra.mxu0 0.0
    %3319 = vmatprep.subr.mxu0 0.0
    %3320 = vmatpush1.msra.mxu0 0.0
    %3321 = vmatprep.subr.mxu0 0.0
    %3322 = vmatpush1.msra.mxu0 0.0
    %3323 = vmatprep.subr.mxu0 0.0
    %3324 = vmatpush1.msra.mxu0 0.0
    %3325 = vmatprep.mubr.f32.mxu0 0.0
    %3326 = vmatmul.mubr.f32.gmra.mrb[0].mxu0 %v2934
    %v3327 = vpop.f32.mrb[0].mxu0
    %v3328 = vadd.f32 0.0, %v3327
    %v3329 = vpop.f32.mrb[0].mxu0
    %3330 = vmatprep.mubr.f32.mxu0 0.0
    %3331 = vmatmul.mubr.f32.gmra.mrb[0].mxu0 %v2936
    %v3332 = vpop.f32.mrb[0].mxu0
    %v3333 = vadd.f32 0.0, %v3332
    %v3334 = vpop.f32.mrb[0].mxu0
    %3335 = vmatprep.mubr.f32.mxu0 0.0
    %3336 = vmatmul.mubr.f32.gmra.mrb[0].mxu0 %v2938
    %v3337 = vpop.f32.mrb[0].mxu0
    %v3338 = vadd.f32 0.0, %v3337
    %v3339 = vpop.f32.mrb[0].mxu0
    %3340 = vmatprep.mubr.f32.mxu0 0.0
    %3341 = vmatmul.mubr.f32.gmra.mrb[0].mxu0 %v2940
    %v3342 = vpop.f32.mrb[0].mxu0
    %v3343 = vadd.f32 0.0, %v3342
    %v3344 = vpop.f32.mrb[0].mxu0
    %3345 = vdwg.mxu0
    %v3346 = vadd.f32 %v3039, %v3328
    %v3347 = vadd.f32 %v3112, %v3333
    %v3348 = vadd.f32 %v3185, %v3338
    %v3349 = vadd.f32 %v3258, %v3343
    %v3350 = vmul.f32 %v3346, %v2965
    %v3351 = vmul.f32 %v3347, %v2966
    %v3352 = vmul.f32 %v3348, %v2967
    %v3353 = vmul.f32 %v3349, %v2968
    %3354 = vst [vmem:[#allocation2 + $0x10] sm:$0xff] %v3350
    %3355 = vst [vmem:[#allocation2 + $0x30] sm:$0xff] %v3351
    %3356 = vst [vmem:[#allocation2 + $0x50] sm:$0xff] %v3352
    %3357 = vst [vmem:[#allocation2 + $0x70] sm:$0xff] %v3353
    %3358 = vmatprep.subr.mxu0 0.0
    %3359 = vmatpush1.xpose.msra.mxu0 %v594
    %3360 = vmatprep.subr.mxu0 0.0
    %3361 = vmatpush1.xpose.msra.mxu0 0.0
    %3362 = vmatprep.subr.mxu0 0.0
    %3363 = vmatpush1.xpose.msra.mxu0 0.0
    %3364 = vmatprep.subr.mxu0 0.0
    %3365 = vmatpush1.xpose.msra.mxu0 0.0
    %3366 = vmatprep.subr.mxu0 0.0
    %3367 = vmatpush1.xpose.msra.mxu0 0.0
    %3368 = vmatprep.subr.mxu0 0.0
    %3369 = vmatpush1.xpose.msra.mxu0 0.0
    %3370 = vmatprep.subr.mxu0 0.0
    %3371 = vmatpush1.xpose.msra.mxu0 0.0
    %3372 = vmatprep.subr.mxu0 0.0
    %3373 = vmatpush1.xpose.msra.mxu0 0.0
    %3374 = vmatprep.subr.mxu0 0.0
    %3375 = vmatpush1.xpose.msra.mxu0 0.0
    %3376 = vmatprep.subr.mxu0 0.0
    %3377 = vmatpush1.xpose.msra.mxu0 0.0
    %3378 = vmatprep.subr.mxu0 0.0
    %3379 = vmatpush1.xpose.msra.mxu0 0.0
    %3380 = vmatprep.subr.mxu0 0.0
    %3381 = vmatpush1.xpose.msra.mxu0 0.0
    %3382 = vmatprep.subr.mxu0 0.0
    %3383 = vmatpush1.xpose.msra.mxu0 0.0
    %3384 = vmatprep.subr.mxu0 0.0
    %3385 = vmatpush1.xpose.msra.mxu0 0.0
    %3386 = vmatprep.subr.mxu0 0.0
    %3387 = vmatpush1.xpose.msra.mxu0 0.0
    %3388 = vmatprep.subr.mxu0 0.0
    %3389 = vmatpush1.xpose.msra.mxu0 0.0
    %3390 = vmatprep.subr.mxu0 0.0
    %3391 = vmatpush1.xpose.msra.mxu0 0.0
    %3392 = vmatprep.subr.mxu0 0.0
    %3393 = vmatpush1.xpose.msra.mxu0 0.0
    %3394 = vmatprep.subr.mxu0 0.0
    %3395 = vmatpush1.xpose.msra.mxu0 0.0
    %3396 = vmatprep.subr.mxu0 0.0
    %3397 = vmatpush1.xpose.msra.mxu0 0.0
    %3398 = vmatprep.subr.mxu0 0.0
    %3399 = vmatpush1.xpose.msra.mxu0 0.0
    %3400 = vmatprep.subr.mxu0 0.0
    %3401 = vmatpush1.xpose.msra.mxu0 0.0
    %3402 = vmatprep.subr.mxu0 0.0
    %3403 = vmatpush1.xpose.msra.mxu0 0.0
    %3404 = vmatprep.subr.mxu0 0.0
    %3405 = vmatpush1.xpose.msra.mxu0 0.0
    %3406 = vmatprep.subr.mxu0 0.0
    %3407 = vmatpush1.xpose.msra.mxu0 0.0
    %3408 = vmatprep.subr.mxu0 0.0
    %3409 = vmatpush1.xpose.msra.mxu0 0.0
    %3410 = vmatprep.subr.mxu0 0.0
    %3411 = vmatpush1.xpose.msra.mxu0 0.0
    %3412 = vmatprep.subr.mxu0 0.0
    %3413 = vmatpush1.xpose.msra.mxu0 0.0
    %3414 = vmatprep.subr.mxu0 0.0
    %3415 = vmatpush1.xpose.msra.mxu0 0.0
    %3416 = vmatprep.subr.mxu0 0.0
    %3417 = vmatpush1.xpose.msra.mxu0 0.0
    %3418 = vmatprep.subr.mxu0 0.0
    %3419 = vmatpush1.xpose.msra.mxu0 0.0
    %3420 = vmatprep.subr.mxu0 0.0
    %3421 = vmatpush1.xpose.msra.mxu0 0.0
    %3422 = vmatprep.mubr.f32.mxu0 0.0
    %3423 = vmatmul.mubr.f32.gmra.mrb[0].mxu0 %v366
    %v3424 = vpop.f32.mrb[0].mxu0
    %v3425 = vadd.f32 0.0, %v3424
    %v3426 = vpop.f32.mrb[0].mxu0
    %3427 = vdwg.mxu0
    %3428 = vmatprep.subr.mxu0 0.0
    %3429 = vmatpush1.xpose.msra.mxu0 %v600
    %3430 = vmatprep.subr.mxu0 0.0
    %3431 = vmatpush1.xpose.msra.mxu0 0.0
    %3432 = vmatprep.subr.mxu0 0.0
    %3433 = vmatpush1.xpose.msra.mxu0 0.0
    %3434 = vmatprep.subr.mxu0 0.0
    %3435 = vmatpush1.xpose.msra.mxu0 0.0
    %3436 = vmatprep.subr.mxu0 0.0
    %3437 = vmatpush1.xpose.msra.mxu0 0.0
    %3438 = vmatprep.subr.mxu0 0.0
    %3439 = vmatpush1.xpose.msra.mxu0 0.0
    %3440 = vmatprep.subr.mxu0 0.0
    %3441 = vmatpush1.xpose.msra.mxu0 0.0
    %3442 = vmatprep.subr.mxu0 0.0
    %3443 = vmatpush1.xpose.msra.mxu0 0.0
    %3444 = vmatprep.subr.mxu0 0.0
    %3445 = vmatpush1.xpose.msra.mxu0 0.0
    %3446 = vmatprep.subr.mxu0 0.0
    %3447 = vmatpush1.xpose.msra.mxu0 0.0
    %3448 = vmatprep.subr.mxu0 0.0
    %3449 = vmatpush1.xpose.msra.mxu0 0.0
    %3450 = vmatprep.subr.mxu0 0.0
    %3451 = vmatpush1.xpose.msra.mxu0 0.0
    %3452 = vmatprep.subr.mxu0 0.0
    %3453 = vmatpush1.xpose.msra.mxu0 0.0
    %3454 = vmatprep.subr.mxu0 0.0
    %3455 = vmatpush1.xpose.msra.mxu0 0.0
    %3456 = vmatprep.subr.mxu0 0.0
    %3457 = vmatpush1.xpose.msra.mxu0 0.0
    %3458 = vmatprep.subr.mxu0 0.0
    %3459 = vmatpush1.xpose.msra.mxu0 0.0
    %3460 = vmatprep.subr.mxu0 0.0
    %3461 = vmatpush1.xpose.msra.mxu0 0.0
    %3462 = vmatprep.subr.mxu0 0.0
    %3463 = vmatpush1.xpose.msra.mxu0 0.0
    %3464 = vmatprep.subr.mxu0 0.0
    %3465 = vmatpush1.xpose.msra.mxu0 0.0
    %3466 = vmatprep.subr.mxu0 0.0
    %3467 = vmatpush1.xpose.msra.mxu0 0.0
    %3468 = vmatprep.subr.mxu0 0.0
    %3469 = vmatpush1.xpose.msra.mxu0 0.0
    %3470 = vmatprep.subr.mxu0 0.0
    %3471 = vmatpush1.xpose.msra.mxu0 0.0
    %3472 = vmatprep.subr.mxu0 0.0
    %3473 = vmatpush1.xpose.msra.mxu0 0.0
    %3474 = vmatprep.subr.mxu0 0.0
    %3475 = vmatpush1.xpose.msra.mxu0 0.0
    %3476 = vmatprep.subr.mxu0 0.0
    %3477 = vmatpush1.xpose.msra.mxu0 0.0
    %3478 = vmatprep.subr.mxu0 0.0
    %3479 = vmatpush1.xpose.msra.mxu0 0.0
    %3480 = vmatprep.subr.mxu0 0.0
    %3481 = vmatpush1.xpose.msra.mxu0 0.0
    %3482 = vmatprep.subr.mxu0 0.0
    %3483 = vmatpush1.xpose.msra.mxu0 0.0
    %3484 = vmatprep.subr.mxu0 0.0
    %3485 = vmatpush1.xpose.msra.mxu0 0.0
    %3486 = vmatprep.subr.mxu0 0.0
    %3487 = vmatpush1.xpose.msra.mxu0 0.0
    %3488 = vmatprep.subr.mxu0 0.0
    %3489 = vmatpush1.xpose.msra.mxu0 0.0
    %3490 = vmatprep.subr.mxu0 0.0
    %3491 = vmatpush1.xpose.msra.mxu0 0.0
    %3492 = vmatprep.mubr.f32.mxu0 0.0
    %3493 = vmatmul.mubr.f32.gmra.mrb[0].mxu0 %v372
    %v3494 = vpop.f32.mrb[0].mxu0
    %v3495 = vadd.f32 0.0, %v3494
    %v3496 = vpop.f32.mrb[0].mxu0
    %3497 = vdwg.mxu0
    %3498 = vmatprep.subr.mxu0 0.0
    %3499 = vmatpush1.xpose.msra.mxu0 %v606
    %3500 = vmatprep.subr.mxu0 0.0
    %3501 = vmatpush1.xpose.msra.mxu0 0.0
    %3502 = vmatprep.subr.mxu0 0.0
    %3503 = vmatpush1.xpose.msra.mxu0 0.0
    %3504 = vmatprep.subr.mxu0 0.0
    %3505 = vmatpush1.xpose.msra.mxu0 0.0
    %3506 = vmatprep.subr.mxu0 0.0
    %3507 = vmatpush1.xpose.msra.mxu0 0.0
    %3508 = vmatprep.subr.mxu0 0.0
    %3509 = vmatpush1.xpose.msra.mxu0 0.0
    %3510 = vmatprep.subr.mxu0 0.0
    %3511 = vmatpush1.xpose.msra.mxu0 0.0
    %3512 = vmatprep.subr.mxu0 0.0
    %3513 = vmatpush1.xpose.msra.mxu0 0.0
    %3514 = vmatprep.subr.mxu0 0.0
    %3515 = vmatpush1.xpose.msra.mxu0 0.0
    %3516 = vmatprep.subr.mxu0 0.0
    %3517 = vmatpush1.xpose.msra.mxu0 0.0
    %3518 = vmatprep.subr.mxu0 0.0
    %3519 = vmatpush1.xpose.msra.mxu0 0.0
    %3520 = vmatprep.subr.mxu0 0.0
    %3521 = vmatpush1.xpose.msra.mxu0 0.0
    %3522 = vmatprep.subr.mxu0 0.0
    %3523 = vmatpush1.xpose.msra.mxu0 0.0
    %3524 = vmatprep.subr.mxu0 0.0
    %3525 = vmatpush1.xpose.msra.mxu0 0.0
    %3526 = vmatprep.subr.mxu0 0.0
    %3527 = vmatpush1.xpose.msra.mxu0 0.0
    %3528 = vmatprep.subr.mxu0 0.0
    %3529 = vmatpush1.xpose.msra.mxu0 0.0
    %3530 = vmatprep.subr.mxu0 0.0
    %3531 = vmatpush1.xpose.msra.mxu0 0.0
    %3532 = vmatprep.subr.mxu0 0.0
    %3533 = vmatpush1.xpose.msra.mxu0 0.0
    %3534 = vmatprep.subr.mxu0 0.0
    %3535 = vmatpush1.xpose.msra.mxu0 0.0
    %3536 = vmatprep.subr.mxu0 0.0
    %3537 = vmatpush1.xpose.msra.mxu0 0.0
    %3538 = vmatprep.subr.mxu0 0.0
    %3539 = vmatpush1.xpose.msra.mxu0 0.0
    %3540 = vmatprep.subr.mxu0 0.0
    %3541 = vmatpush1.xpose.msra.mxu0 0.0
    %3542 = vmatprep.subr.mxu0 0.0
    %3543 = vmatpush1.xpose.msra.mxu0 0.0
    %3544 = vmatprep.subr.mxu0 0.0
    %3545 = vmatpush1.xpose.msra.mxu0 0.0
    %3546 = vmatprep.subr.mxu0 0.0
    %3547 = vmatpush1.xpose.msra.mxu0 0.0
    %3548 = vmatprep.subr.mxu0 0.0
    %3549 = vmatpush1.xpose.msra.mxu0 0.0
    %3550 = vmatprep.subr.mxu0 0.0
    %3551 = vmatpush1.xpose.msra.mxu0 0.0
    %3552 = vmatprep.subr.mxu0 0.0
    %3553 = vmatpush1.xpose.msra.mxu0 0.0
    %3554 = vmatprep.subr.mxu0 0.0
    %3555 = vmatpush1.xpose.msra.mxu0 0.0
    %3556 = vmatprep.subr.mxu0 0.0
    %3557 = vmatpush1.xpose.msra.mxu0 0.0
    %3558 = vmatprep.subr.mxu0 0.0
    %3559 = vmatpush1.xpose.msra.mxu0 0.0
    %3560 = vmatprep.subr.mxu0 0.0
    %3561 = vmatpush1.xpose.msra.mxu0 0.0
    %3562 = vmatprep.mubr.f32.mxu0 0.0
    %3563 = vmatmul.mubr.f32.gmra.mrb[0].mxu0 %v378
    %v3564 = vpop.f32.mrb[0].mxu0
    %v3565 = vadd.f32 0.0, %v3564
    %v3566 = vpop.f32.mrb[0].mxu0
    %3567 = vdwg.mxu0
    %3568 = vmatprep.subr.mxu0 0.0
    %3569 = vmatpush1.xpose.msra.mxu0 %v612
    %3570 = vmatprep.subr.mxu0 0.0
    %3571 = vmatpush1.xpose.msra.mxu0 0.0
    %3572 = vmatprep.subr.mxu0 0.0
    %3573 = vmatpush1.xpose.msra.mxu0 0.0
    %3574 = vmatprep.subr.mxu0 0.0
    %3575 = vmatpush1.xpose.msra.mxu0 0.0
    %3576 = vmatprep.subr.mxu0 0.0
    %3577 = vmatpush1.xpose.msra.mxu0 0.0
    %3578 = vmatprep.subr.mxu0 0.0
    %3579 = vmatpush1.xpose.msra.mxu0 0.0
    %3580 = vmatprep.subr.mxu0 0.0
    %3581 = vmatpush1.xpose.msra.mxu0 0.0
    %3582 = vmatprep.subr.mxu0 0.0
    %3583 = vmatpush1.xpose.msra.mxu0 0.0
    %3584 = vmatprep.subr.mxu0 0.0
    %3585 = vmatpush1.xpose.msra.mxu0 0.0
    %3586 = vmatprep.subr.mxu0 0.0
    %3587 = vmatpush1.xpose.msra.mxu0 0.0
    %3588 = vmatprep.subr.mxu0 0.0
    %3589 = vmatpush1.xpose.msra.mxu0 0.0
    %3590 = vmatprep.subr.mxu0 0.0
    %3591 = vmatpush1.xpose.msra.mxu0 0.0
    %3592 = vmatprep.subr.mxu0 0.0
    %3593 = vmatpush1.xpose.msra.mxu0 0.0
    %3594 = vmatprep.subr.mxu0 0.0
    %3595 = vmatpush1.xpose.msra.mxu0 0.0
    %3596 = vmatprep.subr.mxu0 0.0
    %3597 = vmatpush1.xpose.msra.mxu0 0.0
    %3598 = vmatprep.subr.mxu0 0.0
    %3599 = vmatpush1.xpose.msra.mxu0 0.0
    %3600 = vmatprep.subr.mxu0 0.0
    %3601 = vmatpush1.xpose.msra.mxu0 0.0
    %3602 = vmatprep.subr.mxu0 0.0
    %3603 = vmatpush1.xpose.msra.mxu0 0.0
    %3604 = vmatprep.subr.mxu0 0.0
    %3605 = vmatpush1.xpose.msra.mxu0 0.0
    %3606 = vmatprep.subr.mxu0 0.0
    %3607 = vmatpush1.xpose.msra.mxu0 0.0
    %3608 = vmatprep.subr.mxu0 0.0
    %3609 = vmatpush1.xpose.msra.mxu0 0.0
    %3610 = vmatprep.subr.mxu0 0.0
    %3611 = vmatpush1.xpose.msra.mxu0 0.0
    %3612 = vmatprep.subr.mxu0 0.0
    %3613 = vmatpush1.xpose.msra.mxu0 0.0
    %3614 = vmatprep.subr.mxu0 0.0
    %3615 = vmatpush1.xpose.msra.mxu0 0.0
    %3616 = vmatprep.subr.mxu0 0.0
    %3617 = vmatpush1.xpose.msra.mxu0 0.0
    %3618 = vmatprep.subr.mxu0 0.0
    %3619 = vmatpush1.xpose.msra.mxu0 0.0
    %3620 = vmatprep.subr.mxu0 0.0
    %3621 = vmatpush1.xpose.msra.mxu0 0.0
    %3622 = vmatprep.subr.mxu0 0.0
    %3623 = vmatpush1.xpose.msra.mxu0 0.0
    %3624 = vmatprep.subr.mxu0 0.0
    %3625 = vmatpush1.xpose.msra.mxu0 0.0
    %3626 = vmatprep.subr.mxu0 0.0
    %3627 = vmatpush1.xpose.msra.mxu0 0.0
    %3628 = vmatprep.subr.mxu0 0.0
    %3629 = vmatpush1.xpose.msra.mxu0 0.0
    %3630 = vmatprep.subr.mxu0 0.0
    %3631 = vmatpush1.xpose.msra.mxu0 0.0
    %3632 = vmatprep.mubr.f32.mxu0 0.0
    %3633 = vmatmul.mubr.f32.gmra.mrb[0].mxu0 %v384
    %v3634 = vpop.f32.mrb[0].mxu0
    %v3635 = vadd.f32 0.0, %v3634
    %v3636 = vpop.f32.mrb[0].mxu0
    %3637 = vdwg.mxu0
    %v3638 = vsel %vm1402, %v3425, -inf
    %3639 = vmax.xlane.f32.xlu0 %v3638
    %v3640 = vpop.xlane.xlu0 %3639
    %v3641 = vsel %vm1402, %v3495, -inf
    %3642 = vmax.xlane.f32.xlu0 %v3641
    %v3643 = vpop.xlane.xlu0 %3642
    %v3644 = vsel %vm1402, %v3565, -inf
    %3645 = vmax.xlane.f32.xlu0 %v3644
    %v3646 = vpop.xlane.xlu0 %3645
    %v3647 = vsel %vm1402, %v3635, -inf
    %3648 = vmax.xlane.f32.xlu0 %v3647
    %v3649 = vpop.xlane.xlu0 %3648
    %3650 = vmax.xlane.f32.xlu0 %v1038
    %v3651 = vpop.xlane.xlu0 %3650
    %3652 = vmax.xlane.f32.xlu0 %v1044
    %v3653 = vpop.xlane.xlu0 %3652
    %3654 = vmax.xlane.f32.xlu0 %v1050
    %v3655 = vpop.xlane.xlu0 %3654
    %3656 = vmax.xlane.f32.xlu0 %v1056
    %v3657 = vpop.xlane.xlu0 %3656
    %v3658 = vmax.f32 %v3640, %v3651
    %v3659 = vmax.f32 %v3643, %v3653
    %v3660 = vmax.f32 %v3646, %v3655
    %v3661 = vmax.f32 %v3649, %v3657
    %v3662 = vsub.f32 %v3425, %v3658
    %v3663 = vsub.f32 %v3495, %v3659
    %v3664 = vsub.f32 %v3565, %v3660
    %v3665 = vsub.f32 %v3635, %v3661
    %v3666 = vmul.f32 %v3662, 1.442695
    %v3667 = vpow.pop %v3666
    %v3668 = vmul.f32 %v3663, 1.442695
    %v3669 = vpow.pop %v3668
    %v3670 = vmul.f32 %v3664, 1.442695
    %v3671 = vpow.pop %v3670
    %v3672 = vmul.f32 %v3665, 1.442695
    %v3673 = vpow.pop %v3672
    %v3674 = vsub.f32 %v1038, %v3658
    %v3675 = vsub.f32 %v1044, %v3659
    %v3676 = vsub.f32 %v1050, %v3660
    %v3677 = vsub.f32 %v1056, %v3661
    %v3678 = vmul.f32 %v3674, 1.442695
    %v3679 = vpow.pop %v3678
    %v3680 = vmul.f32 %v3675, 1.442695
    %v3681 = vpow.pop %v3680
    %v3682 = vmul.f32 %v3676, 1.442695
    %v3683 = vpow.pop %v3682
    %v3684 = vmul.f32 %v3677, 1.442695
    %v3685 = vpow.pop %v3684
    %v3686 = vsel %vm1402, %v3667, 0.0
    %3687 = vadd.xlane.f32.xlu0 %v3686
    %v3688 = vpop.xlane.xlu0 %3687
    %v3689 = vsel %vm1402, %v3669, 0.0
    %3690 = vadd.xlane.f32.xlu0 %v3689
    %v3691 = vpop.xlane.xlu0 %3690
    %v3692 = vsel %vm1402, %v3671, 0.0
    %3693 = vadd.xlane.f32.xlu0 %v3692
    %v3694 = vpop.xlane.xlu0 %3693
    %v3695 = vsel %vm1402, %v3673, 0.0
    %3696 = vadd.xlane.f32.xlu0 %v3695
    %v3697 = vpop.xlane.xlu0 %3696
    %3698 = vadd.xlane.f32.xlu0 %v3679
    %v3699 = vpop.xlane.xlu0 %3698
    %3700 = vadd.xlane.f32.xlu0 %v3681
    %v3701 = vpop.xlane.xlu0 %3700
    %3702 = vadd.xlane.f32.xlu0 %v3683
    %v3703 = vpop.xlane.xlu0 %3702
    %3704 = vadd.xlane.f32.xlu0 %v3685
    %v3705 = vpop.xlane.xlu0 %3704
    %v3706 = vadd.f32 %v3688, %v3699
    %v3707 = vadd.f32 %v3691, %v3701
    %v3708 = vadd.f32 %v3694, %v3703
    %v3709 = vadd.f32 %v3697, %v3705
    %v3710 = vrcp.pop %v3706
    %v3711 = vrcp.pop %v3707
    %v3712 = vrcp.pop %v3708
    %v3713 = vrcp.pop %v3709
    %v3715 = vsel %vm1402, %v3667, 0
    %3717 = vmatprep.subr.mxu0 0.0
    %3718 = vmatpush1.msra.mxu0 %v822
    %3719 = vmatprep.subr.mxu0 0.0
    %3720 = vmatpush1.msra.mxu0 0.0
    %3721 = vmatprep.subr.mxu0 0.0
    %3722 = vmatpush1.msra.mxu0 0.0
    %3723 = vmatprep.subr.mxu0 0.0
    %3724 = vmatpush1.msra.mxu0 0.0
    %3725 = vmatprep.subr.mxu0 0.0
    %3726 = vmatpush1.msra.mxu0 0.0
    %3727 = vmatprep.subr.mxu0 0.0
    %3728 = vmatpush1.msra.mxu0 0.0
    %3729 = vmatprep.subr.mxu0 0.0
    %3730 = vmatpush1.msra.mxu0 0.0
    %3731 = vmatprep.subr.mxu0 0.0
    %3732 = vmatpush1.msra.mxu0 0.0
    %3733 = vmatprep.subr.mxu0 0.0
    %3734 = vmatpush1.msra.mxu0 0.0
    %3735 = vmatprep.subr.mxu0 0.0
    %3736 = vmatpush1.msra.mxu0 0.0
    %3737 = vmatprep.subr.mxu0 0.0
    %3738 = vmatpush1.msra.mxu0 0.0
    %3739 = vmatprep.subr.mxu0 0.0
    %3740 = vmatpush1.msra.mxu0 0.0
    %3741 = vmatprep.subr.mxu0 0.0
    %3742 = vmatpush1.msra.mxu0 0.0
    %3743 = vmatprep.subr.mxu0 0.0
    %3744 = vmatpush1.msra.mxu0 0.0
    %3745 = vmatprep.subr.mxu0 0.0
    %3746 = vmatpush1.msra.mxu0 0.0
    %3747 = vmatprep.subr.mxu0 0.0
    %3748 = vmatpush1.msra.mxu0 0.0
    %3749 = vmatprep.subr.mxu0 0.0
    %3750 = vmatpush1.msra.mxu0 0.0
    %3751 = vmatprep.subr.mxu0 0.0
    %3752 = vmatpush1.msra.mxu0 0.0
    %3753 = vmatprep.subr.mxu0 0.0
    %3754 = vmatpush1.msra.mxu0 0.0
    %3755 = vmatprep.subr.mxu0 0.0
    %3756 = vmatpush1.msra.mxu0 0.0
    %3757 = vmatprep.subr.mxu0 0.0
    %3758 = vmatpush1.msra.mxu0 0.0
    %3759 = vmatprep.subr.mxu0 0.0
    %3760 = vmatpush1.msra.mxu0 0.0
    %3761 = vmatprep.subr.mxu0 0.0
    %3762 = vmatpush1.msra.mxu0 0.0
    %3763 = vmatprep.subr.mxu0 0.0
    %3764 = vmatpush1.msra.mxu0 0.0
    %3765 = vmatprep.subr.mxu0 0.0
    %3766 = vmatpush1.msra.mxu0 0.0
    %3767 = vmatprep.subr.mxu0 0.0
    %3768 = vmatpush1.msra.mxu0 0.0
    %3769 = vmatprep.subr.mxu0 0.0
    %3770 = vmatpush1.msra.mxu0 0.0
    %3771 = vmatprep.subr.mxu0 0.0
    %3772 = vmatpush1.msra.mxu0 0.0
    %3773 = vmatprep.subr.mxu0 0.0
    %3774 = vmatpush1.msra.mxu0 0.0
    %3775 = vmatprep.subr.mxu0 0.0
    %3776 = vmatpush1.msra.mxu0 0.0
    %3777 = vmatprep.subr.mxu0 0.0
    %3778 = vmatpush1.msra.mxu0 0.0
    %3779 = vmatprep.subr.mxu0 0.0
    %3780 = vmatpush1.msra.mxu0 0.0
    %3781 = vmatprep.mubr.f32.mxu0 0.0
    %3782 = vmatmul.mubr.f32.gmra.mrb[0].mxu0 %v3715
    %v3783 = vpop.f32.mrb[0].mxu0
    %v3784 = vadd.f32 0.0, %v3783
    %v3785 = vpop.f32.mrb[0].mxu0
    %3786 = vdwg.mxu0
    %v3788 = vsel %vm1402, %v3669, 0
    %3790 = vmatprep.subr.mxu0 0.0
    %3791 = vmatpush1.msra.mxu0 %v828
    %3792 = vmatprep.subr.mxu0 0.0
    %3793 = vmatpush1.msra.mxu0 0.0
    %3794 = vmatprep.subr.mxu0 0.0
    %3795 = vmatpush1.msra.mxu0 0.0
    %3796 = vmatprep.subr.mxu0 0.0
    %3797 = vmatpush1.msra.mxu0 0.0
    %3798 = vmatprep.subr.mxu0 0.0
    %3799 = vmatpush1.msra.mxu0 0.0
    %3800 = vmatprep.subr.mxu0 0.0
    %3801 = vmatpush1.msra.mxu0 0.0
    %3802 = vmatprep.subr.mxu0 0.0
    %3803 = vmatpush1.msra.mxu0 0.0
    %3804 = vmatprep.subr.mxu0 0.0
    %3805 = vmatpush1.msra.mxu0 0.0
    %3806 = vmatprep.subr.mxu0 0.0
    %3807 = vmatpush1.msra.mxu0 0.0
    %3808 = vmatprep.subr.mxu0 0.0
    %3809 = vmatpush1.msra.mxu0 0.0
    %3810 = vmatprep.subr.mxu0 0.0
    %3811 = vmatpush1.msra.mxu0 0.0
    %3812 = vmatprep.subr.mxu0 0.0
    %3813 = vmatpush1.msra.mxu0 0.0
    %3814 = vmatprep.subr.mxu0 0.0
    %3815 = vmatpush1.msra.mxu0 0.0
    %3816 = vmatprep.subr.mxu0 0.0
    %3817 = vmatpush1.msra.mxu0 0.0
    %3818 = vmatprep.subr.mxu0 0.0
    %3819 = vmatpush1.msra.mxu0 0.0
    %3820 = vmatprep.subr.mxu0 0.0
    %3821 = vmatpush1.msra.mxu0 0.0
    %3822 = vmatprep.subr.mxu0 0.0
    %3823 = vmatpush1.msra.mxu0 0.0
    %3824 = vmatprep.subr.mxu0 0.0
    %3825 = vmatpush1.msra.mxu0 0.0
    %3826 = vmatprep.subr.mxu0 0.0
    %3827 = vmatpush1.msra.mxu0 0.0
    %3828 = vmatprep.subr.mxu0 0.0
    %3829 = vmatpush1.msra.mxu0 0.0
    %3830 = vmatprep.subr.mxu0 0.0
    %3831 = vmatpush1.msra.mxu0 0.0
    %3832 = vmatprep.subr.mxu0 0.0
    %3833 = vmatpush1.msra.mxu0 0.0
    %3834 = vmatprep.subr.mxu0 0.0
    %3835 = vmatpush1.msra.mxu0 0.0
    %3836 = vmatprep.subr.mxu0 0.0
    %3837 = vmatpush1.msra.mxu0 0.0
    %3838 = vmatprep.subr.mxu0 0.0
    %3839 = vmatpush1.msra.mxu0 0.0
    %3840 = vmatprep.subr.mxu0 0.0
    %3841 = vmatpush1.msra.mxu0 0.0
    %3842 = vmatprep.subr.mxu0 0.0
    %3843 = vmatpush1.msra.mxu0 0.0
    %3844 = vmatprep.subr.mxu0 0.0
    %3845 = vmatpush1.msra.mxu0 0.0
    %3846 = vmatprep.subr.mxu0 0.0
    %3847 = vmatpush1.msra.mxu0 0.0
    %3848 = vmatprep.subr.mxu0 0.0
    %3849 = vmatpush1.msra.mxu0 0.0
    %3850 = vmatprep.subr.mxu0 0.0
    %3851 = vmatpush1.msra.mxu0 0.0
    %3852 = vmatprep.subr.mxu0 0.0
    %3853 = vmatpush1.msra.mxu0 0.0
    %3854 = vmatprep.mubr.f32.mxu0 0.0
    %3855 = vmatmul.mubr.f32.gmra.mrb[0].mxu0 %v3788
    %v3856 = vpop.f32.mrb[0].mxu0
    %v3857 = vadd.f32 0.0, %v3856
    %v3858 = vpop.f32.mrb[0].mxu0
    %3859 = vdwg.mxu0
    %v3861 = vsel %vm1402, %v3671, 0
    %3863 = vmatprep.subr.mxu0 0.0
    %3864 = vmatpush1.msra.mxu0 %v834
    %3865 = vmatprep.subr.mxu0 0.0
    %3866 = vmatpush1.msra.mxu0 0.0
    %3867 = vmatprep.subr.mxu0 0.0
    %3868 = vmatpush1.msra.mxu0 0.0
    %3869 = vmatprep.subr.mxu0 0.0
    %3870 = vmatpush1.msra.mxu0 0.0
    %3871 = vmatprep.subr.mxu0 0.0
    %3872 = vmatpush1.msra.mxu0 0.0
    %3873 = vmatprep.subr.mxu0 0.0
    %3874 = vmatpush1.msra.mxu0 0.0
    %3875 = vmatprep.subr.mxu0 0.0
    %3876 = vmatpush1.msra.mxu0 0.0
    %3877 = vmatprep.subr.mxu0 0.0
    %3878 = vmatpush1.msra.mxu0 0.0
    %3879 = vmatprep.subr.mxu0 0.0
    %3880 = vmatpush1.msra.mxu0 0.0
    %3881 = vmatprep.subr.mxu0 0.0
    %3882 = vmatpush1.msra.mxu0 0.0
    %3883 = vmatprep.subr.mxu0 0.0
    %3884 = vmatpush1.msra.mxu0 0.0
    %3885 = vmatprep.subr.mxu0 0.0
    %3886 = vmatpush1.msra.mxu0 0.0
    %3887 = vmatprep.subr.mxu0 0.0
    %3888 = vmatpush1.msra.mxu0 0.0
    %3889 = vmatprep.subr.mxu0 0.0
    %3890 = vmatpush1.msra.mxu0 0.0
    %3891 = vmatprep.subr.mxu0 0.0
    %3892 = vmatpush1.msra.mxu0 0.0
    %3893 = vmatprep.subr.mxu0 0.0
    %3894 = vmatpush1.msra.mxu0 0.0
    %3895 = vmatprep.subr.mxu0 0.0
    %3896 = vmatpush1.msra.mxu0 0.0
    %3897 = vmatprep.subr.mxu0 0.0
    %3898 = vmatpush1.msra.mxu0 0.0
    %3899 = vmatprep.subr.mxu0 0.0
    %3900 = vmatpush1.msra.mxu0 0.0
    %3901 = vmatprep.subr.mxu0 0.0
    %3902 = vmatpush1.msra.mxu0 0.0
    %3903 = vmatprep.subr.mxu0 0.0
    %3904 = vmatpush1.msra.mxu0 0.0
    %3905 = vmatprep.subr.mxu0 0.0
    %3906 = vmatpush1.msra.mxu0 0.0
    %3907 = vmatprep.subr.mxu0 0.0
    %3908 = vmatpush1.msra.mxu0 0.0
    %3909 = vmatprep.subr.mxu0 0.0
    %3910 = vmatpush1.msra.mxu0 0.0
    %3911 = vmatprep.subr.mxu0 0.0
    %3912 = vmatpush1.msra.mxu0 0.0
    %3913 = vmatprep.subr.mxu0 0.0
    %3914 = vmatpush1.msra.mxu0 0.0
    %3915 = vmatprep.subr.mxu0 0.0
    %3916 = vmatpush1.msra.mxu0 0.0
    %3917 = vmatprep.subr.mxu0 0.0
    %3918 = vmatpush1.msra.mxu0 0.0
    %3919 = vmatprep.subr.mxu0 0.0
    %3920 = vmatpush1.msra.mxu0 0.0
    %3921 = vmatprep.subr.mxu0 0.0
    %3922 = vmatpush1.msra.mxu0 0.0
    %3923 = vmatprep.subr.mxu0 0.0
    %3924 = vmatpush1.msra.mxu0 0.0
    %3925 = vmatprep.subr.mxu0 0.0
    %3926 = vmatpush1.msra.mxu0 0.0
    %3927 = vmatprep.mubr.f32.mxu0 0.0
    %3928 = vmatmul.mubr.f32.gmra.mrb[0].mxu0 %v3861
    %v3929 = vpop.f32.mrb[0].mxu0
    %v3930 = vadd.f32 0.0, %v3929
    %v3931 = vpop.f32.mrb[0].mxu0
    %3932 = vdwg.mxu0
    %v3934 = vsel %vm1402, %v3673, 0
    %3936 = vmatprep.subr.mxu0 0.0
    %3937 = vmatpush1.msra.mxu0 %v840
    %3938 = vmatprep.subr.mxu0 0.0
    %3939 = vmatpush1.msra.mxu0 0.0
    %3940 = vmatprep.subr.mxu0 0.0
    %3941 = vmatpush1.msra.mxu0 0.0
    %3942 = vmatprep.subr.mxu0 0.0
    %3943 = vmatpush1.msra.mxu0 0.0
    %3944 = vmatprep.subr.mxu0 0.0
    %3945 = vmatpush1.msra.mxu0 0.0
    %3946 = vmatprep.subr.mxu0 0.0
    %3947 = vmatpush1.msra.mxu0 0.0
    %3948 = vmatprep.subr.mxu0 0.0
    %3949 = vmatpush1.msra.mxu0 0.0
    %3950 = vmatprep.subr.mxu0 0.0
    %3951 = vmatpush1.msra.mxu0 0.0
    %3952 = vmatprep.subr.mxu0 0.0
    %3953 = vmatpush1.msra.mxu0 0.0
    %3954 = vmatprep.subr.mxu0 0.0
    %3955 = vmatpush1.msra.mxu0 0.0
    %3956 = vmatprep.subr.mxu0 0.0
    %3957 = vmatpush1.msra.mxu0 0.0
    %3958 = vmatprep.subr.mxu0 0.0
    %3959 = vmatpush1.msra.mxu0 0.0
    %3960 = vmatprep.subr.mxu0 0.0
    %3961 = vmatpush1.msra.mxu0 0.0
    %3962 = vmatprep.subr.mxu0 0.0
    %3963 = vmatpush1.msra.mxu0 0.0
    %3964 = vmatprep.subr.mxu0 0.0
    %3965 = vmatpush1.msra.mxu0 0.0
    %3966 = vmatprep.subr.mxu0 0.0
    %3967 = vmatpush1.msra.mxu0 0.0
    %3968 = vmatprep.subr.mxu0 0.0
    %3969 = vmatpush1.msra.mxu0 0.0
    %3970 = vmatprep.subr.mxu0 0.0
    %3971 = vmatpush1.msra.mxu0 0.0
    %3972 = vmatprep.subr.mxu0 0.0
    %3973 = vmatpush1.msra.mxu0 0.0
    %3974 = vmatprep.subr.mxu0 0.0
    %3975 = vmatpush1.msra.mxu0 0.0
    %3976 = vmatprep.subr.mxu0 0.0
    %3977 = vmatpush1.msra.mxu0 0.0
    %3978 = vmatprep.subr.mxu0 0.0
    %3979 = vmatpush1.msra.mxu0 0.0
    %3980 = vmatprep.subr.mxu0 0.0
    %3981 = vmatpush1.msra.mxu0 0.0
    %3982 = vmatprep.subr.mxu0 0.0
    %3983 = vmatpush1.msra.mxu0 0.0
    %3984 = vmatprep.subr.mxu0 0.0
    %3985 = vmatpush1.msra.mxu0 0.0
    %3986 = vmatprep.subr.mxu0 0.0
    %3987 = vmatpush1.msra.mxu0 0.0
    %3988 = vmatprep.subr.mxu0 0.0
    %3989 = vmatpush1.msra.mxu0 0.0
    %3990 = vmatprep.subr.mxu0 0.0
    %3991 = vmatpush1.msra.mxu0 0.0
    %3992 = vmatprep.subr.mxu0 0.0
    %3993 = vmatpush1.msra.mxu0 0.0
    %3994 = vmatprep.subr.mxu0 0.0
    %3995 = vmatpush1.msra.mxu0 0.0
    %3996 = vmatprep.subr.mxu0 0.0
    %3997 = vmatpush1.msra.mxu0 0.0
    %3998 = vmatprep.subr.mxu0 0.0
    %3999 = vmatpush1.msra.mxu0 0.0
    %4000 = vmatprep.mubr.f32.mxu0 0.0
    %4001 = vmatmul.mubr.f32.gmra.mrb[0].mxu0 %v3934
    %v4002 = vpop.f32.mrb[0].mxu0
    %v4003 = vadd.f32 0.0, %v4002
    %v4004 = vpop.f32.mrb[0].mxu0
    %4005 = vdwg.mxu0
    %4006 = vmatprep.subr.mxu0 0.0
    %4007 = vmatpush1.msra.mxu0 %v1061
    %4008 = vmatprep.subr.mxu0 0.0
    %4009 = vmatpush1.msra.mxu0 %v1065
    %4010 = vmatprep.subr.mxu0 0.0
    %4011 = vmatpush1.msra.mxu0 %v1069
    %4012 = vmatprep.subr.mxu0 0.0
    %4013 = vmatpush1.msra.mxu0 %v1073
    %4014 = vmatprep.subr.mxu0 0.0
    %4015 = vmatpush1.msra.mxu0 %v1077
    %4016 = vmatprep.subr.mxu0 0.0
    %4017 = vmatpush1.msra.mxu0 %v1081
    %4018 = vmatprep.subr.mxu0 0.0
    %4019 = vmatpush1.msra.mxu0 %v1085
    %4020 = vmatprep.subr.mxu0 0.0
    %4021 = vmatpush1.msra.mxu0 %v1089
    %4022 = vmatprep.subr.mxu0 0.0
    %4023 = vmatpush1.msra.mxu0 %v1093
    %4024 = vmatprep.subr.mxu0 0.0
    %4025 = vmatpush1.msra.mxu0 %v1097
    %4026 = vmatprep.subr.mxu0 0.0
    %4027 = vmatpush1.msra.mxu0 %v1101
    %4028 = vmatprep.subr.mxu0 0.0
    %4029 = vmatpush1.msra.mxu0 %v1105
    %4030 = vmatprep.subr.mxu0 0.0
    %4031 = vmatpush1.msra.mxu0 %v1109
    %4032 = vmatprep.subr.mxu0 0.0
    %4033 = vmatpush1.msra.mxu0 %v1113
    %4034 = vmatprep.subr.mxu0 0.0
    %4035 = vmatpush1.msra.mxu0 %v1117
    %4036 = vmatprep.subr.mxu0 0.0
    %4037 = vmatpush1.msra.mxu0 %v1121
    %4038 = vmatprep.subr.mxu0 0.0
    %4039 = vmatpush1.msra.mxu0 0.0
    %4040 = vmatprep.subr.mxu0 0.0
    %4041 = vmatpush1.msra.mxu0 0.0
    %4042 = vmatprep.subr.mxu0 0.0
    %4043 = vmatpush1.msra.mxu0 0.0
    %4044 = vmatprep.subr.mxu0 0.0
    %4045 = vmatpush1.msra.mxu0 0.0
    %4046 = vmatprep.subr.mxu0 0.0
    %4047 = vmatpush1.msra.mxu0 0.0
    %4048 = vmatprep.subr.mxu0 0.0
    %4049 = vmatpush1.msra.mxu0 0.0
    %4050 = vmatprep.subr.mxu0 0.0
    %4051 = vmatpush1.msra.mxu0 0.0
    %4052 = vmatprep.subr.mxu0 0.0
    %4053 = vmatpush1.msra.mxu0 0.0
    %4054 = vmatprep.subr.mxu0 0.0
    %4055 = vmatpush1.msra.mxu0 0.0
    %4056 = vmatprep.subr.mxu0 0.0
    %4057 = vmatpush1.msra.mxu0 0.0
    %4058 = vmatprep.subr.mxu0 0.0
    %4059 = vmatpush1.msra.mxu0 0.0
    %4060 = vmatprep.subr.mxu0 0.0
    %4061 = vmatpush1.msra.mxu0 0.0
    %4062 = vmatprep.subr.mxu0 0.0
    %4063 = vmatpush1.msra.mxu0 0.0
    %4064 = vmatprep.subr.mxu0 0.0
    %4065 = vmatpush1.msra.mxu0 0.0
    %4066 = vmatprep.subr.mxu0 0.0
    %4067 = vmatpush1.msra.mxu0 0.0
    %4068 = vmatprep.subr.mxu0 0.0
    %4069 = vmatpush1.msra.mxu0 0.0
    %4070 = vmatprep.mubr.f32.mxu0 0.0
    %4071 = vmatmul.mubr.f32.gmra.mrb[0].mxu0 %v3679
    %v4072 = vpop.f32.mrb[0].mxu0
    %v4073 = vadd.f32 0.0, %v4072
    %v4074 = vpop.f32.mrb[0].mxu0
    %4075 = vmatprep.mubr.f32.mxu0 0.0
    %4076 = vmatmul.mubr.f32.gmra.mrb[0].mxu0 %v3681
    %v4077 = vpop.f32.mrb[0].mxu0
    %v4078 = vadd.f32 0.0, %v4077
    %v4079 = vpop.f32.mrb[0].mxu0
    %4080 = vmatprep.mubr.f32.mxu0 0.0
    %4081 = vmatmul.mubr.f32.gmra.mrb[0].mxu0 %v3683
    %v4082 = vpop.f32.mrb[0].mxu0
    %v4083 = vadd.f32 0.0, %v4082
    %v4084 = vpop.f32.mrb[0].mxu0
    %4085 = vmatprep.mubr.f32.mxu0 0.0
    %4086 = vmatmul.mubr.f32.gmra.mrb[0].mxu0 %v3685
    %v4087 = vpop.f32.mrb[0].mxu0
    %v4088 = vadd.f32 0.0, %v4087
    %v4089 = vpop.f32.mrb[0].mxu0
    %4090 = vdwg.mxu0
    %v4091 = vadd.f32 %v3784, %v4073
    %v4092 = vadd.f32 %v3857, %v4078
    %v4093 = vadd.f32 %v3930, %v4083
    %v4094 = vadd.f32 %v4003, %v4088
    %v4095 = vmul.f32 %v4091, %v3710
    %v4096 = vmul.f32 %v4092, %v3711
    %v4097 = vmul.f32 %v4093, %v3712
    %v4098 = vmul.f32 %v4094, %v3713
    %4099 = vst [vmem:[#allocation2 + $0x18] sm:$0xff] %v4095
    %4100 = vst [vmem:[#allocation2 + $0x38] sm:$0xff] %v4096
    %4101 = vst [vmem:[#allocation2 + $0x58] sm:$0xff] %v4097
    %4102 = vst [vmem:[#allocation2 + $0x78] sm:$0xff] %v4098
    %v4103 = vld [vmem:[#allocation2] sm:$0xff]
    %v4104 = vld [vmem:[#allocation2 + $0x8] sm:$0xff]
    %v4105 = vld [vmem:[#allocation2 + $0x10] sm:$0xff]
    %v4106 = vld [vmem:[#allocation2 + $0x18] sm:$0xff]
    %v4107 = vld [vmem:[#allocation2 + $0x20] sm:$0xff]
    %v4108 = vld [vmem:[#allocation2 + $0x28] sm:$0xff]
    %v4109 = vld [vmem:[#allocation2 + $0x30] sm:$0xff]
    %v4110 = vld [vmem:[#allocation2 + $0x38] sm:$0xff]
    %v4111 = vld [vmem:[#allocation2 + $0x40] sm:$0xff]
    %v4112 = vld [vmem:[#allocation2 + $0x48] sm:$0xff]
    %v4113 = vld [vmem:[#allocation2 + $0x50] sm:$0xff]
    %v4114 = vld [vmem:[#allocation2 + $0x58] sm:$0xff]
    %v4115 = vld [vmem:[#allocation2 + $0x60] sm:$0xff]
    %v4116 = vld [vmem:[#allocation2 + $0x68] sm:$0xff]
    %v4117 = vld [vmem:[#allocation2 + $0x70] sm:$0xff]
    %v4118 = vld [vmem:[#allocation2 + $0x78] sm:$0xff]
    %v4119 = vld [vmem:[%s12] sm:$0xff]
    %v4120 = vld [vmem:[%s12 + $0x8] sm:$0xff]
    %v4121 = vld [vmem:[%s12 + $0x10] sm:$0xff]
    %v4122 = vld [vmem:[%s12 + $0x18] sm:$0xff]
    %v4123 = vld [vmem:[%s12 + $0x20] sm:$0xff]
    %v4124 = vld [vmem:[%s12 + $0x28] sm:$0xff]
    %v4125 = vld [vmem:[%s12 + $0x30] sm:$0xff]
    %v4126 = vld [vmem:[%s12 + $0x38] sm:$0xff]
    %v4127 = vld [vmem:[%s12 + $0x40] sm:$0xff]
    %v4128 = vld [vmem:[%s12 + $0x48] sm:$0xff]
    %v4129 = vld [vmem:[%s12 + $0x50] sm:$0xff]
    %v4130 = vld [vmem:[%s12 + $0x58] sm:$0xff]
    %v4131 = vld [vmem:[%s12 + $0x60] sm:$0xff]
    %v4132 = vld [vmem:[%s12 + $0x68] sm:$0xff]
    %v4133 = vld [vmem:[%s12 + $0x70] sm:$0xff]
    %v4134 = vld [vmem:[%s12 + $0x78] sm:$0xff]
    %v4135 = vld [vmem:[%s12 + $0x80] sm:$0xff]
    %v4136 = vld [vmem:[%s12 + $0x88] sm:$0xff]
    %v4137 = vld [vmem:[%s12 + $0x90] sm:$0xff]
    %v4138 = vld [vmem:[%s12 + $0x98] sm:$0xff]
    %v4139 = vld [vmem:[%s12 + $0xa0] sm:$0xff]
    %v4140 = vld [vmem:[%s12 + $0xa8] sm:$0xff]
    %v4141 = vld [vmem:[%s12 + $0xb0] sm:$0xff]
    %v4142 = vld [vmem:[%s12 + $0xb8] sm:$0xff]
    %v4143 = vld [vmem:[%s12 + $0xc0] sm:$0xff]
    %v4144 = vld [vmem:[%s12 + $0xc8] sm:$0xff]
    %v4145 = vld [vmem:[%s12 + $0xd0] sm:$0xff]
    %v4146 = vld [vmem:[%s12 + $0xd8] sm:$0xff]
    %v4147 = vld [vmem:[%s12 + $0xe0] sm:$0xff]
    %v4148 = vld [vmem:[%s12 + $0xe8] sm:$0xff]
    %v4149 = vld [vmem:[%s12 + $0xf0] sm:$0xff]
    %v4150 = vld [vmem:[%s12 + $0xf8] sm:$0xff]
    %v4151 = vld [vmem:[%s12 + $0x100] sm:$0xff]
    %v4152 = vld [vmem:[%s12 + $0x108] sm:$0xff]
    %v4153 = vld [vmem:[%s12 + $0x110] sm:$0xff]
    %v4154 = vld [vmem:[%s12 + $0x118] sm:$0xff]
    %v4155 = vld [vmem:[%s12 + $0x120] sm:$0xff]
    %v4156 = vld [vmem:[%s12 + $0x128] sm:$0xff]
    %v4157 = vld [vmem:[%s12 + $0x130] sm:$0xff]
    %v4158 = vld [vmem:[%s12 + $0x138] sm:$0xff]
    %v4159 = vld [vmem:[%s12 + $0x140] sm:$0xff]
    %v4160 = vld [vmem:[%s12 + $0x148] sm:$0xff]
    %v4161 = vld [vmem:[%s12 + $0x150] sm:$0xff]
    %v4162 = vld [vmem:[%s12 + $0x158] sm:$0xff]
    %v4163 = vld [vmem:[%s12 + $0x160] sm:$0xff]
    %v4164 = vld [vmem:[%s12 + $0x168] sm:$0xff]
    %v4165 = vld [vmem:[%s12 + $0x170] sm:$0xff]
    %v4166 = vld [vmem:[%s12 + $0x178] sm:$0xff]
    %v4167 = vld [vmem:[%s12 + $0x180] sm:$0xff]
    %v4168 = vld [vmem:[%s12 + $0x188] sm:$0xff]
    %v4169 = vld [vmem:[%s12 + $0x190] sm:$0xff]
    %v4170 = vld [vmem:[%s12 + $0x198] sm:$0xff]
    %v4171 = vld [vmem:[%s12 + $0x1a0] sm:$0xff]
    %v4172 = vld [vmem:[%s12 + $0x1a8] sm:$0xff]
    %v4173 = vld [vmem:[%s12 + $0x1b0] sm:$0xff]
    %v4174 = vld [vmem:[%s12 + $0x1b8] sm:$0xff]
    %v4175 = vld [vmem:[%s12 + $0x1c0] sm:$0xff]
    %v4176 = vld [vmem:[%s12 + $0x1c8] sm:$0xff]
    %v4177 = vld [vmem:[%s12 + $0x1d0] sm:$0xff]
    %v4178 = vld [vmem:[%s12 + $0x1d8] sm:$0xff]
    %v4179 = vld [vmem:[%s12 + $0x1e0] sm:$0xff]
    %v4180 = vld [vmem:[%s12 + $0x1e8] sm:$0xff]
    %v4181 = vld [vmem:[%s12 + $0x1f0] sm:$0xff]
    %v4182 = vld [vmem:[%s12 + $0x1f8] sm:$0xff]
    %v4183 = vld [vmem:[%s13] sm:$0x1]
    %v4185 = vlaneseq
    %v4186 = vshrl.u32 %v4185, 7
    %v4187 = vsub.s32 0, %v4186
    %v4188 = vrot.slane %v4183, %v4187
    %4190 = vmatprep.subr.mxu0 0.0
    %4191 = vmatpush1.msra.mxu0 %v4119
    %4192 = vmatprep.subr.mxu0 0.0
    %4193 = vmatpush1.msra.mxu0 %v4120
    %4194 = vmatprep.subr.mxu0 0.0
    %4195 = vmatpush1.msra.mxu0 %v4121
    %4196 = vmatprep.subr.mxu0 0.0
    %4197 = vmatpush1.msra.mxu0 %v4122
    %4198 = vmatprep.subr.mxu0 0.0
    %4199 = vmatpush1.msra.mxu0 %v4123
    %4200 = vmatprep.subr.mxu0 0.0
    %4201 = vmatpush1.msra.mxu0 %v4124
    %4202 = vmatprep.subr.mxu0 0.0
    %4203 = vmatpush1.msra.mxu0 %v4125
    %4204 = vmatprep.subr.mxu0 0.0
    %4205 = vmatpush1.msra.mxu0 %v4126
    %4206 = vmatprep.subr.mxu0 0.0
    %4207 = vmatpush1.msra.mxu0 %v4127
    %4208 = vmatprep.subr.mxu0 0.0
    %4209 = vmatpush1.msra.mxu0 %v4128
    %4210 = vmatprep.subr.mxu0 0.0
    %4211 = vmatpush1.msra.mxu0 %v4129
    %4212 = vmatprep.subr.mxu0 0.0
    %4213 = vmatpush1.msra.mxu0 %v4130
    %4214 = vmatprep.subr.mxu0 0.0
    %4215 = vmatpush1.msra.mxu0 %v4131
    %4216 = vmatprep.subr.mxu0 0.0
    %4217 = vmatpush1.msra.mxu0 %v4132
    %4218 = vmatprep.subr.mxu0 0.0
    %4219 = vmatpush1.msra.mxu0 %v4133
    %4220 = vmatprep.subr.mxu0 0.0
    %4221 = vmatpush1.msra.mxu0 %v4134
    %4222 = vmatprep.subr.mxu0 0.0
    %4223 = vmatpush1.msra.mxu0 %v4135
    %4224 = vmatprep.subr.mxu0 0.0
    %4225 = vmatpush1.msra.mxu0 %v4136
    %4226 = vmatprep.subr.mxu0 0.0
    %4227 = vmatpush1.msra.mxu0 %v4137
    %4228 = vmatprep.subr.mxu0 0.0
    %4229 = vmatpush1.msra.mxu0 %v4138
    %4230 = vmatprep.subr.mxu0 0.0
    %4231 = vmatpush1.msra.mxu0 %v4139
    %4232 = vmatprep.subr.mxu0 0.0
    %4233 = vmatpush1.msra.mxu0 %v4140
    %4234 = vmatprep.subr.mxu0 0.0
    %4235 = vmatpush1.msra.mxu0 %v4141
    %4236 = vmatprep.subr.mxu0 0.0
    %4237 = vmatpush1.msra.mxu0 %v4142
    %4238 = vmatprep.subr.mxu0 0.0
    %4239 = vmatpush1.msra.mxu0 %v4143
    %4240 = vmatprep.subr.mxu0 0.0
    %4241 = vmatpush1.msra.mxu0 %v4144
    %4242 = vmatprep.subr.mxu0 0.0
    %4243 = vmatpush1.msra.mxu0 %v4145
    %4244 = vmatprep.subr.mxu0 0.0
    %4245 = vmatpush1.msra.mxu0 %v4146
    %4246 = vmatprep.subr.mxu0 0.0
    %4247 = vmatpush1.msra.mxu0 %v4147
    %4248 = vmatprep.subr.mxu0 0.0
    %4249 = vmatpush1.msra.mxu0 %v4148
    %4250 = vmatprep.subr.mxu0 0.0
    %4251 = vmatpush1.msra.mxu0 %v4149
    %4252 = vmatprep.subr.mxu0 0.0
    %4253 = vmatpush1.msra.mxu0 %v4150
    %4254 = vmatprep.mubr.f32.mxu0 %v4104
    %4255 = vmatmul.mubr.f32.gmra.mrb[0].mxu0 %v4103
    %v4256 = vpop.f32.mrb[0].mxu0
    %v4257 = vadd.f32 %v4188, %v4256
    %v4258 = vpop.f32.mrb[0].mxu0
    %4259 = vmatprep.mubr.f32.mxu0 %v4108
    %4260 = vmatmul.mubr.f32.gmra.mrb[0].mxu0 %v4107
    %v4261 = vpop.f32.mrb[0].mxu0
    %v4262 = vadd.f32 %v4188, %v4261
    %v4263 = vpop.f32.mrb[0].mxu0
    %4264 = vmatprep.mubr.f32.mxu0 %v4112
    %4265 = vmatmul.mubr.f32.gmra.mrb[0].mxu0 %v4111
    %v4266 = vpop.f32.mrb[0].mxu0
    %v4267 = vadd.f32 %v4188, %v4266
    %v4268 = vpop.f32.mrb[0].mxu0
    %4269 = vmatprep.mubr.f32.mxu0 %v4116
    %4270 = vmatmul.mubr.f32.gmra.mrb[0].mxu0 %v4115
    %v4271 = vpop.f32.mrb[0].mxu0
    %v4272 = vadd.f32 %v4188, %v4271
    %v4273 = vpop.f32.mrb[0].mxu0
    %4274 = vdwg.mxu0
    %4275 = vmatprep.subr.mxu0 0.0
    %4276 = vmatpush1.msra.mxu0 %v4151
    %4277 = vmatprep.subr.mxu0 0.0
    %4278 = vmatpush1.msra.mxu0 %v4152
    %4279 = vmatprep.subr.mxu0 0.0
    %4280 = vmatpush1.msra.mxu0 %v4153
    %4281 = vmatprep.subr.mxu0 0.0
    %4282 = vmatpush1.msra.mxu0 %v4154
    %4283 = vmatprep.subr.mxu0 0.0
    %4284 = vmatpush1.msra.mxu0 %v4155
    %4285 = vmatprep.subr.mxu0 0.0
    %4286 = vmatpush1.msra.mxu0 %v4156
    %4287 = vmatprep.subr.mxu0 0.0
    %4288 = vmatpush1.msra.mxu0 %v4157
    %4289 = vmatprep.subr.mxu0 0.0
    %4290 = vmatpush1.msra.mxu0 %v4158
    %4291 = vmatprep.subr.mxu0 0.0
    %4292 = vmatpush1.msra.mxu0 %v4159
    %4293 = vmatprep.subr.mxu0 0.0
    %4294 = vmatpush1.msra.mxu0 %v4160
    %4295 = vmatprep.subr.mxu0 0.0
    %4296 = vmatpush1.msra.mxu0 %v4161
    %4297 = vmatprep.subr.mxu0 0.0
    %4298 = vmatpush1.msra.mxu0 %v4162
    %4299 = vmatprep.subr.mxu0 0.0
    %4300 = vmatpush1.msra.mxu0 %v4163
    %4301 = vmatprep.subr.mxu0 0.0
    %4302 = vmatpush1.msra.mxu0 %v4164
    %4303 = vmatprep.subr.mxu0 0.0
    %4304 = vmatpush1.msra.mxu0 %v4165
    %4305 = vmatprep.subr.mxu0 0.0
    %4306 = vmatpush1.msra.mxu0 %v4166
    %4307 = vmatprep.subr.mxu0 0.0
    %4308 = vmatpush1.msra.mxu0 %v4167
    %4309 = vmatprep.subr.mxu0 0.0
    %4310 = vmatpush1.msra.mxu0 %v4168
    %4311 = vmatprep.subr.mxu0 0.0
    %4312 = vmatpush1.msra.mxu0 %v4169
    %4313 = vmatprep.subr.mxu0 0.0
    %4314 = vmatpush1.msra.mxu0 %v4170
    %4315 = vmatprep.subr.mxu0 0.0
    %4316 = vmatpush1.msra.mxu0 %v4171
    %4317 = vmatprep.subr.mxu0 0.0
    %4318 = vmatpush1.msra.mxu0 %v4172
    %4319 = vmatprep.subr.mxu0 0.0
    %4320 = vmatpush1.msra.mxu0 %v4173
    %4321 = vmatprep.subr.mxu0 0.0
    %4322 = vmatpush1.msra.mxu0 %v4174
    %4323 = vmatprep.subr.mxu0 0.0
    %4324 = vmatpush1.msra.mxu0 %v4175
    %4325 = vmatprep.subr.mxu0 0.0
    %4326 = vmatpush1.msra.mxu0 %v4176
    %4327 = vmatprep.subr.mxu0 0.0
    %4328 = vmatpush1.msra.mxu0 %v4177
    %4329 = vmatprep.subr.mxu0 0.0
    %4330 = vmatpush1.msra.mxu0 %v4178
    %4331 = vmatprep.subr.mxu0 0.0
    %4332 = vmatpush1.msra.mxu0 %v4179
    %4333 = vmatprep.subr.mxu0 0.0
    %4334 = vmatpush1.msra.mxu0 %v4180
    %4335 = vmatprep.subr.mxu0 0.0
    %4336 = vmatpush1.msra.mxu0 %v4181
    %4337 = vmatprep.subr.mxu0 0.0
    %4338 = vmatpush1.msra.mxu0 %v4182
    %4339 = vmatprep.mubr.f32.mxu0 %v4106
    %4340 = vmatmul.mubr.f32.gmra.mrb[0].mxu0 %v4105
    %v4341 = vpop.f32.mrb[0].mxu0
    %v4342 = vadd.f32 %v4257, %v4341
    %v4343 = vpop.f32.mrb[0].mxu0
    %4344 = vmatprep.mubr.f32.mxu0 %v4110
    %4345 = vmatmul.mubr.f32.gmra.mrb[0].mxu0 %v4109
    %v4346 = vpop.f32.mrb[0].mxu0
    %v4347 = vadd.f32 %v4262, %v4346
    %v4348 = vpop.f32.mrb[0].mxu0
    %4349 = vmatprep.mubr.f32.mxu0 %v4114
    %4350 = vmatmul.mubr.f32.gmra.mrb[0].mxu0 %v4113
    %v4351 = vpop.f32.mrb[0].mxu0
    %v4352 = vadd.f32 %v4267, %v4351
    %v4353 = vpop.f32.mrb[0].mxu0
    %4354 = vmatprep.mubr.f32.mxu0 %v4118
    %4355 = vmatmul.mubr.f32.gmra.mrb[0].mxu0 %v4117
    %v4356 = vpop.f32.mrb[0].mxu0
    %v4357 = vadd.f32 %v4272, %v4356
    %v4358 = vpop.f32.mrb[0].mxu0
    %4359 = vdwg.mxu0
    %v4360 = vadd.f32 %v145, %v4342
    %v4361 = vadd.f32 %v146, %v4347
    %v4362 = vadd.f32 %v147, %v4352
    %v4363 = vadd.f32 %v148, %v4357
    %v4364 = vsel %vm195, %v4360, 0.0
    %4365 = vadd.xlane.f32.xlu0 %v4364
    %v4366 = vpop.xlane.xlu0 %4365
    %v4367 = vsel %vm195, %v4361, 0.0
    %4368 = vadd.xlane.f32.xlu0 %v4367
    %v4369 = vpop.xlane.xlu0 %4368
    %v4370 = vsel %vm195, %v4362, 0.0
    %4371 = vadd.xlane.f32.xlu0 %v4370
    %v4372 = vpop.xlane.xlu0 %4371
    %v4373 = vsel %vm195, %v4363, 0.0
    %4374 = vadd.xlane.f32.xlu0 %v4373
    %v4375 = vpop.xlane.xlu0 %4374
    %v4376 = vrcp.pop 32.0
    %v4377 = vmul.f32 %v4366, %v4376
    %v4378 = vmul.f32 %v4369, %v4376
    %v4379 = vmul.f32 %v4372, %v4376
    %v4380 = vmul.f32 %v4375, %v4376
    %v4381 = vsub.f32 %v4360, %v4377
    %v4382 = vsub.f32 %v4361, %v4378
    %v4383 = vsub.f32 %v4362, %v4379
    %v4384 = vsub.f32 %v4363, %v4380
    %v4385 = vmul.f32 %v4381, %v4381
    %v4386 = vmul.f32 %v4382, %v4382
    %v4387 = vmul.f32 %v4383, %v4383
    %v4388 = vmul.f32 %v4384, %v4384
    %v4389 = vsel %vm195, %v4385, 0.0
    %4390 = vadd.xlane.f32.xlu0 %v4389
    %v4391 = vpop.xlane.xlu0 %4390
    %v4392 = vsel %vm195, %v4386, 0.0
    %4393 = vadd.xlane.f32.xlu0 %v4392
    %v4394 = vpop.xlane.xlu0 %4393
    %v4395 = vsel %vm195, %v4387, 0.0
    %4396 = vadd.xlane.f32.xlu0 %v4395
    %v4397 = vpop.xlane.xlu0 %4396
    %v4398 = vsel %vm195, %v4388, 0.0
    %4399 = vadd.xlane.f32.xlu0 %v4398
    %v4400 = vpop.xlane.xlu0 %4399
    %v4401 = vmul.f32 %v4391, %v4376
    %v4402 = vmul.f32 %v4394, %v4376
    %v4403 = vmul.f32 %v4397, %v4376
    %v4404 = vmul.f32 %v4400, %v4376
    %v4405 = vadd.f32 %v4401, 1e-05
    %v4406 = vadd.f32 %v4402, 1e-05
    %v4407 = vadd.f32 %v4403, 1e-05
    %v4408 = vadd.f32 %v4404, 1e-05
    %v4409 = vrsqrt.pop %v4405
    %v4410 = vrsqrt.pop %v4406
    %v4411 = vrsqrt.pop %v4407
    %v4412 = vrsqrt.pop %v4408
    %v4413 = vmul.f32 %v4381, %v4409
    %v4414 = vmul.f32 %v4382, %v4410
    %v4415 = vmul.f32 %v4383, %v4411
    %v4416 = vmul.f32 %v4384, %v4412
    %v4417 = vld [vmem:[%s14] sm:$0x1]
    %v4419 = vlaneseq
    %v4420 = vshrl.u32 %v4419, 7
    %v4421 = vsub.s32 0, %v4420
    %v4422 = vrot.slane %v4417, %v4421
    %v4424 = vmul.f32 %v4413, %v4422
    %v4425 = vmul.f32 %v4414, %v4422
    %v4426 = vmul.f32 %v4415, %v4422
    %v4427 = vmul.f32 %v4416, %v4422
    %v4428 = vld [vmem:[%s15] sm:$0x1]
    %v4430 = vlaneseq
    %v4431 = vshrl.u32 %v4430, 7
    %v4432 = vsub.s32 0, %v4431
    %v4433 = vrot.slane %v4428, %v4432
    %v4435 = vadd.f32 %v4424, %v4433
    %v4436 = vadd.f32 %v4425, %v4433
    %v4437 = vadd.f32 %v4426, %v4433
    %v4438 = vadd.f32 %v4427, %v4433
    %4439 = vst.msk [vmem:[#allocation15] sm:$0xff] %vm195, %v4435
    %4440 = vst.msk [vmem:[#allocation15 + $0x8] sm:$0xff] %vm195, %v4436
    %4441 = vst.msk [vmem:[#allocation15 + $0x10] sm:$0xff] %vm195, %v4437
    %4442 = vst.msk [vmem:[#allocation15 + $0x18] sm:$0xff] %vm195, %v4438
    // Predicated region
    $region94: #{tpu_custom_call.1} parent=1 // pred_check
      _
    $region95: #{tpu_custom_call.1} parent=1 // pred_check_branch
      %4444 = sbr.rel (0) target = $region97
    $region96: #{tpu_custom_call.1} parent=1 // pred_region
      %s4446 = ssub.s32 512, 512
      %4447 = vsyncadd [#allocation5], %s4446
      %s4448 = sshll.u32 [#allocation15], 4
      %s4449 = int_to_ptr.vmem [resolvable:$true] %s4448
      %4454 = dma.vmem_to_hbm [thread:$0]  %s4449, 512, %s16, [#allocation5], 128, 128, 8
    $region97: #{tpu_custom_call.1} parent=1 // pred_fallthru
      _
    // Predicated region
    $region98: #{tpu_custom_call.1} parent=1 // pred_check
      _
    $region99: #{tpu_custom_call.1} parent=1 // pred_check_branch
      %4456 = sbr.rel (0) target = $region101
    $region100: #{tpu_custom_call.1} parent=1 // pred_region
      %4457 = dma.done [#allocation5], 512
    $region101: #{tpu_custom_call.1} parent=1 // pred_fallthru
      _
    %4458 = vsyncpa [#allocation4], 1
    %4459 = vsyncpa [#allocation7], 1
    %4460 = vsyncpa [#allocation10], 1
    %4461 = vsyncpa [#allocation13], 1
    %4462 = vsyncpa [#allocation5], 1

</llo_original>
